<compile_context>
chip_gen: v7x
topology: tpu7x:2x2x1
jax: 0.10.0
libtpu: 0.0.40
codegen_flags: <defaults>
</compile_context>

<pallas_src>
import jax
import jax.numpy as jnp
from jax.experimental import pallas as pl
from jax.experimental.pallas import tpu as pltpu

# ---- module hyper-parameters (PyTorch defaults) ------------------------------
D = 8
W = 256
EMBED_FRQ = 16
OUTPUT_CH = 1
SKIPS = (4,)
INPUT_CH = 3 + 6 * EMBED_FRQ      # 99
INPUT_CH_PAD = 128                # zero-padded to a full lane width


# ---- glue: NeRF positional embedding (plain JAX, elementwise), lane-padded ---
def positional_embedding_padded(x):
    # x: [N, 3] -> [N, 128]; identity followed by (sin, cos) per frequency
    # band 2^k, k = 0..EMBED_FRQ-1, then zero-pad 99 -> 128 channels.
    x = x.astype(jnp.float32)
    feats = [x]
    for k in range(EMBED_FRQ):
        freq = jnp.float32(2.0 ** k)
        feats.append(jnp.sin(freq * x))
        feats.append(jnp.cos(freq * x))
    emb = jnp.concatenate(feats, axis=-1)                     # [N, 99]
    pad = INPUT_CH_PAD - emb.shape[-1]
    return jnp.pad(emb, ((0, 0), (0, pad))).astype(jnp.float32)


# ---- Pallas kernel: full MLP tile (bf16 matmuls, f32 accum/activations) ------
def _make_nerf_kernel(depth, skips):
    def kernel(x_ref, *refs):
        out_ref = refs[-1]
        prefs = refs[:-1]
        x_bf = x_ref[...].astype(jnp.bfloat16)    # [TM, 128] bf16 (padded cols are 0)
        h = None
        idx = 0
        for i in range(depth):
            if i == 0:
                w = prefs[idx][...]               # [128, 256] bf16
                b = prefs[idx + 1][...]           # [1, 256]   f32
                idx += 2
                h = jnp.dot(x_bf, w, preferred_element_type=jnp.float32) + b
            elif i in skips:
                # h <- ReLU(cat([x, h]) @ W_full + b) == ReLU(x @ Wx + h @ Wh + b)
                wx = prefs[idx][...]              # [128, 256] bf16
                wh = prefs[idx + 1][...]          # [256, 256] bf16
                b = prefs[idx + 2][...]           # [1, 256]   f32
                idx += 3
                h = (jnp.dot(x_bf, wx, preferred_element_type=jnp.float32)
                     + jnp.dot(h.astype(jnp.bfloat16), wh,
                               preferred_element_type=jnp.float32)
                     + b)
            else:
                w = prefs[idx][...]               # [256, 256] bf16
                b = prefs[idx + 1][...]           # [1, 256]   f32
                idx += 2
                h = jnp.dot(h.astype(jnp.bfloat16), w,
                            preferred_element_type=jnp.float32) + b
            h = jnp.maximum(h, 0.0)               # ReLU (f32, VPU)
        # Output layer: [TM,256]@[256,1] done on VPU/XLU (broadcast-mul + lane
        # reduce) instead of a nearly-empty MXU pass.
        wout = prefs[idx][...]                    # [1, 256] f32 (transposed W_out)
        bout = prefs[idx + 1][...]                # [1, 1]   f32
        o = jnp.sum(h * wout, axis=-1, keepdims=True) + bout
        out_ref[...] = jax.nn.sigmoid(o)          # sigmoid (EUP)
    return kernel


# ---- parameter initialization (deterministic, PyTorch-Linear-style) ----------
def init_params(key):
    """Flat list of arrays in kernel order: matmul weights bf16 (x-side rows
    zero-padded 99->128), biases f32, output layer f32 transposed."""
    params = []

    def linear(key, fan_in, fan_out):
        k_w, k_b = jax.random.split(key)
        bound = 1.0 / jnp.sqrt(jnp.float32(fan_in))
        w = jax.random.uniform(k_w, (fan_in, fan_out), jnp.float32, -bound, bound)
        b = jax.random.uniform(k_b, (1, fan_out), jnp.float32, -bound, bound)
        return w, b

    def pad_rows(w, rows):
        return jnp.pad(w, ((0, rows - w.shape[0]), (0, 0)))

    keys = jax.random.split(key, D + 1)
    for i in range(D):
        if i == 0:
            w, b = linear(keys[i], INPUT_CH, W)
            params += [pad_rows(w, INPUT_CH_PAD).astype(jnp.bfloat16), b]
        elif i in SKIPS:
            w_full, b = linear(keys[i], W + INPUT_CH, W)
            # cat order is [x, h]: first INPUT_CH rows act on x, the rest on h.
            wx = pad_rows(w_full[:INPUT_CH], INPUT_CH_PAD).astype(jnp.bfloat16)
            wh = w_full[INPUT_CH:].astype(jnp.bfloat16)
            params += [wx, wh, b]
        else:
            w, b = linear(keys[i], W, W)
            params += [w.astype(jnp.bfloat16), b]
    w_out, b_out = linear(keys[D], W, OUTPUT_CH)
    params += [w_out.T, b_out.reshape(1, 1)]      # [1, 256] f32, [1, 1] f32
    return params


# ---- wrapper -----------------------------------------------------------------
def nerf_forward(x, params, tm=512):
    n = x.shape[0]
    x_emb = positional_embedding_padded(x)                    # [N, 128] f32
    n_pad = pl.cdiv(n, tm) * tm
    if n_pad != n:
        x_emb = jnp.pad(x_emb, ((0, n_pad - n), (0, 0)))
    grid = (n_pad // tm,)

    kernel = _make_nerf_kernel(D, SKIPS)
    in_specs = [pl.BlockSpec((tm, INPUT_CH_PAD), lambda i: (i, 0))]
    # Weights/biases: full-array blocks, constant index_map -> resident in VMEM.
    for p in params:
        in_specs.append(pl.BlockSpec(p.shape, lambda i: (0, 0)))

    out = pl.pallas_call(
        kernel,
        out_shape=jax.ShapeDtypeStruct((n_pad, OUTPUT_CH), jnp.float32),
        grid=grid,
        in_specs=in_specs,
        out_specs=pl.BlockSpec((tm, OUTPUT_CH), lambda i: (i, 0)),
        compiler_params=pltpu.CompilerParams(
            dimension_semantics=("parallel",)),
    )(x_emb, *params)
    return out[:n]


# ---- pure-JAX reference (same bf16-operand math, for sanity) ------------------
def nerf_reference(x, params):
    x_emb = positional_embedding_padded(x)
    x_bf = x_emb.astype(jnp.bfloat16)
    h = None
    idx = 0
    for i in range(D):
        if i == 0:
            w, b = params[idx], params[idx + 1]
            idx += 2
            h = jnp.dot(x_bf, w, preferred_element_type=jnp.float32) + b
        elif i in SKIPS:
            wx, wh, b = params[idx], params[idx + 1], params[idx + 2]
            idx += 3
            h = (jnp.dot(x_bf, wx, preferred_element_type=jnp.float32)
                 + jnp.dot(h.astype(jnp.bfloat16), wh,
                           preferred_element_type=jnp.float32)
                 + b)
        else:
            w, b = params[idx], params[idx + 1]
            idx += 2
            h = jnp.dot(h.astype(jnp.bfloat16), w,
                        preferred_element_type=jnp.float32) + b
        h = jnp.maximum(h, 0.0)
    wout, bout = params[idx], params[idx + 1]
    o = jnp.sum(h * wout, axis=-1, keepdims=True) + bout
    return jax.nn.sigmoid(o)


if __name__ == "__main__":
    key = jax.random.PRNGKey(0)
    k_params, k_x = jax.random.split(key)
    params = init_params(k_params)

    # Small deterministic input batch of 3-D points (exercises >1 grid step
    # plus the ragged-N padding path with TM=512).
    N = 600
    x = jax.random.normal(k_x, (N, 3), dtype=jnp.float32)

    out = nerf_forward(x, params)
    out = jax.block_until_ready(out)

    ref = jax.block_until_ready(nerf_reference(x, params))
    assert out.shape == (N, OUTPUT_CH)
    assert jnp.allclose(out, ref, atol=1e-3, rtol=1e-3)

    print("KERNEL_OK")
</pallas_src>

<mosaic_0001>
module attributes {stable_mosaic.version = 11 : i64} {
  func.func @kernel(%arg0: i32, %arg1: memref<512x128xf32, #tpu.memory_space<vmem>>, %arg2: memref<128x256xbf16, #tpu.memory_space<vmem>>, %arg3: memref<1x256xf32, #tpu.memory_space<vmem>>, %arg4: memref<256x256xbf16, #tpu.memory_space<vmem>>, %arg5: memref<1x256xf32, #tpu.memory_space<vmem>>, %arg6: memref<256x256xbf16, #tpu.memory_space<vmem>>, %arg7: memref<1x256xf32, #tpu.memory_space<vmem>>, %arg8: memref<256x256xbf16, #tpu.memory_space<vmem>>, %arg9: memref<1x256xf32, #tpu.memory_space<vmem>>, %arg10: memref<128x256xbf16, #tpu.memory_space<vmem>>, %arg11: memref<256x256xbf16, #tpu.memory_space<vmem>>, %arg12: memref<1x256xf32, #tpu.memory_space<vmem>>, %arg13: memref<256x256xbf16, #tpu.memory_space<vmem>>, %arg14: memref<1x256xf32, #tpu.memory_space<vmem>>, %arg15: memref<256x256xbf16, #tpu.memory_space<vmem>>, %arg16: memref<1x256xf32, #tpu.memory_space<vmem>>, %arg17: memref<256x256xbf16, #tpu.memory_space<vmem>>, %arg18: memref<1x256xf32, #tpu.memory_space<vmem>>, %arg19: memref<1x256xf32, #tpu.memory_space<vmem>>, %arg20: memref<1x1xf32, #tpu.memory_space<vmem>>, %arg21: memref<512x1xf32, #tpu.memory_space<vmem>>) attributes {dimension_semantics = [#tpu.dimension_semantics<parallel>], iteration_bounds = array<i64: 2>, scalar_prefetch = 0 : i64, scratch_operands = 0 : i64, tpu.core_type = #tpu.core_type<tc>, window_params = [{transform_indices = @transform_0, window_bounds = array<i64: 512, 128>}, {pipeline_mode = #tpu.pipeline_mode<synchronous>, transform_indices = @transform_1, window_bounds = array<i64: 128, 256>}, {pipeline_mode = #tpu.pipeline_mode<synchronous>, transform_indices = @transform_2, window_bounds = array<i64: 1, 256>}, {pipeline_mode = #tpu.pipeline_mode<synchronous>, transform_indices = @transform_3, window_bounds = array<i64: 256, 256>}, {pipeline_mode = #tpu.pipeline_mode<synchronous>, transform_indices = @transform_4, window_bounds = array<i64: 1, 256>}, {pipeline_mode = #tpu.pipeline_mode<synchronous>, transform_indices = @transform_5, window_bounds = array<i64: 256, 256>}, {pipeline_mode = #tpu.pipeline_mode<synchronous>, transform_indices = @transform_6, window_bounds = array<i64: 1, 256>}, {pipeline_mode = #tpu.pipeline_mode<synchronous>, transform_indices = @transform_7, window_bounds = array<i64: 256, 256>}, {pipeline_mode = #tpu.pipeline_mode<synchronous>, transform_indices = @transform_8, window_bounds = array<i64: 1, 256>}, {pipeline_mode = #tpu.pipeline_mode<synchronous>, transform_indices = @transform_9, window_bounds = array<i64: 128, 256>}, {pipeline_mode = #tpu.pipeline_mode<synchronous>, transform_indices = @transform_10, window_bounds = array<i64: 256, 256>}, {pipeline_mode = #tpu.pipeline_mode<synchronous>, transform_indices = @transform_11, window_bounds = array<i64: 1, 256>}, {pipeline_mode = #tpu.pipeline_mode<synchronous>, transform_indices = @transform_12, window_bounds = array<i64: 256, 256>}, {pipeline_mode = #tpu.pipeline_mode<synchronous>, transform_indices = @transform_13, window_bounds = array<i64: 1, 256>}, {pipeline_mode = #tpu.pipeline_mode<synchronous>, transform_indices = @transform_14, window_bounds = array<i64: 256, 256>}, {pipeline_mode = #tpu.pipeline_mode<synchronous>, transform_indices = @transform_15, window_bounds = array<i64: 1, 256>}, {pipeline_mode = #tpu.pipeline_mode<synchronous>, transform_indices = @transform_16, window_bounds = array<i64: 256, 256>}, {pipeline_mode = #tpu.pipeline_mode<synchronous>, transform_indices = @transform_17, window_bounds = array<i64: 1, 256>}, {pipeline_mode = #tpu.pipeline_mode<synchronous>, transform_indices = @transform_18, window_bounds = array<i64: 1, 256>}, {pipeline_mode = #tpu.pipeline_mode<synchronous>, transform_indices = @transform_19, window_bounds = array<i64: 1, 1>}, {transform_indices = @transform_20, window_bounds = array<i64: 512, 1>}]} {
    %c0 = arith.constant 0 : index
    %c0_0 = arith.constant 0 : index
    %0 = vector.load %arg1[%c0, %c0_0] : memref<512x128xf32, #tpu.memory_space<vmem>>, vector<512x128xf32>
    %1 = arith.truncf %0 : vector<512x128xf32> to vector<512x128xbf16>
    %c0_1 = arith.constant 0 : index
    %c0_2 = arith.constant 0 : index
    %2 = vector.load %arg2[%c0_1, %c0_2] : memref<128x256xbf16, #tpu.memory_space<vmem>>, vector<128x256xbf16>
    %c0_3 = arith.constant 0 : index
    %c0_4 = arith.constant 0 : index
    %3 = vector.load %arg3[%c0_3, %c0_4] : memref<1x256xf32, #tpu.memory_space<vmem>>, vector<1x256xf32>
    %cst = arith.constant dense<0.000000e+00> : vector<512x256xf32>
    %4 = tpu.matmul %1, %2, %cst {dimension_numbers = #tpu.dot_dimension_numbers<[1], [0], [0], [1], [0, 0, 1, 1], [], []>} : vector<512x128xbf16>, vector<128x256xbf16>, vector<512x256xf32> -> vector<512x256xf32>
    %5 = vector.broadcast %3 : vector<1x256xf32> to vector<512x256xf32>
    %6 = arith.addf %4, %5 : vector<512x256xf32>
    %cst_5 = arith.constant 0.000000e+00 : f32
    %7 = vector.broadcast %cst_5 : f32 to vector<512x256xf32>
    %8 = arith.maximumf %6, %7 : vector<512x256xf32>
    %c0_6 = arith.constant 0 : index
    %c0_7 = arith.constant 0 : index
    %9 = vector.load %arg4[%c0_6, %c0_7] : memref<256x256xbf16, #tpu.memory_space<vmem>>, vector<256x256xbf16>
    %c0_8 = arith.constant 0 : index
    %c0_9 = arith.constant 0 : index
    %10 = vector.load %arg5[%c0_8, %c0_9] : memref<1x256xf32, #tpu.memory_space<vmem>>, vector<1x256xf32>
    %11 = arith.truncf %8 : vector<512x256xf32> to vector<512x256xbf16>
    %cst_10 = arith.constant dense<0.000000e+00> : vector<512x256xf32>
    %12 = tpu.matmul %11, %9, %cst_10 {dimension_numbers = #tpu.dot_dimension_numbers<[1], [0], [0], [1], [0, 0, 1, 1], [], []>} : vector<512x256xbf16>, vector<256x256xbf16>, vector<512x256xf32> -> vector<512x256xf32>
    %13 = vector.broadcast %10 : vector<1x256xf32> to vector<512x256xf32>
    %14 = arith.addf %12, %13 : vector<512x256xf32>
    %cst_11 = arith.constant 0.000000e+00 : f32
    %15 = vector.broadcast %cst_11 : f32 to vector<512x256xf32>
    %16 = arith.maximumf %14, %15 : vector<512x256xf32>
    %c0_12 = arith.constant 0 : index
    %c0_13 = arith.constant 0 : index
    %17 = vector.load %arg6[%c0_12, %c0_13] : memref<256x256xbf16, #tpu.memory_space<vmem>>, vector<256x256xbf16>
    %c0_14 = arith.constant 0 : index
    %c0_15 = arith.constant 0 : index
    %18 = vector.load %arg7[%c0_14, %c0_15] : memref<1x256xf32, #tpu.memory_space<vmem>>, vector<1x256xf32>
    %19 = arith.truncf %16 : vector<512x256xf32> to vector<512x256xbf16>
    %cst_16 = arith.constant dense<0.000000e+00> : vector<512x256xf32>
    %20 = tpu.matmul %19, %17, %cst_16 {dimension_numbers = #tpu.dot_dimension_numbers<[1], [0], [0], [1], [0, 0, 1, 1], [], []>} : vector<512x256xbf16>, vector<256x256xbf16>, vector<512x256xf32> -> vector<512x256xf32>
    %21 = vector.broadcast %18 : vector<1x256xf32> to vector<512x256xf32>
    %22 = arith.addf %20, %21 : vector<512x256xf32>
    %cst_17 = arith.constant 0.000000e+00 : f32
    %23 = vector.broadcast %cst_17 : f32 to vector<512x256xf32>
    %24 = arith.maximumf %22, %23 : vector<512x256xf32>
    %c0_18 = arith.constant 0 : index
    %c0_19 = arith.constant 0 : index
    %25 = vector.load %arg8[%c0_18, %c0_19] : memref<256x256xbf16, #tpu.memory_space<vmem>>, vector<256x256xbf16>
    %c0_20 = arith.constant 0 : index
    %c0_21 = arith.constant 0 : index
    %26 = vector.load %arg9[%c0_20, %c0_21] : memref<1x256xf32, #tpu.memory_space<vmem>>, vector<1x256xf32>
    %27 = arith.truncf %24 : vector<512x256xf32> to vector<512x256xbf16>
    %cst_22 = arith.constant dense<0.000000e+00> : vector<512x256xf32>
    %28 = tpu.matmul %27, %25, %cst_22 {dimension_numbers = #tpu.dot_dimension_numbers<[1], [0], [0], [1], [0, 0, 1, 1], [], []>} : vector<512x256xbf16>, vector<256x256xbf16>, vector<512x256xf32> -> vector<512x256xf32>
    %29 = vector.broadcast %26 : vector<1x256xf32> to vector<512x256xf32>
    %30 = arith.addf %28, %29 : vector<512x256xf32>
    %cst_23 = arith.constant 0.000000e+00 : f32
    %31 = vector.broadcast %cst_23 : f32 to vector<512x256xf32>
    %32 = arith.maximumf %30, %31 : vector<512x256xf32>
    %c0_24 = arith.constant 0 : index
    %c0_25 = arith.constant 0 : index
    %33 = vector.load %arg10[%c0_24, %c0_25] : memref<128x256xbf16, #tpu.memory_space<vmem>>, vector<128x256xbf16>
    %c0_26 = arith.constant 0 : index
    %c0_27 = arith.constant 0 : index
    %34 = vector.load %arg11[%c0_26, %c0_27] : memref<256x256xbf16, #tpu.memory_space<vmem>>, vector<256x256xbf16>
    %c0_28 = arith.constant 0 : index
    %c0_29 = arith.constant 0 : index
    %35 = vector.load %arg12[%c0_28, %c0_29] : memref<1x256xf32, #tpu.memory_space<vmem>>, vector<1x256xf32>
    %cst_30 = arith.constant dense<0.000000e+00> : vector<512x256xf32>
    %36 = tpu.matmul %1, %33, %cst_30 {dimension_numbers = #tpu.dot_dimension_numbers<[1], [0], [0], [1], [0, 0, 1, 1], [], []>} : vector<512x128xbf16>, vector<128x256xbf16>, vector<512x256xf32> -> vector<512x256xf32>
    %37 = arith.truncf %32 : vector<512x256xf32> to vector<512x256xbf16>
    %cst_31 = arith.constant dense<0.000000e+00> : vector<512x256xf32>
    %38 = tpu.matmul %37, %34, %cst_31 {dimension_numbers = #tpu.dot_dimension_numbers<[1], [0], [0], [1], [0, 0, 1, 1], [], []>} : vector<512x256xbf16>, vector<256x256xbf16>, vector<512x256xf32> -> vector<512x256xf32>
    %39 = arith.addf %36, %38 : vector<512x256xf32>
    %40 = vector.broadcast %35 : vector<1x256xf32> to vector<512x256xf32>
    %41 = arith.addf %39, %40 : vector<512x256xf32>
    %cst_32 = arith.constant 0.000000e+00 : f32
    %42 = vector.broadcast %cst_32 : f32 to vector<512x256xf32>
    %43 = arith.maximumf %41, %42 : vector<512x256xf32>
    %c0_33 = arith.constant 0 : index
    %c0_34 = arith.constant 0 : index
    %44 = vector.load %arg13[%c0_33, %c0_34] : memref<256x256xbf16, #tpu.memory_space<vmem>>, vector<256x256xbf16>
    %c0_35 = arith.constant 0 : index
    %c0_36 = arith.constant 0 : index
    %45 = vector.load %arg14[%c0_35, %c0_36] : memref<1x256xf32, #tpu.memory_space<vmem>>, vector<1x256xf32>
    %46 = arith.truncf %43 : vector<512x256xf32> to vector<512x256xbf16>
    %cst_37 = arith.constant dense<0.000000e+00> : vector<512x256xf32>
    %47 = tpu.matmul %46, %44, %cst_37 {dimension_numbers = #tpu.dot_dimension_numbers<[1], [0], [0], [1], [0, 0, 1, 1], [], []>} : vector<512x256xbf16>, vector<256x256xbf16>, vector<512x256xf32> -> vector<512x256xf32>
    %48 = vector.broadcast %45 : vector<1x256xf32> to vector<512x256xf32>
    %49 = arith.addf %47, %48 : vector<512x256xf32>
    %cst_38 = arith.constant 0.000000e+00 : f32
    %50 = vector.broadcast %cst_38 : f32 to vector<512x256xf32>
    %51 = arith.maximumf %49, %50 : vector<512x256xf32>
    %c0_39 = arith.constant 0 : index
    %c0_40 = arith.constant 0 : index
    %52 = vector.load %arg15[%c0_39, %c0_40] : memref<256x256xbf16, #tpu.memory_space<vmem>>, vector<256x256xbf16>
    %c0_41 = arith.constant 0 : index
    %c0_42 = arith.constant 0 : index
    %53 = vector.load %arg16[%c0_41, %c0_42] : memref<1x256xf32, #tpu.memory_space<vmem>>, vector<1x256xf32>
    %54 = arith.truncf %51 : vector<512x256xf32> to vector<512x256xbf16>
    %cst_43 = arith.constant dense<0.000000e+00> : vector<512x256xf32>
    %55 = tpu.matmul %54, %52, %cst_43 {dimension_numbers = #tpu.dot_dimension_numbers<[1], [0], [0], [1], [0, 0, 1, 1], [], []>} : vector<512x256xbf16>, vector<256x256xbf16>, vector<512x256xf32> -> vector<512x256xf32>
    %56 = vector.broadcast %53 : vector<1x256xf32> to vector<512x256xf32>
    %57 = arith.addf %55, %56 : vector<512x256xf32>
    %cst_44 = arith.constant 0.000000e+00 : f32
    %58 = vector.broadcast %cst_44 : f32 to vector<512x256xf32>
    %59 = arith.maximumf %57, %58 : vector<512x256xf32>
    %c0_45 = arith.constant 0 : index
    %c0_46 = arith.constant 0 : index
    %60 = vector.load %arg17[%c0_45, %c0_46] : memref<256x256xbf16, #tpu.memory_space<vmem>>, vector<256x256xbf16>
    %c0_47 = arith.constant 0 : index
    %c0_48 = arith.constant 0 : index
    %61 = vector.load %arg18[%c0_47, %c0_48] : memref<1x256xf32, #tpu.memory_space<vmem>>, vector<1x256xf32>
    %62 = arith.truncf %59 : vector<512x256xf32> to vector<512x256xbf16>
    %cst_49 = arith.constant dense<0.000000e+00> : vector<512x256xf32>
    %63 = tpu.matmul %62, %60, %cst_49 {dimension_numbers = #tpu.dot_dimension_numbers<[1], [0], [0], [1], [0, 0, 1, 1], [], []>} : vector<512x256xbf16>, vector<256x256xbf16>, vector<512x256xf32> -> vector<512x256xf32>
    %64 = vector.broadcast %61 : vector<1x256xf32> to vector<512x256xf32>
    %65 = arith.addf %63, %64 : vector<512x256xf32>
    %cst_50 = arith.constant 0.000000e+00 : f32
    %66 = vector.broadcast %cst_50 : f32 to vector<512x256xf32>
    %67 = arith.maximumf %65, %66 : vector<512x256xf32>
    %c0_51 = arith.constant 0 : index
    %c0_52 = arith.constant 0 : index
    %68 = vector.load %arg19[%c0_51, %c0_52] : memref<1x256xf32, #tpu.memory_space<vmem>>, vector<1x256xf32>
    %c0_53 = arith.constant 0 : index
    %c0_54 = arith.constant 0 : index
    %69 = vector.load %arg20[%c0_53, %c0_54] : memref<1x1xf32, #tpu.memory_space<vmem>>, vector<1x1xf32>
    %70 = vector.broadcast %68 : vector<1x256xf32> to vector<512x256xf32>
    %71 = arith.mulf %67, %70 : vector<512x256xf32>
    %cst_55 = arith.constant dense<0.000000e+00> : vector<512xf32>
    %72 = vector.multi_reduction <add>, %71, %cst_55 [1] : vector<512x256xf32> to vector<512xf32>
    %73 = vector.shape_cast %72 : vector<512xf32> to vector<512x1xf32>
    %74 = vector.broadcast %69 : vector<1x1xf32> to vector<512x1xf32>
    %75 = arith.addf %73, %74 : vector<512x1xf32>
    %76 = arith.negf %75 : vector<512x1xf32>
    %77 = math.exp %76 : vector<512x1xf32>
    %cst_56 = arith.constant 1.000000e+00 : f32
    %78 = vector.broadcast %cst_56 : f32 to vector<512x1xf32>
    %79 = arith.addf %78, %77 : vector<512x1xf32>
    %80 = arith.divf %78, %79 : vector<512x1xf32>
    %c0_57 = arith.constant 0 : index
    %c0_58 = arith.constant 0 : index
    %81 = vector.load %arg21[%c0_57, %c0_58] : memref<512x1xf32, #tpu.memory_space<vmem>>, vector<512x1xf32>
    tpu.vector_store %arg21[%c0_57, %c0_58], %80 {strides = array<i32>} : memref<512x1xf32, #tpu.memory_space<vmem>>, vector<512x1xf32>,
    return
  }
  func.func @transform_0(%arg0: i32) -> (i32, i32) {
    %c0_i32 = arith.constant 0 : i32
    %c0_i32_0 = arith.constant 0 : i32
    return %arg0, %c0_i32 : i32, i32
  }
  func.func @transform_1(%arg0: i32) -> (i32, i32) {
    %c0_i32 = arith.constant 0 : i32
    %c0_i32_0 = arith.constant 0 : i32
    %c0_i32_1 = arith.constant 0 : i32
    return %c0_i32, %c0_i32_0 : i32, i32
  }
  func.func @transform_2(%arg0: i32) -> (i32, i32) {
    %c0_i32 = arith.constant 0 : i32
    %c0_i32_0 = arith.constant 0 : i32
    %c0_i32_1 = arith.constant 0 : i32
    return %c0_i32, %c0_i32_0 : i32, i32
  }
  func.func @transform_3(%arg0: i32) -> (i32, i32) {
    %c0_i32 = arith.constant 0 : i32
    %c0_i32_0 = arith.constant 0 : i32
    %c0_i32_1 = arith.constant 0 : i32
    return %c0_i32, %c0_i32_0 : i32, i32
  }
  func.func @transform_4(%arg0: i32) -> (i32, i32) {
    %c0_i32 = arith.constant 0 : i32
    %c0_i32_0 = arith.constant 0 : i32
    %c0_i32_1 = arith.constant 0 : i32
    return %c0_i32, %c0_i32_0 : i32, i32
  }
  func.func @transform_5(%arg0: i32) -> (i32, i32) {
    %c0_i32 = arith.constant 0 : i32
    %c0_i32_0 = arith.constant 0 : i32
    %c0_i32_1 = arith.constant 0 : i32
    return %c0_i32, %c0_i32_0 : i32, i32
  }
  func.func @transform_6(%arg0: i32) -> (i32, i32) {
    %c0_i32 = arith.constant 0 : i32
    %c0_i32_0 = arith.constant 0 : i32
    %c0_i32_1 = arith.constant 0 : i32
    return %c0_i32, %c0_i32_0 : i32, i32
  }
  func.func @transform_7(%arg0: i32) -> (i32, i32) {
    %c0_i32 = arith.constant 0 : i32
    %c0_i32_0 = arith.constant 0 : i32
    %c0_i32_1 = arith.constant 0 : i32
    return %c0_i32, %c0_i32_0 : i32, i32
  }
  func.func @transform_8(%arg0: i32) -> (i32, i32) {
    %c0_i32 = arith.constant 0 : i32
    %c0_i32_0 = arith.constant 0 : i32
    %c0_i32_1 = arith.constant 0 : i32
    return %c0_i32, %c0_i32_0 : i32, i32
  }
  func.func @transform_9(%arg0: i32) -> (i32, i32) {
    %c0_i32 = arith.constant 0 : i32
    %c0_i32_0 = arith.constant 0 : i32
    %c0_i32_1 = arith.constant 0 : i32
    return %c0_i32, %c0_i32_0 : i32, i32
  }
  func.func @transform_10(%arg0: i32) -> (i32, i32) {
    %c0_i32 = arith.constant 0 : i32
    %c0_i32_0 = arith.constant 0 : i32
    %c0_i32_1 = arith.constant 0 : i32
    return %c0_i32, %c0_i32_0 : i32, i32
  }
  func.func @transform_11(%arg0: i32) -> (i32, i32) {
    %c0_i32 = arith.constant 0 : i32
    %c0_i32_0 = arith.constant 0 : i32
    %c0_i32_1 = arith.constant 0 : i32
    return %c0_i32, %c0_i32_0 : i32, i32
  }
  func.func @transform_12(%arg0: i32) -> (i32, i32) {
    %c0_i32 = arith.constant 0 : i32
    %c0_i32_0 = arith.constant 0 : i32
    %c0_i32_1 = arith.constant 0 : i32
    return %c0_i32, %c0_i32_0 : i32, i32
  }
  func.func @transform_13(%arg0: i32) -> (i32, i32) {
    %c0_i32 = arith.constant 0 : i32
    %c0_i32_0 = arith.constant 0 : i32
    %c0_i32_1 = arith.constant 0 : i32
    return %c0_i32, %c0_i32_0 : i32, i32
  }
  func.func @transform_14(%arg0: i32) -> (i32, i32) {
    %c0_i32 = arith.constant 0 : i32
    %c0_i32_0 = arith.constant 0 : i32
    %c0_i32_1 = arith.constant 0 : i32
    return %c0_i32, %c0_i32_0 : i32, i32
  }
  func.func @transform_15(%arg0: i32) -> (i32, i32) {
    %c0_i32 = arith.constant 0 : i32
    %c0_i32_0 = arith.constant 0 : i32
    %c0_i32_1 = arith.constant 0 : i32
    return %c0_i32, %c0_i32_0 : i32, i32
  }
  func.func @transform_16(%arg0: i32) -> (i32, i32) {
    %c0_i32 = arith.constant 0 : i32
    %c0_i32_0 = arith.constant 0 : i32
    %c0_i32_1 = arith.constant 0 : i32
    return %c0_i32, %c0_i32_0 : i32, i32
  }
  func.func @transform_17(%arg0: i32) -> (i32, i32) {
    %c0_i32 = arith.constant 0 : i32
    %c0_i32_0 = arith.constant 0 : i32
    %c0_i32_1 = arith.constant 0 : i32
    return %c0_i32, %c0_i32_0 : i32, i32
  }
  func.func @transform_18(%arg0: i32) -> (i32, i32) {
    %c0_i32 = arith.constant 0 : i32
    %c0_i32_0 = arith.constant 0 : i32
    %c0_i32_1 = arith.constant 0 : i32
    return %c0_i32, %c0_i32_0 : i32, i32
  }
  func.func @transform_19(%arg0: i32) -> (i32, i32) {
    %c0_i32 = arith.constant 0 : i32
    %c0_i32_0 = arith.constant 0 : i32
    %c0_i32_1 = arith.constant 0 : i32
    return %c0_i32, %c0_i32_0 : i32, i32
  }
  func.func @transform_20(%arg0: i32) -> (i32, i32) {
    %c0_i32 = arith.constant 0 : i32
    %c0_i32_0 = arith.constant 0 : i32
    return %arg0, %c0_i32 : i32, i32
  }
}

</mosaic_0001>

<llo_original>
// kernel: tpu_custom_call.1
$region0: #{tpu_custom_call.1}
  #allocation0 [shape = 'u32[]', space=smem, size = 0x4, offset = 0x4, fixed_abs, tag = 'smem constant byte address 0x4 - core index']
  #allocation1 [shape = 'u32[144,128]{1,0:T(1,128)}', space=vmem, size = 0x12000, scoped, tag = 'internal scratch']
  #allocation2 [shape = 'f32[1,1]{1,0:T(1,128)S(1)}', space=vmem, size = 0x200, scoped, tag = 'scoped memory for tpu_custom_call.1']
  %s0 = inlined_call_operand.hbm [shape: f32[1024,128], index: 0, kind: input, shape index: {}]
  %s1 = inlined_call_operand.hbm [shape: bf16[128,256], index: 1, kind: input, shape index: {}]
  %s2 = inlined_call_operand.vmem [shape: f32[1,256], index: 2, kind: input, shape index: {}]
  %s3 = inlined_call_operand.hbm [shape: bf16[256,256], index: 3, kind: input, shape index: {}]
  %s4 = inlined_call_operand.vmem [shape: f32[1,256], index: 4, kind: input, shape index: {}]
  %s5 = inlined_call_operand.hbm [shape: bf16[256,256], index: 5, kind: input, shape index: {}]
  %s6 = inlined_call_operand.vmem [shape: f32[1,256], index: 6, kind: input, shape index: {}]
  %s7 = inlined_call_operand.hbm [shape: bf16[256,256], index: 7, kind: input, shape index: {}]
  %s8 = inlined_call_operand.vmem [shape: f32[1,256], index: 8, kind: input, shape index: {}]
  %s9 = inlined_call_operand.hbm [shape: bf16[128,256], index: 9, kind: input, shape index: {}]
  %s10 = inlined_call_operand.hbm [shape: bf16[256,256], index: 10, kind: input, shape index: {}]
  %s11 = inlined_call_operand.vmem [shape: f32[1,256], index: 11, kind: input, shape index: {}]
  %s12 = inlined_call_operand.hbm [shape: bf16[256,256], index: 12, kind: input, shape index: {}]
  %s13 = inlined_call_operand.vmem [shape: f32[1,256], index: 13, kind: input, shape index: {}]
  %s14 = inlined_call_operand.hbm [shape: bf16[256,256], index: 14, kind: input, shape index: {}]
  %s15 = inlined_call_operand.vmem [shape: f32[1,256], index: 15, kind: input, shape index: {}]
  %s16 = inlined_call_operand.hbm [shape: bf16[256,256], index: 16, kind: input, shape index: {}]
  %s17 = inlined_call_operand.vmem [shape: f32[1,256], index: 17, kind: input, shape index: {}]
  %s18 = inlined_call_operand.vmem [shape: f32[1,256], index: 18, kind: input, shape index: {}]
  %s19 = inlined_call_operand.<no memory space> [shape: f32[1,1], index: 19, kind: input, shape index: {}]
  %s20 = inlined_call_operand.vmem [shape: f32[1024,1], index: 20, kind: output, shape index: {}]
  %s21 = sld [smem:[#allocation0]]
  $region153: #{tpu_custom_call.1} parent=0
    _
  %s23 = ssub.s32 1, %s21
  %s24 = scalar_select 0, %s23, %s21
  %v25 = vstv %s19
  %26 = vst [vmem:[#allocation2] sm:$0x1] %v25
  $region1: #{tpu_custom_call.1} parent=0
    #allocation3 [shape = 'u8[524288]{0}', space=vmem, size = 0x80000, scoped, tag = 'input window, operand 0']
    #allocation4 [shape = 's32[2]{0}', space=sflag, size = 0x8, scoped, tag = 'scoped memory for tpu_custom_call.1']
    #allocation5 [shape = 'u8[65536]{0}', space=vmem, size = 0x10000, scoped, tag = 'input window, operand 1, single buffered']
    #allocation6 [shape = 's32[1]{0}', space=sflag, size = 0x4, scoped, tag = 'scoped memory for tpu_custom_call.1']
    #allocation7 [shape = 'u8[131072]{0}', space=vmem, size = 0x20000, scoped, tag = 'input window, operand 3, single buffered']
    #allocation8 [shape = 'u8[131072]{0}', space=vmem, size = 0x20000, scoped, tag = 'input window, operand 5, single buffered']
    #allocation9 [shape = 's32[1]{0}', space=sflag, size = 0x4, scoped, tag = 'scoped memory for tpu_custom_call.1']
    #allocation10 [shape = 'u8[131072]{0}', space=vmem, size = 0x20000, scoped, tag = 'input window, operand 7, single buffered']
    #allocation11 [shape = 'u8[65536]{0}', space=vmem, size = 0x10000, scoped, tag = 'input window, operand 9, single buffered']
    #allocation12 [shape = 's32[1]{0}', space=sflag, size = 0x4, scoped, tag = 'scoped memory for tpu_custom_call.1']
    #allocation13 [shape = 'u8[131072]{0}', space=vmem, size = 0x20000, scoped, tag = 'input window, operand 10, single buffered']
    #allocation14 [shape = 'u8[131072]{0}', space=vmem, size = 0x20000, scoped, tag = 'input window, operand 12, single buffered']
    #allocation15 [shape = 's32[1]{0}', space=sflag, size = 0x4, scoped, tag = 'scoped memory for tpu_custom_call.1']
    #allocation16 [shape = 'u8[131072]{0}', space=vmem, size = 0x20000, scoped, tag = 'input window, operand 14, single buffered']
    #allocation17 [shape = 'u8[131072]{0}', space=vmem, size = 0x20000, scoped, tag = 'input window, operand 16, single buffered']
    #allocation18 [shape = 's32[1]{0}', space=sflag, size = 0x4, scoped, tag = 'scoped memory for tpu_custom_call.1']
    %27 = vsyncpa [#allocation4], 0
    %s28 = scalar_lea.sflag [#allocation4], 1
    %29 = vsyncpa %s28, 0
    %30 = vsyncpa [#allocation6], 0
    %31 = vsyncpa [#allocation9], 0
    %32 = vsyncpa [#allocation12], 0
    %33 = vsyncpa [#allocation15], 0
    %34 = vsyncpa [#allocation18], 0
    loop: start=0, step=1, limit=4
    $region2: #{tpu_custom_call.1} parent=1 // loop_pre_header
      _
    $region3: #{tpu_custom_call.1} parent=1 // loop_header
      %s36 = sphi 0, %s40
      %p37 = scmp.ge.s32.totalorder %s36, 4
      %s46 = sphi 0, %s48
      %s49 = sphi 0, %s46
      %s50 = sphi 0, %s49
      %s66 = sphi 0, %s50
      %s70 = sphi 0, %s70
      %s72 = sphi 0, %s70
      %s73 = sphi 0, %s72
      %s87 = sphi 0, %s73
      %s91 = sphi 0, %s91
      %s93 = sphi 0, %s91
      %s94 = sphi 0, %s93
      %s108 = sphi 0, %s94
      %s112 = sphi 0, %s112
      %s114 = sphi 0, %s112
      %s115 = sphi 0, %s114
      %s129 = sphi 0, %s115
      %s133 = sphi 0, %s133
      %s135 = sphi 0, %s133
      %s136 = sphi 0, %s135
      %s150 = sphi 0, %s136
      %s154 = sphi 0, %s154
      %s156 = sphi 0, %s154
      %s157 = sphi 0, %s156
      %s171 = sphi 0, %s157
      %s175 = sphi 0, %s175
      %s177 = sphi 0, %s175
      %s178 = sphi 0, %s177
      %s192 = sphi 0, %s178
      %s196 = sphi 0, %s196
      %s198 = sphi 0, %s196
      %s199 = sphi 0, %s198
      %s213 = sphi 0, %s199
      %s217 = sphi 0, %s217
      %s219 = sphi 0, %s217
      %s220 = sphi 0, %s219
      %s234 = sphi 0, %s220
      %s238 = sphi 0, %s238
      %s240 = sphi 0, %s238
      %s241 = sphi 0, %s240
      %s255 = sphi 0, %s241
      %s259 = sphi 0, %s259
      %s261 = sphi 0, %s259
      %s262 = sphi 0, %s261
      %s276 = sphi 0, %s262
      %s280 = sphi 0, %s280
      %s282 = sphi 0, %s280
      %s283 = sphi 0, %s282
      %s297 = sphi 0, %s283
      %s301 = sphi 0, %s301
      %s303 = sphi 0, %s301
      %s304 = sphi 0, %s303
      %s318 = sphi 0, %s304
      %s322 = sphi 0, %s322
      %s324 = sphi 0, %s322
      %s325 = sphi 0, %s324
      %s339 = sphi 0, %s325
      %s343 = sphi 0, %s343
      %s345 = sphi 0, %s343
      %s346 = sphi 0, %s345
      %s360 = sphi 0, %s346
      %s364 = sphi 0, %s364
      %s366 = sphi 0, %s364
      %s367 = sphi 0, %s366
      %s381 = sphi 0, %s367
      %s385 = sphi 0, %s385
      %s387 = sphi 0, %s385
      %s388 = sphi 0, %s387
      %s402 = sphi 0, %s388
      %s406 = sphi 0, %s406
      %s408 = sphi 0, %s406
      %s409 = sphi 0, %s408
      %s423 = sphi 0, %s409
      %s427 = sphi 0, %s427
      %s429 = sphi 0, %s427
      %s430 = sphi 0, %s429
      %s444 = sphi 0, %s430
      %s448 = sphi 0, %s448
      %s450 = sphi 0, %s448
      %s451 = sphi 0, %s450
      %s465 = sphi 0, %s451
      %s471 = sphi 0, %s473
      %s474 = sphi 0, %s471
      %s475 = sphi 0, %s474
      %s491 = sphi 0, %s475
    $region4: #{tpu_custom_call.1} parent=1 // loop_header_branch
      %39 = sbr.rel (%p37) target = $region8
    $region5: #{tpu_custom_call.1} parent=1 // loop_body
      %s41 = ssub.s32 %s36, 1
      %s42 = ssub.s32 %s36, 2
      %s43 = sadd.s32 %s36, 1
      %s44 = ssub.s32 %s36, %s43
      %p45 = scmp.eq.s32.totalorder %s44, 0
      %s47 = sadd.s32 %s46, 1
      %s48 = scalar_select %p45, %s46, %s47
      %p51 = pneg %p45
      %p52 = scmp.eq.s32.totalorder %s36, 1
      %p53 = por %p51, %p52
      %p54 = scmp.ne.s32.totalorder %s46, %s49
      %p55 = scmp.eq.s32.totalorder %s36, 0
      %p56 = por %p54, %p55
      %p57 = scmp.ne.s32.totalorder %s46, %s49
      %p58 = scmp.eq.s32.totalorder %s41, 1
      %p59 = por %p57, %p58
      %p60 = scmp.ne.s32.totalorder %s49, %s50
      %p61 = scmp.eq.s32.totalorder %s41, 0
      %p62 = por %p60, %p61
      %p63 = scmp.ne.s32.totalorder %s49, %s50
      %p64 = scmp.eq.s32.totalorder %s42, 1
      %p65 = por %p63, %p64
      %p67 = scmp.ne.s32.totalorder %s50, %s66
      %p68 = scmp.eq.s32.totalorder %s42, 0
      %p69 = por %p67, %p68
      %s71 = sadd.s32 %s70, 1
      %p74 = scmp.eq.s32.totalorder %s36, 1
      %p75 = scmp.ne.s32.totalorder %s70, %s72
      %p76 = scmp.eq.s32.totalorder %s36, 0
      %p77 = por %p75, %p76
      %p78 = scmp.ne.s32.totalorder %s70, %s72
      %p79 = scmp.eq.s32.totalorder %s41, 1
      %p80 = por %p78, %p79
      %p81 = scmp.ne.s32.totalorder %s72, %s73
      %p82 = scmp.eq.s32.totalorder %s41, 0
      %p83 = por %p81, %p82
      %p84 = scmp.ne.s32.totalorder %s72, %s73
      %p85 = scmp.eq.s32.totalorder %s42, 1
      %p86 = por %p84, %p85
      %p88 = scmp.ne.s32.totalorder %s73, %s87
      %p89 = scmp.eq.s32.totalorder %s42, 0
      %p90 = por %p88, %p89
      %s92 = sadd.s32 %s91, 1
      %p95 = scmp.eq.s32.totalorder %s36, 1
      %p96 = scmp.ne.s32.totalorder %s91, %s93
      %p97 = scmp.eq.s32.totalorder %s36, 0
      %p98 = por %p96, %p97
      %p99 = scmp.ne.s32.totalorder %s91, %s93
      %p100 = scmp.eq.s32.totalorder %s41, 1
      %p101 = por %p99, %p100
      %p102 = scmp.ne.s32.totalorder %s93, %s94
      %p103 = scmp.eq.s32.totalorder %s41, 0
      %p104 = por %p102, %p103
      %p105 = scmp.ne.s32.totalorder %s93, %s94
      %p106 = scmp.eq.s32.totalorder %s42, 1
      %p107 = por %p105, %p106
      %p109 = scmp.ne.s32.totalorder %s94, %s108
      %p110 = scmp.eq.s32.totalorder %s42, 0
      %p111 = por %p109, %p110
      %s113 = sadd.s32 %s112, 1
      %p116 = scmp.eq.s32.totalorder %s36, 1
      %p117 = scmp.ne.s32.totalorder %s112, %s114
      %p118 = scmp.eq.s32.totalorder %s36, 0
      %p119 = por %p117, %p118
      %p120 = scmp.ne.s32.totalorder %s112, %s114
      %p121 = scmp.eq.s32.totalorder %s41, 1
      %p122 = por %p120, %p121
      %p123 = scmp.ne.s32.totalorder %s114, %s115
      %p124 = scmp.eq.s32.totalorder %s41, 0
      %p125 = por %p123, %p124
      %p126 = scmp.ne.s32.totalorder %s114, %s115
      %p127 = scmp.eq.s32.totalorder %s42, 1
      %p128 = por %p126, %p127
      %p130 = scmp.ne.s32.totalorder %s115, %s129
      %p131 = scmp.eq.s32.totalorder %s42, 0
      %p132 = por %p130, %p131
      %s134 = sadd.s32 %s133, 1
      %p137 = scmp.eq.s32.totalorder %s36, 1
      %p138 = scmp.ne.s32.totalorder %s133, %s135
      %p139 = scmp.eq.s32.totalorder %s36, 0
      %p140 = por %p138, %p139
      %p141 = scmp.ne.s32.totalorder %s133, %s135
      %p142 = scmp.eq.s32.totalorder %s41, 1
      %p143 = por %p141, %p142
      %p144 = scmp.ne.s32.totalorder %s135, %s136
      %p145 = scmp.eq.s32.totalorder %s41, 0
      %p146 = por %p144, %p145
      %p147 = scmp.ne.s32.totalorder %s135, %s136
      %p148 = scmp.eq.s32.totalorder %s42, 1
      %p149 = por %p147, %p148
      %p151 = scmp.ne.s32.totalorder %s136, %s150
      %p152 = scmp.eq.s32.totalorder %s42, 0
      %p153 = por %p151, %p152
      %s155 = sadd.s32 %s154, 1
      %p158 = scmp.eq.s32.totalorder %s36, 1
      %p159 = scmp.ne.s32.totalorder %s154, %s156
      %p160 = scmp.eq.s32.totalorder %s36, 0
      %p161 = por %p159, %p160
      %p162 = scmp.ne.s32.totalorder %s154, %s156
      %p163 = scmp.eq.s32.totalorder %s41, 1
      %p164 = por %p162, %p163
      %p165 = scmp.ne.s32.totalorder %s156, %s157
      %p166 = scmp.eq.s32.totalorder %s41, 0
      %p167 = por %p165, %p166
      %p168 = scmp.ne.s32.totalorder %s156, %s157
      %p169 = scmp.eq.s32.totalorder %s42, 1
      %p170 = por %p168, %p169
      %p172 = scmp.ne.s32.totalorder %s157, %s171
      %p173 = scmp.eq.s32.totalorder %s42, 0
      %p174 = por %p172, %p173
      %s176 = sadd.s32 %s175, 1
      %p179 = scmp.eq.s32.totalorder %s36, 1
      %p180 = scmp.ne.s32.totalorder %s175, %s177
      %p181 = scmp.eq.s32.totalorder %s36, 0
      %p182 = por %p180, %p181
      %p183 = scmp.ne.s32.totalorder %s175, %s177
      %p184 = scmp.eq.s32.totalorder %s41, 1
      %p185 = por %p183, %p184
      %p186 = scmp.ne.s32.totalorder %s177, %s178
      %p187 = scmp.eq.s32.totalorder %s41, 0
      %p188 = por %p186, %p187
      %p189 = scmp.ne.s32.totalorder %s177, %s178
      %p190 = scmp.eq.s32.totalorder %s42, 1
      %p191 = por %p189, %p190
      %p193 = scmp.ne.s32.totalorder %s178, %s192
      %p194 = scmp.eq.s32.totalorder %s42, 0
      %p195 = por %p193, %p194
      %s197 = sadd.s32 %s196, 1
      %p200 = scmp.eq.s32.totalorder %s36, 1
      %p201 = scmp.ne.s32.totalorder %s196, %s198
      %p202 = scmp.eq.s32.totalorder %s36, 0
      %p203 = por %p201, %p202
      %p204 = scmp.ne.s32.totalorder %s196, %s198
      %p205 = scmp.eq.s32.totalorder %s41, 1
      %p206 = por %p204, %p205
      %p207 = scmp.ne.s32.totalorder %s198, %s199
      %p208 = scmp.eq.s32.totalorder %s41, 0
      %p209 = por %p207, %p208
      %p210 = scmp.ne.s32.totalorder %s198, %s199
      %p211 = scmp.eq.s32.totalorder %s42, 1
      %p212 = por %p210, %p211
      %p214 = scmp.ne.s32.totalorder %s199, %s213
      %p215 = scmp.eq.s32.totalorder %s42, 0
      %p216 = por %p214, %p215
      %s218 = sadd.s32 %s217, 1
      %p221 = scmp.eq.s32.totalorder %s36, 1
      %p222 = scmp.ne.s32.totalorder %s217, %s219
      %p223 = scmp.eq.s32.totalorder %s36, 0
      %p224 = por %p222, %p223
      %p225 = scmp.ne.s32.totalorder %s217, %s219
      %p226 = scmp.eq.s32.totalorder %s41, 1
      %p227 = por %p225, %p226
      %p228 = scmp.ne.s32.totalorder %s219, %s220
      %p229 = scmp.eq.s32.totalorder %s41, 0
      %p230 = por %p228, %p229
      %p231 = scmp.ne.s32.totalorder %s219, %s220
      %p232 = scmp.eq.s32.totalorder %s42, 1
      %p233 = por %p231, %p232
      %p235 = scmp.ne.s32.totalorder %s220, %s234
      %p236 = scmp.eq.s32.totalorder %s42, 0
      %p237 = por %p235, %p236
      %s239 = sadd.s32 %s238, 1
      %p242 = scmp.eq.s32.totalorder %s36, 1
      %p243 = scmp.ne.s32.totalorder %s238, %s240
      %p244 = scmp.eq.s32.totalorder %s36, 0
      %p245 = por %p243, %p244
      %p246 = scmp.ne.s32.totalorder %s238, %s240
      %p247 = scmp.eq.s32.totalorder %s41, 1
      %p248 = por %p246, %p247
      %p249 = scmp.ne.s32.totalorder %s240, %s241
      %p250 = scmp.eq.s32.totalorder %s41, 0
      %p251 = por %p249, %p250
      %p252 = scmp.ne.s32.totalorder %s240, %s241
      %p253 = scmp.eq.s32.totalorder %s42, 1
      %p254 = por %p252, %p253
      %p256 = scmp.ne.s32.totalorder %s241, %s255
      %p257 = scmp.eq.s32.totalorder %s42, 0
      %p258 = por %p256, %p257
      %s260 = sadd.s32 %s259, 1
      %p263 = scmp.eq.s32.totalorder %s36, 1
      %p264 = scmp.ne.s32.totalorder %s259, %s261
      %p265 = scmp.eq.s32.totalorder %s36, 0
      %p266 = por %p264, %p265
      %p267 = scmp.ne.s32.totalorder %s259, %s261
      %p268 = scmp.eq.s32.totalorder %s41, 1
      %p269 = por %p267, %p268
      %p270 = scmp.ne.s32.totalorder %s261, %s262
      %p271 = scmp.eq.s32.totalorder %s41, 0
      %p272 = por %p270, %p271
      %p273 = scmp.ne.s32.totalorder %s261, %s262
      %p274 = scmp.eq.s32.totalorder %s42, 1
      %p275 = por %p273, %p274
      %p277 = scmp.ne.s32.totalorder %s262, %s276
      %p278 = scmp.eq.s32.totalorder %s42, 0
      %p279 = por %p277, %p278
      %s281 = sadd.s32 %s280, 1
      %p284 = scmp.eq.s32.totalorder %s36, 1
      %p285 = scmp.ne.s32.totalorder %s280, %s282
      %p286 = scmp.eq.s32.totalorder %s36, 0
      %p287 = por %p285, %p286
      %p288 = scmp.ne.s32.totalorder %s280, %s282
      %p289 = scmp.eq.s32.totalorder %s41, 1
      %p290 = por %p288, %p289
      %p291 = scmp.ne.s32.totalorder %s282, %s283
      %p292 = scmp.eq.s32.totalorder %s41, 0
      %p293 = por %p291, %p292
      %p294 = scmp.ne.s32.totalorder %s282, %s283
      %p295 = scmp.eq.s32.totalorder %s42, 1
      %p296 = por %p294, %p295
      %p298 = scmp.ne.s32.totalorder %s283, %s297
      %p299 = scmp.eq.s32.totalorder %s42, 0
      %p300 = por %p298, %p299
      %s302 = sadd.s32 %s301, 1
      %p305 = scmp.eq.s32.totalorder %s36, 1
      %p306 = scmp.ne.s32.totalorder %s301, %s303
      %p307 = scmp.eq.s32.totalorder %s36, 0
      %p308 = por %p306, %p307
      %p309 = scmp.ne.s32.totalorder %s301, %s303
      %p310 = scmp.eq.s32.totalorder %s41, 1
      %p311 = por %p309, %p310
      %p312 = scmp.ne.s32.totalorder %s303, %s304
      %p313 = scmp.eq.s32.totalorder %s41, 0
      %p314 = por %p312, %p313
      %p315 = scmp.ne.s32.totalorder %s303, %s304
      %p316 = scmp.eq.s32.totalorder %s42, 1
      %p317 = por %p315, %p316
      %p319 = scmp.ne.s32.totalorder %s304, %s318
      %p320 = scmp.eq.s32.totalorder %s42, 0
      %p321 = por %p319, %p320
      %s323 = sadd.s32 %s322, 1
      %p326 = scmp.eq.s32.totalorder %s36, 1
      %p327 = scmp.ne.s32.totalorder %s322, %s324
      %p328 = scmp.eq.s32.totalorder %s36, 0
      %p329 = por %p327, %p328
      %p330 = scmp.ne.s32.totalorder %s322, %s324
      %p331 = scmp.eq.s32.totalorder %s41, 1
      %p332 = por %p330, %p331
      %p333 = scmp.ne.s32.totalorder %s324, %s325
      %p334 = scmp.eq.s32.totalorder %s41, 0
      %p335 = por %p333, %p334
      %p336 = scmp.ne.s32.totalorder %s324, %s325
      %p337 = scmp.eq.s32.totalorder %s42, 1
      %p338 = por %p336, %p337
      %p340 = scmp.ne.s32.totalorder %s325, %s339
      %p341 = scmp.eq.s32.totalorder %s42, 0
      %p342 = por %p340, %p341
      %s344 = sadd.s32 %s343, 1
      %p347 = scmp.eq.s32.totalorder %s36, 1
      %p348 = scmp.ne.s32.totalorder %s343, %s345
      %p349 = scmp.eq.s32.totalorder %s36, 0
      %p350 = por %p348, %p349
      %p351 = scmp.ne.s32.totalorder %s343, %s345
      %p352 = scmp.eq.s32.totalorder %s41, 1
      %p353 = por %p351, %p352
      %p354 = scmp.ne.s32.totalorder %s345, %s346
      %p355 = scmp.eq.s32.totalorder %s41, 0
      %p356 = por %p354, %p355
      %p357 = scmp.ne.s32.totalorder %s345, %s346
      %p358 = scmp.eq.s32.totalorder %s42, 1
      %p359 = por %p357, %p358
      %p361 = scmp.ne.s32.totalorder %s346, %s360
      %p362 = scmp.eq.s32.totalorder %s42, 0
      %p363 = por %p361, %p362
      %s365 = sadd.s32 %s364, 1
      %p368 = scmp.eq.s32.totalorder %s36, 1
      %p369 = scmp.ne.s32.totalorder %s364, %s366
      %p370 = scmp.eq.s32.totalorder %s36, 0
      %p371 = por %p369, %p370
      %p372 = scmp.ne.s32.totalorder %s364, %s366
      %p373 = scmp.eq.s32.totalorder %s41, 1
      %p374 = por %p372, %p373
      %p375 = scmp.ne.s32.totalorder %s366, %s367
      %p376 = scmp.eq.s32.totalorder %s41, 0
      %p377 = por %p375, %p376
      %p378 = scmp.ne.s32.totalorder %s366, %s367
      %p379 = scmp.eq.s32.totalorder %s42, 1
      %p380 = por %p378, %p379
      %p382 = scmp.ne.s32.totalorder %s367, %s381
      %p383 = scmp.eq.s32.totalorder %s42, 0
      %p384 = por %p382, %p383
      %s386 = sadd.s32 %s385, 1
      %p389 = scmp.eq.s32.totalorder %s36, 1
      %p390 = scmp.ne.s32.totalorder %s385, %s387
      %p391 = scmp.eq.s32.totalorder %s36, 0
      %p392 = por %p390, %p391
      %p393 = scmp.ne.s32.totalorder %s385, %s387
      %p394 = scmp.eq.s32.totalorder %s41, 1
      %p395 = por %p393, %p394
      %p396 = scmp.ne.s32.totalorder %s387, %s388
      %p397 = scmp.eq.s32.totalorder %s41, 0
      %p398 = por %p396, %p397
      %p399 = scmp.ne.s32.totalorder %s387, %s388
      %p400 = scmp.eq.s32.totalorder %s42, 1
      %p401 = por %p399, %p400
      %p403 = scmp.ne.s32.totalorder %s388, %s402
      %p404 = scmp.eq.s32.totalorder %s42, 0
      %p405 = por %p403, %p404
      %s407 = sadd.s32 %s406, 1
      %p410 = scmp.eq.s32.totalorder %s36, 1
      %p411 = scmp.ne.s32.totalorder %s406, %s408
      %p412 = scmp.eq.s32.totalorder %s36, 0
      %p413 = por %p411, %p412
      %p414 = scmp.ne.s32.totalorder %s406, %s408
      %p415 = scmp.eq.s32.totalorder %s41, 1
      %p416 = por %p414, %p415
      %p417 = scmp.ne.s32.totalorder %s408, %s409
      %p418 = scmp.eq.s32.totalorder %s41, 0
      %p419 = por %p417, %p418
      %p420 = scmp.ne.s32.totalorder %s408, %s409
      %p421 = scmp.eq.s32.totalorder %s42, 1
      %p422 = por %p420, %p421
      %p424 = scmp.ne.s32.totalorder %s409, %s423
      %p425 = scmp.eq.s32.totalorder %s42, 0
      %p426 = por %p424, %p425
      %s428 = sadd.s32 %s427, 1
      %p431 = scmp.eq.s32.totalorder %s36, 1
      %p432 = scmp.ne.s32.totalorder %s427, %s429
      %p433 = scmp.eq.s32.totalorder %s36, 0
      %p434 = por %p432, %p433
      %p435 = scmp.ne.s32.totalorder %s427, %s429
      %p436 = scmp.eq.s32.totalorder %s41, 1
      %p437 = por %p435, %p436
      %p438 = scmp.ne.s32.totalorder %s429, %s430
      %p439 = scmp.eq.s32.totalorder %s41, 0
      %p440 = por %p438, %p439
      %p441 = scmp.ne.s32.totalorder %s429, %s430
      %p442 = scmp.eq.s32.totalorder %s42, 1
      %p443 = por %p441, %p442
      %p445 = scmp.ne.s32.totalorder %s430, %s444
      %p446 = scmp.eq.s32.totalorder %s42, 0
      %p447 = por %p445, %p446
      %s449 = sadd.s32 %s448, 1
      %p452 = scmp.eq.s32.totalorder %s36, 1
      %p453 = scmp.ne.s32.totalorder %s448, %s450
      %p454 = scmp.eq.s32.totalorder %s36, 0
      %p455 = por %p453, %p454
      %p456 = scmp.ne.s32.totalorder %s448, %s450
      %p457 = scmp.eq.s32.totalorder %s41, 1
      %p458 = por %p456, %p457
      %p459 = scmp.ne.s32.totalorder %s450, %s451
      %p460 = scmp.eq.s32.totalorder %s41, 0
      %p461 = por %p459, %p460
      %p462 = scmp.ne.s32.totalorder %s450, %s451
      %p463 = scmp.eq.s32.totalorder %s42, 1
      %p464 = por %p462, %p463
      %p466 = scmp.ne.s32.totalorder %s451, %s465
      %p467 = scmp.eq.s32.totalorder %s42, 0
      %p468 = por %p466, %p467
      %s469 = ssub.s32 %s36, %s43
      %p470 = scmp.eq.s32.totalorder %s469, 0
      %s472 = sadd.s32 %s471, 1
      %s473 = scalar_select %p470, %s471, %s472
      %p476 = pneg %p470
      %p477 = scmp.eq.s32.totalorder %s36, 1
      %p478 = por %p476, %p477
      %p479 = scmp.ne.s32.totalorder %s471, %s474
      %p480 = scmp.eq.s32.totalorder %s36, 0
      %p481 = por %p479, %p480
      %p482 = scmp.ne.s32.totalorder %s471, %s474
      %p483 = scmp.eq.s32.totalorder %s41, 1
      %p484 = por %p482, %p483
      %p485 = scmp.ne.s32.totalorder %s474, %s475
      %p486 = scmp.eq.s32.totalorder %s41, 0
      %p487 = por %p485, %p486
      %p488 = scmp.ne.s32.totalorder %s474, %s475
      %p489 = scmp.eq.s32.totalorder %s42, 1
      %p490 = por %p488, %p489
      %p492 = scmp.ne.s32.totalorder %s475, %s491
      %p493 = scmp.eq.s32.totalorder %s42, 0
      %p494 = por %p492, %p493
      %p495 = scmp.le.s32.totalorder 1, %s36
      %p496 = scmp.lt.s32.totalorder %s36, 3
      %p497 = pnand %p495, %p496
      %p498 = pneg %p497
      // Predicated region
      $region9: #{tpu_custom_call.1} parent=5 // pred_check
        _
      $region10: #{tpu_custom_call.1} parent=5 // pred_check_branch
        %500 = sbr.rel (%p497) target = $region12
      $region11: #{tpu_custom_call.1} parent=5 // pred_region
        %s501 = ssub.s32 %s36, 1
        // Predicated region
        $region13: #{tpu_custom_call.1} parent=11 // pred_check
          %p502 = pneg %p83
        $region14: #{tpu_custom_call.1} parent=11 // pred_check_branch
          %504 = sbr.rel (%p502) target = $region16
        $region15: #{tpu_custom_call.1} parent=11 // pred_region
          %s506 = ssub.s32 2048, 2048
          %507 = vsyncadd [#allocation6], %s506
          %s508 = sshll.u32 [#allocation5], 4
          %s509 = int_to_ptr.vmem [resolvable:$true] %s508
          %514 = dma.hbm_to_vmem [thread:$0]  %s1, 2048, %s509, [#allocation6], 128, 128, 8
        $region16: #{tpu_custom_call.1} parent=11 // pred_fallthru
          _
        // Predicated region
        $region17: #{tpu_custom_call.1} parent=11 // pred_check
          %p515 = pneg %p104
        $region18: #{tpu_custom_call.1} parent=11 // pred_check_branch
          %517 = sbr.rel (%p515) target = $region20
        $region19: #{tpu_custom_call.1} parent=11 // pred_region
          _
        $region20: #{tpu_custom_call.1} parent=11 // pred_fallthru
          _
        // Predicated region
        $region21: #{tpu_custom_call.1} parent=11 // pred_check
          %p518 = pneg %p125
        $region22: #{tpu_custom_call.1} parent=11 // pred_check_branch
          %520 = sbr.rel (%p518) target = $region24
        $region23: #{tpu_custom_call.1} parent=11 // pred_region
          %s522 = ssub.s32 4096, 4096
          %523 = vsyncadd [#allocation6], %s522
          %s524 = sshll.u32 [#allocation7], 4
          %s525 = int_to_ptr.vmem [resolvable:$true] %s524
          %530 = dma.hbm_to_vmem [thread:$0]  %s3, 4096, %s525, [#allocation6], 128, 128, 8
        $region24: #{tpu_custom_call.1} parent=11 // pred_fallthru
          _
        // Predicated region
        $region25: #{tpu_custom_call.1} parent=11 // pred_check
          %p531 = pneg %p146
        $region26: #{tpu_custom_call.1} parent=11 // pred_check_branch
          %533 = sbr.rel (%p531) target = $region28
        $region27: #{tpu_custom_call.1} parent=11 // pred_region
          _
        $region28: #{tpu_custom_call.1} parent=11 // pred_fallthru
          _
        // Predicated region
        $region29: #{tpu_custom_call.1} parent=11 // pred_check
          %p534 = pneg %p167
        $region30: #{tpu_custom_call.1} parent=11 // pred_check_branch
          %536 = sbr.rel (%p534) target = $region32
        $region31: #{tpu_custom_call.1} parent=11 // pred_region
          %s538 = ssub.s32 4096, 4096
          %539 = vsyncadd [#allocation9], %s538
          %s540 = sshll.u32 [#allocation8], 4
          %s541 = int_to_ptr.vmem [resolvable:$true] %s540
          %546 = dma.hbm_to_vmem [thread:$0]  %s5, 4096, %s541, [#allocation9], 128, 128, 8
        $region32: #{tpu_custom_call.1} parent=11 // pred_fallthru
          _
        // Predicated region
        $region33: #{tpu_custom_call.1} parent=11 // pred_check
          %p547 = pneg %p188
        $region34: #{tpu_custom_call.1} parent=11 // pred_check_branch
          %549 = sbr.rel (%p547) target = $region36
        $region35: #{tpu_custom_call.1} parent=11 // pred_region
          _
        $region36: #{tpu_custom_call.1} parent=11 // pred_fallthru
          _
        // Predicated region
        $region37: #{tpu_custom_call.1} parent=11 // pred_check
          %p550 = pneg %p209
        $region38: #{tpu_custom_call.1} parent=11 // pred_check_branch
          %552 = sbr.rel (%p550) target = $region40
        $region39: #{tpu_custom_call.1} parent=11 // pred_region
          %s554 = ssub.s32 4096, 4096
          %555 = vsyncadd [#allocation9], %s554
          %s556 = sshll.u32 [#allocation10], 4
          %s557 = int_to_ptr.vmem [resolvable:$true] %s556
          %562 = dma.hbm_to_vmem [thread:$0]  %s7, 4096, %s557, [#allocation9], 128, 128, 8
        $region40: #{tpu_custom_call.1} parent=11 // pred_fallthru
          _
        // Predicated region
        $region41: #{tpu_custom_call.1} parent=11 // pred_check
          %p563 = pneg %p230
        $region42: #{tpu_custom_call.1} parent=11 // pred_check_branch
          %565 = sbr.rel (%p563) target = $region44
        $region43: #{tpu_custom_call.1} parent=11 // pred_region
          _
        $region44: #{tpu_custom_call.1} parent=11 // pred_fallthru
          _
        // Predicated region
        $region45: #{tpu_custom_call.1} parent=11 // pred_check
          %p566 = pneg %p251
        $region46: #{tpu_custom_call.1} parent=11 // pred_check_branch
          %568 = sbr.rel (%p566) target = $region48
        $region47: #{tpu_custom_call.1} parent=11 // pred_region
          %s570 = ssub.s32 2048, 2048
          %571 = vsyncadd [#allocation12], %s570
          %s572 = sshll.u32 [#allocation11], 4
          %s573 = int_to_ptr.vmem [resolvable:$true] %s572
          %578 = dma.hbm_to_vmem [thread:$0]  %s9, 2048, %s573, [#allocation12], 128, 128, 8
        $region48: #{tpu_custom_call.1} parent=11 // pred_fallthru
          _
        // Predicated region
        $region49: #{tpu_custom_call.1} parent=11 // pred_check
          %p579 = pneg %p272
        $region50: #{tpu_custom_call.1} parent=11 // pred_check_branch
          %581 = sbr.rel (%p579) target = $region52
        $region51: #{tpu_custom_call.1} parent=11 // pred_region
          %s583 = ssub.s32 4096, 4096
          %584 = vsyncadd [#allocation12], %s583
          %s585 = sshll.u32 [#allocation13], 4
          %s586 = int_to_ptr.vmem [resolvable:$true] %s585
          %591 = dma.hbm_to_vmem [thread:$0]  %s10, 4096, %s586, [#allocation12], 128, 128, 8
        $region52: #{tpu_custom_call.1} parent=11 // pred_fallthru
          _
        // Predicated region
        $region53: #{tpu_custom_call.1} parent=11 // pred_check
          %p592 = pneg %p293
        $region54: #{tpu_custom_call.1} parent=11 // pred_check_branch
          %594 = sbr.rel (%p592) target = $region56
        $region55: #{tpu_custom_call.1} parent=11 // pred_region
          _
        $region56: #{tpu_custom_call.1} parent=11 // pred_fallthru
          _
        // Predicated region
        $region57: #{tpu_custom_call.1} parent=11 // pred_check
          %p595 = pneg %p314
        $region58: #{tpu_custom_call.1} parent=11 // pred_check_branch
          %597 = sbr.rel (%p595) target = $region60
        $region59: #{tpu_custom_call.1} parent=11 // pred_region
          %s599 = ssub.s32 4096, 4096
          %600 = vsyncadd [#allocation15], %s599
          %s601 = sshll.u32 [#allocation14], 4
          %s602 = int_to_ptr.vmem [resolvable:$true] %s601
          %607 = dma.hbm_to_vmem [thread:$0]  %s12, 4096, %s602, [#allocation15], 128, 128, 8
        $region60: #{tpu_custom_call.1} parent=11 // pred_fallthru
          _
        // Predicated region
        $region61: #{tpu_custom_call.1} parent=11 // pred_check
          %p608 = pneg %p335
        $region62: #{tpu_custom_call.1} parent=11 // pred_check_branch
          %610 = sbr.rel (%p608) target = $region64
        $region63: #{tpu_custom_call.1} parent=11 // pred_region
          _
        $region64: #{tpu_custom_call.1} parent=11 // pred_fallthru
          _
        // Predicated region
        $region65: #{tpu_custom_call.1} parent=11 // pred_check
          %p611 = pneg %p356
        $region66: #{tpu_custom_call.1} parent=11 // pred_check_branch
          %613 = sbr.rel (%p611) target = $region68
        $region67: #{tpu_custom_call.1} parent=11 // pred_region
          %s615 = ssub.s32 4096, 4096
          %616 = vsyncadd [#allocation15], %s615
          %s617 = sshll.u32 [#allocation16], 4
          %s618 = int_to_ptr.vmem [resolvable:$true] %s617
          %623 = dma.hbm_to_vmem [thread:$0]  %s14, 4096, %s618, [#allocation15], 128, 128, 8
        $region68: #{tpu_custom_call.1} parent=11 // pred_fallthru
          _
        // Predicated region
        $region69: #{tpu_custom_call.1} parent=11 // pred_check
          %p624 = pneg %p377
        $region70: #{tpu_custom_call.1} parent=11 // pred_check_branch
          %626 = sbr.rel (%p624) target = $region72
        $region71: #{tpu_custom_call.1} parent=11 // pred_region
          _
        $region72: #{tpu_custom_call.1} parent=11 // pred_fallthru
          _
        // Predicated region
        $region73: #{tpu_custom_call.1} parent=11 // pred_check
          %p627 = pneg %p398
        $region74: #{tpu_custom_call.1} parent=11 // pred_check_branch
          %629 = sbr.rel (%p627) target = $region76
        $region75: #{tpu_custom_call.1} parent=11 // pred_region
          %s631 = ssub.s32 4096, 4096
          %632 = vsyncadd [#allocation18], %s631
          %s633 = sshll.u32 [#allocation17], 4
          %s634 = int_to_ptr.vmem [resolvable:$true] %s633
          %639 = dma.hbm_to_vmem [thread:$0]  %s16, 4096, %s634, [#allocation18], 128, 128, 8
        $region76: #{tpu_custom_call.1} parent=11 // pred_fallthru
          _
        // Predicated region
        $region77: #{tpu_custom_call.1} parent=11 // pred_check
          %p640 = pneg %p419
        $region78: #{tpu_custom_call.1} parent=11 // pred_check_branch
          %642 = sbr.rel (%p640) target = $region80
        $region79: #{tpu_custom_call.1} parent=11 // pred_region
          _
        $region80: #{tpu_custom_call.1} parent=11 // pred_fallthru
          _
        // Predicated region
        $region81: #{tpu_custom_call.1} parent=11 // pred_check
          %p643 = pneg %p440
        $region82: #{tpu_custom_call.1} parent=11 // pred_check_branch
          %645 = sbr.rel (%p643) target = $region84
        $region83: #{tpu_custom_call.1} parent=11 // pred_region
          _
        $region84: #{tpu_custom_call.1} parent=11 // pred_fallthru
          _
        // Predicated region
        $region85: #{tpu_custom_call.1} parent=11 // pred_check
          %p646 = pneg %p461
        $region86: #{tpu_custom_call.1} parent=11 // pred_check_branch
          %648 = sbr.rel (%p646) target = $region88
        $region87: #{tpu_custom_call.1} parent=11 // pred_region
          _
        $region88: #{tpu_custom_call.1} parent=11 // pred_fallthru
          _
      $region12: #{tpu_custom_call.1} parent=5 // pred_fallthru
        _
      %p649 = scmp.lt.s32.totalorder %s36, 2
      // Predicated region
      $region89: #{tpu_custom_call.1} parent=5 // pred_check
        %p650 = pneg %p649
      $region90: #{tpu_custom_call.1} parent=5 // pred_check_branch
        %652 = sbr.rel (%p650) target = $region92
      $region91: #{tpu_custom_call.1} parent=5 // pred_region
        // Predicated region
        $region93: #{tpu_custom_call.1} parent=91 // pred_check
          %p653 = pneg %p56
        $region94: #{tpu_custom_call.1} parent=91 // pred_check_branch
          %655 = sbr.rel (%p653) target = $region96
        $region95: #{tpu_custom_call.1} parent=91 // pred_region
          %s656 = sand.u32 %s46, 1
          %s657 = scalar_lea.sflag [#allocation4], %s656
          %s658 = sand.u32 %s46, 1
          %s659 = smul.addr %s658, 512
          %s660 = scalar_lea.vmem [#allocation3], %s659
          %s661 = smul.u32 64, %s36
          %s663 = ssub.s32 8192, 8192
          %664 = vsyncadd %s657, %s663
          %s665 = smul.addr %s661, 128
          %s666 = scalar_lea.hbm %s0, %s665
          %s667 = sshll.u32 %s660, 4
          %s668 = int_to_ptr.vmem [resolvable:$true] %s667
          %673 = dma.hbm_to_vmem [thread:$0]  %s666, 8192, %s668, %s657, 128, 128, 8
        $region96: #{tpu_custom_call.1} parent=91 // pred_fallthru
          _
      $region92: #{tpu_custom_call.1} parent=5 // pred_fallthru
        _
      %p674 = scmp.le.s32.totalorder 1, %s36
      %p675 = scmp.lt.s32.totalorder %s36, 3
      %p676 = pnand %p674, %p675
      %p677 = pneg %p676
      // Predicated region
      $region97: #{tpu_custom_call.1} parent=5 // pred_check
        _
      $region98: #{tpu_custom_call.1} parent=5 // pred_check_branch
        %679 = sbr.rel (%p676) target = $region100
      $region99: #{tpu_custom_call.1} parent=5 // pred_region
        %s680 = ssub.s32 %s36, 1
        %s681 = sand.u32 %s49, 1
        %s682 = scalar_lea.sflag [#allocation4], %s681
        %s683 = sand.u32 %s49, 1
        %s684 = smul.addr %s683, 512
        %s685 = scalar_lea.vmem [#allocation3], %s684
        // Predicated region
        $region101: #{tpu_custom_call.1} parent=99 // pred_check
          %p686 = pneg %p62
        $region102: #{tpu_custom_call.1} parent=99 // pred_check_branch
          %688 = sbr.rel (%p686) target = $region104
        $region103: #{tpu_custom_call.1} parent=99 // pred_region
          %689 = dma.done %s682, 8192
        $region104: #{tpu_custom_call.1} parent=99 // pred_fallthru
          _
        // Predicated region
        $region105: #{tpu_custom_call.1} parent=99 // pred_check
          %p690 = pneg %p83
        $region106: #{tpu_custom_call.1} parent=99 // pred_check_branch
          %692 = sbr.rel (%p690) target = $region108
        $region107: #{tpu_custom_call.1} parent=99 // pred_region
          %693 = dma.done [#allocation6], 2048
        $region108: #{tpu_custom_call.1} parent=99 // pred_fallthru
          _
        // Predicated region
        $region109: #{tpu_custom_call.1} parent=99 // pred_check
          %p694 = pneg %p125
        $region110: #{tpu_custom_call.1} parent=99 // pred_check_branch
          %696 = sbr.rel (%p694) target = $region112
        $region111: #{tpu_custom_call.1} parent=99 // pred_region
          %697 = dma.done [#allocation6], 4096
        $region112: #{tpu_custom_call.1} parent=99 // pred_fallthru
          _
        // Predicated region
        $region113: #{tpu_custom_call.1} parent=99 // pred_check
          %p698 = pneg %p167
        $region114: #{tpu_custom_call.1} parent=99 // pred_check_branch
          %700 = sbr.rel (%p698) target = $region116
        $region115: #{tpu_custom_call.1} parent=99 // pred_region
          %701 = dma.done [#allocation9], 4096
        $region116: #{tpu_custom_call.1} parent=99 // pred_fallthru
          _
        // Predicated region
        $region117: #{tpu_custom_call.1} parent=99 // pred_check
          %p702 = pneg %p209
        $region118: #{tpu_custom_call.1} parent=99 // pred_check_branch
          %704 = sbr.rel (%p702) target = $region120
        $region119: #{tpu_custom_call.1} parent=99 // pred_region
          %705 = dma.done [#allocation9], 4096
        $region120: #{tpu_custom_call.1} parent=99 // pred_fallthru
          _
        // Predicated region
        $region121: #{tpu_custom_call.1} parent=99 // pred_check
          %p706 = pneg %p251
        $region122: #{tpu_custom_call.1} parent=99 // pred_check_branch
          %708 = sbr.rel (%p706) target = $region124
        $region123: #{tpu_custom_call.1} parent=99 // pred_region
          %709 = dma.done [#allocation12], 2048
        $region124: #{tpu_custom_call.1} parent=99 // pred_fallthru
          _
        // Predicated region
        $region125: #{tpu_custom_call.1} parent=99 // pred_check
          %p710 = pneg %p272
        $region126: #{tpu_custom_call.1} parent=99 // pred_check_branch
          %712 = sbr.rel (%p710) target = $region128
        $region127: #{tpu_custom_call.1} parent=99 // pred_region
          %713 = dma.done [#allocation12], 4096
        $region128: #{tpu_custom_call.1} parent=99 // pred_fallthru
          _
        // Predicated region
        $region129: #{tpu_custom_call.1} parent=99 // pred_check
          %p714 = pneg %p314
        $region130: #{tpu_custom_call.1} parent=99 // pred_check_branch
          %716 = sbr.rel (%p714) target = $region132
        $region131: #{tpu_custom_call.1} parent=99 // pred_region
          %717 = dma.done [#allocation15], 4096
        $region132: #{tpu_custom_call.1} parent=99 // pred_fallthru
          _
        // Predicated region
        $region133: #{tpu_custom_call.1} parent=99 // pred_check
          %p718 = pneg %p356
        $region134: #{tpu_custom_call.1} parent=99 // pred_check_branch
          %720 = sbr.rel (%p718) target = $region136
        $region135: #{tpu_custom_call.1} parent=99 // pred_region
          %721 = dma.done [#allocation15], 4096
        $region136: #{tpu_custom_call.1} parent=99 // pred_fallthru
          _
        // Predicated region
        $region137: #{tpu_custom_call.1} parent=99 // pred_check
          %p722 = pneg %p398
        $region138: #{tpu_custom_call.1} parent=99 // pred_check_branch
          %724 = sbr.rel (%p722) target = $region140
        $region139: #{tpu_custom_call.1} parent=99 // pred_region
          %725 = dma.done [#allocation18], 4096
        $region140: #{tpu_custom_call.1} parent=99 // pred_fallthru
          _
        %s726 = sand.u32 %s49, 1
        %s727 = scalar_lea.sflag [#allocation4], %s726
        %s728 = sand.u32 %s49, 1
        %s729 = smul.addr %s728, 512
        %s730 = scalar_lea.vmem [#allocation3], %s729
        %p731 = pneg %p62
        %p732 = pneg %p59
        %p733 = pneg %p83
        %p734 = pneg %p80
        %p735 = pneg %p104
        %p736 = pneg %p101
        %p737 = pneg %p125
        %p738 = pneg %p122
        %p739 = pneg %p146
        %p740 = pneg %p143
        %p741 = pneg %p167
        %p742 = pneg %p164
        %p743 = pneg %p188
        %p744 = pneg %p185
        %p745 = pneg %p209
        %p746 = pneg %p206
        %p747 = pneg %p230
        %p748 = pneg %p227
        %p749 = pneg %p251
        %p750 = pneg %p248
        %p751 = pneg %p272
        %p752 = pneg %p269
        %p753 = pneg %p293
        %p754 = pneg %p290
        %p755 = pneg %p314
        %p756 = pneg %p311
        %p757 = pneg %p335
        %p758 = pneg %p332
        %p759 = pneg %p356
        %p760 = pneg %p353
        %p761 = pneg %p377
        %p762 = pneg %p374
        %p763 = pneg %p398
        %p764 = pneg %p395
        %p765 = pneg %p419
        %p766 = pneg %p416
        %p767 = pneg %p440
        %p768 = pneg %p437
        %p769 = pneg %p461
        %p770 = pneg %p458
        %p771 = pneg %p487
        %p772 = pneg %p484
        %s773 = smul.u32 64, %s41
        %p774 = scmp.lt.s32.totalorder %s773, 127
        %s775 = scalar_select %p774, %s773, 127
        %s776 = smul.addr %s775, 8
        %s777 = scalar_lea.vmem %s20, %s776
        %s778 = smul.u32 64, %s41
        %s779 = smul.u32 64, %s41
        %p780 = scmp.lt.s32.totalorder %s779, 127
        %s781 = scalar_select %p780, %s779, 127
        %s782 = smul.addr %s781, 8
        %s783 = scalar_lea.vmem %s20, %s782
        %s784 = smul.u32 64, %s41
        %v786 = vld [vmem:[%s685] sm:$0xff]
        %v787 = vld [vmem:[%s685 + $0x8] sm:$0xff]
        %v788 = vld [vmem:[%s685 + $0x10] sm:$0xff]
        %v789 = vld [vmem:[%s685 + $0x18] sm:$0xff]
        %v790 = vld [vmem:[%s685 + $0x20] sm:$0xff]
        %v791 = vld [vmem:[%s685 + $0x28] sm:$0xff]
        %v792 = vld [vmem:[%s685 + $0x30] sm:$0xff]
        %v793 = vld [vmem:[%s685 + $0x38] sm:$0xff]
        %v794 = vld [vmem:[%s685 + $0x40] sm:$0xff]
        %v795 = vld [vmem:[%s685 + $0x48] sm:$0xff]
        %v796 = vld [vmem:[%s685 + $0x50] sm:$0xff]
        %v797 = vld [vmem:[%s685 + $0x58] sm:$0xff]
        %v798 = vld [vmem:[%s685 + $0x60] sm:$0xff]
        %v799 = vld [vmem:[%s685 + $0x68] sm:$0xff]
        %v800 = vld [vmem:[%s685 + $0x70] sm:$0xff]
        %v801 = vld [vmem:[%s685 + $0x78] sm:$0xff]
        %v802 = vld [vmem:[%s685 + $0x80] sm:$0xff]
        %v803 = vld [vmem:[%s685 + $0x88] sm:$0xff]
        %v804 = vld [vmem:[%s685 + $0x90] sm:$0xff]
        %v805 = vld [vmem:[%s685 + $0x98] sm:$0xff]
        %v806 = vld [vmem:[%s685 + $0xa0] sm:$0xff]
        %v807 = vld [vmem:[%s685 + $0xa8] sm:$0xff]
        %v808 = vld [vmem:[%s685 + $0xb0] sm:$0xff]
        %v809 = vld [vmem:[%s685 + $0xb8] sm:$0xff]
        %v810 = vld [vmem:[%s685 + $0xc0] sm:$0xff]
        %v811 = vld [vmem:[%s685 + $0xc8] sm:$0xff]
        %v812 = vld [vmem:[%s685 + $0xd0] sm:$0xff]
        %v813 = vld [vmem:[%s685 + $0xd8] sm:$0xff]
        %v814 = vld [vmem:[%s685 + $0xe0] sm:$0xff]
        %v815 = vld [vmem:[%s685 + $0xe8] sm:$0xff]
        %v816 = vld [vmem:[%s685 + $0xf0] sm:$0xff]
        %v817 = vld [vmem:[%s685 + $0xf8] sm:$0xff]
        %v818 = vld [vmem:[%s685 + $0x100] sm:$0xff]
        %v819 = vld [vmem:[%s685 + $0x108] sm:$0xff]
        %v820 = vld [vmem:[%s685 + $0x110] sm:$0xff]
        %v821 = vld [vmem:[%s685 + $0x118] sm:$0xff]
        %v822 = vld [vmem:[%s685 + $0x120] sm:$0xff]
        %v823 = vld [vmem:[%s685 + $0x128] sm:$0xff]
        %v824 = vld [vmem:[%s685 + $0x130] sm:$0xff]
        %v825 = vld [vmem:[%s685 + $0x138] sm:$0xff]
        %v826 = vld [vmem:[%s685 + $0x140] sm:$0xff]
        %v827 = vld [vmem:[%s685 + $0x148] sm:$0xff]
        %v828 = vld [vmem:[%s685 + $0x150] sm:$0xff]
        %v829 = vld [vmem:[%s685 + $0x158] sm:$0xff]
        %v830 = vld [vmem:[%s685 + $0x160] sm:$0xff]
        %v831 = vld [vmem:[%s685 + $0x168] sm:$0xff]
        %v832 = vld [vmem:[%s685 + $0x170] sm:$0xff]
        %v833 = vld [vmem:[%s685 + $0x178] sm:$0xff]
        %v834 = vld [vmem:[%s685 + $0x180] sm:$0xff]
        %v835 = vld [vmem:[%s685 + $0x188] sm:$0xff]
        %v836 = vld [vmem:[%s685 + $0x190] sm:$0xff]
        %v837 = vld [vmem:[%s685 + $0x198] sm:$0xff]
        %v838 = vld [vmem:[%s685 + $0x1a0] sm:$0xff]
        %v839 = vld [vmem:[%s685 + $0x1a8] sm:$0xff]
        %v840 = vld [vmem:[%s685 + $0x1b0] sm:$0xff]
        %v841 = vld [vmem:[%s685 + $0x1b8] sm:$0xff]
        %v842 = vld [vmem:[%s685 + $0x1c0] sm:$0xff]
        %v843 = vld [vmem:[%s685 + $0x1c8] sm:$0xff]
        %v844 = vld [vmem:[%s685 + $0x1d0] sm:$0xff]
        %v845 = vld [vmem:[%s685 + $0x1d8] sm:$0xff]
        %v846 = vld [vmem:[%s685 + $0x1e0] sm:$0xff]
        %v847 = vld [vmem:[%s685 + $0x1e8] sm:$0xff]
        %v848 = vld [vmem:[%s685 + $0x1f0] sm:$0xff]
        %v849 = vld [vmem:[%s685 + $0x1f8] sm:$0xff]
        %v850 = vpack.c.bf16 %v787, %v786
        %v851 = vpack.c.bf16 %v789, %v788
        %v852 = vpack.c.bf16 %v791, %v790
        %v853 = vpack.c.bf16 %v793, %v792
        %v854 = vpack.c.bf16 %v795, %v794
        %v855 = vpack.c.bf16 %v797, %v796
        %v856 = vpack.c.bf16 %v799, %v798
        %v857 = vpack.c.bf16 %v801, %v800
        %v858 = vpack.c.bf16 %v803, %v802
        %v859 = vpack.c.bf16 %v805, %v804
        %v860 = vpack.c.bf16 %v807, %v806
        %v861 = vpack.c.bf16 %v809, %v808
        %v862 = vpack.c.bf16 %v811, %v810
        %v863 = vpack.c.bf16 %v813, %v812
        %v864 = vpack.c.bf16 %v815, %v814
        %v865 = vpack.c.bf16 %v817, %v816
        %v866 = vpack.c.bf16 %v819, %v818
        %v867 = vpack.c.bf16 %v821, %v820
        %v868 = vpack.c.bf16 %v823, %v822
        %v869 = vpack.c.bf16 %v825, %v824
        %v870 = vpack.c.bf16 %v827, %v826
        %v871 = vpack.c.bf16 %v829, %v828
        %v872 = vpack.c.bf16 %v831, %v830
        %v873 = vpack.c.bf16 %v833, %v832
        %v874 = vpack.c.bf16 %v835, %v834
        %v875 = vpack.c.bf16 %v837, %v836
        %v876 = vpack.c.bf16 %v839, %v838
        %v877 = vpack.c.bf16 %v841, %v840
        %v878 = vpack.c.bf16 %v843, %v842
        %v879 = vpack.c.bf16 %v845, %v844
        %v880 = vpack.c.bf16 %v847, %v846
        %v881 = vpack.c.bf16 %v849, %v848
        %v882 = vld [vmem:[#allocation5] sm:$0xff]
        %v883 = vld [vmem:[#allocation5 + $0x8] sm:$0xff]
        %v884 = vld [vmem:[#allocation5 + $0x10] sm:$0xff]
        %v885 = vld [vmem:[#allocation5 + $0x18] sm:$0xff]
        %v886 = vld [vmem:[#allocation5 + $0x20] sm:$0xff]
        %v887 = vld [vmem:[#allocation5 + $0x28] sm:$0xff]
        %v888 = vld [vmem:[#allocation5 + $0x30] sm:$0xff]
        %v889 = vld [vmem:[#allocation5 + $0x38] sm:$0xff]
        %v890 = vld [vmem:[#allocation5 + $0x40] sm:$0xff]
        %v891 = vld [vmem:[#allocation5 + $0x48] sm:$0xff]
        %v892 = vld [vmem:[#allocation5 + $0x50] sm:$0xff]
        %v893 = vld [vmem:[#allocation5 + $0x58] sm:$0xff]
        %v894 = vld [vmem:[#allocation5 + $0x60] sm:$0xff]
        %v895 = vld [vmem:[#allocation5 + $0x68] sm:$0xff]
        %v896 = vld [vmem:[#allocation5 + $0x70] sm:$0xff]
        %v897 = vld [vmem:[#allocation5 + $0x78] sm:$0xff]
        %v898 = vld [vmem:[%s2] sm:$0x3]
        %v900 = vlaneseq
        %v901 = vshrl.u32 %v900, 7
        %v902 = vsub.s32 0, %v901
        %v903 = vrot.slane %v898, %v902
        %v904 = vlaneseq
        %v905 = vshrl.u32 %v904, 7
        %v906 = vsub.s32 1, %v905
        %v907 = vrot.slane %v898, %v906
        %v926 = vunpack.c.l.b16 %v882
        %v927 = vunpack.c.h.b16 %v882
        %v928 = vunpack.c.l.b16 %v883
        %v929 = vunpack.c.h.b16 %v883
        %v930 = vunpack.c.l.b16 %v884
        %v931 = vunpack.c.h.b16 %v884
        %v932 = vunpack.c.l.b16 %v885
        %v933 = vunpack.c.h.b16 %v885
        %v934 = vunpack.c.l.b16 %v886
        %v935 = vunpack.c.h.b16 %v886
        %v936 = vunpack.c.l.b16 %v887
        %v937 = vunpack.c.h.b16 %v887
        %v938 = vunpack.c.l.b16 %v888
        %v939 = vunpack.c.h.b16 %v888
        %v940 = vunpack.c.l.b16 %v889
        %v941 = vunpack.c.h.b16 %v889
        %v942 = vunpack.c.l.b16 %v890
        %v943 = vunpack.c.h.b16 %v890
        %v944 = vunpack.c.l.b16 %v891
        %v945 = vunpack.c.h.b16 %v891
        %v946 = vunpack.c.l.b16 %v892
        %v947 = vunpack.c.h.b16 %v892
        %v948 = vunpack.c.l.b16 %v893
        %v949 = vunpack.c.h.b16 %v893
        %v950 = vunpack.c.l.b16 %v894
        %v951 = vunpack.c.h.b16 %v894
        %v952 = vunpack.c.l.b16 %v895
        %v953 = vunpack.c.h.b16 %v895
        %v954 = vunpack.c.l.b16 %v896
        %v955 = vunpack.c.h.b16 %v896
        %v956 = vunpack.c.l.b16 %v897
        %v957 = vunpack.c.h.b16 %v897
        %v958 = vpack.c.b16 %v928, %v926
        %v959 = vpack.c.b16 %v929, %v927
        %v960 = vpack.c.b16 %v932, %v930
        %v961 = vpack.c.b16 %v933, %v931
        %v962 = vpack.c.b16 %v936, %v934
        %v963 = vpack.c.b16 %v937, %v935
        %v964 = vpack.c.b16 %v940, %v938
        %v965 = vpack.c.b16 %v941, %v939
        %v966 = vpack.c.b16 %v944, %v942
        %v967 = vpack.c.b16 %v945, %v943
        %v968 = vpack.c.b16 %v948, %v946
        %v969 = vpack.c.b16 %v949, %v947
        %v970 = vpack.c.b16 %v952, %v950
        %v971 = vpack.c.b16 %v953, %v951
        %v972 = vpack.c.b16 %v956, %v954
        %v973 = vpack.c.b16 %v957, %v955
        %990 = vmatprep.subr.bf16.mxu0 %v959
        %991 = vmatpush1.bf16.msra.mxu0 %v958
        %992 = vmatprep.subr.bf16.mxu0 %v961
        %993 = vmatpush1.bf16.msra.mxu0 %v960
        %994 = vmatprep.subr.bf16.mxu0 %v963
        %995 = vmatpush1.bf16.msra.mxu0 %v962
        %996 = vmatprep.subr.bf16.mxu0 %v965
        %997 = vmatpush1.bf16.msra.mxu0 %v964
        %998 = vmatprep.subr.bf16.mxu0 %v967
        %999 = vmatpush1.bf16.msra.mxu0 %v966
        %1000 = vmatprep.subr.bf16.mxu0 %v969
        %1001 = vmatpush1.bf16.msra.mxu0 %v968
        %1002 = vmatprep.subr.bf16.mxu0 %v971
        %1003 = vmatpush1.bf16.msra.mxu0 %v970
        %1004 = vmatprep.subr.bf16.mxu0 %v973
        %1005 = vmatpush1.bf16.msra.mxu0 %v972
        %1006 = vmatprep.subr.bf16.mxu0 0
        %1007 = vmatpush1.bf16.msra.mxu0 0
        %1008 = vmatprep.subr.bf16.mxu0 0
        %1009 = vmatpush1.bf16.msra.mxu0 0
        %1010 = vmatprep.subr.bf16.mxu0 0
        %1011 = vmatpush1.bf16.msra.mxu0 0
        %1012 = vmatprep.subr.bf16.mxu0 0
        %1013 = vmatpush1.bf16.msra.mxu0 0
        %1014 = vmatprep.subr.bf16.mxu0 0
        %1015 = vmatpush1.bf16.msra.mxu0 0
        %1016 = vmatprep.subr.bf16.mxu0 0
        %1017 = vmatpush1.bf16.msra.mxu0 0
        %1018 = vmatprep.subr.bf16.mxu0 0
        %1019 = vmatpush1.bf16.msra.mxu0 0
        %1020 = vmatprep.subr.bf16.mxu0 0
        %1021 = vmatpush1.bf16.msra.mxu0 0
        %1022 = vmatprep.mubr.bf16.mxu0 0
        %1023 = vmatmul.mubr.bf16.gmra.mrb[0].mxu0 %v850
        %v1024 = vpop.f32.mrb[0].mxu0
        %v1025 = vadd.f32 %v903, %v1024
        %v1026 = vpop.f32.mrb[0].mxu0
        %v1027 = vadd.f32 %v907, %v1026
        %v1028 = vpop.f32.mrb[0].mxu0
        %v1029 = vadd.f32 %v903, %v1028
        %v1030 = vpop.f32.mrb[0].mxu0
        %v1031 = vadd.f32 %v907, %v1030
        %1032 = vmatprep.mubr.bf16.mxu0 0
        %1033 = vmatmul.mubr.bf16.gmra.mrb[0].mxu0 %v851
        %v1034 = vpop.f32.mrb[0].mxu0
        %v1035 = vadd.f32 %v903, %v1034
        %v1036 = vpop.f32.mrb[0].mxu0
        %v1037 = vadd.f32 %v907, %v1036
        %v1038 = vpop.f32.mrb[0].mxu0
        %v1039 = vadd.f32 %v903, %v1038
        %v1040 = vpop.f32.mrb[0].mxu0
        %v1041 = vadd.f32 %v907, %v1040
        %1042 = vmatprep.mubr.bf16.mxu0 0
        %1043 = vmatmul.mubr.bf16.gmra.mrb[0].mxu0 %v852
        %v1044 = vpop.f32.mrb[0].mxu0
        %v1045 = vadd.f32 %v903, %v1044
        %v1046 = vpop.f32.mrb[0].mxu0
        %v1047 = vadd.f32 %v907, %v1046
        %v1048 = vpop.f32.mrb[0].mxu0
        %v1049 = vadd.f32 %v903, %v1048
        %v1050 = vpop.f32.mrb[0].mxu0
        %v1051 = vadd.f32 %v907, %v1050
        %1052 = vmatprep.mubr.bf16.mxu0 0
        %1053 = vmatmul.mubr.bf16.gmra.mrb[0].mxu0 %v853
        %v1054 = vpop.f32.mrb[0].mxu0
        %v1055 = vadd.f32 %v903, %v1054
        %v1056 = vpop.f32.mrb[0].mxu0
        %v1057 = vadd.f32 %v907, %v1056
        %v1058 = vpop.f32.mrb[0].mxu0
        %v1059 = vadd.f32 %v903, %v1058
        %v1060 = vpop.f32.mrb[0].mxu0
        %v1061 = vadd.f32 %v907, %v1060
        %1062 = vmatprep.mubr.bf16.mxu0 0
        %1063 = vmatmul.mubr.bf16.gmra.mrb[0].mxu0 %v854
        %v1064 = vpop.f32.mrb[0].mxu0
        %v1065 = vadd.f32 %v903, %v1064
        %v1066 = vpop.f32.mrb[0].mxu0
        %v1067 = vadd.f32 %v907, %v1066
        %v1068 = vpop.f32.mrb[0].mxu0
        %v1069 = vadd.f32 %v903, %v1068
        %v1070 = vpop.f32.mrb[0].mxu0
        %v1071 = vadd.f32 %v907, %v1070
        %1072 = vmatprep.mubr.bf16.mxu0 0
        %1073 = vmatmul.mubr.bf16.gmra.mrb[0].mxu0 %v855
        %v1074 = vpop.f32.mrb[0].mxu0
        %v1075 = vadd.f32 %v903, %v1074
        %v1076 = vpop.f32.mrb[0].mxu0
        %v1077 = vadd.f32 %v907, %v1076
        %v1078 = vpop.f32.mrb[0].mxu0
        %v1079 = vadd.f32 %v903, %v1078
        %v1080 = vpop.f32.mrb[0].mxu0
        %v1081 = vadd.f32 %v907, %v1080
        %1082 = vmatprep.mubr.bf16.mxu0 0
        %1083 = vmatmul.mubr.bf16.gmra.mrb[0].mxu0 %v856
        %v1084 = vpop.f32.mrb[0].mxu0
        %v1085 = vadd.f32 %v903, %v1084
        %v1086 = vpop.f32.mrb[0].mxu0
        %v1087 = vadd.f32 %v907, %v1086
        %v1088 = vpop.f32.mrb[0].mxu0
        %v1089 = vadd.f32 %v903, %v1088
        %v1090 = vpop.f32.mrb[0].mxu0
        %v1091 = vadd.f32 %v907, %v1090
        %1092 = vmatprep.mubr.bf16.mxu0 0
        %1093 = vmatmul.mubr.bf16.gmra.mrb[0].mxu0 %v857
        %v1094 = vpop.f32.mrb[0].mxu0
        %v1095 = vadd.f32 %v903, %v1094
        %v1096 = vpop.f32.mrb[0].mxu0
        %v1097 = vadd.f32 %v907, %v1096
        %v1098 = vpop.f32.mrb[0].mxu0
        %v1099 = vadd.f32 %v903, %v1098
        %v1100 = vpop.f32.mrb[0].mxu0
        %v1101 = vadd.f32 %v907, %v1100
        %1102 = vmatprep.mubr.bf16.mxu0 0
        %1103 = vmatmul.mubr.bf16.gmra.mrb[0].mxu0 %v858
        %v1104 = vpop.f32.mrb[0].mxu0
        %v1105 = vadd.f32 %v903, %v1104
        %v1106 = vpop.f32.mrb[0].mxu0
        %v1107 = vadd.f32 %v907, %v1106
        %v1108 = vpop.f32.mrb[0].mxu0
        %v1109 = vadd.f32 %v903, %v1108
        %v1110 = vpop.f32.mrb[0].mxu0
        %v1111 = vadd.f32 %v907, %v1110
        %1112 = vmatprep.mubr.bf16.mxu0 0
        %1113 = vmatmul.mubr.bf16.gmra.mrb[0].mxu0 %v859
        %v1114 = vpop.f32.mrb[0].mxu0
        %v1115 = vadd.f32 %v903, %v1114
        %v1116 = vpop.f32.mrb[0].mxu0
        %v1117 = vadd.f32 %v907, %v1116
        %v1118 = vpop.f32.mrb[0].mxu0
        %v1119 = vadd.f32 %v903, %v1118
        %v1120 = vpop.f32.mrb[0].mxu0
        %v1121 = vadd.f32 %v907, %v1120
        %1122 = vmatprep.mubr.bf16.mxu0 0
        %1123 = vmatmul.mubr.bf16.gmra.mrb[0].mxu0 %v860
        %v1124 = vpop.f32.mrb[0].mxu0
        %v1125 = vadd.f32 %v903, %v1124
        %v1126 = vpop.f32.mrb[0].mxu0
        %v1127 = vadd.f32 %v907, %v1126
        %v1128 = vpop.f32.mrb[0].mxu0
        %v1129 = vadd.f32 %v903, %v1128
        %v1130 = vpop.f32.mrb[0].mxu0
        %v1131 = vadd.f32 %v907, %v1130
        %1132 = vmatprep.mubr.bf16.mxu0 0
        %1133 = vmatmul.mubr.bf16.gmra.mrb[0].mxu0 %v861
        %v1134 = vpop.f32.mrb[0].mxu0
        %v1135 = vadd.f32 %v903, %v1134
        %v1136 = vpop.f32.mrb[0].mxu0
        %v1137 = vadd.f32 %v907, %v1136
        %v1138 = vpop.f32.mrb[0].mxu0
        %v1139 = vadd.f32 %v903, %v1138
        %v1140 = vpop.f32.mrb[0].mxu0
        %v1141 = vadd.f32 %v907, %v1140
        %1142 = vmatprep.mubr.bf16.mxu0 0
        %1143 = vmatmul.mubr.bf16.gmra.mrb[0].mxu0 %v862
        %v1144 = vpop.f32.mrb[0].mxu0
        %v1145 = vadd.f32 %v903, %v1144
        %v1146 = vpop.f32.mrb[0].mxu0
        %v1147 = vadd.f32 %v907, %v1146
        %v1148 = vpop.f32.mrb[0].mxu0
        %v1149 = vadd.f32 %v903, %v1148
        %v1150 = vpop.f32.mrb[0].mxu0
        %v1151 = vadd.f32 %v907, %v1150
        %1152 = vmatprep.mubr.bf16.mxu0 0
        %1153 = vmatmul.mubr.bf16.gmra.mrb[0].mxu0 %v863
        %v1154 = vpop.f32.mrb[0].mxu0
        %v1155 = vadd.f32 %v903, %v1154
        %v1156 = vpop.f32.mrb[0].mxu0
        %v1157 = vadd.f32 %v907, %v1156
        %v1158 = vpop.f32.mrb[0].mxu0
        %v1159 = vadd.f32 %v903, %v1158
        %v1160 = vpop.f32.mrb[0].mxu0
        %v1161 = vadd.f32 %v907, %v1160
        %1162 = vmatprep.mubr.bf16.mxu0 0
        %1163 = vmatmul.mubr.bf16.gmra.mrb[0].mxu0 %v864
        %v1164 = vpop.f32.mrb[0].mxu0
        %v1165 = vadd.f32 %v903, %v1164
        %v1166 = vpop.f32.mrb[0].mxu0
        %v1167 = vadd.f32 %v907, %v1166
        %v1168 = vpop.f32.mrb[0].mxu0
        %v1169 = vadd.f32 %v903, %v1168
        %v1170 = vpop.f32.mrb[0].mxu0
        %v1171 = vadd.f32 %v907, %v1170
        %1172 = vmatprep.mubr.bf16.mxu0 0
        %1173 = vmatmul.mubr.bf16.gmra.mrb[0].mxu0 %v865
        %v1174 = vpop.f32.mrb[0].mxu0
        %v1175 = vadd.f32 %v903, %v1174
        %v1176 = vpop.f32.mrb[0].mxu0
        %v1177 = vadd.f32 %v907, %v1176
        %v1178 = vpop.f32.mrb[0].mxu0
        %v1179 = vadd.f32 %v903, %v1178
        %v1180 = vpop.f32.mrb[0].mxu0
        %v1181 = vadd.f32 %v907, %v1180
        %1182 = vmatprep.mubr.bf16.mxu0 0
        %1183 = vmatmul.mubr.bf16.gmra.mrb[0].mxu0 %v866
        %v1184 = vpop.f32.mrb[0].mxu0
        %v1185 = vadd.f32 %v903, %v1184
        %v1186 = vpop.f32.mrb[0].mxu0
        %v1187 = vadd.f32 %v907, %v1186
        %v1188 = vpop.f32.mrb[0].mxu0
        %v1189 = vadd.f32 %v903, %v1188
        %v1190 = vpop.f32.mrb[0].mxu0
        %v1191 = vadd.f32 %v907, %v1190
        %1192 = vmatprep.mubr.bf16.mxu0 0
        %1193 = vmatmul.mubr.bf16.gmra.mrb[0].mxu0 %v867
        %v1194 = vpop.f32.mrb[0].mxu0
        %v1195 = vadd.f32 %v903, %v1194
        %v1196 = vpop.f32.mrb[0].mxu0
        %v1197 = vadd.f32 %v907, %v1196
        %v1198 = vpop.f32.mrb[0].mxu0
        %v1199 = vadd.f32 %v903, %v1198
        %v1200 = vpop.f32.mrb[0].mxu0
        %v1201 = vadd.f32 %v907, %v1200
        %1202 = vmatprep.mubr.bf16.mxu0 0
        %1203 = vmatmul.mubr.bf16.gmra.mrb[0].mxu0 %v868
        %v1204 = vpop.f32.mrb[0].mxu0
        %v1205 = vadd.f32 %v903, %v1204
        %v1206 = vpop.f32.mrb[0].mxu0
        %v1207 = vadd.f32 %v907, %v1206
        %v1208 = vpop.f32.mrb[0].mxu0
        %v1209 = vadd.f32 %v903, %v1208
        %v1210 = vpop.f32.mrb[0].mxu0
        %v1211 = vadd.f32 %v907, %v1210
        %1212 = vmatprep.mubr.bf16.mxu0 0
        %1213 = vmatmul.mubr.bf16.gmra.mrb[0].mxu0 %v869
        %v1214 = vpop.f32.mrb[0].mxu0
        %v1215 = vadd.f32 %v903, %v1214
        %v1216 = vpop.f32.mrb[0].mxu0
        %v1217 = vadd.f32 %v907, %v1216
        %v1218 = vpop.f32.mrb[0].mxu0
        %v1219 = vadd.f32 %v903, %v1218
        %v1220 = vpop.f32.mrb[0].mxu0
        %v1221 = vadd.f32 %v907, %v1220
        %1222 = vmatprep.mubr.bf16.mxu0 0
        %1223 = vmatmul.mubr.bf16.gmra.mrb[0].mxu0 %v870
        %v1224 = vpop.f32.mrb[0].mxu0
        %v1225 = vadd.f32 %v903, %v1224
        %v1226 = vpop.f32.mrb[0].mxu0
        %v1227 = vadd.f32 %v907, %v1226
        %v1228 = vpop.f32.mrb[0].mxu0
        %v1229 = vadd.f32 %v903, %v1228
        %v1230 = vpop.f32.mrb[0].mxu0
        %v1231 = vadd.f32 %v907, %v1230
        %1232 = vmatprep.mubr.bf16.mxu0 0
        %1233 = vmatmul.mubr.bf16.gmra.mrb[0].mxu0 %v871
        %v1234 = vpop.f32.mrb[0].mxu0
        %v1235 = vadd.f32 %v903, %v1234
        %v1236 = vpop.f32.mrb[0].mxu0
        %v1237 = vadd.f32 %v907, %v1236
        %v1238 = vpop.f32.mrb[0].mxu0
        %v1239 = vadd.f32 %v903, %v1238
        %v1240 = vpop.f32.mrb[0].mxu0
        %v1241 = vadd.f32 %v907, %v1240
        %1242 = vmatprep.mubr.bf16.mxu0 0
        %1243 = vmatmul.mubr.bf16.gmra.mrb[0].mxu0 %v872
        %v1244 = vpop.f32.mrb[0].mxu0
        %v1245 = vadd.f32 %v903, %v1244
        %v1246 = vpop.f32.mrb[0].mxu0
        %v1247 = vadd.f32 %v907, %v1246
        %v1248 = vpop.f32.mrb[0].mxu0
        %v1249 = vadd.f32 %v903, %v1248
        %v1250 = vpop.f32.mrb[0].mxu0
        %v1251 = vadd.f32 %v907, %v1250
        %1252 = vmatprep.mubr.bf16.mxu0 0
        %1253 = vmatmul.mubr.bf16.gmra.mrb[0].mxu0 %v873
        %v1254 = vpop.f32.mrb[0].mxu0
        %v1255 = vadd.f32 %v903, %v1254
        %v1256 = vpop.f32.mrb[0].mxu0
        %v1257 = vadd.f32 %v907, %v1256
        %v1258 = vpop.f32.mrb[0].mxu0
        %v1259 = vadd.f32 %v903, %v1258
        %v1260 = vpop.f32.mrb[0].mxu0
        %v1261 = vadd.f32 %v907, %v1260
        %1262 = vmatprep.mubr.bf16.mxu0 0
        %1263 = vmatmul.mubr.bf16.gmra.mrb[0].mxu0 %v874
        %v1264 = vpop.f32.mrb[0].mxu0
        %v1265 = vadd.f32 %v903, %v1264
        %v1266 = vpop.f32.mrb[0].mxu0
        %v1267 = vadd.f32 %v907, %v1266
        %v1268 = vpop.f32.mrb[0].mxu0
        %v1269 = vadd.f32 %v903, %v1268
        %v1270 = vpop.f32.mrb[0].mxu0
        %v1271 = vadd.f32 %v907, %v1270
        %1272 = vmatprep.mubr.bf16.mxu0 0
        %1273 = vmatmul.mubr.bf16.gmra.mrb[0].mxu0 %v875
        %v1274 = vpop.f32.mrb[0].mxu0
        %v1275 = vadd.f32 %v903, %v1274
        %v1276 = vpop.f32.mrb[0].mxu0
        %v1277 = vadd.f32 %v907, %v1276
        %v1278 = vpop.f32.mrb[0].mxu0
        %v1279 = vadd.f32 %v903, %v1278
        %v1280 = vpop.f32.mrb[0].mxu0
        %v1281 = vadd.f32 %v907, %v1280
        %1282 = vmatprep.mubr.bf16.mxu0 0
        %1283 = vmatmul.mubr.bf16.gmra.mrb[0].mxu0 %v876
        %v1284 = vpop.f32.mrb[0].mxu0
        %v1285 = vadd.f32 %v903, %v1284
        %v1286 = vpop.f32.mrb[0].mxu0
        %v1287 = vadd.f32 %v907, %v1286
        %v1288 = vpop.f32.mrb[0].mxu0
        %v1289 = vadd.f32 %v903, %v1288
        %v1290 = vpop.f32.mrb[0].mxu0
        %v1291 = vadd.f32 %v907, %v1290
        %1292 = vmatprep.mubr.bf16.mxu0 0
        %1293 = vmatmul.mubr.bf16.gmra.mrb[0].mxu0 %v877
        %v1294 = vpop.f32.mrb[0].mxu0
        %v1295 = vadd.f32 %v903, %v1294
        %v1296 = vpop.f32.mrb[0].mxu0
        %v1297 = vadd.f32 %v907, %v1296
        %v1298 = vpop.f32.mrb[0].mxu0
        %v1299 = vadd.f32 %v903, %v1298
        %v1300 = vpop.f32.mrb[0].mxu0
        %v1301 = vadd.f32 %v907, %v1300
        %1302 = vmatprep.mubr.bf16.mxu0 0
        %1303 = vmatmul.mubr.bf16.gmra.mrb[0].mxu0 %v878
        %v1304 = vpop.f32.mrb[0].mxu0
        %v1305 = vadd.f32 %v903, %v1304
        %v1306 = vpop.f32.mrb[0].mxu0
        %v1307 = vadd.f32 %v907, %v1306
        %v1308 = vpop.f32.mrb[0].mxu0
        %v1309 = vadd.f32 %v903, %v1308
        %v1310 = vpop.f32.mrb[0].mxu0
        %v1311 = vadd.f32 %v907, %v1310
        %1312 = vmatprep.mubr.bf16.mxu0 0
        %1313 = vmatmul.mubr.bf16.gmra.mrb[0].mxu0 %v879
        %v1314 = vpop.f32.mrb[0].mxu0
        %v1315 = vadd.f32 %v903, %v1314
        %v1316 = vpop.f32.mrb[0].mxu0
        %v1317 = vadd.f32 %v907, %v1316
        %v1318 = vpop.f32.mrb[0].mxu0
        %v1319 = vadd.f32 %v903, %v1318
        %v1320 = vpop.f32.mrb[0].mxu0
        %v1321 = vadd.f32 %v907, %v1320
        %1322 = vmatprep.mubr.bf16.mxu0 0
        %1323 = vmatmul.mubr.bf16.gmra.mrb[0].mxu0 %v880
        %v1324 = vpop.f32.mrb[0].mxu0
        %v1325 = vadd.f32 %v903, %v1324
        %v1326 = vpop.f32.mrb[0].mxu0
        %v1327 = vadd.f32 %v907, %v1326
        %v1328 = vpop.f32.mrb[0].mxu0
        %v1329 = vadd.f32 %v903, %v1328
        %v1330 = vpop.f32.mrb[0].mxu0
        %v1331 = vadd.f32 %v907, %v1330
        %1332 = vmatprep.mubr.bf16.mxu0 0
        %1333 = vmatmul.mubr.bf16.gmra.mrb[0].mxu0 %v881
        %v1334 = vpop.f32.mrb[0].mxu0
        %v1335 = vadd.f32 %v903, %v1334
        %v1336 = vpop.f32.mrb[0].mxu0
        %v1337 = vadd.f32 %v907, %v1336
        %v1338 = vpop.f32.mrb[0].mxu0
        %v1339 = vadd.f32 %v903, %v1338
        %v1340 = vpop.f32.mrb[0].mxu0
        %v1341 = vadd.f32 %v907, %v1340
        %1342 = vdwg.mxu0
        %v1343 = vmax.f32 %v1025, 0.0
        %v1344 = vmax.f32 %v1027, 0.0
        %v1345 = vmax.f32 %v1029, 0.0
        %v1346 = vmax.f32 %v1031, 0.0
        %v1347 = vmax.f32 %v1035, 0.0
        %v1348 = vmax.f32 %v1037, 0.0
        %v1349 = vmax.f32 %v1039, 0.0
        %v1350 = vmax.f32 %v1041, 0.0
        %v1351 = vmax.f32 %v1045, 0.0
        %v1352 = vmax.f32 %v1047, 0.0
        %v1353 = vmax.f32 %v1049, 0.0
        %v1354 = vmax.f32 %v1051, 0.0
        %v1355 = vmax.f32 %v1055, 0.0
        %v1356 = vmax.f32 %v1057, 0.0
        %v1357 = vmax.f32 %v1059, 0.0
        %v1358 = vmax.f32 %v1061, 0.0
        %v1359 = vmax.f32 %v1065, 0.0
        %v1360 = vmax.f32 %v1067, 0.0
        %v1361 = vmax.f32 %v1069, 0.0
        %v1362 = vmax.f32 %v1071, 0.0
        %v1363 = vmax.f32 %v1075, 0.0
        %v1364 = vmax.f32 %v1077, 0.0
        %v1365 = vmax.f32 %v1079, 0.0
        %v1366 = vmax.f32 %v1081, 0.0
        %v1367 = vmax.f32 %v1085, 0.0
        %v1368 = vmax.f32 %v1087, 0.0
        %v1369 = vmax.f32 %v1089, 0.0
        %v1370 = vmax.f32 %v1091, 0.0
        %v1371 = vmax.f32 %v1095, 0.0
        %v1372 = vmax.f32 %v1097, 0.0
        %v1373 = vmax.f32 %v1099, 0.0
        %v1374 = vmax.f32 %v1101, 0.0
        %v1375 = vmax.f32 %v1105, 0.0
        %v1376 = vmax.f32 %v1107, 0.0
        %v1377 = vmax.f32 %v1109, 0.0
        %v1378 = vmax.f32 %v1111, 0.0
        %v1379 = vmax.f32 %v1115, 0.0
        %v1380 = vmax.f32 %v1117, 0.0
        %v1381 = vmax.f32 %v1119, 0.0
        %v1382 = vmax.f32 %v1121, 0.0
        %v1383 = vmax.f32 %v1125, 0.0
        %v1384 = vmax.f32 %v1127, 0.0
        %v1385 = vmax.f32 %v1129, 0.0
        %v1386 = vmax.f32 %v1131, 0.0
        %v1387 = vmax.f32 %v1135, 0.0
        %v1388 = vmax.f32 %v1137, 0.0
        %v1389 = vmax.f32 %v1139, 0.0
        %v1390 = vmax.f32 %v1141, 0.0
        %v1391 = vmax.f32 %v1145, 0.0
        %v1392 = vmax.f32 %v1147, 0.0
        %v1393 = vmax.f32 %v1149, 0.0
        %v1394 = vmax.f32 %v1151, 0.0
        %v1395 = vmax.f32 %v1155, 0.0
        %v1396 = vmax.f32 %v1157, 0.0
        %v1397 = vmax.f32 %v1159, 0.0
        %v1398 = vmax.f32 %v1161, 0.0
        %v1399 = vmax.f32 %v1165, 0.0
        %v1400 = vmax.f32 %v1167, 0.0
        %v1401 = vmax.f32 %v1169, 0.0
        %v1402 = vmax.f32 %v1171, 0.0
        %v1403 = vmax.f32 %v1175, 0.0
        %v1404 = vmax.f32 %v1177, 0.0
        %v1405 = vmax.f32 %v1179, 0.0
        %v1406 = vmax.f32 %v1181, 0.0
        %v1407 = vmax.f32 %v1185, 0.0
        %v1408 = vmax.f32 %v1187, 0.0
        %v1409 = vmax.f32 %v1189, 0.0
        %v1410 = vmax.f32 %v1191, 0.0
        %v1411 = vmax.f32 %v1195, 0.0
        %v1412 = vmax.f32 %v1197, 0.0
        %v1413 = vmax.f32 %v1199, 0.0
        %v1414 = vmax.f32 %v1201, 0.0
        %v1415 = vmax.f32 %v1205, 0.0
        %v1416 = vmax.f32 %v1207, 0.0
        %v1417 = vmax.f32 %v1209, 0.0
        %v1418 = vmax.f32 %v1211, 0.0
        %v1419 = vmax.f32 %v1215, 0.0
        %v1420 = vmax.f32 %v1217, 0.0
        %v1421 = vmax.f32 %v1219, 0.0
        %v1422 = vmax.f32 %v1221, 0.0
        %v1423 = vmax.f32 %v1225, 0.0
        %v1424 = vmax.f32 %v1227, 0.0
        %v1425 = vmax.f32 %v1229, 0.0
        %v1426 = vmax.f32 %v1231, 0.0
        %v1427 = vmax.f32 %v1235, 0.0
        %v1428 = vmax.f32 %v1237, 0.0
        %v1429 = vmax.f32 %v1239, 0.0
        %v1430 = vmax.f32 %v1241, 0.0
        %v1431 = vmax.f32 %v1245, 0.0
        %v1432 = vmax.f32 %v1247, 0.0
        %v1433 = vmax.f32 %v1249, 0.0
        %v1434 = vmax.f32 %v1251, 0.0
        %v1435 = vmax.f32 %v1255, 0.0
        %v1436 = vmax.f32 %v1257, 0.0
        %v1437 = vmax.f32 %v1259, 0.0
        %v1438 = vmax.f32 %v1261, 0.0
        %v1439 = vmax.f32 %v1265, 0.0
        %v1440 = vmax.f32 %v1267, 0.0
        %v1441 = vmax.f32 %v1269, 0.0
        %v1442 = vmax.f32 %v1271, 0.0
        %v1443 = vmax.f32 %v1275, 0.0
        %v1444 = vmax.f32 %v1277, 0.0
        %v1445 = vmax.f32 %v1279, 0.0
        %v1446 = vmax.f32 %v1281, 0.0
        %v1447 = vmax.f32 %v1285, 0.0
        %v1448 = vmax.f32 %v1287, 0.0
        %v1449 = vmax.f32 %v1289, 0.0
        %v1450 = vmax.f32 %v1291, 0.0
        %v1451 = vmax.f32 %v1295, 0.0
        %v1452 = vmax.f32 %v1297, 0.0
        %v1453 = vmax.f32 %v1299, 0.0
        %v1454 = vmax.f32 %v1301, 0.0
        %v1455 = vmax.f32 %v1305, 0.0
        %v1456 = vmax.f32 %v1307, 0.0
        %v1457 = vmax.f32 %v1309, 0.0
        %v1458 = vmax.f32 %v1311, 0.0
        %v1459 = vmax.f32 %v1315, 0.0
        %v1460 = vmax.f32 %v1317, 0.0
        %v1461 = vmax.f32 %v1319, 0.0
        %v1462 = vmax.f32 %v1321, 0.0
        %v1463 = vmax.f32 %v1325, 0.0
        %v1464 = vmax.f32 %v1327, 0.0
        %v1465 = vmax.f32 %v1329, 0.0
        %v1466 = vmax.f32 %v1331, 0.0
        %v1467 = vmax.f32 %v1335, 0.0
        %v1468 = vmax.f32 %v1337, 0.0
        %v1469 = vmax.f32 %v1339, 0.0
        %v1470 = vmax.f32 %v1341, 0.0
        %v1471 = vld [vmem:[#allocation7] sm:$0xff]
        %v1472 = vld [vmem:[#allocation7 + $0x8] sm:$0xff]
        %v1473 = vld [vmem:[#allocation7 + $0x10] sm:$0xff]
        %v1474 = vld [vmem:[#allocation7 + $0x18] sm:$0xff]
        %v1475 = vld [vmem:[#allocation7 + $0x20] sm:$0xff]
        %v1476 = vld [vmem:[#allocation7 + $0x28] sm:$0xff]
        %v1477 = vld [vmem:[#allocation7 + $0x30] sm:$0xff]
        %v1478 = vld [vmem:[#allocation7 + $0x38] sm:$0xff]
        %v1479 = vld [vmem:[#allocation7 + $0x40] sm:$0xff]
        %v1480 = vld [vmem:[#allocation7 + $0x48] sm:$0xff]
        %v1481 = vld [vmem:[#allocation7 + $0x50] sm:$0xff]
        %v1482 = vld [vmem:[#allocation7 + $0x58] sm:$0xff]
        %v1483 = vld [vmem:[#allocation7 + $0x60] sm:$0xff]
        %v1484 = vld [vmem:[#allocation7 + $0x68] sm:$0xff]
        %v1485 = vld [vmem:[#allocation7 + $0x70] sm:$0xff]
        %v1486 = vld [vmem:[#allocation7 + $0x78] sm:$0xff]
        %v1487 = vld [vmem:[#allocation7 + $0x80] sm:$0xff]
        %v1488 = vld [vmem:[#allocation7 + $0x88] sm:$0xff]
        %v1489 = vld [vmem:[#allocation7 + $0x90] sm:$0xff]
        %v1490 = vld [vmem:[#allocation7 + $0x98] sm:$0xff]
        %v1491 = vld [vmem:[#allocation7 + $0xa0] sm:$0xff]
        %v1492 = vld [vmem:[#allocation7 + $0xa8] sm:$0xff]
        %v1493 = vld [vmem:[#allocation7 + $0xb0] sm:$0xff]
        %v1494 = vld [vmem:[#allocation7 + $0xb8] sm:$0xff]
        %v1495 = vld [vmem:[#allocation7 + $0xc0] sm:$0xff]
        %v1496 = vld [vmem:[#allocation7 + $0xc8] sm:$0xff]
        %v1497 = vld [vmem:[#allocation7 + $0xd0] sm:$0xff]
        %v1498 = vld [vmem:[#allocation7 + $0xd8] sm:$0xff]
        %v1499 = vld [vmem:[#allocation7 + $0xe0] sm:$0xff]
        %v1500 = vld [vmem:[#allocation7 + $0xe8] sm:$0xff]
        %v1501 = vld [vmem:[#allocation7 + $0xf0] sm:$0xff]
        %v1502 = vld [vmem:[#allocation7 + $0xf8] sm:$0xff]
        %v1503 = vld [vmem:[%s4] sm:$0x3]
        %v1504 = vpack.c.bf16 %v1345, %v1343
        %v1505 = vpack.c.bf16 %v1346, %v1344
        %v1506 = vpack.c.bf16 %v1349, %v1347
        %v1507 = vpack.c.bf16 %v1350, %v1348
        %v1508 = vpack.c.bf16 %v1353, %v1351
        %v1509 = vpack.c.bf16 %v1354, %v1352
        %v1510 = vpack.c.bf16 %v1357, %v1355
        %v1511 = vpack.c.bf16 %v1358, %v1356
        %v1512 = vpack.c.bf16 %v1361, %v1359
        %v1513 = vpack.c.bf16 %v1362, %v1360
        %v1514 = vpack.c.bf16 %v1365, %v1363
        %v1515 = vpack.c.bf16 %v1366, %v1364
        %v1516 = vpack.c.bf16 %v1369, %v1367
        %v1517 = vpack.c.bf16 %v1370, %v1368
        %v1518 = vpack.c.bf16 %v1373, %v1371
        %v1519 = vpack.c.bf16 %v1374, %v1372
        %v1520 = vpack.c.bf16 %v1377, %v1375
        %v1521 = vpack.c.bf16 %v1378, %v1376
        %v1522 = vpack.c.bf16 %v1381, %v1379
        %v1523 = vpack.c.bf16 %v1382, %v1380
        %v1524 = vpack.c.bf16 %v1385, %v1383
        %v1525 = vpack.c.bf16 %v1386, %v1384
        %v1526 = vpack.c.bf16 %v1389, %v1387
        %v1527 = vpack.c.bf16 %v1390, %v1388
        %v1528 = vpack.c.bf16 %v1393, %v1391
        %v1529 = vpack.c.bf16 %v1394, %v1392
        %v1530 = vpack.c.bf16 %v1397, %v1395
        %v1531 = vpack.c.bf16 %v1398, %v1396
        %v1532 = vpack.c.bf16 %v1401, %v1399
        %v1533 = vpack.c.bf16 %v1402, %v1400
        %v1534 = vpack.c.bf16 %v1405, %v1403
        %v1535 = vpack.c.bf16 %v1406, %v1404
        %v1536 = vpack.c.bf16 %v1409, %v1407
        %v1537 = vpack.c.bf16 %v1410, %v1408
        %v1538 = vpack.c.bf16 %v1413, %v1411
        %v1539 = vpack.c.bf16 %v1414, %v1412
        %v1540 = vpack.c.bf16 %v1417, %v1415
        %v1541 = vpack.c.bf16 %v1418, %v1416
        %v1542 = vpack.c.bf16 %v1421, %v1419
        %v1543 = vpack.c.bf16 %v1422, %v1420
        %v1544 = vpack.c.bf16 %v1425, %v1423
        %v1545 = vpack.c.bf16 %v1426, %v1424
        %v1546 = vpack.c.bf16 %v1429, %v1427
        %v1547 = vpack.c.bf16 %v1430, %v1428
        %v1548 = vpack.c.bf16 %v1433, %v1431
        %v1549 = vpack.c.bf16 %v1434, %v1432
        %v1550 = vpack.c.bf16 %v1437, %v1435
        %v1551 = vpack.c.bf16 %v1438, %v1436
        %v1552 = vpack.c.bf16 %v1441, %v1439
        %v1553 = vpack.c.bf16 %v1442, %v1440
        %v1554 = vpack.c.bf16 %v1445, %v1443
        %v1555 = vpack.c.bf16 %v1446, %v1444
        %v1556 = vpack.c.bf16 %v1449, %v1447
        %v1557 = vpack.c.bf16 %v1450, %v1448
        %v1558 = vpack.c.bf16 %v1453, %v1451
        %v1559 = vpack.c.bf16 %v1454, %v1452
        %v1560 = vpack.c.bf16 %v1457, %v1455
        %v1561 = vpack.c.bf16 %v1458, %v1456
        %v1562 = vpack.c.bf16 %v1461, %v1459
        %v1563 = vpack.c.bf16 %v1462, %v1460
        %v1564 = vpack.c.bf16 %v1465, %v1463
        %v1565 = vpack.c.bf16 %v1466, %v1464
        %v1566 = vpack.c.bf16 %v1469, %v1467
        %v1567 = vpack.c.bf16 %v1470, %v1468
        %v1569 = vlaneseq
        %v1570 = vshrl.u32 %v1569, 7
        %v1571 = vsub.s32 0, %v1570
        %v1572 = vrot.slane %v1503, %v1571
        %v1573 = vlaneseq
        %v1574 = vshrl.u32 %v1573, 7
        %v1575 = vsub.s32 1, %v1574
        %v1576 = vrot.slane %v1503, %v1575
        %v1611 = vunpack.c.l.b16 %v1471
        %v1612 = vunpack.c.h.b16 %v1471
        %v1613 = vunpack.c.l.b16 %v1472
        %v1614 = vunpack.c.h.b16 %v1472
        %v1615 = vunpack.c.l.b16 %v1473
        %v1616 = vunpack.c.h.b16 %v1473
        %v1617 = vunpack.c.l.b16 %v1474
        %v1618 = vunpack.c.h.b16 %v1474
        %v1619 = vunpack.c.l.b16 %v1475
        %v1620 = vunpack.c.h.b16 %v1475
        %v1621 = vunpack.c.l.b16 %v1476
        %v1622 = vunpack.c.h.b16 %v1476
        %v1623 = vunpack.c.l.b16 %v1477
        %v1624 = vunpack.c.h.b16 %v1477
        %v1625 = vunpack.c.l.b16 %v1478
        %v1626 = vunpack.c.h.b16 %v1478
        %v1627 = vunpack.c.l.b16 %v1479
        %v1628 = vunpack.c.h.b16 %v1479
        %v1629 = vunpack.c.l.b16 %v1480
        %v1630 = vunpack.c.h.b16 %v1480
        %v1631 = vunpack.c.l.b16 %v1481
        %v1632 = vunpack.c.h.b16 %v1481
        %v1633 = vunpack.c.l.b16 %v1482
        %v1634 = vunpack.c.h.b16 %v1482
        %v1635 = vunpack.c.l.b16 %v1483
        %v1636 = vunpack.c.h.b16 %v1483
        %v1637 = vunpack.c.l.b16 %v1484
        %v1638 = vunpack.c.h.b16 %v1484
        %v1639 = vunpack.c.l.b16 %v1485
        %v1640 = vunpack.c.h.b16 %v1485
        %v1641 = vunpack.c.l.b16 %v1486
        %v1642 = vunpack.c.h.b16 %v1486
        %v1643 = vunpack.c.l.b16 %v1487
        %v1644 = vunpack.c.h.b16 %v1487
        %v1645 = vunpack.c.l.b16 %v1488
        %v1646 = vunpack.c.h.b16 %v1488
        %v1647 = vunpack.c.l.b16 %v1489
        %v1648 = vunpack.c.h.b16 %v1489
        %v1649 = vunpack.c.l.b16 %v1490
        %v1650 = vunpack.c.h.b16 %v1490
        %v1651 = vunpack.c.l.b16 %v1491
        %v1652 = vunpack.c.h.b16 %v1491
        %v1653 = vunpack.c.l.b16 %v1492
        %v1654 = vunpack.c.h.b16 %v1492
        %v1655 = vunpack.c.l.b16 %v1493
        %v1656 = vunpack.c.h.b16 %v1493
        %v1657 = vunpack.c.l.b16 %v1494
        %v1658 = vunpack.c.h.b16 %v1494
        %v1659 = vunpack.c.l.b16 %v1495
        %v1660 = vunpack.c.h.b16 %v1495
        %v1661 = vunpack.c.l.b16 %v1496
        %v1662 = vunpack.c.h.b16 %v1496
        %v1663 = vunpack.c.l.b16 %v1497
        %v1664 = vunpack.c.h.b16 %v1497
        %v1665 = vunpack.c.l.b16 %v1498
        %v1666 = vunpack.c.h.b16 %v1498
        %v1667 = vunpack.c.l.b16 %v1499
        %v1668 = vunpack.c.h.b16 %v1499
        %v1669 = vunpack.c.l.b16 %v1500
        %v1670 = vunpack.c.h.b16 %v1500
        %v1671 = vunpack.c.l.b16 %v1501
        %v1672 = vunpack.c.h.b16 %v1501
        %v1673 = vunpack.c.l.b16 %v1502
        %v1674 = vunpack.c.h.b16 %v1502
        %v1675 = vpack.c.b16 %v1613, %v1611
        %v1676 = vpack.c.b16 %v1614, %v1612
        %v1677 = vpack.c.b16 %v1617, %v1615
        %v1678 = vpack.c.b16 %v1618, %v1616
        %v1679 = vpack.c.b16 %v1621, %v1619
        %v1680 = vpack.c.b16 %v1622, %v1620
        %v1681 = vpack.c.b16 %v1625, %v1623
        %v1682 = vpack.c.b16 %v1626, %v1624
        %v1683 = vpack.c.b16 %v1629, %v1627
        %v1684 = vpack.c.b16 %v1630, %v1628
        %v1685 = vpack.c.b16 %v1633, %v1631
        %v1686 = vpack.c.b16 %v1634, %v1632
        %v1687 = vpack.c.b16 %v1637, %v1635
        %v1688 = vpack.c.b16 %v1638, %v1636
        %v1689 = vpack.c.b16 %v1641, %v1639
        %v1690 = vpack.c.b16 %v1642, %v1640
        %v1691 = vpack.c.b16 %v1645, %v1643
        %v1692 = vpack.c.b16 %v1646, %v1644
        %v1693 = vpack.c.b16 %v1649, %v1647
        %v1694 = vpack.c.b16 %v1650, %v1648
        %v1695 = vpack.c.b16 %v1653, %v1651
        %v1696 = vpack.c.b16 %v1654, %v1652
        %v1697 = vpack.c.b16 %v1657, %v1655
        %v1698 = vpack.c.b16 %v1658, %v1656
        %v1699 = vpack.c.b16 %v1661, %v1659
        %v1700 = vpack.c.b16 %v1662, %v1660
        %v1701 = vpack.c.b16 %v1665, %v1663
        %v1702 = vpack.c.b16 %v1666, %v1664
        %v1703 = vpack.c.b16 %v1669, %v1667
        %v1704 = vpack.c.b16 %v1670, %v1668
        %v1705 = vpack.c.b16 %v1673, %v1671
        %v1706 = vpack.c.b16 %v1674, %v1672
        %1739 = vmatprep.subr.bf16.mxu0 %v1676
        %1740 = vmatpush1.bf16.msra.mxu0 %v1675
        %1741 = vmatprep.subr.bf16.mxu0 %v1678
        %1742 = vmatpush1.bf16.msra.mxu0 %v1677
        %1743 = vmatprep.subr.bf16.mxu0 %v1680
        %1744 = vmatpush1.bf16.msra.mxu0 %v1679
        %1745 = vmatprep.subr.bf16.mxu0 %v1682
        %1746 = vmatpush1.bf16.msra.mxu0 %v1681
        %1747 = vmatprep.subr.bf16.mxu0 %v1684
        %1748 = vmatpush1.bf16.msra.mxu0 %v1683
        %1749 = vmatprep.subr.bf16.mxu0 %v1686
        %1750 = vmatpush1.bf16.msra.mxu0 %v1685
        %1751 = vmatprep.subr.bf16.mxu0 %v1688
        %1752 = vmatpush1.bf16.msra.mxu0 %v1687
        %1753 = vmatprep.subr.bf16.mxu0 %v1690
        %1754 = vmatpush1.bf16.msra.mxu0 %v1689
        %1755 = vmatprep.subr.bf16.mxu0 %v1692
        %1756 = vmatpush1.bf16.msra.mxu0 %v1691
        %1757 = vmatprep.subr.bf16.mxu0 %v1694
        %1758 = vmatpush1.bf16.msra.mxu0 %v1693
        %1759 = vmatprep.subr.bf16.mxu0 %v1696
        %1760 = vmatpush1.bf16.msra.mxu0 %v1695
        %1761 = vmatprep.subr.bf16.mxu0 %v1698
        %1762 = vmatpush1.bf16.msra.mxu0 %v1697
        %1763 = vmatprep.subr.bf16.mxu0 %v1700
        %1764 = vmatpush1.bf16.msra.mxu0 %v1699
        %1765 = vmatprep.subr.bf16.mxu0 %v1702
        %1766 = vmatpush1.bf16.msra.mxu0 %v1701
        %1767 = vmatprep.subr.bf16.mxu0 %v1704
        %1768 = vmatpush1.bf16.msra.mxu0 %v1703
        %1769 = vmatprep.subr.bf16.mxu0 %v1706
        %1770 = vmatpush1.bf16.msra.mxu0 %v1705
        %1771 = vmatprep.mubr.bf16.mxu0 %v1505
        %1772 = vmatmul.mubr.bf16.gmra.mrb[0].mxu0 %v1504
        %v1773 = vpop.f32.mrb[0].mxu0
        %v1774 = vadd.f32 %v1572, %v1773
        %v1775 = vpop.f32.mrb[0].mxu0
        %v1776 = vadd.f32 %v1576, %v1775
        %v1777 = vpop.f32.mrb[0].mxu0
        %v1778 = vadd.f32 %v1572, %v1777
        %v1779 = vpop.f32.mrb[0].mxu0
        %v1780 = vadd.f32 %v1576, %v1779
        %1781 = vmatprep.mubr.bf16.mxu0 %v1507
        %1782 = vmatmul.mubr.bf16.gmra.mrb[0].mxu0 %v1506
        %v1783 = vpop.f32.mrb[0].mxu0
        %v1784 = vadd.f32 %v1572, %v1783
        %v1785 = vpop.f32.mrb[0].mxu0
        %v1786 = vadd.f32 %v1576, %v1785
        %v1787 = vpop.f32.mrb[0].mxu0
        %v1788 = vadd.f32 %v1572, %v1787
        %v1789 = vpop.f32.mrb[0].mxu0
        %v1790 = vadd.f32 %v1576, %v1789
        %1791 = vmatprep.mubr.bf16.mxu0 %v1509
        %1792 = vmatmul.mubr.bf16.gmra.mrb[0].mxu0 %v1508
        %v1793 = vpop.f32.mrb[0].mxu0
        %v1794 = vadd.f32 %v1572, %v1793
        %v1795 = vpop.f32.mrb[0].mxu0
        %v1796 = vadd.f32 %v1576, %v1795
        %v1797 = vpop.f32.mrb[0].mxu0
        %v1798 = vadd.f32 %v1572, %v1797
        %v1799 = vpop.f32.mrb[0].mxu0
        %v1800 = vadd.f32 %v1576, %v1799
        %1801 = vmatprep.mubr.bf16.mxu0 %v1511
        %1802 = vmatmul.mubr.bf16.gmra.mrb[0].mxu0 %v1510
        %v1803 = vpop.f32.mrb[0].mxu0
        %v1804 = vadd.f32 %v1572, %v1803
        %v1805 = vpop.f32.mrb[0].mxu0
        %v1806 = vadd.f32 %v1576, %v1805
        %v1807 = vpop.f32.mrb[0].mxu0
        %v1808 = vadd.f32 %v1572, %v1807
        %v1809 = vpop.f32.mrb[0].mxu0
        %v1810 = vadd.f32 %v1576, %v1809
        %1811 = vmatprep.mubr.bf16.mxu0 %v1513
        %1812 = vmatmul.mubr.bf16.gmra.mrb[0].mxu0 %v1512
        %v1813 = vpop.f32.mrb[0].mxu0
        %v1814 = vadd.f32 %v1572, %v1813
        %v1815 = vpop.f32.mrb[0].mxu0
        %v1816 = vadd.f32 %v1576, %v1815
        %v1817 = vpop.f32.mrb[0].mxu0
        %v1818 = vadd.f32 %v1572, %v1817
        %v1819 = vpop.f32.mrb[0].mxu0
        %v1820 = vadd.f32 %v1576, %v1819
        %1821 = vmatprep.mubr.bf16.mxu0 %v1515
        %1822 = vmatmul.mubr.bf16.gmra.mrb[0].mxu0 %v1514
        %v1823 = vpop.f32.mrb[0].mxu0
        %v1824 = vadd.f32 %v1572, %v1823
        %v1825 = vpop.f32.mrb[0].mxu0
        %v1826 = vadd.f32 %v1576, %v1825
        %v1827 = vpop.f32.mrb[0].mxu0
        %v1828 = vadd.f32 %v1572, %v1827
        %v1829 = vpop.f32.mrb[0].mxu0
        %v1830 = vadd.f32 %v1576, %v1829
        %1831 = vmatprep.mubr.bf16.mxu0 %v1517
        %1832 = vmatmul.mubr.bf16.gmra.mrb[0].mxu0 %v1516
        %v1833 = vpop.f32.mrb[0].mxu0
        %v1834 = vadd.f32 %v1572, %v1833
        %v1835 = vpop.f32.mrb[0].mxu0
        %v1836 = vadd.f32 %v1576, %v1835
        %v1837 = vpop.f32.mrb[0].mxu0
        %v1838 = vadd.f32 %v1572, %v1837
        %v1839 = vpop.f32.mrb[0].mxu0
        %v1840 = vadd.f32 %v1576, %v1839
        %1841 = vmatprep.mubr.bf16.mxu0 %v1519
        %1842 = vmatmul.mubr.bf16.gmra.mrb[0].mxu0 %v1518
        %v1843 = vpop.f32.mrb[0].mxu0
        %v1844 = vadd.f32 %v1572, %v1843
        %v1845 = vpop.f32.mrb[0].mxu0
        %v1846 = vadd.f32 %v1576, %v1845
        %v1847 = vpop.f32.mrb[0].mxu0
        %v1848 = vadd.f32 %v1572, %v1847
        %v1849 = vpop.f32.mrb[0].mxu0
        %v1850 = vadd.f32 %v1576, %v1849
        %1851 = vmatprep.mubr.bf16.mxu0 %v1521
        %1852 = vmatmul.mubr.bf16.gmra.mrb[0].mxu0 %v1520
        %v1853 = vpop.f32.mrb[0].mxu0
        %v1854 = vadd.f32 %v1572, %v1853
        %v1855 = vpop.f32.mrb[0].mxu0
        %v1856 = vadd.f32 %v1576, %v1855
        %v1857 = vpop.f32.mrb[0].mxu0
        %v1858 = vadd.f32 %v1572, %v1857
        %v1859 = vpop.f32.mrb[0].mxu0
        %v1860 = vadd.f32 %v1576, %v1859
        %1861 = vmatprep.mubr.bf16.mxu0 %v1523
        %1862 = vmatmul.mubr.bf16.gmra.mrb[0].mxu0 %v1522
        %v1863 = vpop.f32.mrb[0].mxu0
        %v1864 = vadd.f32 %v1572, %v1863
        %v1865 = vpop.f32.mrb[0].mxu0
        %v1866 = vadd.f32 %v1576, %v1865
        %v1867 = vpop.f32.mrb[0].mxu0
        %v1868 = vadd.f32 %v1572, %v1867
        %v1869 = vpop.f32.mrb[0].mxu0
        %v1870 = vadd.f32 %v1576, %v1869
        %1871 = vmatprep.mubr.bf16.mxu0 %v1525
        %1872 = vmatmul.mubr.bf16.gmra.mrb[0].mxu0 %v1524
        %v1873 = vpop.f32.mrb[0].mxu0
        %v1874 = vadd.f32 %v1572, %v1873
        %v1875 = vpop.f32.mrb[0].mxu0
        %v1876 = vadd.f32 %v1576, %v1875
        %v1877 = vpop.f32.mrb[0].mxu0
        %v1878 = vadd.f32 %v1572, %v1877
        %v1879 = vpop.f32.mrb[0].mxu0
        %v1880 = vadd.f32 %v1576, %v1879
        %1881 = vmatprep.mubr.bf16.mxu0 %v1527
        %1882 = vmatmul.mubr.bf16.gmra.mrb[0].mxu0 %v1526
        %v1883 = vpop.f32.mrb[0].mxu0
        %v1884 = vadd.f32 %v1572, %v1883
        %v1885 = vpop.f32.mrb[0].mxu0
        %v1886 = vadd.f32 %v1576, %v1885
        %v1887 = vpop.f32.mrb[0].mxu0
        %v1888 = vadd.f32 %v1572, %v1887
        %v1889 = vpop.f32.mrb[0].mxu0
        %v1890 = vadd.f32 %v1576, %v1889
        %1891 = vmatprep.mubr.bf16.mxu0 %v1529
        %1892 = vmatmul.mubr.bf16.gmra.mrb[0].mxu0 %v1528
        %v1893 = vpop.f32.mrb[0].mxu0
        %v1894 = vadd.f32 %v1572, %v1893
        %v1895 = vpop.f32.mrb[0].mxu0
        %v1896 = vadd.f32 %v1576, %v1895
        %v1897 = vpop.f32.mrb[0].mxu0
        %v1898 = vadd.f32 %v1572, %v1897
        %v1899 = vpop.f32.mrb[0].mxu0
        %v1900 = vadd.f32 %v1576, %v1899
        %1901 = vmatprep.mubr.bf16.mxu0 %v1531
        %1902 = vmatmul.mubr.bf16.gmra.mrb[0].mxu0 %v1530
        %v1903 = vpop.f32.mrb[0].mxu0
        %v1904 = vadd.f32 %v1572, %v1903
        %v1905 = vpop.f32.mrb[0].mxu0
        %v1906 = vadd.f32 %v1576, %v1905
        %v1907 = vpop.f32.mrb[0].mxu0
        %v1908 = vadd.f32 %v1572, %v1907
        %v1909 = vpop.f32.mrb[0].mxu0
        %v1910 = vadd.f32 %v1576, %v1909
        %1911 = vmatprep.mubr.bf16.mxu0 %v1533
        %1912 = vmatmul.mubr.bf16.gmra.mrb[0].mxu0 %v1532
        %v1913 = vpop.f32.mrb[0].mxu0
        %v1914 = vadd.f32 %v1572, %v1913
        %v1915 = vpop.f32.mrb[0].mxu0
        %v1916 = vadd.f32 %v1576, %v1915
        %v1917 = vpop.f32.mrb[0].mxu0
        %v1918 = vadd.f32 %v1572, %v1917
        %v1919 = vpop.f32.mrb[0].mxu0
        %v1920 = vadd.f32 %v1576, %v1919
        %1921 = vmatprep.mubr.bf16.mxu0 %v1535
        %1922 = vmatmul.mubr.bf16.gmra.mrb[0].mxu0 %v1534
        %v1923 = vpop.f32.mrb[0].mxu0
        %v1924 = vadd.f32 %v1572, %v1923
        %v1925 = vpop.f32.mrb[0].mxu0
        %v1926 = vadd.f32 %v1576, %v1925
        %v1927 = vpop.f32.mrb[0].mxu0
        %v1928 = vadd.f32 %v1572, %v1927
        %v1929 = vpop.f32.mrb[0].mxu0
        %v1930 = vadd.f32 %v1576, %v1929
        %1931 = vmatprep.mubr.bf16.mxu0 %v1537
        %1932 = vmatmul.mubr.bf16.gmra.mrb[0].mxu0 %v1536
        %v1933 = vpop.f32.mrb[0].mxu0
        %v1934 = vadd.f32 %v1572, %v1933
        %v1935 = vpop.f32.mrb[0].mxu0
        %v1936 = vadd.f32 %v1576, %v1935
        %v1937 = vpop.f32.mrb[0].mxu0
        %v1938 = vadd.f32 %v1572, %v1937
        %v1939 = vpop.f32.mrb[0].mxu0
        %v1940 = vadd.f32 %v1576, %v1939
        %1941 = vmatprep.mubr.bf16.mxu0 %v1539
        %1942 = vmatmul.mubr.bf16.gmra.mrb[0].mxu0 %v1538
        %v1943 = vpop.f32.mrb[0].mxu0
        %v1944 = vadd.f32 %v1572, %v1943
        %v1945 = vpop.f32.mrb[0].mxu0
        %v1946 = vadd.f32 %v1576, %v1945
        %v1947 = vpop.f32.mrb[0].mxu0
        %v1948 = vadd.f32 %v1572, %v1947
        %v1949 = vpop.f32.mrb[0].mxu0
        %v1950 = vadd.f32 %v1576, %v1949
        %1951 = vmatprep.mubr.bf16.mxu0 %v1541
        %1952 = vmatmul.mubr.bf16.gmra.mrb[0].mxu0 %v1540
        %v1953 = vpop.f32.mrb[0].mxu0
        %v1954 = vadd.f32 %v1572, %v1953
        %v1955 = vpop.f32.mrb[0].mxu0
        %v1956 = vadd.f32 %v1576, %v1955
        %v1957 = vpop.f32.mrb[0].mxu0
        %v1958 = vadd.f32 %v1572, %v1957
        %v1959 = vpop.f32.mrb[0].mxu0
        %v1960 = vadd.f32 %v1576, %v1959
        %1961 = vmatprep.mubr.bf16.mxu0 %v1543
        %1962 = vmatmul.mubr.bf16.gmra.mrb[0].mxu0 %v1542
        %v1963 = vpop.f32.mrb[0].mxu0
        %v1964 = vadd.f32 %v1572, %v1963
        %v1965 = vpop.f32.mrb[0].mxu0
        %v1966 = vadd.f32 %v1576, %v1965
        %v1967 = vpop.f32.mrb[0].mxu0
        %v1968 = vadd.f32 %v1572, %v1967
        %v1969 = vpop.f32.mrb[0].mxu0
        %v1970 = vadd.f32 %v1576, %v1969
        %1971 = vmatprep.mubr.bf16.mxu0 %v1545
        %1972 = vmatmul.mubr.bf16.gmra.mrb[0].mxu0 %v1544
        %v1973 = vpop.f32.mrb[0].mxu0
        %v1974 = vadd.f32 %v1572, %v1973
        %v1975 = vpop.f32.mrb[0].mxu0
        %v1976 = vadd.f32 %v1576, %v1975
        %v1977 = vpop.f32.mrb[0].mxu0
        %v1978 = vadd.f32 %v1572, %v1977
        %v1979 = vpop.f32.mrb[0].mxu0
        %v1980 = vadd.f32 %v1576, %v1979
        %1981 = vmatprep.mubr.bf16.mxu0 %v1547
        %1982 = vmatmul.mubr.bf16.gmra.mrb[0].mxu0 %v1546
        %v1983 = vpop.f32.mrb[0].mxu0
        %v1984 = vadd.f32 %v1572, %v1983
        %v1985 = vpop.f32.mrb[0].mxu0
        %v1986 = vadd.f32 %v1576, %v1985
        %v1987 = vpop.f32.mrb[0].mxu0
        %v1988 = vadd.f32 %v1572, %v1987
        %v1989 = vpop.f32.mrb[0].mxu0
        %v1990 = vadd.f32 %v1576, %v1989
        %1991 = vmatprep.mubr.bf16.mxu0 %v1549
        %1992 = vmatmul.mubr.bf16.gmra.mrb[0].mxu0 %v1548
        %v1993 = vpop.f32.mrb[0].mxu0
        %v1994 = vadd.f32 %v1572, %v1993
        %v1995 = vpop.f32.mrb[0].mxu0
        %v1996 = vadd.f32 %v1576, %v1995
        %v1997 = vpop.f32.mrb[0].mxu0
        %v1998 = vadd.f32 %v1572, %v1997
        %v1999 = vpop.f32.mrb[0].mxu0
        %v2000 = vadd.f32 %v1576, %v1999
        %2001 = vmatprep.mubr.bf16.mxu0 %v1551
        %2002 = vmatmul.mubr.bf16.gmra.mrb[0].mxu0 %v1550
        %v2003 = vpop.f32.mrb[0].mxu0
        %v2004 = vadd.f32 %v1572, %v2003
        %v2005 = vpop.f32.mrb[0].mxu0
        %v2006 = vadd.f32 %v1576, %v2005
        %v2007 = vpop.f32.mrb[0].mxu0
        %v2008 = vadd.f32 %v1572, %v2007
        %v2009 = vpop.f32.mrb[0].mxu0
        %v2010 = vadd.f32 %v1576, %v2009
        %2011 = vmatprep.mubr.bf16.mxu0 %v1553
        %2012 = vmatmul.mubr.bf16.gmra.mrb[0].mxu0 %v1552
        %v2013 = vpop.f32.mrb[0].mxu0
        %v2014 = vadd.f32 %v1572, %v2013
        %v2015 = vpop.f32.mrb[0].mxu0
        %v2016 = vadd.f32 %v1576, %v2015
        %v2017 = vpop.f32.mrb[0].mxu0
        %v2018 = vadd.f32 %v1572, %v2017
        %v2019 = vpop.f32.mrb[0].mxu0
        %v2020 = vadd.f32 %v1576, %v2019
        %2021 = vmatprep.mubr.bf16.mxu0 %v1555
        %2022 = vmatmul.mubr.bf16.gmra.mrb[0].mxu0 %v1554
        %v2023 = vpop.f32.mrb[0].mxu0
        %v2024 = vadd.f32 %v1572, %v2023
        %v2025 = vpop.f32.mrb[0].mxu0
        %v2026 = vadd.f32 %v1576, %v2025
        %v2027 = vpop.f32.mrb[0].mxu0
        %v2028 = vadd.f32 %v1572, %v2027
        %v2029 = vpop.f32.mrb[0].mxu0
        %v2030 = vadd.f32 %v1576, %v2029
        %2031 = vmatprep.mubr.bf16.mxu0 %v1557
        %2032 = vmatmul.mubr.bf16.gmra.mrb[0].mxu0 %v1556
        %v2033 = vpop.f32.mrb[0].mxu0
        %v2034 = vadd.f32 %v1572, %v2033
        %v2035 = vpop.f32.mrb[0].mxu0
        %v2036 = vadd.f32 %v1576, %v2035
        %v2037 = vpop.f32.mrb[0].mxu0
        %v2038 = vadd.f32 %v1572, %v2037
        %v2039 = vpop.f32.mrb[0].mxu0
        %v2040 = vadd.f32 %v1576, %v2039
        %2041 = vmatprep.mubr.bf16.mxu0 %v1559
        %2042 = vmatmul.mubr.bf16.gmra.mrb[0].mxu0 %v1558
        %v2043 = vpop.f32.mrb[0].mxu0
        %v2044 = vadd.f32 %v1572, %v2043
        %v2045 = vpop.f32.mrb[0].mxu0
        %v2046 = vadd.f32 %v1576, %v2045
        %v2047 = vpop.f32.mrb[0].mxu0
        %v2048 = vadd.f32 %v1572, %v2047
        %v2049 = vpop.f32.mrb[0].mxu0
        %v2050 = vadd.f32 %v1576, %v2049
        %2051 = vmatprep.mubr.bf16.mxu0 %v1561
        %2052 = vmatmul.mubr.bf16.gmra.mrb[0].mxu0 %v1560
        %v2053 = vpop.f32.mrb[0].mxu0
        %v2054 = vadd.f32 %v1572, %v2053
        %v2055 = vpop.f32.mrb[0].mxu0
        %v2056 = vadd.f32 %v1576, %v2055
        %v2057 = vpop.f32.mrb[0].mxu0
        %v2058 = vadd.f32 %v1572, %v2057
        %v2059 = vpop.f32.mrb[0].mxu0
        %v2060 = vadd.f32 %v1576, %v2059
        %2061 = vmatprep.mubr.bf16.mxu0 %v1563
        %2062 = vmatmul.mubr.bf16.gmra.mrb[0].mxu0 %v1562
        %v2063 = vpop.f32.mrb[0].mxu0
        %v2064 = vadd.f32 %v1572, %v2063
        %v2065 = vpop.f32.mrb[0].mxu0
        %v2066 = vadd.f32 %v1576, %v2065
        %v2067 = vpop.f32.mrb[0].mxu0
        %v2068 = vadd.f32 %v1572, %v2067
        %v2069 = vpop.f32.mrb[0].mxu0
        %v2070 = vadd.f32 %v1576, %v2069
        %2071 = vmatprep.mubr.bf16.mxu0 %v1565
        %2072 = vmatmul.mubr.bf16.gmra.mrb[0].mxu0 %v1564
        %v2073 = vpop.f32.mrb[0].mxu0
        %v2074 = vadd.f32 %v1572, %v2073
        %v2075 = vpop.f32.mrb[0].mxu0
        %v2076 = vadd.f32 %v1576, %v2075
        %v2077 = vpop.f32.mrb[0].mxu0
        %v2078 = vadd.f32 %v1572, %v2077
        %v2079 = vpop.f32.mrb[0].mxu0
        %v2080 = vadd.f32 %v1576, %v2079
        %2081 = vmatprep.mubr.bf16.mxu0 %v1567
        %2082 = vmatmul.mubr.bf16.gmra.mrb[0].mxu0 %v1566
        %v2083 = vpop.f32.mrb[0].mxu0
        %v2084 = vadd.f32 %v1572, %v2083
        %v2085 = vpop.f32.mrb[0].mxu0
        %v2086 = vadd.f32 %v1576, %v2085
        %v2087 = vpop.f32.mrb[0].mxu0
        %v2088 = vadd.f32 %v1572, %v2087
        %v2089 = vpop.f32.mrb[0].mxu0
        %v2090 = vadd.f32 %v1576, %v2089
        %2091 = vdwg.mxu0
        %v2092 = vmax.f32 %v1774, 0.0
        %v2093 = vmax.f32 %v1776, 0.0
        %v2094 = vmax.f32 %v1778, 0.0
        %v2095 = vmax.f32 %v1780, 0.0
        %v2096 = vmax.f32 %v1784, 0.0
        %v2097 = vmax.f32 %v1786, 0.0
        %v2098 = vmax.f32 %v1788, 0.0
        %v2099 = vmax.f32 %v1790, 0.0
        %v2100 = vmax.f32 %v1794, 0.0
        %v2101 = vmax.f32 %v1796, 0.0
        %v2102 = vmax.f32 %v1798, 0.0
        %v2103 = vmax.f32 %v1800, 0.0
        %v2104 = vmax.f32 %v1804, 0.0
        %v2105 = vmax.f32 %v1806, 0.0
        %v2106 = vmax.f32 %v1808, 0.0
        %v2107 = vmax.f32 %v1810, 0.0
        %v2108 = vmax.f32 %v1814, 0.0
        %v2109 = vmax.f32 %v1816, 0.0
        %v2110 = vmax.f32 %v1818, 0.0
        %v2111 = vmax.f32 %v1820, 0.0
        %v2112 = vmax.f32 %v1824, 0.0
        %v2113 = vmax.f32 %v1826, 0.0
        %v2114 = vmax.f32 %v1828, 0.0
        %v2115 = vmax.f32 %v1830, 0.0
        %v2116 = vmax.f32 %v1834, 0.0
        %v2117 = vmax.f32 %v1836, 0.0
        %v2118 = vmax.f32 %v1838, 0.0
        %v2119 = vmax.f32 %v1840, 0.0
        %v2120 = vmax.f32 %v1844, 0.0
        %v2121 = vmax.f32 %v1846, 0.0
        %v2122 = vmax.f32 %v1848, 0.0
        %v2123 = vmax.f32 %v1850, 0.0
        %v2124 = vmax.f32 %v1854, 0.0
        %v2125 = vmax.f32 %v1856, 0.0
        %v2126 = vmax.f32 %v1858, 0.0
        %v2127 = vmax.f32 %v1860, 0.0
        %v2128 = vmax.f32 %v1864, 0.0
        %v2129 = vmax.f32 %v1866, 0.0
        %v2130 = vmax.f32 %v1868, 0.0
        %v2131 = vmax.f32 %v1870, 0.0
        %v2132 = vmax.f32 %v1874, 0.0
        %v2133 = vmax.f32 %v1876, 0.0
        %v2134 = vmax.f32 %v1878, 0.0
        %v2135 = vmax.f32 %v1880, 0.0
        %v2136 = vmax.f32 %v1884, 0.0
        %v2137 = vmax.f32 %v1886, 0.0
        %v2138 = vmax.f32 %v1888, 0.0
        %v2139 = vmax.f32 %v1890, 0.0
        %v2140 = vmax.f32 %v1894, 0.0
        %v2141 = vmax.f32 %v1896, 0.0
        %v2142 = vmax.f32 %v1898, 0.0
        %v2143 = vmax.f32 %v1900, 0.0
        %v2144 = vmax.f32 %v1904, 0.0
        %v2145 = vmax.f32 %v1906, 0.0
        %v2146 = vmax.f32 %v1908, 0.0
        %v2147 = vmax.f32 %v1910, 0.0
        %v2148 = vmax.f32 %v1914, 0.0
        %v2149 = vmax.f32 %v1916, 0.0
        %v2150 = vmax.f32 %v1918, 0.0
        %v2151 = vmax.f32 %v1920, 0.0
        %v2152 = vmax.f32 %v1924, 0.0
        %v2153 = vmax.f32 %v1926, 0.0
        %v2154 = vmax.f32 %v1928, 0.0
        %v2155 = vmax.f32 %v1930, 0.0
        %v2156 = vmax.f32 %v1934, 0.0
        %v2157 = vmax.f32 %v1936, 0.0
        %v2158 = vmax.f32 %v1938, 0.0
        %v2159 = vmax.f32 %v1940, 0.0
        %v2160 = vmax.f32 %v1944, 0.0
        %v2161 = vmax.f32 %v1946, 0.0
        %v2162 = vmax.f32 %v1948, 0.0
        %v2163 = vmax.f32 %v1950, 0.0
        %v2164 = vmax.f32 %v1954, 0.0
        %v2165 = vmax.f32 %v1956, 0.0
        %v2166 = vmax.f32 %v1958, 0.0
        %v2167 = vmax.f32 %v1960, 0.0
        %v2168 = vmax.f32 %v1964, 0.0
        %v2169 = vmax.f32 %v1966, 0.0
        %v2170 = vmax.f32 %v1968, 0.0
        %v2171 = vmax.f32 %v1970, 0.0
        %v2172 = vmax.f32 %v1974, 0.0
        %v2173 = vmax.f32 %v1976, 0.0
        %v2174 = vmax.f32 %v1978, 0.0
        %v2175 = vmax.f32 %v1980, 0.0
        %v2176 = vmax.f32 %v1984, 0.0
        %v2177 = vmax.f32 %v1986, 0.0
        %v2178 = vmax.f32 %v1988, 0.0
        %v2179 = vmax.f32 %v1990, 0.0
        %v2180 = vmax.f32 %v1994, 0.0
        %v2181 = vmax.f32 %v1996, 0.0
        %v2182 = vmax.f32 %v1998, 0.0
        %v2183 = vmax.f32 %v2000, 0.0
        %v2184 = vmax.f32 %v2004, 0.0
        %v2185 = vmax.f32 %v2006, 0.0
        %v2186 = vmax.f32 %v2008, 0.0
        %v2187 = vmax.f32 %v2010, 0.0
        %v2188 = vmax.f32 %v2014, 0.0
        %v2189 = vmax.f32 %v2016, 0.0
        %v2190 = vmax.f32 %v2018, 0.0
        %v2191 = vmax.f32 %v2020, 0.0
        %v2192 = vmax.f32 %v2024, 0.0
        %v2193 = vmax.f32 %v2026, 0.0
        %v2194 = vmax.f32 %v2028, 0.0
        %v2195 = vmax.f32 %v2030, 0.0
        %v2196 = vmax.f32 %v2034, 0.0
        %v2197 = vmax.f32 %v2036, 0.0
        %v2198 = vmax.f32 %v2038, 0.0
        %v2199 = vmax.f32 %v2040, 0.0
        %v2200 = vmax.f32 %v2044, 0.0
        %v2201 = vmax.f32 %v2046, 0.0
        %v2202 = vmax.f32 %v2048, 0.0
        %v2203 = vmax.f32 %v2050, 0.0
        %v2204 = vmax.f32 %v2054, 0.0
        %v2205 = vmax.f32 %v2056, 0.0
        %v2206 = vmax.f32 %v2058, 0.0
        %v2207 = vmax.f32 %v2060, 0.0
        %v2208 = vmax.f32 %v2064, 0.0
        %v2209 = vmax.f32 %v2066, 0.0
        %v2210 = vmax.f32 %v2068, 0.0
        %v2211 = vmax.f32 %v2070, 0.0
        %v2212 = vmax.f32 %v2074, 0.0
        %v2213 = vmax.f32 %v2076, 0.0
        %v2214 = vmax.f32 %v2078, 0.0
        %v2215 = vmax.f32 %v2080, 0.0
        %v2216 = vmax.f32 %v2084, 0.0
        %v2217 = vmax.f32 %v2086, 0.0
        %v2218 = vmax.f32 %v2088, 0.0
        %v2219 = vmax.f32 %v2090, 0.0
        %v2220 = vld [vmem:[#allocation8] sm:$0xff]
        %v2221 = vld [vmem:[#allocation8 + $0x8] sm:$0xff]
        %v2222 = vld [vmem:[#allocation8 + $0x10] sm:$0xff]
        %v2223 = vld [vmem:[#allocation8 + $0x18] sm:$0xff]
        %v2224 = vld [vmem:[#allocation8 + $0x20] sm:$0xff]
        %v2225 = vld [vmem:[#allocation8 + $0x28] sm:$0xff]
        %v2226 = vld [vmem:[#allocation8 + $0x30] sm:$0xff]
        %v2227 = vld [vmem:[#allocation8 + $0x38] sm:$0xff]
        %v2228 = vld [vmem:[#allocation8 + $0x40] sm:$0xff]
        %v2229 = vld [vmem:[#allocation8 + $0x48] sm:$0xff]
        %v2230 = vld [vmem:[#allocation8 + $0x50] sm:$0xff]
        %v2231 = vld [vmem:[#allocation8 + $0x58] sm:$0xff]
        %v2232 = vld [vmem:[#allocation8 + $0x60] sm:$0xff]
        %v2233 = vld [vmem:[#allocation8 + $0x68] sm:$0xff]
        %v2234 = vld [vmem:[#allocation8 + $0x70] sm:$0xff]
        %v2235 = vld [vmem:[#allocation8 + $0x78] sm:$0xff]
        %v2236 = vld [vmem:[#allocation8 + $0x80] sm:$0xff]
        %v2237 = vld [vmem:[#allocation8 + $0x88] sm:$0xff]
        %v2238 = vld [vmem:[#allocation8 + $0x90] sm:$0xff]
        %v2239 = vld [vmem:[#allocation8 + $0x98] sm:$0xff]
        %v2240 = vld [vmem:[#allocation8 + $0xa0] sm:$0xff]
        %v2241 = vld [vmem:[#allocation8 + $0xa8] sm:$0xff]
        %v2242 = vld [vmem:[#allocation8 + $0xb0] sm:$0xff]
        %v2243 = vld [vmem:[#allocation8 + $0xb8] sm:$0xff]
        %v2244 = vld [vmem:[#allocation8 + $0xc0] sm:$0xff]
        %v2245 = vld [vmem:[#allocation8 + $0xc8] sm:$0xff]
        %v2246 = vld [vmem:[#allocation8 + $0xd0] sm:$0xff]
        %v2247 = vld [vmem:[#allocation8 + $0xd8] sm:$0xff]
        %v2248 = vld [vmem:[#allocation8 + $0xe0] sm:$0xff]
        %v2249 = vld [vmem:[#allocation8 + $0xe8] sm:$0xff]
        %v2250 = vld [vmem:[#allocation8 + $0xf0] sm:$0xff]
        %v2251 = vld [vmem:[#allocation8 + $0xf8] sm:$0xff]
        %v2252 = vld [vmem:[%s6] sm:$0x3]
        %v2253 = vpack.c.bf16 %v2094, %v2092
        %v2254 = vpack.c.bf16 %v2095, %v2093
        %v2255 = vpack.c.bf16 %v2098, %v2096
        %v2256 = vpack.c.bf16 %v2099, %v2097
        %v2257 = vpack.c.bf16 %v2102, %v2100
        %v2258 = vpack.c.bf16 %v2103, %v2101
        %v2259 = vpack.c.bf16 %v2106, %v2104
        %v2260 = vpack.c.bf16 %v2107, %v2105
        %v2261 = vpack.c.bf16 %v2110, %v2108
        %v2262 = vpack.c.bf16 %v2111, %v2109
        %v2263 = vpack.c.bf16 %v2114, %v2112
        %v2264 = vpack.c.bf16 %v2115, %v2113
        %v2265 = vpack.c.bf16 %v2118, %v2116
        %v2266 = vpack.c.bf16 %v2119, %v2117
        %v2267 = vpack.c.bf16 %v2122, %v2120
        %v2268 = vpack.c.bf16 %v2123, %v2121
        %v2269 = vpack.c.bf16 %v2126, %v2124
        %v2270 = vpack.c.bf16 %v2127, %v2125
        %v2271 = vpack.c.bf16 %v2130, %v2128
        %v2272 = vpack.c.bf16 %v2131, %v2129
        %v2273 = vpack.c.bf16 %v2134, %v2132
        %v2274 = vpack.c.bf16 %v2135, %v2133
        %v2275 = vpack.c.bf16 %v2138, %v2136
        %v2276 = vpack.c.bf16 %v2139, %v2137
        %v2277 = vpack.c.bf16 %v2142, %v2140
        %v2278 = vpack.c.bf16 %v2143, %v2141
        %v2279 = vpack.c.bf16 %v2146, %v2144
        %v2280 = vpack.c.bf16 %v2147, %v2145
        %v2281 = vpack.c.bf16 %v2150, %v2148
        %v2282 = vpack.c.bf16 %v2151, %v2149
        %v2283 = vpack.c.bf16 %v2154, %v2152
        %v2284 = vpack.c.bf16 %v2155, %v2153
        %v2285 = vpack.c.bf16 %v2158, %v2156
        %v2286 = vpack.c.bf16 %v2159, %v2157
        %v2287 = vpack.c.bf16 %v2162, %v2160
        %v2288 = vpack.c.bf16 %v2163, %v2161
        %v2289 = vpack.c.bf16 %v2166, %v2164
        %v2290 = vpack.c.bf16 %v2167, %v2165
        %v2291 = vpack.c.bf16 %v2170, %v2168
        %v2292 = vpack.c.bf16 %v2171, %v2169
        %v2293 = vpack.c.bf16 %v2174, %v2172
        %v2294 = vpack.c.bf16 %v2175, %v2173
        %v2295 = vpack.c.bf16 %v2178, %v2176
        %v2296 = vpack.c.bf16 %v2179, %v2177
        %v2297 = vpack.c.bf16 %v2182, %v2180
        %v2298 = vpack.c.bf16 %v2183, %v2181
        %v2299 = vpack.c.bf16 %v2186, %v2184
        %v2300 = vpack.c.bf16 %v2187, %v2185
        %v2301 = vpack.c.bf16 %v2190, %v2188
        %v2302 = vpack.c.bf16 %v2191, %v2189
        %v2303 = vpack.c.bf16 %v2194, %v2192
        %v2304 = vpack.c.bf16 %v2195, %v2193
        %v2305 = vpack.c.bf16 %v2198, %v2196
        %v2306 = vpack.c.bf16 %v2199, %v2197
        %v2307 = vpack.c.bf16 %v2202, %v2200
        %v2308 = vpack.c.bf16 %v2203, %v2201
        %v2309 = vpack.c.bf16 %v2206, %v2204
        %v2310 = vpack.c.bf16 %v2207, %v2205
        %v2311 = vpack.c.bf16 %v2210, %v2208
        %v2312 = vpack.c.bf16 %v2211, %v2209
        %v2313 = vpack.c.bf16 %v2214, %v2212
        %v2314 = vpack.c.bf16 %v2215, %v2213
        %v2315 = vpack.c.bf16 %v2218, %v2216
        %v2316 = vpack.c.bf16 %v2219, %v2217
        %v2318 = vlaneseq
        %v2319 = vshrl.u32 %v2318, 7
        %v2320 = vsub.s32 0, %v2319
        %v2321 = vrot.slane %v2252, %v2320
        %v2322 = vlaneseq
        %v2323 = vshrl.u32 %v2322, 7
        %v2324 = vsub.s32 1, %v2323
        %v2325 = vrot.slane %v2252, %v2324
        %v2360 = vunpack.c.l.b16 %v2220
        %v2361 = vunpack.c.h.b16 %v2220
        %v2362 = vunpack.c.l.b16 %v2221
        %v2363 = vunpack.c.h.b16 %v2221
        %v2364 = vunpack.c.l.b16 %v2222
        %v2365 = vunpack.c.h.b16 %v2222
        %v2366 = vunpack.c.l.b16 %v2223
        %v2367 = vunpack.c.h.b16 %v2223
        %v2368 = vunpack.c.l.b16 %v2224
        %v2369 = vunpack.c.h.b16 %v2224
        %v2370 = vunpack.c.l.b16 %v2225
        %v2371 = vunpack.c.h.b16 %v2225
        %v2372 = vunpack.c.l.b16 %v2226
        %v2373 = vunpack.c.h.b16 %v2226
        %v2374 = vunpack.c.l.b16 %v2227
        %v2375 = vunpack.c.h.b16 %v2227
        %v2376 = vunpack.c.l.b16 %v2228
        %v2377 = vunpack.c.h.b16 %v2228
        %v2378 = vunpack.c.l.b16 %v2229
        %v2379 = vunpack.c.h.b16 %v2229
        %v2380 = vunpack.c.l.b16 %v2230
        %v2381 = vunpack.c.h.b16 %v2230
        %v2382 = vunpack.c.l.b16 %v2231
        %v2383 = vunpack.c.h.b16 %v2231
        %v2384 = vunpack.c.l.b16 %v2232
        %v2385 = vunpack.c.h.b16 %v2232
        %v2386 = vunpack.c.l.b16 %v2233
        %v2387 = vunpack.c.h.b16 %v2233
        %v2388 = vunpack.c.l.b16 %v2234
        %v2389 = vunpack.c.h.b16 %v2234
        %v2390 = vunpack.c.l.b16 %v2235
        %v2391 = vunpack.c.h.b16 %v2235
        %v2392 = vunpack.c.l.b16 %v2236
        %v2393 = vunpack.c.h.b16 %v2236
        %v2394 = vunpack.c.l.b16 %v2237
        %v2395 = vunpack.c.h.b16 %v2237
        %v2396 = vunpack.c.l.b16 %v2238
        %v2397 = vunpack.c.h.b16 %v2238
        %v2398 = vunpack.c.l.b16 %v2239
        %v2399 = vunpack.c.h.b16 %v2239
        %v2400 = vunpack.c.l.b16 %v2240
        %v2401 = vunpack.c.h.b16 %v2240
        %v2402 = vunpack.c.l.b16 %v2241
        %v2403 = vunpack.c.h.b16 %v2241
        %v2404 = vunpack.c.l.b16 %v2242
        %v2405 = vunpack.c.h.b16 %v2242
        %v2406 = vunpack.c.l.b16 %v2243
        %v2407 = vunpack.c.h.b16 %v2243
        %v2408 = vunpack.c.l.b16 %v2244
        %v2409 = vunpack.c.h.b16 %v2244
        %v2410 = vunpack.c.l.b16 %v2245
        %v2411 = vunpack.c.h.b16 %v2245
        %v2412 = vunpack.c.l.b16 %v2246
        %v2413 = vunpack.c.h.b16 %v2246
        %v2414 = vunpack.c.l.b16 %v2247
        %v2415 = vunpack.c.h.b16 %v2247
        %v2416 = vunpack.c.l.b16 %v2248
        %v2417 = vunpack.c.h.b16 %v2248
        %v2418 = vunpack.c.l.b16 %v2249
        %v2419 = vunpack.c.h.b16 %v2249
        %v2420 = vunpack.c.l.b16 %v2250
        %v2421 = vunpack.c.h.b16 %v2250
        %v2422 = vunpack.c.l.b16 %v2251
        %v2423 = vunpack.c.h.b16 %v2251
        %v2424 = vpack.c.b16 %v2362, %v2360
        %v2425 = vpack.c.b16 %v2363, %v2361
        %v2426 = vpack.c.b16 %v2366, %v2364
        %v2427 = vpack.c.b16 %v2367, %v2365
        %v2428 = vpack.c.b16 %v2370, %v2368
        %v2429 = vpack.c.b16 %v2371, %v2369
        %v2430 = vpack.c.b16 %v2374, %v2372
        %v2431 = vpack.c.b16 %v2375, %v2373
        %v2432 = vpack.c.b16 %v2378, %v2376
        %v2433 = vpack.c.b16 %v2379, %v2377
        %v2434 = vpack.c.b16 %v2382, %v2380
        %v2435 = vpack.c.b16 %v2383, %v2381
        %v2436 = vpack.c.b16 %v2386, %v2384
        %v2437 = vpack.c.b16 %v2387, %v2385
        %v2438 = vpack.c.b16 %v2390, %v2388
        %v2439 = vpack.c.b16 %v2391, %v2389
        %v2440 = vpack.c.b16 %v2394, %v2392
        %v2441 = vpack.c.b16 %v2395, %v2393
        %v2442 = vpack.c.b16 %v2398, %v2396
        %v2443 = vpack.c.b16 %v2399, %v2397
        %v2444 = vpack.c.b16 %v2402, %v2400
        %v2445 = vpack.c.b16 %v2403, %v2401
        %v2446 = vpack.c.b16 %v2406, %v2404
        %v2447 = vpack.c.b16 %v2407, %v2405
        %v2448 = vpack.c.b16 %v2410, %v2408
        %v2449 = vpack.c.b16 %v2411, %v2409
        %v2450 = vpack.c.b16 %v2414, %v2412
        %v2451 = vpack.c.b16 %v2415, %v2413
        %v2452 = vpack.c.b16 %v2418, %v2416
        %v2453 = vpack.c.b16 %v2419, %v2417
        %v2454 = vpack.c.b16 %v2422, %v2420
        %v2455 = vpack.c.b16 %v2423, %v2421
        %2488 = vmatprep.subr.bf16.mxu0 %v2425
        %2489 = vmatpush1.bf16.msra.mxu0 %v2424
        %2490 = vmatprep.subr.bf16.mxu0 %v2427
        %2491 = vmatpush1.bf16.msra.mxu0 %v2426
        %2492 = vmatprep.subr.bf16.mxu0 %v2429
        %2493 = vmatpush1.bf16.msra.mxu0 %v2428
        %2494 = vmatprep.subr.bf16.mxu0 %v2431
        %2495 = vmatpush1.bf16.msra.mxu0 %v2430
        %2496 = vmatprep.subr.bf16.mxu0 %v2433
        %2497 = vmatpush1.bf16.msra.mxu0 %v2432
        %2498 = vmatprep.subr.bf16.mxu0 %v2435
        %2499 = vmatpush1.bf16.msra.mxu0 %v2434
        %2500 = vmatprep.subr.bf16.mxu0 %v2437
        %2501 = vmatpush1.bf16.msra.mxu0 %v2436
        %2502 = vmatprep.subr.bf16.mxu0 %v2439
        %2503 = vmatpush1.bf16.msra.mxu0 %v2438
        %2504 = vmatprep.subr.bf16.mxu0 %v2441
        %2505 = vmatpush1.bf16.msra.mxu0 %v2440
        %2506 = vmatprep.subr.bf16.mxu0 %v2443
        %2507 = vmatpush1.bf16.msra.mxu0 %v2442
        %2508 = vmatprep.subr.bf16.mxu0 %v2445
        %2509 = vmatpush1.bf16.msra.mxu0 %v2444
        %2510 = vmatprep.subr.bf16.mxu0 %v2447
        %2511 = vmatpush1.bf16.msra.mxu0 %v2446
        %2512 = vmatprep.subr.bf16.mxu0 %v2449
        %2513 = vmatpush1.bf16.msra.mxu0 %v2448
        %2514 = vmatprep.subr.bf16.mxu0 %v2451
        %2515 = vmatpush1.bf16.msra.mxu0 %v2450
        %2516 = vmatprep.subr.bf16.mxu0 %v2453
        %2517 = vmatpush1.bf16.msra.mxu0 %v2452
        %2518 = vmatprep.subr.bf16.mxu0 %v2455
        %2519 = vmatpush1.bf16.msra.mxu0 %v2454
        %2520 = vmatprep.mubr.bf16.mxu0 %v2254
        %2521 = vmatmul.mubr.bf16.gmra.mrb[0].mxu0 %v2253
        %v2522 = vpop.f32.mrb[0].mxu0
        %v2523 = vadd.f32 %v2321, %v2522
        %v2524 = vpop.f32.mrb[0].mxu0
        %v2525 = vadd.f32 %v2325, %v2524
        %v2526 = vpop.f32.mrb[0].mxu0
        %v2527 = vadd.f32 %v2321, %v2526
        %v2528 = vpop.f32.mrb[0].mxu0
        %v2529 = vadd.f32 %v2325, %v2528
        %2530 = vmatprep.mubr.bf16.mxu0 %v2256
        %2531 = vmatmul.mubr.bf16.gmra.mrb[0].mxu0 %v2255
        %v2532 = vpop.f32.mrb[0].mxu0
        %v2533 = vadd.f32 %v2321, %v2532
        %v2534 = vpop.f32.mrb[0].mxu0
        %v2535 = vadd.f32 %v2325, %v2534
        %v2536 = vpop.f32.mrb[0].mxu0
        %v2537 = vadd.f32 %v2321, %v2536
        %v2538 = vpop.f32.mrb[0].mxu0
        %v2539 = vadd.f32 %v2325, %v2538
        %2540 = vmatprep.mubr.bf16.mxu0 %v2258
        %2541 = vmatmul.mubr.bf16.gmra.mrb[0].mxu0 %v2257
        %v2542 = vpop.f32.mrb[0].mxu0
        %v2543 = vadd.f32 %v2321, %v2542
        %v2544 = vpop.f32.mrb[0].mxu0
        %v2545 = vadd.f32 %v2325, %v2544
        %v2546 = vpop.f32.mrb[0].mxu0
        %v2547 = vadd.f32 %v2321, %v2546
        %v2548 = vpop.f32.mrb[0].mxu0
        %v2549 = vadd.f32 %v2325, %v2548
        %2550 = vmatprep.mubr.bf16.mxu0 %v2260
        %2551 = vmatmul.mubr.bf16.gmra.mrb[0].mxu0 %v2259
        %v2552 = vpop.f32.mrb[0].mxu0
        %v2553 = vadd.f32 %v2321, %v2552
        %v2554 = vpop.f32.mrb[0].mxu0
        %v2555 = vadd.f32 %v2325, %v2554
        %v2556 = vpop.f32.mrb[0].mxu0
        %v2557 = vadd.f32 %v2321, %v2556
        %v2558 = vpop.f32.mrb[0].mxu0
        %v2559 = vadd.f32 %v2325, %v2558
        %2560 = vmatprep.mubr.bf16.mxu0 %v2262
        %2561 = vmatmul.mubr.bf16.gmra.mrb[0].mxu0 %v2261
        %v2562 = vpop.f32.mrb[0].mxu0
        %v2563 = vadd.f32 %v2321, %v2562
        %v2564 = vpop.f32.mrb[0].mxu0
        %v2565 = vadd.f32 %v2325, %v2564
        %v2566 = vpop.f32.mrb[0].mxu0
        %v2567 = vadd.f32 %v2321, %v2566
        %v2568 = vpop.f32.mrb[0].mxu0
        %v2569 = vadd.f32 %v2325, %v2568
        %2570 = vmatprep.mubr.bf16.mxu0 %v2264
        %2571 = vmatmul.mubr.bf16.gmra.mrb[0].mxu0 %v2263
        %v2572 = vpop.f32.mrb[0].mxu0
        %v2573 = vadd.f32 %v2321, %v2572
        %v2574 = vpop.f32.mrb[0].mxu0
        %v2575 = vadd.f32 %v2325, %v2574
        %v2576 = vpop.f32.mrb[0].mxu0
        %v2577 = vadd.f32 %v2321, %v2576
        %v2578 = vpop.f32.mrb[0].mxu0
        %v2579 = vadd.f32 %v2325, %v2578
        %2580 = vmatprep.mubr.bf16.mxu0 %v2266
        %2581 = vmatmul.mubr.bf16.gmra.mrb[0].mxu0 %v2265
        %v2582 = vpop.f32.mrb[0].mxu0
        %v2583 = vadd.f32 %v2321, %v2582
        %v2584 = vpop.f32.mrb[0].mxu0
        %v2585 = vadd.f32 %v2325, %v2584
        %v2586 = vpop.f32.mrb[0].mxu0
        %v2587 = vadd.f32 %v2321, %v2586
        %v2588 = vpop.f32.mrb[0].mxu0
        %v2589 = vadd.f32 %v2325, %v2588
        %2590 = vmatprep.mubr.bf16.mxu0 %v2268
        %2591 = vmatmul.mubr.bf16.gmra.mrb[0].mxu0 %v2267
        %v2592 = vpop.f32.mrb[0].mxu0
        %v2593 = vadd.f32 %v2321, %v2592
        %v2594 = vpop.f32.mrb[0].mxu0
        %v2595 = vadd.f32 %v2325, %v2594
        %v2596 = vpop.f32.mrb[0].mxu0
        %v2597 = vadd.f32 %v2321, %v2596
        %v2598 = vpop.f32.mrb[0].mxu0
        %v2599 = vadd.f32 %v2325, %v2598
        %2600 = vmatprep.mubr.bf16.mxu0 %v2270
        %2601 = vmatmul.mubr.bf16.gmra.mrb[0].mxu0 %v2269
        %v2602 = vpop.f32.mrb[0].mxu0
        %v2603 = vadd.f32 %v2321, %v2602
        %v2604 = vpop.f32.mrb[0].mxu0
        %v2605 = vadd.f32 %v2325, %v2604
        %v2606 = vpop.f32.mrb[0].mxu0
        %v2607 = vadd.f32 %v2321, %v2606
        %v2608 = vpop.f32.mrb[0].mxu0
        %v2609 = vadd.f32 %v2325, %v2608
        %2610 = vmatprep.mubr.bf16.mxu0 %v2272
        %2611 = vmatmul.mubr.bf16.gmra.mrb[0].mxu0 %v2271
        %v2612 = vpop.f32.mrb[0].mxu0
        %v2613 = vadd.f32 %v2321, %v2612
        %v2614 = vpop.f32.mrb[0].mxu0
        %v2615 = vadd.f32 %v2325, %v2614
        %v2616 = vpop.f32.mrb[0].mxu0
        %v2617 = vadd.f32 %v2321, %v2616
        %v2618 = vpop.f32.mrb[0].mxu0
        %v2619 = vadd.f32 %v2325, %v2618
        %2620 = vmatprep.mubr.bf16.mxu0 %v2274
        %2621 = vmatmul.mubr.bf16.gmra.mrb[0].mxu0 %v2273
        %v2622 = vpop.f32.mrb[0].mxu0
        %v2623 = vadd.f32 %v2321, %v2622
        %v2624 = vpop.f32.mrb[0].mxu0
        %v2625 = vadd.f32 %v2325, %v2624
        %v2626 = vpop.f32.mrb[0].mxu0
        %v2627 = vadd.f32 %v2321, %v2626
        %v2628 = vpop.f32.mrb[0].mxu0
        %v2629 = vadd.f32 %v2325, %v2628
        %2630 = vmatprep.mubr.bf16.mxu0 %v2276
        %2631 = vmatmul.mubr.bf16.gmra.mrb[0].mxu0 %v2275
        %v2632 = vpop.f32.mrb[0].mxu0
        %v2633 = vadd.f32 %v2321, %v2632
        %v2634 = vpop.f32.mrb[0].mxu0
        %v2635 = vadd.f32 %v2325, %v2634
        %v2636 = vpop.f32.mrb[0].mxu0
        %v2637 = vadd.f32 %v2321, %v2636
        %v2638 = vpop.f32.mrb[0].mxu0
        %v2639 = vadd.f32 %v2325, %v2638
        %2640 = vmatprep.mubr.bf16.mxu0 %v2278
        %2641 = vmatmul.mubr.bf16.gmra.mrb[0].mxu0 %v2277
        %v2642 = vpop.f32.mrb[0].mxu0
        %v2643 = vadd.f32 %v2321, %v2642
        %v2644 = vpop.f32.mrb[0].mxu0
        %v2645 = vadd.f32 %v2325, %v2644
        %v2646 = vpop.f32.mrb[0].mxu0
        %v2647 = vadd.f32 %v2321, %v2646
        %v2648 = vpop.f32.mrb[0].mxu0
        %v2649 = vadd.f32 %v2325, %v2648
        %2650 = vmatprep.mubr.bf16.mxu0 %v2280
        %2651 = vmatmul.mubr.bf16.gmra.mrb[0].mxu0 %v2279
        %v2652 = vpop.f32.mrb[0].mxu0
        %v2653 = vadd.f32 %v2321, %v2652
        %v2654 = vpop.f32.mrb[0].mxu0
        %v2655 = vadd.f32 %v2325, %v2654
        %v2656 = vpop.f32.mrb[0].mxu0
        %v2657 = vadd.f32 %v2321, %v2656
        %v2658 = vpop.f32.mrb[0].mxu0
        %v2659 = vadd.f32 %v2325, %v2658
        %2660 = vmatprep.mubr.bf16.mxu0 %v2282
        %2661 = vmatmul.mubr.bf16.gmra.mrb[0].mxu0 %v2281
        %v2662 = vpop.f32.mrb[0].mxu0
        %v2663 = vadd.f32 %v2321, %v2662
        %v2664 = vpop.f32.mrb[0].mxu0
        %v2665 = vadd.f32 %v2325, %v2664
        %v2666 = vpop.f32.mrb[0].mxu0
        %v2667 = vadd.f32 %v2321, %v2666
        %v2668 = vpop.f32.mrb[0].mxu0
        %v2669 = vadd.f32 %v2325, %v2668
        %2670 = vmatprep.mubr.bf16.mxu0 %v2284
        %2671 = vmatmul.mubr.bf16.gmra.mrb[0].mxu0 %v2283
        %v2672 = vpop.f32.mrb[0].mxu0
        %v2673 = vadd.f32 %v2321, %v2672
        %v2674 = vpop.f32.mrb[0].mxu0
        %v2675 = vadd.f32 %v2325, %v2674
        %v2676 = vpop.f32.mrb[0].mxu0
        %v2677 = vadd.f32 %v2321, %v2676
        %v2678 = vpop.f32.mrb[0].mxu0
        %v2679 = vadd.f32 %v2325, %v2678
        %2680 = vmatprep.mubr.bf16.mxu0 %v2286
        %2681 = vmatmul.mubr.bf16.gmra.mrb[0].mxu0 %v2285
        %v2682 = vpop.f32.mrb[0].mxu0
        %v2683 = vadd.f32 %v2321, %v2682
        %v2684 = vpop.f32.mrb[0].mxu0
        %v2685 = vadd.f32 %v2325, %v2684
        %v2686 = vpop.f32.mrb[0].mxu0
        %v2687 = vadd.f32 %v2321, %v2686
        %v2688 = vpop.f32.mrb[0].mxu0
        %v2689 = vadd.f32 %v2325, %v2688
        %2690 = vmatprep.mubr.bf16.mxu0 %v2288
        %2691 = vmatmul.mubr.bf16.gmra.mrb[0].mxu0 %v2287
        %v2692 = vpop.f32.mrb[0].mxu0
        %v2693 = vadd.f32 %v2321, %v2692
        %v2694 = vpop.f32.mrb[0].mxu0
        %v2695 = vadd.f32 %v2325, %v2694
        %v2696 = vpop.f32.mrb[0].mxu0
        %v2697 = vadd.f32 %v2321, %v2696
        %v2698 = vpop.f32.mrb[0].mxu0
        %v2699 = vadd.f32 %v2325, %v2698
        %2700 = vmatprep.mubr.bf16.mxu0 %v2290
        %2701 = vmatmul.mubr.bf16.gmra.mrb[0].mxu0 %v2289
        %v2702 = vpop.f32.mrb[0].mxu0
        %v2703 = vadd.f32 %v2321, %v2702
        %v2704 = vpop.f32.mrb[0].mxu0
        %v2705 = vadd.f32 %v2325, %v2704
        %v2706 = vpop.f32.mrb[0].mxu0
        %v2707 = vadd.f32 %v2321, %v2706
        %v2708 = vpop.f32.mrb[0].mxu0
        %v2709 = vadd.f32 %v2325, %v2708
        %2710 = vmatprep.mubr.bf16.mxu0 %v2292
        %2711 = vmatmul.mubr.bf16.gmra.mrb[0].mxu0 %v2291
        %v2712 = vpop.f32.mrb[0].mxu0
        %v2713 = vadd.f32 %v2321, %v2712
        %v2714 = vpop.f32.mrb[0].mxu0
        %v2715 = vadd.f32 %v2325, %v2714
        %v2716 = vpop.f32.mrb[0].mxu0
        %v2717 = vadd.f32 %v2321, %v2716
        %v2718 = vpop.f32.mrb[0].mxu0
        %v2719 = vadd.f32 %v2325, %v2718
        %2720 = vmatprep.mubr.bf16.mxu0 %v2294
        %2721 = vmatmul.mubr.bf16.gmra.mrb[0].mxu0 %v2293
        %v2722 = vpop.f32.mrb[0].mxu0
        %v2723 = vadd.f32 %v2321, %v2722
        %v2724 = vpop.f32.mrb[0].mxu0
        %v2725 = vadd.f32 %v2325, %v2724
        %v2726 = vpop.f32.mrb[0].mxu0
        %v2727 = vadd.f32 %v2321, %v2726
        %v2728 = vpop.f32.mrb[0].mxu0
        %v2729 = vadd.f32 %v2325, %v2728
        %2730 = vmatprep.mubr.bf16.mxu0 %v2296
        %2731 = vmatmul.mubr.bf16.gmra.mrb[0].mxu0 %v2295
        %v2732 = vpop.f32.mrb[0].mxu0
        %v2733 = vadd.f32 %v2321, %v2732
        %v2734 = vpop.f32.mrb[0].mxu0
        %v2735 = vadd.f32 %v2325, %v2734
        %v2736 = vpop.f32.mrb[0].mxu0
        %v2737 = vadd.f32 %v2321, %v2736
        %v2738 = vpop.f32.mrb[0].mxu0
        %v2739 = vadd.f32 %v2325, %v2738
        %2740 = vmatprep.mubr.bf16.mxu0 %v2298
        %2741 = vmatmul.mubr.bf16.gmra.mrb[0].mxu0 %v2297
        %v2742 = vpop.f32.mrb[0].mxu0
        %v2743 = vadd.f32 %v2321, %v2742
        %v2744 = vpop.f32.mrb[0].mxu0
        %v2745 = vadd.f32 %v2325, %v2744
        %v2746 = vpop.f32.mrb[0].mxu0
        %v2747 = vadd.f32 %v2321, %v2746
        %v2748 = vpop.f32.mrb[0].mxu0
        %v2749 = vadd.f32 %v2325, %v2748
        %2750 = vmatprep.mubr.bf16.mxu0 %v2300
        %2751 = vmatmul.mubr.bf16.gmra.mrb[0].mxu0 %v2299
        %v2752 = vpop.f32.mrb[0].mxu0
        %v2753 = vadd.f32 %v2321, %v2752
        %v2754 = vpop.f32.mrb[0].mxu0
        %v2755 = vadd.f32 %v2325, %v2754
        %v2756 = vpop.f32.mrb[0].mxu0
        %v2757 = vadd.f32 %v2321, %v2756
        %v2758 = vpop.f32.mrb[0].mxu0
        %v2759 = vadd.f32 %v2325, %v2758
        %2760 = vmatprep.mubr.bf16.mxu0 %v2302
        %2761 = vmatmul.mubr.bf16.gmra.mrb[0].mxu0 %v2301
        %v2762 = vpop.f32.mrb[0].mxu0
        %v2763 = vadd.f32 %v2321, %v2762
        %v2764 = vpop.f32.mrb[0].mxu0
        %v2765 = vadd.f32 %v2325, %v2764
        %v2766 = vpop.f32.mrb[0].mxu0
        %v2767 = vadd.f32 %v2321, %v2766
        %v2768 = vpop.f32.mrb[0].mxu0
        %v2769 = vadd.f32 %v2325, %v2768
        %2770 = vmatprep.mubr.bf16.mxu0 %v2304
        %2771 = vmatmul.mubr.bf16.gmra.mrb[0].mxu0 %v2303
        %v2772 = vpop.f32.mrb[0].mxu0
        %v2773 = vadd.f32 %v2321, %v2772
        %v2774 = vpop.f32.mrb[0].mxu0
        %v2775 = vadd.f32 %v2325, %v2774
        %v2776 = vpop.f32.mrb[0].mxu0
        %v2777 = vadd.f32 %v2321, %v2776
        %v2778 = vpop.f32.mrb[0].mxu0
        %v2779 = vadd.f32 %v2325, %v2778
        %2780 = vmatprep.mubr.bf16.mxu0 %v2306
        %2781 = vmatmul.mubr.bf16.gmra.mrb[0].mxu0 %v2305
        %v2782 = vpop.f32.mrb[0].mxu0
        %v2783 = vadd.f32 %v2321, %v2782
        %v2784 = vpop.f32.mrb[0].mxu0
        %v2785 = vadd.f32 %v2325, %v2784
        %v2786 = vpop.f32.mrb[0].mxu0
        %v2787 = vadd.f32 %v2321, %v2786
        %v2788 = vpop.f32.mrb[0].mxu0
        %v2789 = vadd.f32 %v2325, %v2788
        %2790 = vmatprep.mubr.bf16.mxu0 %v2308
        %2791 = vmatmul.mubr.bf16.gmra.mrb[0].mxu0 %v2307
        %v2792 = vpop.f32.mrb[0].mxu0
        %v2793 = vadd.f32 %v2321, %v2792
        %v2794 = vpop.f32.mrb[0].mxu0
        %v2795 = vadd.f32 %v2325, %v2794
        %v2796 = vpop.f32.mrb[0].mxu0
        %v2797 = vadd.f32 %v2321, %v2796
        %v2798 = vpop.f32.mrb[0].mxu0
        %v2799 = vadd.f32 %v2325, %v2798
        %2800 = vmatprep.mubr.bf16.mxu0 %v2310
        %2801 = vmatmul.mubr.bf16.gmra.mrb[0].mxu0 %v2309
        %v2802 = vpop.f32.mrb[0].mxu0
        %v2803 = vadd.f32 %v2321, %v2802
        %v2804 = vpop.f32.mrb[0].mxu0
        %v2805 = vadd.f32 %v2325, %v2804
        %v2806 = vpop.f32.mrb[0].mxu0
        %v2807 = vadd.f32 %v2321, %v2806
        %v2808 = vpop.f32.mrb[0].mxu0
        %v2809 = vadd.f32 %v2325, %v2808
        %2810 = vmatprep.mubr.bf16.mxu0 %v2312
        %2811 = vmatmul.mubr.bf16.gmra.mrb[0].mxu0 %v2311
        %v2812 = vpop.f32.mrb[0].mxu0
        %v2813 = vadd.f32 %v2321, %v2812
        %v2814 = vpop.f32.mrb[0].mxu0
        %v2815 = vadd.f32 %v2325, %v2814
        %v2816 = vpop.f32.mrb[0].mxu0
        %v2817 = vadd.f32 %v2321, %v2816
        %v2818 = vpop.f32.mrb[0].mxu0
        %v2819 = vadd.f32 %v2325, %v2818
        %2820 = vmatprep.mubr.bf16.mxu0 %v2314
        %2821 = vmatmul.mubr.bf16.gmra.mrb[0].mxu0 %v2313
        %v2822 = vpop.f32.mrb[0].mxu0
        %v2823 = vadd.f32 %v2321, %v2822
        %v2824 = vpop.f32.mrb[0].mxu0
        %v2825 = vadd.f32 %v2325, %v2824
        %v2826 = vpop.f32.mrb[0].mxu0
        %v2827 = vadd.f32 %v2321, %v2826
        %v2828 = vpop.f32.mrb[0].mxu0
        %v2829 = vadd.f32 %v2325, %v2828
        %2830 = vmatprep.mubr.bf16.mxu0 %v2316
        %2831 = vmatmul.mubr.bf16.gmra.mrb[0].mxu0 %v2315
        %v2832 = vpop.f32.mrb[0].mxu0
        %v2833 = vadd.f32 %v2321, %v2832
        %v2834 = vpop.f32.mrb[0].mxu0
        %v2835 = vadd.f32 %v2325, %v2834
        %v2836 = vpop.f32.mrb[0].mxu0
        %v2837 = vadd.f32 %v2321, %v2836
        %v2838 = vpop.f32.mrb[0].mxu0
        %v2839 = vadd.f32 %v2325, %v2838
        %2840 = vdwg.mxu0
        %v2841 = vmax.f32 %v2523, 0.0
        %v2842 = vmax.f32 %v2525, 0.0
        %v2843 = vmax.f32 %v2527, 0.0
        %v2844 = vmax.f32 %v2529, 0.0
        %v2845 = vmax.f32 %v2533, 0.0
        %v2846 = vmax.f32 %v2535, 0.0
        %v2847 = vmax.f32 %v2537, 0.0
        %v2848 = vmax.f32 %v2539, 0.0
        %v2849 = vmax.f32 %v2543, 0.0
        %v2850 = vmax.f32 %v2545, 0.0
        %v2851 = vmax.f32 %v2547, 0.0
        %v2852 = vmax.f32 %v2549, 0.0
        %v2853 = vmax.f32 %v2553, 0.0
        %v2854 = vmax.f32 %v2555, 0.0
        %v2855 = vmax.f32 %v2557, 0.0
        %v2856 = vmax.f32 %v2559, 0.0
        %v2857 = vmax.f32 %v2563, 0.0
        %v2858 = vmax.f32 %v2565, 0.0
        %v2859 = vmax.f32 %v2567, 0.0
        %v2860 = vmax.f32 %v2569, 0.0
        %v2861 = vmax.f32 %v2573, 0.0
        %v2862 = vmax.f32 %v2575, 0.0
        %v2863 = vmax.f32 %v2577, 0.0
        %v2864 = vmax.f32 %v2579, 0.0
        %v2865 = vmax.f32 %v2583, 0.0
        %v2866 = vmax.f32 %v2585, 0.0
        %v2867 = vmax.f32 %v2587, 0.0
        %v2868 = vmax.f32 %v2589, 0.0
        %v2869 = vmax.f32 %v2593, 0.0
        %v2870 = vmax.f32 %v2595, 0.0
        %v2871 = vmax.f32 %v2597, 0.0
        %v2872 = vmax.f32 %v2599, 0.0
        %v2873 = vmax.f32 %v2603, 0.0
        %v2874 = vmax.f32 %v2605, 0.0
        %v2875 = vmax.f32 %v2607, 0.0
        %v2876 = vmax.f32 %v2609, 0.0
        %v2877 = vmax.f32 %v2613, 0.0
        %v2878 = vmax.f32 %v2615, 0.0
        %v2879 = vmax.f32 %v2617, 0.0
        %v2880 = vmax.f32 %v2619, 0.0
        %v2881 = vmax.f32 %v2623, 0.0
        %v2882 = vmax.f32 %v2625, 0.0
        %v2883 = vmax.f32 %v2627, 0.0
        %v2884 = vmax.f32 %v2629, 0.0
        %v2885 = vmax.f32 %v2633, 0.0
        %v2886 = vmax.f32 %v2635, 0.0
        %v2887 = vmax.f32 %v2637, 0.0
        %v2888 = vmax.f32 %v2639, 0.0
        %v2889 = vmax.f32 %v2643, 0.0
        %v2890 = vmax.f32 %v2645, 0.0
        %v2891 = vmax.f32 %v2647, 0.0
        %v2892 = vmax.f32 %v2649, 0.0
        %v2893 = vmax.f32 %v2653, 0.0
        %v2894 = vmax.f32 %v2655, 0.0
        %v2895 = vmax.f32 %v2657, 0.0
        %v2896 = vmax.f32 %v2659, 0.0
        %v2897 = vmax.f32 %v2663, 0.0
        %v2898 = vmax.f32 %v2665, 0.0
        %v2899 = vmax.f32 %v2667, 0.0
        %v2900 = vmax.f32 %v2669, 0.0
        %v2901 = vmax.f32 %v2673, 0.0
        %v2902 = vmax.f32 %v2675, 0.0
        %v2903 = vmax.f32 %v2677, 0.0
        %v2904 = vmax.f32 %v2679, 0.0
        %v2905 = vmax.f32 %v2683, 0.0
        %v2906 = vmax.f32 %v2685, 0.0
        %v2907 = vmax.f32 %v2687, 0.0
        %v2908 = vmax.f32 %v2689, 0.0
        %v2909 = vmax.f32 %v2693, 0.0
        %v2910 = vmax.f32 %v2695, 0.0
        %v2911 = vmax.f32 %v2697, 0.0
        %v2912 = vmax.f32 %v2699, 0.0
        %v2913 = vmax.f32 %v2703, 0.0
        %v2914 = vmax.f32 %v2705, 0.0
        %v2915 = vmax.f32 %v2707, 0.0
        %v2916 = vmax.f32 %v2709, 0.0
        %v2917 = vmax.f32 %v2713, 0.0
        %v2918 = vmax.f32 %v2715, 0.0
        %v2919 = vmax.f32 %v2717, 0.0
        %v2920 = vmax.f32 %v2719, 0.0
        %v2921 = vmax.f32 %v2723, 0.0
        %v2922 = vmax.f32 %v2725, 0.0
        %v2923 = vmax.f32 %v2727, 0.0
        %v2924 = vmax.f32 %v2729, 0.0
        %v2925 = vmax.f32 %v2733, 0.0
        %v2926 = vmax.f32 %v2735, 0.0
        %v2927 = vmax.f32 %v2737, 0.0
        %v2928 = vmax.f32 %v2739, 0.0
        %v2929 = vmax.f32 %v2743, 0.0
        %v2930 = vmax.f32 %v2745, 0.0
        %v2931 = vmax.f32 %v2747, 0.0
        %v2932 = vmax.f32 %v2749, 0.0
        %v2933 = vmax.f32 %v2753, 0.0
        %v2934 = vmax.f32 %v2755, 0.0
        %v2935 = vmax.f32 %v2757, 0.0
        %v2936 = vmax.f32 %v2759, 0.0
        %v2937 = vmax.f32 %v2763, 0.0
        %v2938 = vmax.f32 %v2765, 0.0
        %v2939 = vmax.f32 %v2767, 0.0
        %v2940 = vmax.f32 %v2769, 0.0
        %v2941 = vmax.f32 %v2773, 0.0
        %v2942 = vmax.f32 %v2775, 0.0
        %v2943 = vmax.f32 %v2777, 0.0
        %v2944 = vmax.f32 %v2779, 0.0
        %v2945 = vmax.f32 %v2783, 0.0
        %v2946 = vmax.f32 %v2785, 0.0
        %v2947 = vmax.f32 %v2787, 0.0
        %v2948 = vmax.f32 %v2789, 0.0
        %v2949 = vmax.f32 %v2793, 0.0
        %v2950 = vmax.f32 %v2795, 0.0
        %v2951 = vmax.f32 %v2797, 0.0
        %v2952 = vmax.f32 %v2799, 0.0
        %v2953 = vmax.f32 %v2803, 0.0
        %v2954 = vmax.f32 %v2805, 0.0
        %v2955 = vmax.f32 %v2807, 0.0
        %v2956 = vmax.f32 %v2809, 0.0
        %v2957 = vmax.f32 %v2813, 0.0
        %v2958 = vmax.f32 %v2815, 0.0
        %v2959 = vmax.f32 %v2817, 0.0
        %v2960 = vmax.f32 %v2819, 0.0
        %v2961 = vmax.f32 %v2823, 0.0
        %v2962 = vmax.f32 %v2825, 0.0
        %v2963 = vmax.f32 %v2827, 0.0
        %v2964 = vmax.f32 %v2829, 0.0
        %v2965 = vmax.f32 %v2833, 0.0
        %v2966 = vmax.f32 %v2835, 0.0
        %v2967 = vmax.f32 %v2837, 0.0
        %v2968 = vmax.f32 %v2839, 0.0
        %v2969 = vld [vmem:[#allocation10] sm:$0xff]
        %v2970 = vld [vmem:[#allocation10 + $0x8] sm:$0xff]
        %v2971 = vld [vmem:[#allocation10 + $0x10] sm:$0xff]
        %v2972 = vld [vmem:[#allocation10 + $0x18] sm:$0xff]
        %v2973 = vld [vmem:[#allocation10 + $0x20] sm:$0xff]
        %v2974 = vld [vmem:[#allocation10 + $0x28] sm:$0xff]
        %v2975 = vld [vmem:[#allocation10 + $0x30] sm:$0xff]
        %v2976 = vld [vmem:[#allocation10 + $0x38] sm:$0xff]
        %v2977 = vld [vmem:[#allocation10 + $0x40] sm:$0xff]
        %v2978 = vld [vmem:[#allocation10 + $0x48] sm:$0xff]
        %v2979 = vld [vmem:[#allocation10 + $0x50] sm:$0xff]
        %v2980 = vld [vmem:[#allocation10 + $0x58] sm:$0xff]
        %v2981 = vld [vmem:[#allocation10 + $0x60] sm:$0xff]
        %v2982 = vld [vmem:[#allocation10 + $0x68] sm:$0xff]
        %v2983 = vld [vmem:[#allocation10 + $0x70] sm:$0xff]
        %v2984 = vld [vmem:[#allocation10 + $0x78] sm:$0xff]
        %v2985 = vld [vmem:[#allocation10 + $0x80] sm:$0xff]
        %v2986 = vld [vmem:[#allocation10 + $0x88] sm:$0xff]
        %v2987 = vld [vmem:[#allocation10 + $0x90] sm:$0xff]
        %v2988 = vld [vmem:[#allocation10 + $0x98] sm:$0xff]
        %v2989 = vld [vmem:[#allocation10 + $0xa0] sm:$0xff]
        %v2990 = vld [vmem:[#allocation10 + $0xa8] sm:$0xff]
        %v2991 = vld [vmem:[#allocation10 + $0xb0] sm:$0xff]
        %v2992 = vld [vmem:[#allocation10 + $0xb8] sm:$0xff]
        %v2993 = vld [vmem:[#allocation10 + $0xc0] sm:$0xff]
        %v2994 = vld [vmem:[#allocation10 + $0xc8] sm:$0xff]
        %v2995 = vld [vmem:[#allocation10 + $0xd0] sm:$0xff]
        %v2996 = vld [vmem:[#allocation10 + $0xd8] sm:$0xff]
        %v2997 = vld [vmem:[#allocation10 + $0xe0] sm:$0xff]
        %v2998 = vld [vmem:[#allocation10 + $0xe8] sm:$0xff]
        %v2999 = vld [vmem:[#allocation10 + $0xf0] sm:$0xff]
        %v3000 = vld [vmem:[#allocation10 + $0xf8] sm:$0xff]
        %v3001 = vld [vmem:[%s8] sm:$0x3]
        %v3002 = vpack.c.bf16 %v2843, %v2841
        %v3003 = vpack.c.bf16 %v2844, %v2842
        %v3004 = vpack.c.bf16 %v2847, %v2845
        %v3005 = vpack.c.bf16 %v2848, %v2846
        %v3006 = vpack.c.bf16 %v2851, %v2849
        %v3007 = vpack.c.bf16 %v2852, %v2850
        %v3008 = vpack.c.bf16 %v2855, %v2853
        %v3009 = vpack.c.bf16 %v2856, %v2854
        %v3010 = vpack.c.bf16 %v2859, %v2857
        %v3011 = vpack.c.bf16 %v2860, %v2858
        %v3012 = vpack.c.bf16 %v2863, %v2861
        %v3013 = vpack.c.bf16 %v2864, %v2862
        %v3014 = vpack.c.bf16 %v2867, %v2865
        %v3015 = vpack.c.bf16 %v2868, %v2866
        %v3016 = vpack.c.bf16 %v2871, %v2869
        %v3017 = vpack.c.bf16 %v2872, %v2870
        %v3018 = vpack.c.bf16 %v2875, %v2873
        %v3019 = vpack.c.bf16 %v2876, %v2874
        %v3020 = vpack.c.bf16 %v2879, %v2877
        %v3021 = vpack.c.bf16 %v2880, %v2878
        %v3022 = vpack.c.bf16 %v2883, %v2881
        %v3023 = vpack.c.bf16 %v2884, %v2882
        %v3024 = vpack.c.bf16 %v2887, %v2885
        %v3025 = vpack.c.bf16 %v2888, %v2886
        %v3026 = vpack.c.bf16 %v2891, %v2889
        %v3027 = vpack.c.bf16 %v2892, %v2890
        %v3028 = vpack.c.bf16 %v2895, %v2893
        %v3029 = vpack.c.bf16 %v2896, %v2894
        %v3030 = vpack.c.bf16 %v2899, %v2897
        %v3031 = vpack.c.bf16 %v2900, %v2898
        %v3032 = vpack.c.bf16 %v2903, %v2901
        %v3033 = vpack.c.bf16 %v2904, %v2902
        %v3034 = vpack.c.bf16 %v2907, %v2905
        %v3035 = vpack.c.bf16 %v2908, %v2906
        %v3036 = vpack.c.bf16 %v2911, %v2909
        %v3037 = vpack.c.bf16 %v2912, %v2910
        %v3038 = vpack.c.bf16 %v2915, %v2913
        %v3039 = vpack.c.bf16 %v2916, %v2914
        %v3040 = vpack.c.bf16 %v2919, %v2917
        %v3041 = vpack.c.bf16 %v2920, %v2918
        %v3042 = vpack.c.bf16 %v2923, %v2921
        %v3043 = vpack.c.bf16 %v2924, %v2922
        %v3044 = vpack.c.bf16 %v2927, %v2925
        %v3045 = vpack.c.bf16 %v2928, %v2926
        %v3046 = vpack.c.bf16 %v2931, %v2929
        %v3047 = vpack.c.bf16 %v2932, %v2930
        %v3048 = vpack.c.bf16 %v2935, %v2933
        %v3049 = vpack.c.bf16 %v2936, %v2934
        %v3050 = vpack.c.bf16 %v2939, %v2937
        %v3051 = vpack.c.bf16 %v2940, %v2938
        %v3052 = vpack.c.bf16 %v2943, %v2941
        %v3053 = vpack.c.bf16 %v2944, %v2942
        %v3054 = vpack.c.bf16 %v2947, %v2945
        %v3055 = vpack.c.bf16 %v2948, %v2946
        %v3056 = vpack.c.bf16 %v2951, %v2949
        %v3057 = vpack.c.bf16 %v2952, %v2950
        %v3058 = vpack.c.bf16 %v2955, %v2953
        %v3059 = vpack.c.bf16 %v2956, %v2954
        %v3060 = vpack.c.bf16 %v2959, %v2957
        %v3061 = vpack.c.bf16 %v2960, %v2958
        %v3062 = vpack.c.bf16 %v2963, %v2961
        %v3063 = vpack.c.bf16 %v2964, %v2962
        %v3064 = vpack.c.bf16 %v2967, %v2965
        %v3065 = vpack.c.bf16 %v2968, %v2966
        %v3067 = vlaneseq
        %v3068 = vshrl.u32 %v3067, 7
        %v3069 = vsub.s32 0, %v3068
        %v3070 = vrot.slane %v3001, %v3069
        %v3071 = vlaneseq
        %v3072 = vshrl.u32 %v3071, 7
        %v3073 = vsub.s32 1, %v3072
        %v3074 = vrot.slane %v3001, %v3073
        %v3109 = vunpack.c.l.b16 %v2969
        %v3110 = vunpack.c.h.b16 %v2969
        %v3111 = vunpack.c.l.b16 %v2970
        %v3112 = vunpack.c.h.b16 %v2970
        %v3113 = vunpack.c.l.b16 %v2971
        %v3114 = vunpack.c.h.b16 %v2971
        %v3115 = vunpack.c.l.b16 %v2972
        %v3116 = vunpack.c.h.b16 %v2972
        %v3117 = vunpack.c.l.b16 %v2973
        %v3118 = vunpack.c.h.b16 %v2973
        %v3119 = vunpack.c.l.b16 %v2974
        %v3120 = vunpack.c.h.b16 %v2974
        %v3121 = vunpack.c.l.b16 %v2975
        %v3122 = vunpack.c.h.b16 %v2975
        %v3123 = vunpack.c.l.b16 %v2976
        %v3124 = vunpack.c.h.b16 %v2976
        %v3125 = vunpack.c.l.b16 %v2977
        %v3126 = vunpack.c.h.b16 %v2977
        %v3127 = vunpack.c.l.b16 %v2978
        %v3128 = vunpack.c.h.b16 %v2978
        %v3129 = vunpack.c.l.b16 %v2979
        %v3130 = vunpack.c.h.b16 %v2979
        %v3131 = vunpack.c.l.b16 %v2980
        %v3132 = vunpack.c.h.b16 %v2980
        %v3133 = vunpack.c.l.b16 %v2981
        %v3134 = vunpack.c.h.b16 %v2981
        %v3135 = vunpack.c.l.b16 %v2982
        %v3136 = vunpack.c.h.b16 %v2982
        %v3137 = vunpack.c.l.b16 %v2983
        %v3138 = vunpack.c.h.b16 %v2983
        %v3139 = vunpack.c.l.b16 %v2984
        %v3140 = vunpack.c.h.b16 %v2984
        %v3141 = vunpack.c.l.b16 %v2985
        %v3142 = vunpack.c.h.b16 %v2985
        %v3143 = vunpack.c.l.b16 %v2986
        %v3144 = vunpack.c.h.b16 %v2986
        %v3145 = vunpack.c.l.b16 %v2987
        %v3146 = vunpack.c.h.b16 %v2987
        %v3147 = vunpack.c.l.b16 %v2988
        %v3148 = vunpack.c.h.b16 %v2988
        %v3149 = vunpack.c.l.b16 %v2989
        %v3150 = vunpack.c.h.b16 %v2989
        %v3151 = vunpack.c.l.b16 %v2990
        %v3152 = vunpack.c.h.b16 %v2990
        %v3153 = vunpack.c.l.b16 %v2991
        %v3154 = vunpack.c.h.b16 %v2991
        %v3155 = vunpack.c.l.b16 %v2992
        %v3156 = vunpack.c.h.b16 %v2992
        %v3157 = vunpack.c.l.b16 %v2993
        %v3158 = vunpack.c.h.b16 %v2993
        %v3159 = vunpack.c.l.b16 %v2994
        %v3160 = vunpack.c.h.b16 %v2994
        %v3161 = vunpack.c.l.b16 %v2995
        %v3162 = vunpack.c.h.b16 %v2995
        %v3163 = vunpack.c.l.b16 %v2996
        %v3164 = vunpack.c.h.b16 %v2996
        %v3165 = vunpack.c.l.b16 %v2997
        %v3166 = vunpack.c.h.b16 %v2997
        %v3167 = vunpack.c.l.b16 %v2998
        %v3168 = vunpack.c.h.b16 %v2998
        %v3169 = vunpack.c.l.b16 %v2999
        %v3170 = vunpack.c.h.b16 %v2999
        %v3171 = vunpack.c.l.b16 %v3000
        %v3172 = vunpack.c.h.b16 %v3000
        %v3173 = vpack.c.b16 %v3111, %v3109
        %v3174 = vpack.c.b16 %v3112, %v3110
        %v3175 = vpack.c.b16 %v3115, %v3113
        %v3176 = vpack.c.b16 %v3116, %v3114
        %v3177 = vpack.c.b16 %v3119, %v3117
        %v3178 = vpack.c.b16 %v3120, %v3118
        %v3179 = vpack.c.b16 %v3123, %v3121
        %v3180 = vpack.c.b16 %v3124, %v3122
        %v3181 = vpack.c.b16 %v3127, %v3125
        %v3182 = vpack.c.b16 %v3128, %v3126
        %v3183 = vpack.c.b16 %v3131, %v3129
        %v3184 = vpack.c.b16 %v3132, %v3130
        %v3185 = vpack.c.b16 %v3135, %v3133
        %v3186 = vpack.c.b16 %v3136, %v3134
        %v3187 = vpack.c.b16 %v3139, %v3137
        %v3188 = vpack.c.b16 %v3140, %v3138
        %v3189 = vpack.c.b16 %v3143, %v3141
        %v3190 = vpack.c.b16 %v3144, %v3142
        %v3191 = vpack.c.b16 %v3147, %v3145
        %v3192 = vpack.c.b16 %v3148, %v3146
        %v3193 = vpack.c.b16 %v3151, %v3149
        %v3194 = vpack.c.b16 %v3152, %v3150
        %v3195 = vpack.c.b16 %v3155, %v3153
        %v3196 = vpack.c.b16 %v3156, %v3154
        %v3197 = vpack.c.b16 %v3159, %v3157
        %v3198 = vpack.c.b16 %v3160, %v3158
        %v3199 = vpack.c.b16 %v3163, %v3161
        %v3200 = vpack.c.b16 %v3164, %v3162
        %v3201 = vpack.c.b16 %v3167, %v3165
        %v3202 = vpack.c.b16 %v3168, %v3166
        %v3203 = vpack.c.b16 %v3171, %v3169
        %v3204 = vpack.c.b16 %v3172, %v3170
        %3237 = vmatprep.subr.bf16.mxu0 %v3174
        %3238 = vmatpush1.bf16.msra.mxu0 %v3173
        %3239 = vmatprep.subr.bf16.mxu0 %v3176
        %3240 = vmatpush1.bf16.msra.mxu0 %v3175
        %3241 = vmatprep.subr.bf16.mxu0 %v3178
        %3242 = vmatpush1.bf16.msra.mxu0 %v3177
        %3243 = vmatprep.subr.bf16.mxu0 %v3180
        %3244 = vmatpush1.bf16.msra.mxu0 %v3179
        %3245 = vmatprep.subr.bf16.mxu0 %v3182
        %3246 = vmatpush1.bf16.msra.mxu0 %v3181
        %3247 = vmatprep.subr.bf16.mxu0 %v3184
        %3248 = vmatpush1.bf16.msra.mxu0 %v3183
        %3249 = vmatprep.subr.bf16.mxu0 %v3186
        %3250 = vmatpush1.bf16.msra.mxu0 %v3185
        %3251 = vmatprep.subr.bf16.mxu0 %v3188
        %3252 = vmatpush1.bf16.msra.mxu0 %v3187
        %3253 = vmatprep.subr.bf16.mxu0 %v3190
        %3254 = vmatpush1.bf16.msra.mxu0 %v3189
        %3255 = vmatprep.subr.bf16.mxu0 %v3192
        %3256 = vmatpush1.bf16.msra.mxu0 %v3191
        %3257 = vmatprep.subr.bf16.mxu0 %v3194
        %3258 = vmatpush1.bf16.msra.mxu0 %v3193
        %3259 = vmatprep.subr.bf16.mxu0 %v3196
        %3260 = vmatpush1.bf16.msra.mxu0 %v3195
        %3261 = vmatprep.subr.bf16.mxu0 %v3198
        %3262 = vmatpush1.bf16.msra.mxu0 %v3197
        %3263 = vmatprep.subr.bf16.mxu0 %v3200
        %3264 = vmatpush1.bf16.msra.mxu0 %v3199
        %3265 = vmatprep.subr.bf16.mxu0 %v3202
        %3266 = vmatpush1.bf16.msra.mxu0 %v3201
        %3267 = vmatprep.subr.bf16.mxu0 %v3204
        %3268 = vmatpush1.bf16.msra.mxu0 %v3203
        %3269 = vmatprep.mubr.bf16.mxu0 %v3003
        %3270 = vmatmul.mubr.bf16.gmra.mrb[0].mxu0 %v3002
        %v3271 = vpop.f32.mrb[0].mxu0
        %v3272 = vadd.f32 %v3070, %v3271
        %v3273 = vpop.f32.mrb[0].mxu0
        %v3274 = vadd.f32 %v3074, %v3273
        %v3275 = vpop.f32.mrb[0].mxu0
        %v3276 = vadd.f32 %v3070, %v3275
        %v3277 = vpop.f32.mrb[0].mxu0
        %v3278 = vadd.f32 %v3074, %v3277
        %3279 = vmatprep.mubr.bf16.mxu0 %v3005
        %3280 = vmatmul.mubr.bf16.gmra.mrb[0].mxu0 %v3004
        %v3281 = vpop.f32.mrb[0].mxu0
        %v3282 = vadd.f32 %v3070, %v3281
        %v3283 = vpop.f32.mrb[0].mxu0
        %v3284 = vadd.f32 %v3074, %v3283
        %v3285 = vpop.f32.mrb[0].mxu0
        %v3286 = vadd.f32 %v3070, %v3285
        %v3287 = vpop.f32.mrb[0].mxu0
        %v3288 = vadd.f32 %v3074, %v3287
        %3289 = vmatprep.mubr.bf16.mxu0 %v3007
        %3290 = vmatmul.mubr.bf16.gmra.mrb[0].mxu0 %v3006
        %v3291 = vpop.f32.mrb[0].mxu0
        %v3292 = vadd.f32 %v3070, %v3291
        %v3293 = vpop.f32.mrb[0].mxu0
        %v3294 = vadd.f32 %v3074, %v3293
        %v3295 = vpop.f32.mrb[0].mxu0
        %v3296 = vadd.f32 %v3070, %v3295
        %v3297 = vpop.f32.mrb[0].mxu0
        %v3298 = vadd.f32 %v3074, %v3297
        %3299 = vmatprep.mubr.bf16.mxu0 %v3009
        %3300 = vmatmul.mubr.bf16.gmra.mrb[0].mxu0 %v3008
        %v3301 = vpop.f32.mrb[0].mxu0
        %v3302 = vadd.f32 %v3070, %v3301
        %v3303 = vpop.f32.mrb[0].mxu0
        %v3304 = vadd.f32 %v3074, %v3303
        %v3305 = vpop.f32.mrb[0].mxu0
        %v3306 = vadd.f32 %v3070, %v3305
        %v3307 = vpop.f32.mrb[0].mxu0
        %v3308 = vadd.f32 %v3074, %v3307
        %3309 = vmatprep.mubr.bf16.mxu0 %v3011
        %3310 = vmatmul.mubr.bf16.gmra.mrb[0].mxu0 %v3010
        %v3311 = vpop.f32.mrb[0].mxu0
        %v3312 = vadd.f32 %v3070, %v3311
        %v3313 = vpop.f32.mrb[0].mxu0
        %v3314 = vadd.f32 %v3074, %v3313
        %v3315 = vpop.f32.mrb[0].mxu0
        %v3316 = vadd.f32 %v3070, %v3315
        %v3317 = vpop.f32.mrb[0].mxu0
        %v3318 = vadd.f32 %v3074, %v3317
        %3319 = vmatprep.mubr.bf16.mxu0 %v3013
        %3320 = vmatmul.mubr.bf16.gmra.mrb[0].mxu0 %v3012
        %v3321 = vpop.f32.mrb[0].mxu0
        %v3322 = vadd.f32 %v3070, %v3321
        %v3323 = vpop.f32.mrb[0].mxu0
        %v3324 = vadd.f32 %v3074, %v3323
        %v3325 = vpop.f32.mrb[0].mxu0
        %v3326 = vadd.f32 %v3070, %v3325
        %v3327 = vpop.f32.mrb[0].mxu0
        %v3328 = vadd.f32 %v3074, %v3327
        %3329 = vmatprep.mubr.bf16.mxu0 %v3015
        %3330 = vmatmul.mubr.bf16.gmra.mrb[0].mxu0 %v3014
        %v3331 = vpop.f32.mrb[0].mxu0
        %v3332 = vadd.f32 %v3070, %v3331
        %v3333 = vpop.f32.mrb[0].mxu0
        %v3334 = vadd.f32 %v3074, %v3333
        %v3335 = vpop.f32.mrb[0].mxu0
        %v3336 = vadd.f32 %v3070, %v3335
        %v3337 = vpop.f32.mrb[0].mxu0
        %v3338 = vadd.f32 %v3074, %v3337
        %3339 = vmatprep.mubr.bf16.mxu0 %v3017
        %3340 = vmatmul.mubr.bf16.gmra.mrb[0].mxu0 %v3016
        %v3341 = vpop.f32.mrb[0].mxu0
        %v3342 = vadd.f32 %v3070, %v3341
        %v3343 = vpop.f32.mrb[0].mxu0
        %v3344 = vadd.f32 %v3074, %v3343
        %v3345 = vpop.f32.mrb[0].mxu0
        %v3346 = vadd.f32 %v3070, %v3345
        %v3347 = vpop.f32.mrb[0].mxu0
        %v3348 = vadd.f32 %v3074, %v3347
        %3349 = vmatprep.mubr.bf16.mxu0 %v3019
        %3350 = vmatmul.mubr.bf16.gmra.mrb[0].mxu0 %v3018
        %v3351 = vpop.f32.mrb[0].mxu0
        %v3352 = vadd.f32 %v3070, %v3351
        %v3353 = vpop.f32.mrb[0].mxu0
        %v3354 = vadd.f32 %v3074, %v3353
        %v3355 = vpop.f32.mrb[0].mxu0
        %v3356 = vadd.f32 %v3070, %v3355
        %v3357 = vpop.f32.mrb[0].mxu0
        %v3358 = vadd.f32 %v3074, %v3357
        %3359 = vmatprep.mubr.bf16.mxu0 %v3021
        %3360 = vmatmul.mubr.bf16.gmra.mrb[0].mxu0 %v3020
        %v3361 = vpop.f32.mrb[0].mxu0
        %v3362 = vadd.f32 %v3070, %v3361
        %v3363 = vpop.f32.mrb[0].mxu0
        %v3364 = vadd.f32 %v3074, %v3363
        %v3365 = vpop.f32.mrb[0].mxu0
        %v3366 = vadd.f32 %v3070, %v3365
        %v3367 = vpop.f32.mrb[0].mxu0
        %v3368 = vadd.f32 %v3074, %v3367
        %3369 = vmatprep.mubr.bf16.mxu0 %v3023
        %3370 = vmatmul.mubr.bf16.gmra.mrb[0].mxu0 %v3022
        %v3371 = vpop.f32.mrb[0].mxu0
        %v3372 = vadd.f32 %v3070, %v3371
        %v3373 = vpop.f32.mrb[0].mxu0
        %v3374 = vadd.f32 %v3074, %v3373
        %v3375 = vpop.f32.mrb[0].mxu0
        %v3376 = vadd.f32 %v3070, %v3375
        %v3377 = vpop.f32.mrb[0].mxu0
        %v3378 = vadd.f32 %v3074, %v3377
        %3379 = vmatprep.mubr.bf16.mxu0 %v3025
        %3380 = vmatmul.mubr.bf16.gmra.mrb[0].mxu0 %v3024
        %v3381 = vpop.f32.mrb[0].mxu0
        %v3382 = vadd.f32 %v3070, %v3381
        %v3383 = vpop.f32.mrb[0].mxu0
        %v3384 = vadd.f32 %v3074, %v3383
        %v3385 = vpop.f32.mrb[0].mxu0
        %v3386 = vadd.f32 %v3070, %v3385
        %v3387 = vpop.f32.mrb[0].mxu0
        %v3388 = vadd.f32 %v3074, %v3387
        %3389 = vmatprep.mubr.bf16.mxu0 %v3027
        %3390 = vmatmul.mubr.bf16.gmra.mrb[0].mxu0 %v3026
        %v3391 = vpop.f32.mrb[0].mxu0
        %v3392 = vadd.f32 %v3070, %v3391
        %v3393 = vpop.f32.mrb[0].mxu0
        %v3394 = vadd.f32 %v3074, %v3393
        %v3395 = vpop.f32.mrb[0].mxu0
        %v3396 = vadd.f32 %v3070, %v3395
        %v3397 = vpop.f32.mrb[0].mxu0
        %v3398 = vadd.f32 %v3074, %v3397
        %3399 = vmatprep.mubr.bf16.mxu0 %v3029
        %3400 = vmatmul.mubr.bf16.gmra.mrb[0].mxu0 %v3028
        %v3401 = vpop.f32.mrb[0].mxu0
        %v3402 = vadd.f32 %v3070, %v3401
        %v3403 = vpop.f32.mrb[0].mxu0
        %v3404 = vadd.f32 %v3074, %v3403
        %v3405 = vpop.f32.mrb[0].mxu0
        %v3406 = vadd.f32 %v3070, %v3405
        %v3407 = vpop.f32.mrb[0].mxu0
        %v3408 = vadd.f32 %v3074, %v3407
        %3409 = vmatprep.mubr.bf16.mxu0 %v3031
        %3410 = vmatmul.mubr.bf16.gmra.mrb[0].mxu0 %v3030
        %v3411 = vpop.f32.mrb[0].mxu0
        %v3412 = vadd.f32 %v3070, %v3411
        %v3413 = vpop.f32.mrb[0].mxu0
        %v3414 = vadd.f32 %v3074, %v3413
        %v3415 = vpop.f32.mrb[0].mxu0
        %v3416 = vadd.f32 %v3070, %v3415
        %v3417 = vpop.f32.mrb[0].mxu0
        %v3418 = vadd.f32 %v3074, %v3417
        %3419 = vmatprep.mubr.bf16.mxu0 %v3033
        %3420 = vmatmul.mubr.bf16.gmra.mrb[0].mxu0 %v3032
        %v3421 = vpop.f32.mrb[0].mxu0
        %v3422 = vadd.f32 %v3070, %v3421
        %v3423 = vpop.f32.mrb[0].mxu0
        %v3424 = vadd.f32 %v3074, %v3423
        %v3425 = vpop.f32.mrb[0].mxu0
        %v3426 = vadd.f32 %v3070, %v3425
        %v3427 = vpop.f32.mrb[0].mxu0
        %v3428 = vadd.f32 %v3074, %v3427
        %3429 = vmatprep.mubr.bf16.mxu0 %v3035
        %3430 = vmatmul.mubr.bf16.gmra.mrb[0].mxu0 %v3034
        %v3431 = vpop.f32.mrb[0].mxu0
        %v3432 = vadd.f32 %v3070, %v3431
        %v3433 = vpop.f32.mrb[0].mxu0
        %v3434 = vadd.f32 %v3074, %v3433
        %v3435 = vpop.f32.mrb[0].mxu0
        %v3436 = vadd.f32 %v3070, %v3435
        %v3437 = vpop.f32.mrb[0].mxu0
        %v3438 = vadd.f32 %v3074, %v3437
        %3439 = vmatprep.mubr.bf16.mxu0 %v3037
        %3440 = vmatmul.mubr.bf16.gmra.mrb[0].mxu0 %v3036
        %v3441 = vpop.f32.mrb[0].mxu0
        %v3442 = vadd.f32 %v3070, %v3441
        %v3443 = vpop.f32.mrb[0].mxu0
        %v3444 = vadd.f32 %v3074, %v3443
        %v3445 = vpop.f32.mrb[0].mxu0
        %v3446 = vadd.f32 %v3070, %v3445
        %v3447 = vpop.f32.mrb[0].mxu0
        %v3448 = vadd.f32 %v3074, %v3447
        %3449 = vmatprep.mubr.bf16.mxu0 %v3039
        %3450 = vmatmul.mubr.bf16.gmra.mrb[0].mxu0 %v3038
        %v3451 = vpop.f32.mrb[0].mxu0
        %v3452 = vadd.f32 %v3070, %v3451
        %v3453 = vpop.f32.mrb[0].mxu0
        %v3454 = vadd.f32 %v3074, %v3453
        %v3455 = vpop.f32.mrb[0].mxu0
        %v3456 = vadd.f32 %v3070, %v3455
        %v3457 = vpop.f32.mrb[0].mxu0
        %v3458 = vadd.f32 %v3074, %v3457
        %3459 = vmatprep.mubr.bf16.mxu0 %v3041
        %3460 = vmatmul.mubr.bf16.gmra.mrb[0].mxu0 %v3040
        %v3461 = vpop.f32.mrb[0].mxu0
        %v3462 = vadd.f32 %v3070, %v3461
        %v3463 = vpop.f32.mrb[0].mxu0
        %v3464 = vadd.f32 %v3074, %v3463
        %v3465 = vpop.f32.mrb[0].mxu0
        %v3466 = vadd.f32 %v3070, %v3465
        %v3467 = vpop.f32.mrb[0].mxu0
        %v3468 = vadd.f32 %v3074, %v3467
        %3469 = vmatprep.mubr.bf16.mxu0 %v3043
        %3470 = vmatmul.mubr.bf16.gmra.mrb[0].mxu0 %v3042
        %v3471 = vpop.f32.mrb[0].mxu0
        %v3472 = vadd.f32 %v3070, %v3471
        %v3473 = vpop.f32.mrb[0].mxu0
        %v3474 = vadd.f32 %v3074, %v3473
        %v3475 = vpop.f32.mrb[0].mxu0
        %v3476 = vadd.f32 %v3070, %v3475
        %v3477 = vpop.f32.mrb[0].mxu0
        %v3478 = vadd.f32 %v3074, %v3477
        %3479 = vmatprep.mubr.bf16.mxu0 %v3045
        %3480 = vmatmul.mubr.bf16.gmra.mrb[0].mxu0 %v3044
        %v3481 = vpop.f32.mrb[0].mxu0
        %v3482 = vadd.f32 %v3070, %v3481
        %v3483 = vpop.f32.mrb[0].mxu0
        %v3484 = vadd.f32 %v3074, %v3483
        %v3485 = vpop.f32.mrb[0].mxu0
        %v3486 = vadd.f32 %v3070, %v3485
        %v3487 = vpop.f32.mrb[0].mxu0
        %v3488 = vadd.f32 %v3074, %v3487
        %3489 = vmatprep.mubr.bf16.mxu0 %v3047
        %3490 = vmatmul.mubr.bf16.gmra.mrb[0].mxu0 %v3046
        %v3491 = vpop.f32.mrb[0].mxu0
        %v3492 = vadd.f32 %v3070, %v3491
        %v3493 = vpop.f32.mrb[0].mxu0
        %v3494 = vadd.f32 %v3074, %v3493
        %v3495 = vpop.f32.mrb[0].mxu0
        %v3496 = vadd.f32 %v3070, %v3495
        %v3497 = vpop.f32.mrb[0].mxu0
        %v3498 = vadd.f32 %v3074, %v3497
        %3499 = vmatprep.mubr.bf16.mxu0 %v3049
        %3500 = vmatmul.mubr.bf16.gmra.mrb[0].mxu0 %v3048
        %v3501 = vpop.f32.mrb[0].mxu0
        %v3502 = vadd.f32 %v3070, %v3501
        %v3503 = vpop.f32.mrb[0].mxu0
        %v3504 = vadd.f32 %v3074, %v3503
        %v3505 = vpop.f32.mrb[0].mxu0
        %v3506 = vadd.f32 %v3070, %v3505
        %v3507 = vpop.f32.mrb[0].mxu0
        %v3508 = vadd.f32 %v3074, %v3507
        %3509 = vmatprep.mubr.bf16.mxu0 %v3051
        %3510 = vmatmul.mubr.bf16.gmra.mrb[0].mxu0 %v3050
        %v3511 = vpop.f32.mrb[0].mxu0
        %v3512 = vadd.f32 %v3070, %v3511
        %v3513 = vpop.f32.mrb[0].mxu0
        %v3514 = vadd.f32 %v3074, %v3513
        %v3515 = vpop.f32.mrb[0].mxu0
        %v3516 = vadd.f32 %v3070, %v3515
        %v3517 = vpop.f32.mrb[0].mxu0
        %v3518 = vadd.f32 %v3074, %v3517
        %3519 = vmatprep.mubr.bf16.mxu0 %v3053
        %3520 = vmatmul.mubr.bf16.gmra.mrb[0].mxu0 %v3052
        %v3521 = vpop.f32.mrb[0].mxu0
        %v3522 = vadd.f32 %v3070, %v3521
        %v3523 = vpop.f32.mrb[0].mxu0
        %v3524 = vadd.f32 %v3074, %v3523
        %v3525 = vpop.f32.mrb[0].mxu0
        %v3526 = vadd.f32 %v3070, %v3525
        %v3527 = vpop.f32.mrb[0].mxu0
        %v3528 = vadd.f32 %v3074, %v3527
        %3529 = vmatprep.mubr.bf16.mxu0 %v3055
        %3530 = vmatmul.mubr.bf16.gmra.mrb[0].mxu0 %v3054
        %v3531 = vpop.f32.mrb[0].mxu0
        %v3532 = vadd.f32 %v3070, %v3531
        %v3533 = vpop.f32.mrb[0].mxu0
        %v3534 = vadd.f32 %v3074, %v3533
        %v3535 = vpop.f32.mrb[0].mxu0
        %v3536 = vadd.f32 %v3070, %v3535
        %v3537 = vpop.f32.mrb[0].mxu0
        %v3538 = vadd.f32 %v3074, %v3537
        %3539 = vmatprep.mubr.bf16.mxu0 %v3057
        %3540 = vmatmul.mubr.bf16.gmra.mrb[0].mxu0 %v3056
        %v3541 = vpop.f32.mrb[0].mxu0
        %v3542 = vadd.f32 %v3070, %v3541
        %v3543 = vpop.f32.mrb[0].mxu0
        %v3544 = vadd.f32 %v3074, %v3543
        %v3545 = vpop.f32.mrb[0].mxu0
        %v3546 = vadd.f32 %v3070, %v3545
        %v3547 = vpop.f32.mrb[0].mxu0
        %v3548 = vadd.f32 %v3074, %v3547
        %3549 = vmatprep.mubr.bf16.mxu0 %v3059
        %3550 = vmatmul.mubr.bf16.gmra.mrb[0].mxu0 %v3058
        %v3551 = vpop.f32.mrb[0].mxu0
        %v3552 = vadd.f32 %v3070, %v3551
        %v3553 = vpop.f32.mrb[0].mxu0
        %v3554 = vadd.f32 %v3074, %v3553
        %v3555 = vpop.f32.mrb[0].mxu0
        %v3556 = vadd.f32 %v3070, %v3555
        %v3557 = vpop.f32.mrb[0].mxu0
        %v3558 = vadd.f32 %v3074, %v3557
        %3559 = vmatprep.mubr.bf16.mxu0 %v3061
        %3560 = vmatmul.mubr.bf16.gmra.mrb[0].mxu0 %v3060
        %v3561 = vpop.f32.mrb[0].mxu0
        %v3562 = vadd.f32 %v3070, %v3561
        %v3563 = vpop.f32.mrb[0].mxu0
        %v3564 = vadd.f32 %v3074, %v3563
        %v3565 = vpop.f32.mrb[0].mxu0
        %v3566 = vadd.f32 %v3070, %v3565
        %v3567 = vpop.f32.mrb[0].mxu0
        %v3568 = vadd.f32 %v3074, %v3567
        %3569 = vmatprep.mubr.bf16.mxu0 %v3063
        %3570 = vmatmul.mubr.bf16.gmra.mrb[0].mxu0 %v3062
        %v3571 = vpop.f32.mrb[0].mxu0
        %v3572 = vadd.f32 %v3070, %v3571
        %v3573 = vpop.f32.mrb[0].mxu0
        %v3574 = vadd.f32 %v3074, %v3573
        %v3575 = vpop.f32.mrb[0].mxu0
        %v3576 = vadd.f32 %v3070, %v3575
        %v3577 = vpop.f32.mrb[0].mxu0
        %v3578 = vadd.f32 %v3074, %v3577
        %3579 = vmatprep.mubr.bf16.mxu0 %v3065
        %3580 = vmatmul.mubr.bf16.gmra.mrb[0].mxu0 %v3064
        %v3581 = vpop.f32.mrb[0].mxu0
        %v3582 = vadd.f32 %v3070, %v3581
        %v3583 = vpop.f32.mrb[0].mxu0
        %v3584 = vadd.f32 %v3074, %v3583
        %v3585 = vpop.f32.mrb[0].mxu0
        %v3586 = vadd.f32 %v3070, %v3585
        %v3587 = vpop.f32.mrb[0].mxu0
        %v3588 = vadd.f32 %v3074, %v3587
        %3589 = vdwg.mxu0
        %v3590 = vmax.f32 %v3272, 0.0
        %v3591 = vmax.f32 %v3274, 0.0
        %v3592 = vmax.f32 %v3276, 0.0
        %v3593 = vmax.f32 %v3278, 0.0
        %v3594 = vmax.f32 %v3282, 0.0
        %v3595 = vmax.f32 %v3284, 0.0
        %v3596 = vmax.f32 %v3286, 0.0
        %v3597 = vmax.f32 %v3288, 0.0
        %v3598 = vmax.f32 %v3292, 0.0
        %v3599 = vmax.f32 %v3294, 0.0
        %v3600 = vmax.f32 %v3296, 0.0
        %v3601 = vmax.f32 %v3298, 0.0
        %v3602 = vmax.f32 %v3302, 0.0
        %v3603 = vmax.f32 %v3304, 0.0
        %v3604 = vmax.f32 %v3306, 0.0
        %v3605 = vmax.f32 %v3308, 0.0
        %v3606 = vmax.f32 %v3312, 0.0
        %v3607 = vmax.f32 %v3314, 0.0
        %v3608 = vmax.f32 %v3316, 0.0
        %v3609 = vmax.f32 %v3318, 0.0
        %v3610 = vmax.f32 %v3322, 0.0
        %v3611 = vmax.f32 %v3324, 0.0
        %v3612 = vmax.f32 %v3326, 0.0
        %v3613 = vmax.f32 %v3328, 0.0
        %v3614 = vmax.f32 %v3332, 0.0
        %v3615 = vmax.f32 %v3334, 0.0
        %v3616 = vmax.f32 %v3336, 0.0
        %v3617 = vmax.f32 %v3338, 0.0
        %v3618 = vmax.f32 %v3342, 0.0
        %v3619 = vmax.f32 %v3344, 0.0
        %v3620 = vmax.f32 %v3346, 0.0
        %v3621 = vmax.f32 %v3348, 0.0
        %v3622 = vmax.f32 %v3352, 0.0
        %v3623 = vmax.f32 %v3354, 0.0
        %v3624 = vmax.f32 %v3356, 0.0
        %v3625 = vmax.f32 %v3358, 0.0
        %v3626 = vmax.f32 %v3362, 0.0
        %v3627 = vmax.f32 %v3364, 0.0
        %v3628 = vmax.f32 %v3366, 0.0
        %v3629 = vmax.f32 %v3368, 0.0
        %v3630 = vmax.f32 %v3372, 0.0
        %v3631 = vmax.f32 %v3374, 0.0
        %v3632 = vmax.f32 %v3376, 0.0
        %v3633 = vmax.f32 %v3378, 0.0
        %v3634 = vmax.f32 %v3382, 0.0
        %v3635 = vmax.f32 %v3384, 0.0
        %v3636 = vmax.f32 %v3386, 0.0
        %v3637 = vmax.f32 %v3388, 0.0
        %v3638 = vmax.f32 %v3392, 0.0
        %v3639 = vmax.f32 %v3394, 0.0
        %v3640 = vmax.f32 %v3396, 0.0
        %v3641 = vmax.f32 %v3398, 0.0
        %v3642 = vmax.f32 %v3402, 0.0
        %v3643 = vmax.f32 %v3404, 0.0
        %v3644 = vmax.f32 %v3406, 0.0
        %v3645 = vmax.f32 %v3408, 0.0
        %v3646 = vmax.f32 %v3412, 0.0
        %v3647 = vmax.f32 %v3414, 0.0
        %v3648 = vmax.f32 %v3416, 0.0
        %v3649 = vmax.f32 %v3418, 0.0
        %v3650 = vmax.f32 %v3422, 0.0
        %v3651 = vmax.f32 %v3424, 0.0
        %v3652 = vmax.f32 %v3426, 0.0
        %v3653 = vmax.f32 %v3428, 0.0
        %v3654 = vmax.f32 %v3432, 0.0
        %v3655 = vmax.f32 %v3434, 0.0
        %v3656 = vmax.f32 %v3436, 0.0
        %v3657 = vmax.f32 %v3438, 0.0
        %v3658 = vmax.f32 %v3442, 0.0
        %v3659 = vmax.f32 %v3444, 0.0
        %v3660 = vmax.f32 %v3446, 0.0
        %v3661 = vmax.f32 %v3448, 0.0
        %v3662 = vmax.f32 %v3452, 0.0
        %v3663 = vmax.f32 %v3454, 0.0
        %v3664 = vmax.f32 %v3456, 0.0
        %v3665 = vmax.f32 %v3458, 0.0
        %v3666 = vmax.f32 %v3462, 0.0
        %v3667 = vmax.f32 %v3464, 0.0
        %v3668 = vmax.f32 %v3466, 0.0
        %v3669 = vmax.f32 %v3468, 0.0
        %v3670 = vmax.f32 %v3472, 0.0
        %v3671 = vmax.f32 %v3474, 0.0
        %v3672 = vmax.f32 %v3476, 0.0
        %v3673 = vmax.f32 %v3478, 0.0
        %v3674 = vmax.f32 %v3482, 0.0
        %v3675 = vmax.f32 %v3484, 0.0
        %v3676 = vmax.f32 %v3486, 0.0
        %v3677 = vmax.f32 %v3488, 0.0
        %v3678 = vmax.f32 %v3492, 0.0
        %v3679 = vmax.f32 %v3494, 0.0
        %v3680 = vmax.f32 %v3496, 0.0
        %v3681 = vmax.f32 %v3498, 0.0
        %v3682 = vmax.f32 %v3502, 0.0
        %v3683 = vmax.f32 %v3504, 0.0
        %v3684 = vmax.f32 %v3506, 0.0
        %v3685 = vmax.f32 %v3508, 0.0
        %v3686 = vmax.f32 %v3512, 0.0
        %v3687 = vmax.f32 %v3514, 0.0
        %v3688 = vmax.f32 %v3516, 0.0
        %v3689 = vmax.f32 %v3518, 0.0
        %v3690 = vmax.f32 %v3522, 0.0
        %v3691 = vmax.f32 %v3524, 0.0
        %v3692 = vmax.f32 %v3526, 0.0
        %v3693 = vmax.f32 %v3528, 0.0
        %v3694 = vmax.f32 %v3532, 0.0
        %v3695 = vmax.f32 %v3534, 0.0
        %v3696 = vmax.f32 %v3536, 0.0
        %v3697 = vmax.f32 %v3538, 0.0
        %v3698 = vmax.f32 %v3542, 0.0
        %v3699 = vmax.f32 %v3544, 0.0
        %v3700 = vmax.f32 %v3546, 0.0
        %v3701 = vmax.f32 %v3548, 0.0
        %v3702 = vmax.f32 %v3552, 0.0
        %v3703 = vmax.f32 %v3554, 0.0
        %v3704 = vmax.f32 %v3556, 0.0
        %v3705 = vmax.f32 %v3558, 0.0
        %v3706 = vmax.f32 %v3562, 0.0
        %v3707 = vmax.f32 %v3564, 0.0
        %v3708 = vmax.f32 %v3566, 0.0
        %v3709 = vmax.f32 %v3568, 0.0
        %v3710 = vmax.f32 %v3572, 0.0
        %v3711 = vmax.f32 %v3574, 0.0
        %v3712 = vmax.f32 %v3576, 0.0
        %v3713 = vmax.f32 %v3578, 0.0
        %v3714 = vmax.f32 %v3582, 0.0
        %v3715 = vmax.f32 %v3584, 0.0
        %v3716 = vmax.f32 %v3586, 0.0
        %v3717 = vmax.f32 %v3588, 0.0
        %v3718 = vld [vmem:[#allocation11] sm:$0xff]
        %v3719 = vld [vmem:[#allocation11 + $0x8] sm:$0xff]
        %v3720 = vld [vmem:[#allocation11 + $0x10] sm:$0xff]
        %v3721 = vld [vmem:[#allocation11 + $0x18] sm:$0xff]
        %v3722 = vld [vmem:[#allocation11 + $0x20] sm:$0xff]
        %v3723 = vld [vmem:[#allocation11 + $0x28] sm:$0xff]
        %v3724 = vld [vmem:[#allocation11 + $0x30] sm:$0xff]
        %v3725 = vld [vmem:[#allocation11 + $0x38] sm:$0xff]
        %v3726 = vld [vmem:[#allocation11 + $0x40] sm:$0xff]
        %v3727 = vld [vmem:[#allocation11 + $0x48] sm:$0xff]
        %v3728 = vld [vmem:[#allocation11 + $0x50] sm:$0xff]
        %v3729 = vld [vmem:[#allocation11 + $0x58] sm:$0xff]
        %v3730 = vld [vmem:[#allocation11 + $0x60] sm:$0xff]
        %v3731 = vld [vmem:[#allocation11 + $0x68] sm:$0xff]
        %v3732 = vld [vmem:[#allocation11 + $0x70] sm:$0xff]
        %v3733 = vld [vmem:[#allocation11 + $0x78] sm:$0xff]
        %v3734 = vld [vmem:[#allocation13] sm:$0xff]
        %v3735 = vld [vmem:[#allocation13 + $0x8] sm:$0xff]
        %v3736 = vld [vmem:[#allocation13 + $0x10] sm:$0xff]
        %v3737 = vld [vmem:[#allocation13 + $0x18] sm:$0xff]
        %v3738 = vld [vmem:[#allocation13 + $0x20] sm:$0xff]
        %v3739 = vld [vmem:[#allocation13 + $0x28] sm:$0xff]
        %v3740 = vld [vmem:[#allocation13 + $0x30] sm:$0xff]
        %v3741 = vld [vmem:[#allocation13 + $0x38] sm:$0xff]
        %v3742 = vld [vmem:[#allocation13 + $0x40] sm:$0xff]
        %v3743 = vld [vmem:[#allocation13 + $0x48] sm:$0xff]
        %v3744 = vld [vmem:[#allocation13 + $0x50] sm:$0xff]
        %v3745 = vld [vmem:[#allocation13 + $0x58] sm:$0xff]
        %v3746 = vld [vmem:[#allocation13 + $0x60] sm:$0xff]
        %v3747 = vld [vmem:[#allocation13 + $0x68] sm:$0xff]
        %v3748 = vld [vmem:[#allocation13 + $0x70] sm:$0xff]
        %v3749 = vld [vmem:[#allocation13 + $0x78] sm:$0xff]
        %v3750 = vld [vmem:[#allocation13 + $0x80] sm:$0xff]
        %v3751 = vld [vmem:[#allocation13 + $0x88] sm:$0xff]
        %v3752 = vld [vmem:[#allocation13 + $0x90] sm:$0xff]
        %v3753 = vld [vmem:[#allocation13 + $0x98] sm:$0xff]
        %v3754 = vld [vmem:[#allocation13 + $0xa0] sm:$0xff]
        %v3755 = vld [vmem:[#allocation13 + $0xa8] sm:$0xff]
        %v3756 = vld [vmem:[#allocation13 + $0xb0] sm:$0xff]
        %v3757 = vld [vmem:[#allocation13 + $0xb8] sm:$0xff]
        %v3758 = vld [vmem:[#allocation13 + $0xc0] sm:$0xff]
        %v3759 = vld [vmem:[#allocation13 + $0xc8] sm:$0xff]
        %v3760 = vld [vmem:[#allocation13 + $0xd0] sm:$0xff]
        %v3761 = vld [vmem:[#allocation13 + $0xd8] sm:$0xff]
        %v3762 = vld [vmem:[#allocation13 + $0xe0] sm:$0xff]
        %v3763 = vld [vmem:[#allocation13 + $0xe8] sm:$0xff]
        %v3764 = vld [vmem:[#allocation13 + $0xf0] sm:$0xff]
        %v3765 = vld [vmem:[#allocation13 + $0xf8] sm:$0xff]
        %v3766 = vld [vmem:[%s11] sm:$0x3]
        %v3767 = vpack.c.bf16 %v3592, %v3590
        %v3768 = vpack.c.bf16 %v3593, %v3591
        %v3769 = vpack.c.bf16 %v3596, %v3594
        %v3770 = vpack.c.bf16 %v3597, %v3595
        %v3771 = vpack.c.bf16 %v3600, %v3598
        %v3772 = vpack.c.bf16 %v3601, %v3599
        %v3773 = vpack.c.bf16 %v3604, %v3602
        %v3774 = vpack.c.bf16 %v3605, %v3603
        %v3775 = vpack.c.bf16 %v3608, %v3606
        %v3776 = vpack.c.bf16 %v3609, %v3607
        %v3777 = vpack.c.bf16 %v3612, %v3610
        %v3778 = vpack.c.bf16 %v3613, %v3611
        %v3779 = vpack.c.bf16 %v3616, %v3614
        %v3780 = vpack.c.bf16 %v3617, %v3615
        %v3781 = vpack.c.bf16 %v3620, %v3618
        %v3782 = vpack.c.bf16 %v3621, %v3619
        %v3783 = vpack.c.bf16 %v3624, %v3622
        %v3784 = vpack.c.bf16 %v3625, %v3623
        %v3785 = vpack.c.bf16 %v3628, %v3626
        %v3786 = vpack.c.bf16 %v3629, %v3627
        %v3787 = vpack.c.bf16 %v3632, %v3630
        %v3788 = vpack.c.bf16 %v3633, %v3631
        %v3789 = vpack.c.bf16 %v3636, %v3634
        %v3790 = vpack.c.bf16 %v3637, %v3635
        %v3791 = vpack.c.bf16 %v3640, %v3638
        %v3792 = vpack.c.bf16 %v3641, %v3639
        %v3793 = vpack.c.bf16 %v3644, %v3642
        %v3794 = vpack.c.bf16 %v3645, %v3643
        %v3795 = vpack.c.bf16 %v3648, %v3646
        %v3796 = vpack.c.bf16 %v3649, %v3647
        %v3797 = vpack.c.bf16 %v3652, %v3650
        %v3798 = vpack.c.bf16 %v3653, %v3651
        %v3799 = vpack.c.bf16 %v3656, %v3654
        %v3800 = vpack.c.bf16 %v3657, %v3655
        %v3801 = vpack.c.bf16 %v3660, %v3658
        %v3802 = vpack.c.bf16 %v3661, %v3659
        %v3803 = vpack.c.bf16 %v3664, %v3662
        %v3804 = vpack.c.bf16 %v3665, %v3663
        %v3805 = vpack.c.bf16 %v3668, %v3666
        %v3806 = vpack.c.bf16 %v3669, %v3667
        %v3807 = vpack.c.bf16 %v3672, %v3670
        %v3808 = vpack.c.bf16 %v3673, %v3671
        %v3809 = vpack.c.bf16 %v3676, %v3674
        %v3810 = vpack.c.bf16 %v3677, %v3675
        %v3811 = vpack.c.bf16 %v3680, %v3678
        %v3812 = vpack.c.bf16 %v3681, %v3679
        %v3813 = vpack.c.bf16 %v3684, %v3682
        %v3814 = vpack.c.bf16 %v3685, %v3683
        %v3815 = vpack.c.bf16 %v3688, %v3686
        %v3816 = vpack.c.bf16 %v3689, %v3687
        %v3817 = vpack.c.bf16 %v3692, %v3690
        %v3818 = vpack.c.bf16 %v3693, %v3691
        %v3819 = vpack.c.bf16 %v3696, %v3694
        %v3820 = vpack.c.bf16 %v3697, %v3695
        %v3821 = vpack.c.bf16 %v3700, %v3698
        %v3822 = vpack.c.bf16 %v3701, %v3699
        %v3823 = vpack.c.bf16 %v3704, %v3702
        %v3824 = vpack.c.bf16 %v3705, %v3703
        %v3825 = vpack.c.bf16 %v3708, %v3706
        %v3826 = vpack.c.bf16 %v3709, %v3707
        %v3827 = vpack.c.bf16 %v3712, %v3710
        %v3828 = vpack.c.bf16 %v3713, %v3711
        %v3829 = vpack.c.bf16 %v3716, %v3714
        %v3830 = vpack.c.bf16 %v3717, %v3715
        %v3863 = vunpack.c.l.b16 %v3734
        %v3864 = vunpack.c.h.b16 %v3734
        %v3865 = vunpack.c.l.b16 %v3735
        %v3866 = vunpack.c.h.b16 %v3735
        %v3867 = vunpack.c.l.b16 %v3736
        %v3868 = vunpack.c.h.b16 %v3736
        %v3869 = vunpack.c.l.b16 %v3737
        %v3870 = vunpack.c.h.b16 %v3737
        %v3871 = vunpack.c.l.b16 %v3738
        %v3872 = vunpack.c.h.b16 %v3738
        %v3873 = vunpack.c.l.b16 %v3739
        %v3874 = vunpack.c.h.b16 %v3739
        %v3875 = vunpack.c.l.b16 %v3740
        %v3876 = vunpack.c.h.b16 %v3740
        %v3877 = vunpack.c.l.b16 %v3741
        %v3878 = vunpack.c.h.b16 %v3741
        %v3879 = vunpack.c.l.b16 %v3742
        %v3880 = vunpack.c.h.b16 %v3742
        %v3881 = vunpack.c.l.b16 %v3743
        %v3882 = vunpack.c.h.b16 %v3743
        %v3883 = vunpack.c.l.b16 %v3744
        %v3884 = vunpack.c.h.b16 %v3744
        %v3885 = vunpack.c.l.b16 %v3745
        %v3886 = vunpack.c.h.b16 %v3745
        %v3887 = vunpack.c.l.b16 %v3746
        %v3888 = vunpack.c.h.b16 %v3746
        %v3889 = vunpack.c.l.b16 %v3747
        %v3890 = vunpack.c.h.b16 %v3747
        %v3891 = vunpack.c.l.b16 %v3748
        %v3892 = vunpack.c.h.b16 %v3748
        %v3893 = vunpack.c.l.b16 %v3749
        %v3894 = vunpack.c.h.b16 %v3749
        %v3895 = vunpack.c.l.b16 %v3750
        %v3896 = vunpack.c.h.b16 %v3750
        %v3897 = vunpack.c.l.b16 %v3751
        %v3898 = vunpack.c.h.b16 %v3751
        %v3899 = vunpack.c.l.b16 %v3752
        %v3900 = vunpack.c.h.b16 %v3752
        %v3901 = vunpack.c.l.b16 %v3753
        %v3902 = vunpack.c.h.b16 %v3753
        %v3903 = vunpack.c.l.b16 %v3754
        %v3904 = vunpack.c.h.b16 %v3754
        %v3905 = vunpack.c.l.b16 %v3755
        %v3906 = vunpack.c.h.b16 %v3755
        %v3907 = vunpack.c.l.b16 %v3756
        %v3908 = vunpack.c.h.b16 %v3756
        %v3909 = vunpack.c.l.b16 %v3757
        %v3910 = vunpack.c.h.b16 %v3757
        %v3911 = vunpack.c.l.b16 %v3758
        %v3912 = vunpack.c.h.b16 %v3758
        %v3913 = vunpack.c.l.b16 %v3759
        %v3914 = vunpack.c.h.b16 %v3759
        %v3915 = vunpack.c.l.b16 %v3760
        %v3916 = vunpack.c.h.b16 %v3760
        %v3917 = vunpack.c.l.b16 %v3761
        %v3918 = vunpack.c.h.b16 %v3761
        %v3919 = vunpack.c.l.b16 %v3762
        %v3920 = vunpack.c.h.b16 %v3762
        %v3921 = vunpack.c.l.b16 %v3763
        %v3922 = vunpack.c.h.b16 %v3763
        %v3923 = vunpack.c.l.b16 %v3764
        %v3924 = vunpack.c.h.b16 %v3764
        %v3925 = vunpack.c.l.b16 %v3765
        %v3926 = vunpack.c.h.b16 %v3765
        %v3927 = vpack.c.b16 %v3865, %v3863
        %v3928 = vpack.c.b16 %v3866, %v3864
        %v3929 = vpack.c.b16 %v3869, %v3867
        %v3930 = vpack.c.b16 %v3870, %v3868
        %v3931 = vpack.c.b16 %v3873, %v3871
        %v3932 = vpack.c.b16 %v3874, %v3872
        %v3933 = vpack.c.b16 %v3877, %v3875
        %v3934 = vpack.c.b16 %v3878, %v3876
        %v3935 = vpack.c.b16 %v3881, %v3879
        %v3936 = vpack.c.b16 %v3882, %v3880
        %v3937 = vpack.c.b16 %v3885, %v3883
        %v3938 = vpack.c.b16 %v3886, %v3884
        %v3939 = vpack.c.b16 %v3889, %v3887
        %v3940 = vpack.c.b16 %v3890, %v3888
        %v3941 = vpack.c.b16 %v3893, %v3891
        %v3942 = vpack.c.b16 %v3894, %v3892
        %v3943 = vpack.c.b16 %v3897, %v3895
        %v3944 = vpack.c.b16 %v3898, %v3896
        %v3945 = vpack.c.b16 %v3901, %v3899
        %v3946 = vpack.c.b16 %v3902, %v3900
        %v3947 = vpack.c.b16 %v3905, %v3903
        %v3948 = vpack.c.b16 %v3906, %v3904
        %v3949 = vpack.c.b16 %v3909, %v3907
        %v3950 = vpack.c.b16 %v3910, %v3908
        %v3951 = vpack.c.b16 %v3913, %v3911
        %v3952 = vpack.c.b16 %v3914, %v3912
        %v3953 = vpack.c.b16 %v3917, %v3915
        %v3954 = vpack.c.b16 %v3918, %v3916
        %v3955 = vpack.c.b16 %v3921, %v3919
        %v3956 = vpack.c.b16 %v3922, %v3920
        %v3957 = vpack.c.b16 %v3925, %v3923
        %v3958 = vpack.c.b16 %v3926, %v3924
        %3991 = vmatprep.subr.bf16.mxu0 %v3928
        %3992 = vmatpush1.bf16.msra.mxu0 %v3927
        %3993 = vmatprep.subr.bf16.mxu0 %v3930
        %3994 = vmatpush1.bf16.msra.mxu0 %v3929
        %3995 = vmatprep.subr.bf16.mxu0 %v3932
        %3996 = vmatpush1.bf16.msra.mxu0 %v3931
        %3997 = vmatprep.subr.bf16.mxu0 %v3934
        %3998 = vmatpush1.bf16.msra.mxu0 %v3933
        %3999 = vmatprep.subr.bf16.mxu0 %v3936
        %4000 = vmatpush1.bf16.msra.mxu0 %v3935
        %4001 = vmatprep.subr.bf16.mxu0 %v3938
        %4002 = vmatpush1.bf16.msra.mxu0 %v3937
        %4003 = vmatprep.subr.bf16.mxu0 %v3940
        %4004 = vmatpush1.bf16.msra.mxu0 %v3939
        %4005 = vmatprep.subr.bf16.mxu0 %v3942
        %4006 = vmatpush1.bf16.msra.mxu0 %v3941
        %4007 = vmatprep.subr.bf16.mxu0 %v3944
        %4008 = vmatpush1.bf16.msra.mxu0 %v3943
        %4009 = vmatprep.subr.bf16.mxu0 %v3946
        %4010 = vmatpush1.bf16.msra.mxu0 %v3945
        %4011 = vmatprep.subr.bf16.mxu0 %v3948
        %4012 = vmatpush1.bf16.msra.mxu0 %v3947
        %4013 = vmatprep.subr.bf16.mxu0 %v3950
        %4014 = vmatpush1.bf16.msra.mxu0 %v3949
        %4015 = vmatprep.subr.bf16.mxu0 %v3952
        %4016 = vmatpush1.bf16.msra.mxu0 %v3951
        %4017 = vmatprep.subr.bf16.mxu0 %v3954
        %4018 = vmatpush1.bf16.msra.mxu0 %v3953
        %4019 = vmatprep.subr.bf16.mxu0 %v3956
        %4020 = vmatpush1.bf16.msra.mxu0 %v3955
        %4021 = vmatprep.subr.bf16.mxu0 %v3958
        %4022 = vmatpush1.bf16.msra.mxu0 %v3957
        %4023 = vmatprep.mubr.bf16.mxu0 %v3768
        %4024 = vmatmul.mubr.bf16.gmra.mrb[0].mxu0 %v3767
        %v4025 = vpop.f32.mrb[0].mxu0
        %v4026 = vadd.f32 0.0, %v4025
        %v4027 = vpop.f32.mrb[0].mxu0
        %v4028 = vadd.f32 0.0, %v4027
        %v4029 = vpop.f32.mrb[0].mxu0
        %v4030 = vadd.f32 0.0, %v4029
        %v4031 = vpop.f32.mrb[0].mxu0
        %v4032 = vadd.f32 0.0, %v4031
        %4033 = vmatprep.mubr.bf16.mxu0 %v3770
        %4034 = vmatmul.mubr.bf16.gmra.mrb[0].mxu0 %v3769
        %v4035 = vpop.f32.mrb[0].mxu0
        %v4036 = vadd.f32 0.0, %v4035
        %v4037 = vpop.f32.mrb[0].mxu0
        %v4038 = vadd.f32 0.0, %v4037
        %v4039 = vpop.f32.mrb[0].mxu0
        %v4040 = vadd.f32 0.0, %v4039
        %v4041 = vpop.f32.mrb[0].mxu0
        %v4042 = vadd.f32 0.0, %v4041
        %4043 = vmatprep.mubr.bf16.mxu0 %v3772
        %4044 = vmatmul.mubr.bf16.gmra.mrb[0].mxu0 %v3771
        %v4045 = vpop.f32.mrb[0].mxu0
        %v4046 = vadd.f32 0.0, %v4045
        %v4047 = vpop.f32.mrb[0].mxu0
        %v4048 = vadd.f32 0.0, %v4047
        %v4049 = vpop.f32.mrb[0].mxu0
        %v4050 = vadd.f32 0.0, %v4049
        %v4051 = vpop.f32.mrb[0].mxu0
        %v4052 = vadd.f32 0.0, %v4051
        %4053 = vmatprep.mubr.bf16.mxu0 %v3774
        %4054 = vmatmul.mubr.bf16.gmra.mrb[0].mxu0 %v3773
        %v4055 = vpop.f32.mrb[0].mxu0
        %v4056 = vadd.f32 0.0, %v4055
        %v4057 = vpop.f32.mrb[0].mxu0
        %v4058 = vadd.f32 0.0, %v4057
        %v4059 = vpop.f32.mrb[0].mxu0
        %v4060 = vadd.f32 0.0, %v4059
        %v4061 = vpop.f32.mrb[0].mxu0
        %v4062 = vadd.f32 0.0, %v4061
        %4063 = vmatprep.mubr.bf16.mxu0 %v3776
        %4064 = vmatmul.mubr.bf16.gmra.mrb[0].mxu0 %v3775
        %v4065 = vpop.f32.mrb[0].mxu0
        %v4066 = vadd.f32 0.0, %v4065
        %v4067 = vpop.f32.mrb[0].mxu0
        %v4068 = vadd.f32 0.0, %v4067
        %v4069 = vpop.f32.mrb[0].mxu0
        %v4070 = vadd.f32 0.0, %v4069
        %v4071 = vpop.f32.mrb[0].mxu0
        %v4072 = vadd.f32 0.0, %v4071
        %4073 = vmatprep.mubr.bf16.mxu0 %v3778
        %4074 = vmatmul.mubr.bf16.gmra.mrb[0].mxu0 %v3777
        %v4075 = vpop.f32.mrb[0].mxu0
        %v4076 = vadd.f32 0.0, %v4075
        %v4077 = vpop.f32.mrb[0].mxu0
        %v4078 = vadd.f32 0.0, %v4077
        %v4079 = vpop.f32.mrb[0].mxu0
        %v4080 = vadd.f32 0.0, %v4079
        %v4081 = vpop.f32.mrb[0].mxu0
        %v4082 = vadd.f32 0.0, %v4081
        %4083 = vmatprep.mubr.bf16.mxu0 %v3780
        %4084 = vmatmul.mubr.bf16.gmra.mrb[0].mxu0 %v3779
        %v4085 = vpop.f32.mrb[0].mxu0
        %v4086 = vadd.f32 0.0, %v4085
        %v4087 = vpop.f32.mrb[0].mxu0
        %v4088 = vadd.f32 0.0, %v4087
        %v4089 = vpop.f32.mrb[0].mxu0
        %v4090 = vadd.f32 0.0, %v4089
        %v4091 = vpop.f32.mrb[0].mxu0
        %v4092 = vadd.f32 0.0, %v4091
        %4093 = vmatprep.mubr.bf16.mxu0 %v3782
        %4094 = vmatmul.mubr.bf16.gmra.mrb[0].mxu0 %v3781
        %v4095 = vpop.f32.mrb[0].mxu0
        %v4096 = vadd.f32 0.0, %v4095
        %v4097 = vpop.f32.mrb[0].mxu0
        %v4098 = vadd.f32 0.0, %v4097
        %v4099 = vpop.f32.mrb[0].mxu0
        %v4100 = vadd.f32 0.0, %v4099
        %v4101 = vpop.f32.mrb[0].mxu0
        %v4102 = vadd.f32 0.0, %v4101
        %4103 = vmatprep.mubr.bf16.mxu0 %v3784
        %4104 = vmatmul.mubr.bf16.gmra.mrb[0].mxu0 %v3783
        %v4105 = vpop.f32.mrb[0].mxu0
        %v4106 = vadd.f32 0.0, %v4105
        %v4107 = vpop.f32.mrb[0].mxu0
        %v4108 = vadd.f32 0.0, %v4107
        %v4109 = vpop.f32.mrb[0].mxu0
        %v4110 = vadd.f32 0.0, %v4109
        %v4111 = vpop.f32.mrb[0].mxu0
        %v4112 = vadd.f32 0.0, %v4111
        %4113 = vmatprep.mubr.bf16.mxu0 %v3786
        %4114 = vmatmul.mubr.bf16.gmra.mrb[0].mxu0 %v3785
        %v4115 = vpop.f32.mrb[0].mxu0
        %v4116 = vadd.f32 0.0, %v4115
        %v4117 = vpop.f32.mrb[0].mxu0
        %v4118 = vadd.f32 0.0, %v4117
        %v4119 = vpop.f32.mrb[0].mxu0
        %v4120 = vadd.f32 0.0, %v4119
        %v4121 = vpop.f32.mrb[0].mxu0
        %v4122 = vadd.f32 0.0, %v4121
        %4123 = vmatprep.mubr.bf16.mxu0 %v3788
        %4124 = vmatmul.mubr.bf16.gmra.mrb[0].mxu0 %v3787
        %v4125 = vpop.f32.mrb[0].mxu0
        %v4126 = vadd.f32 0.0, %v4125
        %v4127 = vpop.f32.mrb[0].mxu0
        %v4128 = vadd.f32 0.0, %v4127
        %v4129 = vpop.f32.mrb[0].mxu0
        %v4130 = vadd.f32 0.0, %v4129
        %v4131 = vpop.f32.mrb[0].mxu0
        %v4132 = vadd.f32 0.0, %v4131
        %4133 = vmatprep.mubr.bf16.mxu0 %v3790
        %4134 = vmatmul.mubr.bf16.gmra.mrb[0].mxu0 %v3789
        %v4135 = vpop.f32.mrb[0].mxu0
        %v4136 = vadd.f32 0.0, %v4135
        %v4137 = vpop.f32.mrb[0].mxu0
        %v4138 = vadd.f32 0.0, %v4137
        %v4139 = vpop.f32.mrb[0].mxu0
        %v4140 = vadd.f32 0.0, %v4139
        %v4141 = vpop.f32.mrb[0].mxu0
        %v4142 = vadd.f32 0.0, %v4141
        %4143 = vmatprep.mubr.bf16.mxu0 %v3792
        %4144 = vmatmul.mubr.bf16.gmra.mrb[0].mxu0 %v3791
        %v4145 = vpop.f32.mrb[0].mxu0
        %v4146 = vadd.f32 0.0, %v4145
        %v4147 = vpop.f32.mrb[0].mxu0
        %v4148 = vadd.f32 0.0, %v4147
        %v4149 = vpop.f32.mrb[0].mxu0
        %v4150 = vadd.f32 0.0, %v4149
        %v4151 = vpop.f32.mrb[0].mxu0
        %v4152 = vadd.f32 0.0, %v4151
        %4153 = vmatprep.mubr.bf16.mxu0 %v3794
        %4154 = vmatmul.mubr.bf16.gmra.mrb[0].mxu0 %v3793
        %v4155 = vpop.f32.mrb[0].mxu0
        %v4156 = vadd.f32 0.0, %v4155
        %v4157 = vpop.f32.mrb[0].mxu0
        %v4158 = vadd.f32 0.0, %v4157
        %v4159 = vpop.f32.mrb[0].mxu0
        %v4160 = vadd.f32 0.0, %v4159
        %v4161 = vpop.f32.mrb[0].mxu0
        %v4162 = vadd.f32 0.0, %v4161
        %4163 = vmatprep.mubr.bf16.mxu0 %v3796
        %4164 = vmatmul.mubr.bf16.gmra.mrb[0].mxu0 %v3795
        %v4165 = vpop.f32.mrb[0].mxu0
        %v4166 = vadd.f32 0.0, %v4165
        %v4167 = vpop.f32.mrb[0].mxu0
        %v4168 = vadd.f32 0.0, %v4167
        %v4169 = vpop.f32.mrb[0].mxu0
        %v4170 = vadd.f32 0.0, %v4169
        %v4171 = vpop.f32.mrb[0].mxu0
        %v4172 = vadd.f32 0.0, %v4171
        %4173 = vmatprep.mubr.bf16.mxu0 %v3798
        %4174 = vmatmul.mubr.bf16.gmra.mrb[0].mxu0 %v3797
        %v4175 = vpop.f32.mrb[0].mxu0
        %v4176 = vadd.f32 0.0, %v4175
        %v4177 = vpop.f32.mrb[0].mxu0
        %v4178 = vadd.f32 0.0, %v4177
        %v4179 = vpop.f32.mrb[0].mxu0
        %v4180 = vadd.f32 0.0, %v4179
        %v4181 = vpop.f32.mrb[0].mxu0
        %v4182 = vadd.f32 0.0, %v4181
        %4183 = vmatprep.mubr.bf16.mxu0 %v3800
        %4184 = vmatmul.mubr.bf16.gmra.mrb[0].mxu0 %v3799
        %v4185 = vpop.f32.mrb[0].mxu0
        %v4186 = vadd.f32 0.0, %v4185
        %v4187 = vpop.f32.mrb[0].mxu0
        %v4188 = vadd.f32 0.0, %v4187
        %v4189 = vpop.f32.mrb[0].mxu0
        %v4190 = vadd.f32 0.0, %v4189
        %v4191 = vpop.f32.mrb[0].mxu0
        %v4192 = vadd.f32 0.0, %v4191
        %4193 = vmatprep.mubr.bf16.mxu0 %v3802
        %4194 = vmatmul.mubr.bf16.gmra.mrb[0].mxu0 %v3801
        %v4195 = vpop.f32.mrb[0].mxu0
        %v4196 = vadd.f32 0.0, %v4195
        %v4197 = vpop.f32.mrb[0].mxu0
        %v4198 = vadd.f32 0.0, %v4197
        %v4199 = vpop.f32.mrb[0].mxu0
        %v4200 = vadd.f32 0.0, %v4199
        %v4201 = vpop.f32.mrb[0].mxu0
        %v4202 = vadd.f32 0.0, %v4201
        %4203 = vmatprep.mubr.bf16.mxu0 %v3804
        %4204 = vmatmul.mubr.bf16.gmra.mrb[0].mxu0 %v3803
        %v4205 = vpop.f32.mrb[0].mxu0
        %v4206 = vadd.f32 0.0, %v4205
        %v4207 = vpop.f32.mrb[0].mxu0
        %v4208 = vadd.f32 0.0, %v4207
        %v4209 = vpop.f32.mrb[0].mxu0
        %v4210 = vadd.f32 0.0, %v4209
        %v4211 = vpop.f32.mrb[0].mxu0
        %v4212 = vadd.f32 0.0, %v4211
        %4213 = vmatprep.mubr.bf16.mxu0 %v3806
        %4214 = vmatmul.mubr.bf16.gmra.mrb[0].mxu0 %v3805
        %v4215 = vpop.f32.mrb[0].mxu0
        %v4216 = vadd.f32 0.0, %v4215
        %v4217 = vpop.f32.mrb[0].mxu0
        %v4218 = vadd.f32 0.0, %v4217
        %v4219 = vpop.f32.mrb[0].mxu0
        %v4220 = vadd.f32 0.0, %v4219
        %v4221 = vpop.f32.mrb[0].mxu0
        %v4222 = vadd.f32 0.0, %v4221
        %4223 = vmatprep.mubr.bf16.mxu0 %v3808
        %4224 = vmatmul.mubr.bf16.gmra.mrb[0].mxu0 %v3807
        %v4225 = vpop.f32.mrb[0].mxu0
        %v4226 = vadd.f32 0.0, %v4225
        %v4227 = vpop.f32.mrb[0].mxu0
        %v4228 = vadd.f32 0.0, %v4227
        %v4229 = vpop.f32.mrb[0].mxu0
        %v4230 = vadd.f32 0.0, %v4229
        %v4231 = vpop.f32.mrb[0].mxu0
        %v4232 = vadd.f32 0.0, %v4231
        %4233 = vmatprep.mubr.bf16.mxu0 %v3810
        %4234 = vmatmul.mubr.bf16.gmra.mrb[0].mxu0 %v3809
        %v4235 = vpop.f32.mrb[0].mxu0
        %v4236 = vadd.f32 0.0, %v4235
        %v4237 = vpop.f32.mrb[0].mxu0
        %v4238 = vadd.f32 0.0, %v4237
        %v4239 = vpop.f32.mrb[0].mxu0
        %v4240 = vadd.f32 0.0, %v4239
        %v4241 = vpop.f32.mrb[0].mxu0
        %v4242 = vadd.f32 0.0, %v4241
        %4243 = vmatprep.mubr.bf16.mxu0 %v3812
        %4244 = vmatmul.mubr.bf16.gmra.mrb[0].mxu0 %v3811
        %v4245 = vpop.f32.mrb[0].mxu0
        %v4246 = vadd.f32 0.0, %v4245
        %v4247 = vpop.f32.mrb[0].mxu0
        %v4248 = vadd.f32 0.0, %v4247
        %v4249 = vpop.f32.mrb[0].mxu0
        %v4250 = vadd.f32 0.0, %v4249
        %v4251 = vpop.f32.mrb[0].mxu0
        %v4252 = vadd.f32 0.0, %v4251
        %4253 = vmatprep.mubr.bf16.mxu0 %v3814
        %4254 = vmatmul.mubr.bf16.gmra.mrb[0].mxu0 %v3813
        %v4255 = vpop.f32.mrb[0].mxu0
        %v4256 = vadd.f32 0.0, %v4255
        %v4257 = vpop.f32.mrb[0].mxu0
        %v4258 = vadd.f32 0.0, %v4257
        %v4259 = vpop.f32.mrb[0].mxu0
        %v4260 = vadd.f32 0.0, %v4259
        %v4261 = vpop.f32.mrb[0].mxu0
        %v4262 = vadd.f32 0.0, %v4261
        %4263 = vmatprep.mubr.bf16.mxu0 %v3816
        %4264 = vmatmul.mubr.bf16.gmra.mrb[0].mxu0 %v3815
        %v4265 = vpop.f32.mrb[0].mxu0
        %v4266 = vadd.f32 0.0, %v4265
        %v4267 = vpop.f32.mrb[0].mxu0
        %v4268 = vadd.f32 0.0, %v4267
        %v4269 = vpop.f32.mrb[0].mxu0
        %v4270 = vadd.f32 0.0, %v4269
        %v4271 = vpop.f32.mrb[0].mxu0
        %v4272 = vadd.f32 0.0, %v4271
        %4273 = vmatprep.mubr.bf16.mxu0 %v3818
        %4274 = vmatmul.mubr.bf16.gmra.mrb[0].mxu0 %v3817
        %v4275 = vpop.f32.mrb[0].mxu0
        %v4276 = vadd.f32 0.0, %v4275
        %v4277 = vpop.f32.mrb[0].mxu0
        %v4278 = vadd.f32 0.0, %v4277
        %v4279 = vpop.f32.mrb[0].mxu0
        %v4280 = vadd.f32 0.0, %v4279
        %v4281 = vpop.f32.mrb[0].mxu0
        %v4282 = vadd.f32 0.0, %v4281
        %4283 = vmatprep.mubr.bf16.mxu0 %v3820
        %4284 = vmatmul.mubr.bf16.gmra.mrb[0].mxu0 %v3819
        %v4285 = vpop.f32.mrb[0].mxu0
        %v4286 = vadd.f32 0.0, %v4285
        %v4287 = vpop.f32.mrb[0].mxu0
        %v4288 = vadd.f32 0.0, %v4287
        %v4289 = vpop.f32.mrb[0].mxu0
        %v4290 = vadd.f32 0.0, %v4289
        %v4291 = vpop.f32.mrb[0].mxu0
        %v4292 = vadd.f32 0.0, %v4291
        %4293 = vmatprep.mubr.bf16.mxu0 %v3822
        %4294 = vmatmul.mubr.bf16.gmra.mrb[0].mxu0 %v3821
        %v4295 = vpop.f32.mrb[0].mxu0
        %v4296 = vadd.f32 0.0, %v4295
        %v4297 = vpop.f32.mrb[0].mxu0
        %v4298 = vadd.f32 0.0, %v4297
        %v4299 = vpop.f32.mrb[0].mxu0
        %v4300 = vadd.f32 0.0, %v4299
        %v4301 = vpop.f32.mrb[0].mxu0
        %v4302 = vadd.f32 0.0, %v4301
        %4303 = vmatprep.mubr.bf16.mxu0 %v3824
        %4304 = vmatmul.mubr.bf16.gmra.mrb[0].mxu0 %v3823
        %v4305 = vpop.f32.mrb[0].mxu0
        %v4306 = vadd.f32 0.0, %v4305
        %v4307 = vpop.f32.mrb[0].mxu0
        %v4308 = vadd.f32 0.0, %v4307
        %v4309 = vpop.f32.mrb[0].mxu0
        %v4310 = vadd.f32 0.0, %v4309
        %v4311 = vpop.f32.mrb[0].mxu0
        %v4312 = vadd.f32 0.0, %v4311
        %4313 = vmatprep.mubr.bf16.mxu0 %v3826
        %4314 = vmatmul.mubr.bf16.gmra.mrb[0].mxu0 %v3825
        %v4315 = vpop.f32.mrb[0].mxu0
        %v4316 = vadd.f32 0.0, %v4315
        %v4317 = vpop.f32.mrb[0].mxu0
        %v4318 = vadd.f32 0.0, %v4317
        %v4319 = vpop.f32.mrb[0].mxu0
        %v4320 = vadd.f32 0.0, %v4319
        %v4321 = vpop.f32.mrb[0].mxu0
        %v4322 = vadd.f32 0.0, %v4321
        %4323 = vmatprep.mubr.bf16.mxu0 %v3828
        %4324 = vmatmul.mubr.bf16.gmra.mrb[0].mxu0 %v3827
        %v4325 = vpop.f32.mrb[0].mxu0
        %v4326 = vadd.f32 0.0, %v4325
        %v4327 = vpop.f32.mrb[0].mxu0
        %v4328 = vadd.f32 0.0, %v4327
        %v4329 = vpop.f32.mrb[0].mxu0
        %v4330 = vadd.f32 0.0, %v4329
        %v4331 = vpop.f32.mrb[0].mxu0
        %v4332 = vadd.f32 0.0, %v4331
        %4333 = vmatprep.mubr.bf16.mxu0 %v3830
        %4334 = vmatmul.mubr.bf16.gmra.mrb[0].mxu0 %v3829
        %v4335 = vpop.f32.mrb[0].mxu0
        %v4336 = vadd.f32 0.0, %v4335
        %v4337 = vpop.f32.mrb[0].mxu0
        %v4338 = vadd.f32 0.0, %v4337
        %v4339 = vpop.f32.mrb[0].mxu0
        %v4340 = vadd.f32 0.0, %v4339
        %v4341 = vpop.f32.mrb[0].mxu0
        %v4342 = vadd.f32 0.0, %v4341
        %4343 = vdwg.mxu0
        %v4360 = vunpack.c.l.b16 %v3718
        %v4361 = vunpack.c.h.b16 %v3718
        %v4362 = vunpack.c.l.b16 %v3719
        %v4363 = vunpack.c.h.b16 %v3719
        %v4364 = vunpack.c.l.b16 %v3720
        %v4365 = vunpack.c.h.b16 %v3720
        %v4366 = vunpack.c.l.b16 %v3721
        %v4367 = vunpack.c.h.b16 %v3721
        %v4368 = vunpack.c.l.b16 %v3722
        %v4369 = vunpack.c.h.b16 %v3722
        %v4370 = vunpack.c.l.b16 %v3723
        %v4371 = vunpack.c.h.b16 %v3723
        %v4372 = vunpack.c.l.b16 %v3724
        %v4373 = vunpack.c.h.b16 %v3724
        %v4374 = vunpack.c.l.b16 %v3725
        %v4375 = vunpack.c.h.b16 %v3725
        %v4376 = vunpack.c.l.b16 %v3726
        %v4377 = vunpack.c.h.b16 %v3726
        %v4378 = vunpack.c.l.b16 %v3727
        %v4379 = vunpack.c.h.b16 %v3727
        %v4380 = vunpack.c.l.b16 %v3728
        %v4381 = vunpack.c.h.b16 %v3728
        %v4382 = vunpack.c.l.b16 %v3729
        %v4383 = vunpack.c.h.b16 %v3729
        %v4384 = vunpack.c.l.b16 %v3730
        %v4385 = vunpack.c.h.b16 %v3730
        %v4386 = vunpack.c.l.b16 %v3731
        %v4387 = vunpack.c.h.b16 %v3731
        %v4388 = vunpack.c.l.b16 %v3732
        %v4389 = vunpack.c.h.b16 %v3732
        %v4390 = vunpack.c.l.b16 %v3733
        %v4391 = vunpack.c.h.b16 %v3733
        %v4392 = vpack.c.b16 %v4362, %v4360
        %v4393 = vpack.c.b16 %v4363, %v4361
        %v4394 = vpack.c.b16 %v4366, %v4364
        %v4395 = vpack.c.b16 %v4367, %v4365
        %v4396 = vpack.c.b16 %v4370, %v4368
        %v4397 = vpack.c.b16 %v4371, %v4369
        %v4398 = vpack.c.b16 %v4374, %v4372
        %v4399 = vpack.c.b16 %v4375, %v4373
        %v4400 = vpack.c.b16 %v4378, %v4376
        %v4401 = vpack.c.b16 %v4379, %v4377
        %v4402 = vpack.c.b16 %v4382, %v4380
        %v4403 = vpack.c.b16 %v4383, %v4381
        %v4404 = vpack.c.b16 %v4386, %v4384
        %v4405 = vpack.c.b16 %v4387, %v4385
        %v4406 = vpack.c.b16 %v4390, %v4388
        %v4407 = vpack.c.b16 %v4391, %v4389
        %4424 = vmatprep.subr.bf16.mxu0 %v4393
        %4425 = vmatpush1.bf16.msra.mxu0 %v4392
        %4426 = vmatprep.subr.bf16.mxu0 %v4395
        %4427 = vmatpush1.bf16.msra.mxu0 %v4394
        %4428 = vmatprep.subr.bf16.mxu0 %v4397
        %4429 = vmatpush1.bf16.msra.mxu0 %v4396
        %4430 = vmatprep.subr.bf16.mxu0 %v4399
        %4431 = vmatpush1.bf16.msra.mxu0 %v4398
        %4432 = vmatprep.subr.bf16.mxu0 %v4401
        %4433 = vmatpush1.bf16.msra.mxu0 %v4400
        %4434 = vmatprep.subr.bf16.mxu0 %v4403
        %4435 = vmatpush1.bf16.msra.mxu0 %v4402
        %4436 = vmatprep.subr.bf16.mxu0 %v4405
        %4437 = vmatpush1.bf16.msra.mxu0 %v4404
        %4438 = vmatprep.subr.bf16.mxu0 %v4407
        %4439 = vmatpush1.bf16.msra.mxu0 %v4406
        %4440 = vmatprep.subr.bf16.mxu0 0
        %4441 = vmatpush1.bf16.msra.mxu0 0
        %4442 = vmatprep.subr.bf16.mxu0 0
        %4443 = vmatpush1.bf16.msra.mxu0 0
        %4444 = vmatprep.subr.bf16.mxu0 0
        %4445 = vmatpush1.bf16.msra.mxu0 0
        %4446 = vmatprep.subr.bf16.mxu0 0
        %4447 = vmatpush1.bf16.msra.mxu0 0
        %4448 = vmatprep.subr.bf16.mxu0 0
        %4449 = vmatpush1.bf16.msra.mxu0 0
        %4450 = vmatprep.subr.bf16.mxu0 0
        %4451 = vmatpush1.bf16.msra.mxu0 0
        %4452 = vmatprep.subr.bf16.mxu0 0
        %4453 = vmatpush1.bf16.msra.mxu0 0
        %4454 = vmatprep.subr.bf16.mxu0 0
        %4455 = vmatpush1.bf16.msra.mxu0 0
        %4456 = vmatprep.mubr.bf16.mxu0 0
        %4457 = vmatmul.mubr.bf16.gmra.mrb[0].mxu0 %v850
        %v4458 = vpop.f32.mrb[0].mxu0
        %v4459 = vadd.f32 %v4026, %v4458
        %v4460 = vpop.f32.mrb[0].mxu0
        %v4461 = vadd.f32 %v4028, %v4460
        %v4462 = vpop.f32.mrb[0].mxu0
        %v4463 = vadd.f32 %v4030, %v4462
        %v4464 = vpop.f32.mrb[0].mxu0
        %v4465 = vadd.f32 %v4032, %v4464
        %4466 = vmatprep.mubr.bf16.mxu0 0
        %4467 = vmatmul.mubr.bf16.gmra.mrb[0].mxu0 %v851
        %v4468 = vpop.f32.mrb[0].mxu0
        %v4469 = vadd.f32 %v4036, %v4468
        %v4470 = vpop.f32.mrb[0].mxu0
        %v4471 = vadd.f32 %v4038, %v4470
        %v4472 = vpop.f32.mrb[0].mxu0
        %v4473 = vadd.f32 %v4040, %v4472
        %v4474 = vpop.f32.mrb[0].mxu0
        %v4475 = vadd.f32 %v4042, %v4474
        %4476 = vmatprep.mubr.bf16.mxu0 0
        %4477 = vmatmul.mubr.bf16.gmra.mrb[0].mxu0 %v852
        %v4478 = vpop.f32.mrb[0].mxu0
        %v4479 = vadd.f32 %v4046, %v4478
        %v4480 = vpop.f32.mrb[0].mxu0
        %v4481 = vadd.f32 %v4048, %v4480
        %v4482 = vpop.f32.mrb[0].mxu0
        %v4483 = vadd.f32 %v4050, %v4482
        %v4484 = vpop.f32.mrb[0].mxu0
        %v4485 = vadd.f32 %v4052, %v4484
        %4486 = vmatprep.mubr.bf16.mxu0 0
        %4487 = vmatmul.mubr.bf16.gmra.mrb[0].mxu0 %v853
        %v4488 = vpop.f32.mrb[0].mxu0
        %v4489 = vadd.f32 %v4056, %v4488
        %v4490 = vpop.f32.mrb[0].mxu0
        %v4491 = vadd.f32 %v4058, %v4490
        %v4492 = vpop.f32.mrb[0].mxu0
        %v4493 = vadd.f32 %v4060, %v4492
        %v4494 = vpop.f32.mrb[0].mxu0
        %v4495 = vadd.f32 %v4062, %v4494
        %4496 = vmatprep.mubr.bf16.mxu0 0
        %4497 = vmatmul.mubr.bf16.gmra.mrb[0].mxu0 %v854
        %v4498 = vpop.f32.mrb[0].mxu0
        %v4499 = vadd.f32 %v4066, %v4498
        %v4500 = vpop.f32.mrb[0].mxu0
        %v4501 = vadd.f32 %v4068, %v4500
        %v4502 = vpop.f32.mrb[0].mxu0
        %v4503 = vadd.f32 %v4070, %v4502
        %v4504 = vpop.f32.mrb[0].mxu0
        %v4505 = vadd.f32 %v4072, %v4504
        %4506 = vmatprep.mubr.bf16.mxu0 0
        %4507 = vmatmul.mubr.bf16.gmra.mrb[0].mxu0 %v855
        %v4508 = vpop.f32.mrb[0].mxu0
        %v4509 = vadd.f32 %v4076, %v4508
        %v4510 = vpop.f32.mrb[0].mxu0
        %v4511 = vadd.f32 %v4078, %v4510
        %v4512 = vpop.f32.mrb[0].mxu0
        %v4513 = vadd.f32 %v4080, %v4512
        %v4514 = vpop.f32.mrb[0].mxu0
        %v4515 = vadd.f32 %v4082, %v4514
        %4516 = vmatprep.mubr.bf16.mxu0 0
        %4517 = vmatmul.mubr.bf16.gmra.mrb[0].mxu0 %v856
        %v4518 = vpop.f32.mrb[0].mxu0
        %v4519 = vadd.f32 %v4086, %v4518
        %v4520 = vpop.f32.mrb[0].mxu0
        %v4521 = vadd.f32 %v4088, %v4520
        %v4522 = vpop.f32.mrb[0].mxu0
        %v4523 = vadd.f32 %v4090, %v4522
        %v4524 = vpop.f32.mrb[0].mxu0
        %v4525 = vadd.f32 %v4092, %v4524
        %4526 = vmatprep.mubr.bf16.mxu0 0
        %4527 = vmatmul.mubr.bf16.gmra.mrb[0].mxu0 %v857
        %v4528 = vpop.f32.mrb[0].mxu0
        %v4529 = vadd.f32 %v4096, %v4528
        %v4530 = vpop.f32.mrb[0].mxu0
        %v4531 = vadd.f32 %v4098, %v4530
        %v4532 = vpop.f32.mrb[0].mxu0
        %v4533 = vadd.f32 %v4100, %v4532
        %v4534 = vpop.f32.mrb[0].mxu0
        %v4535 = vadd.f32 %v4102, %v4534
        %4536 = vmatprep.mubr.bf16.mxu0 0
        %4537 = vmatmul.mubr.bf16.gmra.mrb[0].mxu0 %v858
        %v4538 = vpop.f32.mrb[0].mxu0
        %v4539 = vadd.f32 %v4106, %v4538
        %v4540 = vpop.f32.mrb[0].mxu0
        %v4541 = vadd.f32 %v4108, %v4540
        %v4542 = vpop.f32.mrb[0].mxu0
        %v4543 = vadd.f32 %v4110, %v4542
        %v4544 = vpop.f32.mrb[0].mxu0
        %v4545 = vadd.f32 %v4112, %v4544
        %4546 = vmatprep.mubr.bf16.mxu0 0
        %4547 = vmatmul.mubr.bf16.gmra.mrb[0].mxu0 %v859
        %v4548 = vpop.f32.mrb[0].mxu0
        %v4549 = vadd.f32 %v4116, %v4548
        %v4550 = vpop.f32.mrb[0].mxu0
        %v4551 = vadd.f32 %v4118, %v4550
        %v4552 = vpop.f32.mrb[0].mxu0
        %v4553 = vadd.f32 %v4120, %v4552
        %v4554 = vpop.f32.mrb[0].mxu0
        %v4555 = vadd.f32 %v4122, %v4554
        %4556 = vmatprep.mubr.bf16.mxu0 0
        %4557 = vmatmul.mubr.bf16.gmra.mrb[0].mxu0 %v860
        %v4558 = vpop.f32.mrb[0].mxu0
        %v4559 = vadd.f32 %v4126, %v4558
        %v4560 = vpop.f32.mrb[0].mxu0
        %v4561 = vadd.f32 %v4128, %v4560
        %v4562 = vpop.f32.mrb[0].mxu0
        %v4563 = vadd.f32 %v4130, %v4562
        %v4564 = vpop.f32.mrb[0].mxu0
        %v4565 = vadd.f32 %v4132, %v4564
        %4566 = vmatprep.mubr.bf16.mxu0 0
        %4567 = vmatmul.mubr.bf16.gmra.mrb[0].mxu0 %v861
        %v4568 = vpop.f32.mrb[0].mxu0
        %v4569 = vadd.f32 %v4136, %v4568
        %v4570 = vpop.f32.mrb[0].mxu0
        %v4571 = vadd.f32 %v4138, %v4570
        %v4572 = vpop.f32.mrb[0].mxu0
        %v4573 = vadd.f32 %v4140, %v4572
        %v4574 = vpop.f32.mrb[0].mxu0
        %v4575 = vadd.f32 %v4142, %v4574
        %4576 = vmatprep.mubr.bf16.mxu0 0
        %4577 = vmatmul.mubr.bf16.gmra.mrb[0].mxu0 %v862
        %v4578 = vpop.f32.mrb[0].mxu0
        %v4579 = vadd.f32 %v4146, %v4578
        %v4580 = vpop.f32.mrb[0].mxu0
        %v4581 = vadd.f32 %v4148, %v4580
        %v4582 = vpop.f32.mrb[0].mxu0
        %v4583 = vadd.f32 %v4150, %v4582
        %v4584 = vpop.f32.mrb[0].mxu0
        %v4585 = vadd.f32 %v4152, %v4584
        %4586 = vmatprep.mubr.bf16.mxu0 0
        %4587 = vmatmul.mubr.bf16.gmra.mrb[0].mxu0 %v863
        %v4588 = vpop.f32.mrb[0].mxu0
        %v4589 = vadd.f32 %v4156, %v4588
        %v4590 = vpop.f32.mrb[0].mxu0
        %v4591 = vadd.f32 %v4158, %v4590
        %v4592 = vpop.f32.mrb[0].mxu0
        %v4593 = vadd.f32 %v4160, %v4592
        %v4594 = vpop.f32.mrb[0].mxu0
        %v4595 = vadd.f32 %v4162, %v4594
        %4596 = vmatprep.mubr.bf16.mxu0 0
        %4597 = vmatmul.mubr.bf16.gmra.mrb[0].mxu0 %v864
        %v4598 = vpop.f32.mrb[0].mxu0
        %v4599 = vadd.f32 %v4166, %v4598
        %v4600 = vpop.f32.mrb[0].mxu0
        %v4601 = vadd.f32 %v4168, %v4600
        %v4602 = vpop.f32.mrb[0].mxu0
        %v4603 = vadd.f32 %v4170, %v4602
        %v4604 = vpop.f32.mrb[0].mxu0
        %v4605 = vadd.f32 %v4172, %v4604
        %4606 = vmatprep.mubr.bf16.mxu0 0
        %4607 = vmatmul.mubr.bf16.gmra.mrb[0].mxu0 %v865
        %v4608 = vpop.f32.mrb[0].mxu0
        %v4609 = vadd.f32 %v4176, %v4608
        %v4610 = vpop.f32.mrb[0].mxu0
        %v4611 = vadd.f32 %v4178, %v4610
        %v4612 = vpop.f32.mrb[0].mxu0
        %v4613 = vadd.f32 %v4180, %v4612
        %v4614 = vpop.f32.mrb[0].mxu0
        %v4615 = vadd.f32 %v4182, %v4614
        %4616 = vmatprep.mubr.bf16.mxu0 0
        %4617 = vmatmul.mubr.bf16.gmra.mrb[0].mxu0 %v866
        %v4618 = vpop.f32.mrb[0].mxu0
        %v4619 = vadd.f32 %v4186, %v4618
        %v4620 = vpop.f32.mrb[0].mxu0
        %v4621 = vadd.f32 %v4188, %v4620
        %v4622 = vpop.f32.mrb[0].mxu0
        %v4623 = vadd.f32 %v4190, %v4622
        %v4624 = vpop.f32.mrb[0].mxu0
        %v4625 = vadd.f32 %v4192, %v4624
        %4626 = vmatprep.mubr.bf16.mxu0 0
        %4627 = vmatmul.mubr.bf16.gmra.mrb[0].mxu0 %v867
        %v4628 = vpop.f32.mrb[0].mxu0
        %v4629 = vadd.f32 %v4196, %v4628
        %v4630 = vpop.f32.mrb[0].mxu0
        %v4631 = vadd.f32 %v4198, %v4630
        %v4632 = vpop.f32.mrb[0].mxu0
        %v4633 = vadd.f32 %v4200, %v4632
        %v4634 = vpop.f32.mrb[0].mxu0
        %v4635 = vadd.f32 %v4202, %v4634
        %4636 = vmatprep.mubr.bf16.mxu0 0
        %4637 = vmatmul.mubr.bf16.gmra.mrb[0].mxu0 %v868
        %v4638 = vpop.f32.mrb[0].mxu0
        %v4639 = vadd.f32 %v4206, %v4638
        %v4640 = vpop.f32.mrb[0].mxu0
        %v4641 = vadd.f32 %v4208, %v4640
        %v4642 = vpop.f32.mrb[0].mxu0
        %v4643 = vadd.f32 %v4210, %v4642
        %v4644 = vpop.f32.mrb[0].mxu0
        %v4645 = vadd.f32 %v4212, %v4644
        %4646 = vmatprep.mubr.bf16.mxu0 0
        %4647 = vmatmul.mubr.bf16.gmra.mrb[0].mxu0 %v869
        %v4648 = vpop.f32.mrb[0].mxu0
        %v4649 = vadd.f32 %v4216, %v4648
        %v4650 = vpop.f32.mrb[0].mxu0
        %v4651 = vadd.f32 %v4218, %v4650
        %v4652 = vpop.f32.mrb[0].mxu0
        %v4653 = vadd.f32 %v4220, %v4652
        %v4654 = vpop.f32.mrb[0].mxu0
        %v4655 = vadd.f32 %v4222, %v4654
        %4656 = vmatprep.mubr.bf16.mxu0 0
        %4657 = vmatmul.mubr.bf16.gmra.mrb[0].mxu0 %v870
        %v4658 = vpop.f32.mrb[0].mxu0
        %v4659 = vadd.f32 %v4226, %v4658
        %v4660 = vpop.f32.mrb[0].mxu0
        %v4661 = vadd.f32 %v4228, %v4660
        %v4662 = vpop.f32.mrb[0].mxu0
        %v4663 = vadd.f32 %v4230, %v4662
        %v4664 = vpop.f32.mrb[0].mxu0
        %v4665 = vadd.f32 %v4232, %v4664
        %4666 = vmatprep.mubr.bf16.mxu0 0
        %4667 = vmatmul.mubr.bf16.gmra.mrb[0].mxu0 %v871
        %v4668 = vpop.f32.mrb[0].mxu0
        %v4669 = vadd.f32 %v4236, %v4668
        %v4670 = vpop.f32.mrb[0].mxu0
        %v4671 = vadd.f32 %v4238, %v4670
        %v4672 = vpop.f32.mrb[0].mxu0
        %v4673 = vadd.f32 %v4240, %v4672
        %v4674 = vpop.f32.mrb[0].mxu0
        %v4675 = vadd.f32 %v4242, %v4674
        %4676 = vmatprep.mubr.bf16.mxu0 0
        %4677 = vmatmul.mubr.bf16.gmra.mrb[0].mxu0 %v872
        %v4678 = vpop.f32.mrb[0].mxu0
        %v4679 = vadd.f32 %v4246, %v4678
        %v4680 = vpop.f32.mrb[0].mxu0
        %v4681 = vadd.f32 %v4248, %v4680
        %v4682 = vpop.f32.mrb[0].mxu0
        %v4683 = vadd.f32 %v4250, %v4682
        %v4684 = vpop.f32.mrb[0].mxu0
        %v4685 = vadd.f32 %v4252, %v4684
        %4686 = vmatprep.mubr.bf16.mxu0 0
        %4687 = vmatmul.mubr.bf16.gmra.mrb[0].mxu0 %v873
        %v4688 = vpop.f32.mrb[0].mxu0
        %v4689 = vadd.f32 %v4256, %v4688
        %v4690 = vpop.f32.mrb[0].mxu0
        %v4691 = vadd.f32 %v4258, %v4690
        %v4692 = vpop.f32.mrb[0].mxu0
        %v4693 = vadd.f32 %v4260, %v4692
        %v4694 = vpop.f32.mrb[0].mxu0
        %v4695 = vadd.f32 %v4262, %v4694
        %4696 = vmatprep.mubr.bf16.mxu0 0
        %4697 = vmatmul.mubr.bf16.gmra.mrb[0].mxu0 %v874
        %v4698 = vpop.f32.mrb[0].mxu0
        %v4699 = vadd.f32 %v4266, %v4698
        %v4700 = vpop.f32.mrb[0].mxu0
        %v4701 = vadd.f32 %v4268, %v4700
        %v4702 = vpop.f32.mrb[0].mxu0
        %v4703 = vadd.f32 %v4270, %v4702
        %v4704 = vpop.f32.mrb[0].mxu0
        %v4705 = vadd.f32 %v4272, %v4704
        %4706 = vmatprep.mubr.bf16.mxu0 0
        %4707 = vmatmul.mubr.bf16.gmra.mrb[0].mxu0 %v875
        %v4708 = vpop.f32.mrb[0].mxu0
        %v4709 = vadd.f32 %v4276, %v4708
        %v4710 = vpop.f32.mrb[0].mxu0
        %v4711 = vadd.f32 %v4278, %v4710
        %v4712 = vpop.f32.mrb[0].mxu0
        %v4713 = vadd.f32 %v4280, %v4712
        %v4714 = vpop.f32.mrb[0].mxu0
        %v4715 = vadd.f32 %v4282, %v4714
        %4716 = vmatprep.mubr.bf16.mxu0 0
        %4717 = vmatmul.mubr.bf16.gmra.mrb[0].mxu0 %v876
        %v4718 = vpop.f32.mrb[0].mxu0
        %v4719 = vadd.f32 %v4286, %v4718
        %v4720 = vpop.f32.mrb[0].mxu0
        %v4721 = vadd.f32 %v4288, %v4720
        %v4722 = vpop.f32.mrb[0].mxu0
        %v4723 = vadd.f32 %v4290, %v4722
        %v4724 = vpop.f32.mrb[0].mxu0
        %v4725 = vadd.f32 %v4292, %v4724
        %4726 = vmatprep.mubr.bf16.mxu0 0
        %4727 = vmatmul.mubr.bf16.gmra.mrb[0].mxu0 %v877
        %v4728 = vpop.f32.mrb[0].mxu0
        %v4729 = vadd.f32 %v4296, %v4728
        %v4730 = vpop.f32.mrb[0].mxu0
        %v4731 = vadd.f32 %v4298, %v4730
        %v4732 = vpop.f32.mrb[0].mxu0
        %v4733 = vadd.f32 %v4300, %v4732
        %v4734 = vpop.f32.mrb[0].mxu0
        %v4735 = vadd.f32 %v4302, %v4734
        %4736 = vmatprep.mubr.bf16.mxu0 0
        %4737 = vmatmul.mubr.bf16.gmra.mrb[0].mxu0 %v878
        %v4738 = vpop.f32.mrb[0].mxu0
        %v4739 = vadd.f32 %v4306, %v4738
        %v4740 = vpop.f32.mrb[0].mxu0
        %v4741 = vadd.f32 %v4308, %v4740
        %v4742 = vpop.f32.mrb[0].mxu0
        %v4743 = vadd.f32 %v4310, %v4742
        %v4744 = vpop.f32.mrb[0].mxu0
        %v4745 = vadd.f32 %v4312, %v4744
        %4746 = vmatprep.mubr.bf16.mxu0 0
        %4747 = vmatmul.mubr.bf16.gmra.mrb[0].mxu0 %v879
        %v4748 = vpop.f32.mrb[0].mxu0
        %v4749 = vadd.f32 %v4316, %v4748
        %v4750 = vpop.f32.mrb[0].mxu0
        %v4751 = vadd.f32 %v4318, %v4750
        %v4752 = vpop.f32.mrb[0].mxu0
        %v4753 = vadd.f32 %v4320, %v4752
        %v4754 = vpop.f32.mrb[0].mxu0
        %v4755 = vadd.f32 %v4322, %v4754
        %4756 = vmatprep.mubr.bf16.mxu0 0
        %4757 = vmatmul.mubr.bf16.gmra.mrb[0].mxu0 %v880
        %v4758 = vpop.f32.mrb[0].mxu0
        %v4759 = vadd.f32 %v4326, %v4758
        %v4760 = vpop.f32.mrb[0].mxu0
        %v4761 = vadd.f32 %v4328, %v4760
        %v4762 = vpop.f32.mrb[0].mxu0
        %v4763 = vadd.f32 %v4330, %v4762
        %v4764 = vpop.f32.mrb[0].mxu0
        %v4765 = vadd.f32 %v4332, %v4764
        %4766 = vmatprep.mubr.bf16.mxu0 0
        %4767 = vmatmul.mubr.bf16.gmra.mrb[0].mxu0 %v881
        %v4768 = vpop.f32.mrb[0].mxu0
        %v4769 = vadd.f32 %v4336, %v4768
        %v4770 = vpop.f32.mrb[0].mxu0
        %v4771 = vadd.f32 %v4338, %v4770
        %v4772 = vpop.f32.mrb[0].mxu0
        %v4773 = vadd.f32 %v4340, %v4772
        %v4774 = vpop.f32.mrb[0].mxu0
        %v4775 = vadd.f32 %v4342, %v4774
        %4776 = vdwg.mxu0
        %v4778 = vlaneseq
        %v4779 = vshrl.u32 %v4778, 7
        %v4780 = vsub.s32 0, %v4779
        %v4781 = vrot.slane %v3766, %v4780
        %v4782 = vlaneseq
        %v4783 = vshrl.u32 %v4782, 7
        %v4784 = vsub.s32 1, %v4783
        %v4785 = vrot.slane %v3766, %v4784
        %v4788 = vadd.f32 %v4459, %v4781
        %v4789 = vadd.f32 %v4461, %v4785
        %v4790 = vadd.f32 %v4463, %v4781
        %v4791 = vadd.f32 %v4465, %v4785
        %v4792 = vadd.f32 %v4469, %v4781
        %v4793 = vadd.f32 %v4471, %v4785
        %v4794 = vadd.f32 %v4473, %v4781
        %v4795 = vadd.f32 %v4475, %v4785
        %v4796 = vadd.f32 %v4479, %v4781
        %v4797 = vadd.f32 %v4481, %v4785
        %v4798 = vadd.f32 %v4483, %v4781
        %v4799 = vadd.f32 %v4485, %v4785
        %v4800 = vadd.f32 %v4489, %v4781
        %v4801 = vadd.f32 %v4491, %v4785
        %v4802 = vadd.f32 %v4493, %v4781
        %v4803 = vadd.f32 %v4495, %v4785
        %v4804 = vadd.f32 %v4499, %v4781
        %v4805 = vadd.f32 %v4501, %v4785
        %v4806 = vadd.f32 %v4503, %v4781
        %v4807 = vadd.f32 %v4505, %v4785
        %v4808 = vadd.f32 %v4509, %v4781
        %v4809 = vadd.f32 %v4511, %v4785
        %v4810 = vadd.f32 %v4513, %v4781
        %v4811 = vadd.f32 %v4515, %v4785
        %v4812 = vadd.f32 %v4519, %v4781
        %v4813 = vadd.f32 %v4521, %v4785
        %v4814 = vadd.f32 %v4523, %v4781
        %v4815 = vadd.f32 %v4525, %v4785
        %v4816 = vadd.f32 %v4529, %v4781
        %v4817 = vadd.f32 %v4531, %v4785
        %v4818 = vadd.f32 %v4533, %v4781
        %v4819 = vadd.f32 %v4535, %v4785
        %v4820 = vadd.f32 %v4539, %v4781
        %v4821 = vadd.f32 %v4541, %v4785
        %v4822 = vadd.f32 %v4543, %v4781
        %v4823 = vadd.f32 %v4545, %v4785
        %v4824 = vadd.f32 %v4549, %v4781
        %v4825 = vadd.f32 %v4551, %v4785
        %v4826 = vadd.f32 %v4553, %v4781
        %v4827 = vadd.f32 %v4555, %v4785
        %v4828 = vadd.f32 %v4559, %v4781
        %v4829 = vadd.f32 %v4561, %v4785
        %v4830 = vadd.f32 %v4563, %v4781
        %v4831 = vadd.f32 %v4565, %v4785
        %v4832 = vadd.f32 %v4569, %v4781
        %v4833 = vadd.f32 %v4571, %v4785
        %v4834 = vadd.f32 %v4573, %v4781
        %v4835 = vadd.f32 %v4575, %v4785
        %v4836 = vadd.f32 %v4579, %v4781
        %v4837 = vadd.f32 %v4581, %v4785
        %v4838 = vadd.f32 %v4583, %v4781
        %v4839 = vadd.f32 %v4585, %v4785
        %v4840 = vadd.f32 %v4589, %v4781
        %v4841 = vadd.f32 %v4591, %v4785
        %v4842 = vadd.f32 %v4593, %v4781
        %v4843 = vadd.f32 %v4595, %v4785
        %v4844 = vadd.f32 %v4599, %v4781
        %v4845 = vadd.f32 %v4601, %v4785
        %v4846 = vadd.f32 %v4603, %v4781
        %v4847 = vadd.f32 %v4605, %v4785
        %v4848 = vadd.f32 %v4609, %v4781
        %v4849 = vadd.f32 %v4611, %v4785
        %v4850 = vadd.f32 %v4613, %v4781
        %v4851 = vadd.f32 %v4615, %v4785
        %v4852 = vadd.f32 %v4619, %v4781
        %v4853 = vadd.f32 %v4621, %v4785
        %v4854 = vadd.f32 %v4623, %v4781
        %v4855 = vadd.f32 %v4625, %v4785
        %v4856 = vadd.f32 %v4629, %v4781
        %v4857 = vadd.f32 %v4631, %v4785
        %v4858 = vadd.f32 %v4633, %v4781
        %v4859 = vadd.f32 %v4635, %v4785
        %v4860 = vadd.f32 %v4639, %v4781
        %v4861 = vadd.f32 %v4641, %v4785
        %v4862 = vadd.f32 %v4643, %v4781
        %v4863 = vadd.f32 %v4645, %v4785
        %v4864 = vadd.f32 %v4649, %v4781
        %v4865 = vadd.f32 %v4651, %v4785
        %v4866 = vadd.f32 %v4653, %v4781
        %v4867 = vadd.f32 %v4655, %v4785
        %v4868 = vadd.f32 %v4659, %v4781
        %v4869 = vadd.f32 %v4661, %v4785
        %v4870 = vadd.f32 %v4663, %v4781
        %v4871 = vadd.f32 %v4665, %v4785
        %v4872 = vadd.f32 %v4669, %v4781
        %v4873 = vadd.f32 %v4671, %v4785
        %v4874 = vadd.f32 %v4673, %v4781
        %v4875 = vadd.f32 %v4675, %v4785
        %v4876 = vadd.f32 %v4679, %v4781
        %v4877 = vadd.f32 %v4681, %v4785
        %v4878 = vadd.f32 %v4683, %v4781
        %v4879 = vadd.f32 %v4685, %v4785
        %v4880 = vadd.f32 %v4689, %v4781
        %v4881 = vadd.f32 %v4691, %v4785
        %v4882 = vadd.f32 %v4693, %v4781
        %v4883 = vadd.f32 %v4695, %v4785
        %v4884 = vadd.f32 %v4699, %v4781
        %v4885 = vadd.f32 %v4701, %v4785
        %v4886 = vadd.f32 %v4703, %v4781
        %v4887 = vadd.f32 %v4705, %v4785
        %v4888 = vadd.f32 %v4709, %v4781
        %v4889 = vadd.f32 %v4711, %v4785
        %v4890 = vadd.f32 %v4713, %v4781
        %v4891 = vadd.f32 %v4715, %v4785
        %v4892 = vadd.f32 %v4719, %v4781
        %v4893 = vadd.f32 %v4721, %v4785
        %v4894 = vadd.f32 %v4723, %v4781
        %v4895 = vadd.f32 %v4725, %v4785
        %v4896 = vadd.f32 %v4729, %v4781
        %v4897 = vadd.f32 %v4731, %v4785
        %v4898 = vadd.f32 %v4733, %v4781
        %v4899 = vadd.f32 %v4735, %v4785
        %v4900 = vadd.f32 %v4739, %v4781
        %v4901 = vadd.f32 %v4741, %v4785
        %v4902 = vadd.f32 %v4743, %v4781
        %v4903 = vadd.f32 %v4745, %v4785
        %v4904 = vadd.f32 %v4749, %v4781
        %v4905 = vadd.f32 %v4751, %v4785
        %v4906 = vadd.f32 %v4753, %v4781
        %v4907 = vadd.f32 %v4755, %v4785
        %v4908 = vadd.f32 %v4759, %v4781
        %v4909 = vadd.f32 %v4761, %v4785
        %v4910 = vadd.f32 %v4763, %v4781
        %v4911 = vadd.f32 %v4765, %v4785
        %v4912 = vadd.f32 %v4769, %v4781
        %v4913 = vadd.f32 %v4771, %v4785
        %v4914 = vadd.f32 %v4773, %v4781
        %v4915 = vadd.f32 %v4775, %v4785
        %v4916 = vmax.f32 %v4788, 0.0
        %v4917 = vmax.f32 %v4789, 0.0
        %v4918 = vmax.f32 %v4790, 0.0
        %v4919 = vmax.f32 %v4791, 0.0
        %v4920 = vmax.f32 %v4792, 0.0
        %v4921 = vmax.f32 %v4793, 0.0
        %v4922 = vmax.f32 %v4794, 0.0
        %v4923 = vmax.f32 %v4795, 0.0
        %v4924 = vmax.f32 %v4796, 0.0
        %v4925 = vmax.f32 %v4797, 0.0
        %v4926 = vmax.f32 %v4798, 0.0
        %v4927 = vmax.f32 %v4799, 0.0
        %v4928 = vmax.f32 %v4800, 0.0
        %v4929 = vmax.f32 %v4801, 0.0
        %v4930 = vmax.f32 %v4802, 0.0
        %v4931 = vmax.f32 %v4803, 0.0
        %v4932 = vmax.f32 %v4804, 0.0
        %v4933 = vmax.f32 %v4805, 0.0
        %v4934 = vmax.f32 %v4806, 0.0
        %v4935 = vmax.f32 %v4807, 0.0
        %v4936 = vmax.f32 %v4808, 0.0
        %v4937 = vmax.f32 %v4809, 0.0
        %v4938 = vmax.f32 %v4810, 0.0
        %v4939 = vmax.f32 %v4811, 0.0
        %v4940 = vmax.f32 %v4812, 0.0
        %v4941 = vmax.f32 %v4813, 0.0
        %v4942 = vmax.f32 %v4814, 0.0
        %v4943 = vmax.f32 %v4815, 0.0
        %v4944 = vmax.f32 %v4816, 0.0
        %v4945 = vmax.f32 %v4817, 0.0
        %v4946 = vmax.f32 %v4818, 0.0
        %v4947 = vmax.f32 %v4819, 0.0
        %v4948 = vmax.f32 %v4820, 0.0
        %v4949 = vmax.f32 %v4821, 0.0
        %v4950 = vmax.f32 %v4822, 0.0
        %v4951 = vmax.f32 %v4823, 0.0
        %v4952 = vmax.f32 %v4824, 0.0
        %v4953 = vmax.f32 %v4825, 0.0
        %v4954 = vmax.f32 %v4826, 0.0
        %v4955 = vmax.f32 %v4827, 0.0
        %v4956 = vmax.f32 %v4828, 0.0
        %v4957 = vmax.f32 %v4829, 0.0
        %v4958 = vmax.f32 %v4830, 0.0
        %v4959 = vmax.f32 %v4831, 0.0
        %v4960 = vmax.f32 %v4832, 0.0
        %v4961 = vmax.f32 %v4833, 0.0
        %v4962 = vmax.f32 %v4834, 0.0
        %v4963 = vmax.f32 %v4835, 0.0
        %v4964 = vmax.f32 %v4836, 0.0
        %v4965 = vmax.f32 %v4837, 0.0
        %v4966 = vmax.f32 %v4838, 0.0
        %v4967 = vmax.f32 %v4839, 0.0
        %v4968 = vmax.f32 %v4840, 0.0
        %v4969 = vmax.f32 %v4841, 0.0
        %v4970 = vmax.f32 %v4842, 0.0
        %v4971 = vmax.f32 %v4843, 0.0
        %v4972 = vmax.f32 %v4844, 0.0
        %v4973 = vmax.f32 %v4845, 0.0
        %v4974 = vmax.f32 %v4846, 0.0
        %v4975 = vmax.f32 %v4847, 0.0
        %v4976 = vmax.f32 %v4848, 0.0
        %v4977 = vmax.f32 %v4849, 0.0
        %v4978 = vmax.f32 %v4850, 0.0
        %v4979 = vmax.f32 %v4851, 0.0
        %v4980 = vmax.f32 %v4852, 0.0
        %v4981 = vmax.f32 %v4853, 0.0
        %v4982 = vmax.f32 %v4854, 0.0
        %v4983 = vmax.f32 %v4855, 0.0
        %v4984 = vmax.f32 %v4856, 0.0
        %v4985 = vmax.f32 %v4857, 0.0
        %v4986 = vmax.f32 %v4858, 0.0
        %v4987 = vmax.f32 %v4859, 0.0
        %v4988 = vmax.f32 %v4860, 0.0
        %v4989 = vmax.f32 %v4861, 0.0
        %v4990 = vmax.f32 %v4862, 0.0
        %v4991 = vmax.f32 %v4863, 0.0
        %v4992 = vmax.f32 %v4864, 0.0
        %v4993 = vmax.f32 %v4865, 0.0
        %v4994 = vmax.f32 %v4866, 0.0
        %v4995 = vmax.f32 %v4867, 0.0
        %v4996 = vmax.f32 %v4868, 0.0
        %v4997 = vmax.f32 %v4869, 0.0
        %v4998 = vmax.f32 %v4870, 0.0
        %v4999 = vmax.f32 %v4871, 0.0
        %v5000 = vmax.f32 %v4872, 0.0
        %v5001 = vmax.f32 %v4873, 0.0
        %v5002 = vmax.f32 %v4874, 0.0
        %v5003 = vmax.f32 %v4875, 0.0
        %v5004 = vmax.f32 %v4876, 0.0
        %v5005 = vmax.f32 %v4877, 0.0
        %v5006 = vmax.f32 %v4878, 0.0
        %v5007 = vmax.f32 %v4879, 0.0
        %v5008 = vmax.f32 %v4880, 0.0
        %v5009 = vmax.f32 %v4881, 0.0
        %v5010 = vmax.f32 %v4882, 0.0
        %v5011 = vmax.f32 %v4883, 0.0
        %v5012 = vmax.f32 %v4884, 0.0
        %v5013 = vmax.f32 %v4885, 0.0
        %v5014 = vmax.f32 %v4886, 0.0
        %v5015 = vmax.f32 %v4887, 0.0
        %v5016 = vmax.f32 %v4888, 0.0
        %v5017 = vmax.f32 %v4889, 0.0
        %v5018 = vmax.f32 %v4890, 0.0
        %v5019 = vmax.f32 %v4891, 0.0
        %v5020 = vmax.f32 %v4892, 0.0
        %v5021 = vmax.f32 %v4893, 0.0
        %v5022 = vmax.f32 %v4894, 0.0
        %v5023 = vmax.f32 %v4895, 0.0
        %v5024 = vmax.f32 %v4896, 0.0
        %v5025 = vmax.f32 %v4897, 0.0
        %v5026 = vmax.f32 %v4898, 0.0
        %v5027 = vmax.f32 %v4899, 0.0
        %v5028 = vmax.f32 %v4900, 0.0
        %v5029 = vmax.f32 %v4901, 0.0
        %v5030 = vmax.f32 %v4902, 0.0
        %v5031 = vmax.f32 %v4903, 0.0
        %v5032 = vmax.f32 %v4904, 0.0
        %v5033 = vmax.f32 %v4905, 0.0
        %v5034 = vmax.f32 %v4906, 0.0
        %v5035 = vmax.f32 %v4907, 0.0
        %v5036 = vmax.f32 %v4908, 0.0
        %v5037 = vmax.f32 %v4909, 0.0
        %v5038 = vmax.f32 %v4910, 0.0
        %v5039 = vmax.f32 %v4911, 0.0
        %v5040 = vmax.f32 %v4912, 0.0
        %v5041 = vmax.f32 %v4913, 0.0
        %v5042 = vmax.f32 %v4914, 0.0
        %v5043 = vmax.f32 %v4915, 0.0
        %v5044 = vld [vmem:[#allocation14] sm:$0xff]
        %v5045 = vld [vmem:[#allocation14 + $0x8] sm:$0xff]
        %v5046 = vld [vmem:[#allocation14 + $0x10] sm:$0xff]
        %v5047 = vld [vmem:[#allocation14 + $0x18] sm:$0xff]
        %v5048 = vld [vmem:[#allocation14 + $0x20] sm:$0xff]
        %v5049 = vld [vmem:[#allocation14 + $0x28] sm:$0xff]
        %v5050 = vld [vmem:[#allocation14 + $0x30] sm:$0xff]
        %v5051 = vld [vmem:[#allocation14 + $0x38] sm:$0xff]
        %v5052 = vld [vmem:[#allocation14 + $0x40] sm:$0xff]
        %v5053 = vld [vmem:[#allocation14 + $0x48] sm:$0xff]
        %v5054 = vld [vmem:[#allocation14 + $0x50] sm:$0xff]
        %v5055 = vld [vmem:[#allocation14 + $0x58] sm:$0xff]
        %v5056 = vld [vmem:[#allocation14 + $0x60] sm:$0xff]
        %v5057 = vld [vmem:[#allocation14 + $0x68] sm:$0xff]
        %v5058 = vld [vmem:[#allocation14 + $0x70] sm:$0xff]
        %v5059 = vld [vmem:[#allocation14 + $0x78] sm:$0xff]
        %v5060 = vld [vmem:[#allocation14 + $0x80] sm:$0xff]
        %v5061 = vld [vmem:[#allocation14 + $0x88] sm:$0xff]
        %v5062 = vld [vmem:[#allocation14 + $0x90] sm:$0xff]
        %v5063 = vld [vmem:[#allocation14 + $0x98] sm:$0xff]
        %v5064 = vld [vmem:[#allocation14 + $0xa0] sm:$0xff]
        %v5065 = vld [vmem:[#allocation14 + $0xa8] sm:$0xff]
        %v5066 = vld [vmem:[#allocation14 + $0xb0] sm:$0xff]
        %v5067 = vld [vmem:[#allocation14 + $0xb8] sm:$0xff]
        %v5068 = vld [vmem:[#allocation14 + $0xc0] sm:$0xff]
        %v5069 = vld [vmem:[#allocation14 + $0xc8] sm:$0xff]
        %v5070 = vld [vmem:[#allocation14 + $0xd0] sm:$0xff]
        %v5071 = vld [vmem:[#allocation14 + $0xd8] sm:$0xff]
        %v5072 = vld [vmem:[#allocation14 + $0xe0] sm:$0xff]
        %v5073 = vld [vmem:[#allocation14 + $0xe8] sm:$0xff]
        %v5074 = vld [vmem:[#allocation14 + $0xf0] sm:$0xff]
        %v5075 = vld [vmem:[#allocation14 + $0xf8] sm:$0xff]
        %v5076 = vld [vmem:[%s13] sm:$0x3]
        %v5077 = vpack.c.bf16 %v4918, %v4916
        %v5078 = vpack.c.bf16 %v4919, %v4917
        %v5079 = vpack.c.bf16 %v4922, %v4920
        %v5080 = vpack.c.bf16 %v4923, %v4921
        %v5081 = vpack.c.bf16 %v4926, %v4924
        %v5082 = vpack.c.bf16 %v4927, %v4925
        %v5083 = vpack.c.bf16 %v4930, %v4928
        %v5084 = vpack.c.bf16 %v4931, %v4929
        %v5085 = vpack.c.bf16 %v4934, %v4932
        %v5086 = vpack.c.bf16 %v4935, %v4933
        %v5087 = vpack.c.bf16 %v4938, %v4936
        %v5088 = vpack.c.bf16 %v4939, %v4937
        %v5089 = vpack.c.bf16 %v4942, %v4940
        %v5090 = vpack.c.bf16 %v4943, %v4941
        %v5091 = vpack.c.bf16 %v4946, %v4944
        %v5092 = vpack.c.bf16 %v4947, %v4945
        %v5093 = vpack.c.bf16 %v4950, %v4948
        %v5094 = vpack.c.bf16 %v4951, %v4949
        %v5095 = vpack.c.bf16 %v4954, %v4952
        %v5096 = vpack.c.bf16 %v4955, %v4953
        %v5097 = vpack.c.bf16 %v4958, %v4956
        %v5098 = vpack.c.bf16 %v4959, %v4957
        %v5099 = vpack.c.bf16 %v4962, %v4960
        %v5100 = vpack.c.bf16 %v4963, %v4961
        %v5101 = vpack.c.bf16 %v4966, %v4964
        %v5102 = vpack.c.bf16 %v4967, %v4965
        %v5103 = vpack.c.bf16 %v4970, %v4968
        %v5104 = vpack.c.bf16 %v4971, %v4969
        %v5105 = vpack.c.bf16 %v4974, %v4972
        %v5106 = vpack.c.bf16 %v4975, %v4973
        %v5107 = vpack.c.bf16 %v4978, %v4976
        %v5108 = vpack.c.bf16 %v4979, %v4977
        %v5109 = vpack.c.bf16 %v4982, %v4980
        %v5110 = vpack.c.bf16 %v4983, %v4981
        %v5111 = vpack.c.bf16 %v4986, %v4984
        %v5112 = vpack.c.bf16 %v4987, %v4985
        %v5113 = vpack.c.bf16 %v4990, %v4988
        %v5114 = vpack.c.bf16 %v4991, %v4989
        %v5115 = vpack.c.bf16 %v4994, %v4992
        %v5116 = vpack.c.bf16 %v4995, %v4993
        %v5117 = vpack.c.bf16 %v4998, %v4996
        %v5118 = vpack.c.bf16 %v4999, %v4997
        %v5119 = vpack.c.bf16 %v5002, %v5000
        %v5120 = vpack.c.bf16 %v5003, %v5001
        %v5121 = vpack.c.bf16 %v5006, %v5004
        %v5122 = vpack.c.bf16 %v5007, %v5005
        %v5123 = vpack.c.bf16 %v5010, %v5008
        %v5124 = vpack.c.bf16 %v5011, %v5009
        %v5125 = vpack.c.bf16 %v5014, %v5012
        %v5126 = vpack.c.bf16 %v5015, %v5013
        %v5127 = vpack.c.bf16 %v5018, %v5016
        %v5128 = vpack.c.bf16 %v5019, %v5017
        %v5129 = vpack.c.bf16 %v5022, %v5020
        %v5130 = vpack.c.bf16 %v5023, %v5021
        %v5131 = vpack.c.bf16 %v5026, %v5024
        %v5132 = vpack.c.bf16 %v5027, %v5025
        %v5133 = vpack.c.bf16 %v5030, %v5028
        %v5134 = vpack.c.bf16 %v5031, %v5029
        %v5135 = vpack.c.bf16 %v5034, %v5032
        %v5136 = vpack.c.bf16 %v5035, %v5033
        %v5137 = vpack.c.bf16 %v5038, %v5036
        %v5138 = vpack.c.bf16 %v5039, %v5037
        %v5139 = vpack.c.bf16 %v5042, %v5040
        %v5140 = vpack.c.bf16 %v5043, %v5041
        %v5142 = vlaneseq
        %v5143 = vshrl.u32 %v5142, 7
        %v5144 = vsub.s32 0, %v5143
        %v5145 = vrot.slane %v5076, %v5144
        %v5146 = vlaneseq
        %v5147 = vshrl.u32 %v5146, 7
        %v5148 = vsub.s32 1, %v5147
        %v5149 = vrot.slane %v5076, %v5148
        %v5184 = vunpack.c.l.b16 %v5044
        %v5185 = vunpack.c.h.b16 %v5044
        %v5186 = vunpack.c.l.b16 %v5045
        %v5187 = vunpack.c.h.b16 %v5045
        %v5188 = vunpack.c.l.b16 %v5046
        %v5189 = vunpack.c.h.b16 %v5046
        %v5190 = vunpack.c.l.b16 %v5047
        %v5191 = vunpack.c.h.b16 %v5047
        %v5192 = vunpack.c.l.b16 %v5048
        %v5193 = vunpack.c.h.b16 %v5048
        %v5194 = vunpack.c.l.b16 %v5049
        %v5195 = vunpack.c.h.b16 %v5049
        %v5196 = vunpack.c.l.b16 %v5050
        %v5197 = vunpack.c.h.b16 %v5050
        %v5198 = vunpack.c.l.b16 %v5051
        %v5199 = vunpack.c.h.b16 %v5051
        %v5200 = vunpack.c.l.b16 %v5052
        %v5201 = vunpack.c.h.b16 %v5052
        %v5202 = vunpack.c.l.b16 %v5053
        %v5203 = vunpack.c.h.b16 %v5053
        %v5204 = vunpack.c.l.b16 %v5054
        %v5205 = vunpack.c.h.b16 %v5054
        %v5206 = vunpack.c.l.b16 %v5055
        %v5207 = vunpack.c.h.b16 %v5055
        %v5208 = vunpack.c.l.b16 %v5056
        %v5209 = vunpack.c.h.b16 %v5056
        %v5210 = vunpack.c.l.b16 %v5057
        %v5211 = vunpack.c.h.b16 %v5057
        %v5212 = vunpack.c.l.b16 %v5058
        %v5213 = vunpack.c.h.b16 %v5058
        %v5214 = vunpack.c.l.b16 %v5059
        %v5215 = vunpack.c.h.b16 %v5059
        %v5216 = vunpack.c.l.b16 %v5060
        %v5217 = vunpack.c.h.b16 %v5060
        %v5218 = vunpack.c.l.b16 %v5061
        %v5219 = vunpack.c.h.b16 %v5061
        %v5220 = vunpack.c.l.b16 %v5062
        %v5221 = vunpack.c.h.b16 %v5062
        %v5222 = vunpack.c.l.b16 %v5063
        %v5223 = vunpack.c.h.b16 %v5063
        %v5224 = vunpack.c.l.b16 %v5064
        %v5225 = vunpack.c.h.b16 %v5064
        %v5226 = vunpack.c.l.b16 %v5065
        %v5227 = vunpack.c.h.b16 %v5065
        %v5228 = vunpack.c.l.b16 %v5066
        %v5229 = vunpack.c.h.b16 %v5066
        %v5230 = vunpack.c.l.b16 %v5067
        %v5231 = vunpack.c.h.b16 %v5067
        %v5232 = vunpack.c.l.b16 %v5068
        %v5233 = vunpack.c.h.b16 %v5068
        %v5234 = vunpack.c.l.b16 %v5069
        %v5235 = vunpack.c.h.b16 %v5069
        %v5236 = vunpack.c.l.b16 %v5070
        %v5237 = vunpack.c.h.b16 %v5070
        %v5238 = vunpack.c.l.b16 %v5071
        %v5239 = vunpack.c.h.b16 %v5071
        %v5240 = vunpack.c.l.b16 %v5072
        %v5241 = vunpack.c.h.b16 %v5072
        %v5242 = vunpack.c.l.b16 %v5073
        %v5243 = vunpack.c.h.b16 %v5073
        %v5244 = vunpack.c.l.b16 %v5074
        %v5245 = vunpack.c.h.b16 %v5074
        %v5246 = vunpack.c.l.b16 %v5075
        %v5247 = vunpack.c.h.b16 %v5075
        %v5248 = vpack.c.b16 %v5186, %v5184
        %v5249 = vpack.c.b16 %v5187, %v5185
        %v5250 = vpack.c.b16 %v5190, %v5188
        %v5251 = vpack.c.b16 %v5191, %v5189
        %v5252 = vpack.c.b16 %v5194, %v5192
        %v5253 = vpack.c.b16 %v5195, %v5193
        %v5254 = vpack.c.b16 %v5198, %v5196
        %v5255 = vpack.c.b16 %v5199, %v5197
        %v5256 = vpack.c.b16 %v5202, %v5200
        %v5257 = vpack.c.b16 %v5203, %v5201
        %v5258 = vpack.c.b16 %v5206, %v5204
        %v5259 = vpack.c.b16 %v5207, %v5205
        %v5260 = vpack.c.b16 %v5210, %v5208
        %v5261 = vpack.c.b16 %v5211, %v5209
        %v5262 = vpack.c.b16 %v5214, %v5212
        %v5263 = vpack.c.b16 %v5215, %v5213
        %v5264 = vpack.c.b16 %v5218, %v5216
        %v5265 = vpack.c.b16 %v5219, %v5217
        %v5266 = vpack.c.b16 %v5222, %v5220
        %v5267 = vpack.c.b16 %v5223, %v5221
        %v5268 = vpack.c.b16 %v5226, %v5224
        %v5269 = vpack.c.b16 %v5227, %v5225
        %v5270 = vpack.c.b16 %v5230, %v5228
        %v5271 = vpack.c.b16 %v5231, %v5229
        %v5272 = vpack.c.b16 %v5234, %v5232
        %v5273 = vpack.c.b16 %v5235, %v5233
        %v5274 = vpack.c.b16 %v5238, %v5236
        %v5275 = vpack.c.b16 %v5239, %v5237
        %v5276 = vpack.c.b16 %v5242, %v5240
        %v5277 = vpack.c.b16 %v5243, %v5241
        %v5278 = vpack.c.b16 %v5246, %v5244
        %v5279 = vpack.c.b16 %v5247, %v5245
        %5312 = vmatprep.subr.bf16.mxu0 %v5249
        %5313 = vmatpush1.bf16.msra.mxu0 %v5248
        %5314 = vmatprep.subr.bf16.mxu0 %v5251
        %5315 = vmatpush1.bf16.msra.mxu0 %v5250
        %5316 = vmatprep.subr.bf16.mxu0 %v5253
        %5317 = vmatpush1.bf16.msra.mxu0 %v5252
        %5318 = vmatprep.subr.bf16.mxu0 %v5255
        %5319 = vmatpush1.bf16.msra.mxu0 %v5254
        %5320 = vmatprep.subr.bf16.mxu0 %v5257
        %5321 = vmatpush1.bf16.msra.mxu0 %v5256
        %5322 = vmatprep.subr.bf16.mxu0 %v5259
        %5323 = vmatpush1.bf16.msra.mxu0 %v5258
        %5324 = vmatprep.subr.bf16.mxu0 %v5261
        %5325 = vmatpush1.bf16.msra.mxu0 %v5260
        %5326 = vmatprep.subr.bf16.mxu0 %v5263
        %5327 = vmatpush1.bf16.msra.mxu0 %v5262
        %5328 = vmatprep.subr.bf16.mxu0 %v5265
        %5329 = vmatpush1.bf16.msra.mxu0 %v5264
        %5330 = vmatprep.subr.bf16.mxu0 %v5267
        %5331 = vmatpush1.bf16.msra.mxu0 %v5266
        %5332 = vmatprep.subr.bf16.mxu0 %v5269
        %5333 = vmatpush1.bf16.msra.mxu0 %v5268
        %5334 = vmatprep.subr.bf16.mxu0 %v5271
        %5335 = vmatpush1.bf16.msra.mxu0 %v5270
        %5336 = vmatprep.subr.bf16.mxu0 %v5273
        %5337 = vmatpush1.bf16.msra.mxu0 %v5272
        %5338 = vmatprep.subr.bf16.mxu0 %v5275
        %5339 = vmatpush1.bf16.msra.mxu0 %v5274
        %5340 = vmatprep.subr.bf16.mxu0 %v5277
        %5341 = vmatpush1.bf16.msra.mxu0 %v5276
        %5342 = vmatprep.subr.bf16.mxu0 %v5279
        %5343 = vmatpush1.bf16.msra.mxu0 %v5278
        %5344 = vmatprep.mubr.bf16.mxu0 %v5078
        %5345 = vmatmul.mubr.bf16.gmra.mrb[0].mxu0 %v5077
        %v5346 = vpop.f32.mrb[0].mxu0
        %v5347 = vadd.f32 %v5145, %v5346
        %v5348 = vpop.f32.mrb[0].mxu0
        %v5349 = vadd.f32 %v5149, %v5348
        %v5350 = vpop.f32.mrb[0].mxu0
        %v5351 = vadd.f32 %v5145, %v5350
        %v5352 = vpop.f32.mrb[0].mxu0
        %v5353 = vadd.f32 %v5149, %v5352
        %5354 = vmatprep.mubr.bf16.mxu0 %v5080
        %5355 = vmatmul.mubr.bf16.gmra.mrb[0].mxu0 %v5079
        %v5356 = vpop.f32.mrb[0].mxu0
        %v5357 = vadd.f32 %v5145, %v5356
        %v5358 = vpop.f32.mrb[0].mxu0
        %v5359 = vadd.f32 %v5149, %v5358
        %v5360 = vpop.f32.mrb[0].mxu0
        %v5361 = vadd.f32 %v5145, %v5360
        %v5362 = vpop.f32.mrb[0].mxu0
        %v5363 = vadd.f32 %v5149, %v5362
        %5364 = vmatprep.mubr.bf16.mxu0 %v5082
        %5365 = vmatmul.mubr.bf16.gmra.mrb[0].mxu0 %v5081
        %v5366 = vpop.f32.mrb[0].mxu0
        %v5367 = vadd.f32 %v5145, %v5366
        %v5368 = vpop.f32.mrb[0].mxu0
        %v5369 = vadd.f32 %v5149, %v5368
        %v5370 = vpop.f32.mrb[0].mxu0
        %v5371 = vadd.f32 %v5145, %v5370
        %v5372 = vpop.f32.mrb[0].mxu0
        %v5373 = vadd.f32 %v5149, %v5372
        %5374 = vmatprep.mubr.bf16.mxu0 %v5084
        %5375 = vmatmul.mubr.bf16.gmra.mrb[0].mxu0 %v5083
        %v5376 = vpop.f32.mrb[0].mxu0
        %v5377 = vadd.f32 %v5145, %v5376
        %v5378 = vpop.f32.mrb[0].mxu0
        %v5379 = vadd.f32 %v5149, %v5378
        %v5380 = vpop.f32.mrb[0].mxu0
        %v5381 = vadd.f32 %v5145, %v5380
        %v5382 = vpop.f32.mrb[0].mxu0
        %v5383 = vadd.f32 %v5149, %v5382
        %5384 = vmatprep.mubr.bf16.mxu0 %v5086
        %5385 = vmatmul.mubr.bf16.gmra.mrb[0].mxu0 %v5085
        %v5386 = vpop.f32.mrb[0].mxu0
        %v5387 = vadd.f32 %v5145, %v5386
        %v5388 = vpop.f32.mrb[0].mxu0
        %v5389 = vadd.f32 %v5149, %v5388
        %v5390 = vpop.f32.mrb[0].mxu0
        %v5391 = vadd.f32 %v5145, %v5390
        %v5392 = vpop.f32.mrb[0].mxu0
        %v5393 = vadd.f32 %v5149, %v5392
        %5394 = vmatprep.mubr.bf16.mxu0 %v5088
        %5395 = vmatmul.mubr.bf16.gmra.mrb[0].mxu0 %v5087
        %v5396 = vpop.f32.mrb[0].mxu0
        %v5397 = vadd.f32 %v5145, %v5396
        %v5398 = vpop.f32.mrb[0].mxu0
        %v5399 = vadd.f32 %v5149, %v5398
        %v5400 = vpop.f32.mrb[0].mxu0
        %v5401 = vadd.f32 %v5145, %v5400
        %v5402 = vpop.f32.mrb[0].mxu0
        %v5403 = vadd.f32 %v5149, %v5402
        %5404 = vmatprep.mubr.bf16.mxu0 %v5090
        %5405 = vmatmul.mubr.bf16.gmra.mrb[0].mxu0 %v5089
        %v5406 = vpop.f32.mrb[0].mxu0
        %v5407 = vadd.f32 %v5145, %v5406
        %v5408 = vpop.f32.mrb[0].mxu0
        %v5409 = vadd.f32 %v5149, %v5408
        %v5410 = vpop.f32.mrb[0].mxu0
        %v5411 = vadd.f32 %v5145, %v5410
        %v5412 = vpop.f32.mrb[0].mxu0
        %v5413 = vadd.f32 %v5149, %v5412
        %5414 = vmatprep.mubr.bf16.mxu0 %v5092
        %5415 = vmatmul.mubr.bf16.gmra.mrb[0].mxu0 %v5091
        %v5416 = vpop.f32.mrb[0].mxu0
        %v5417 = vadd.f32 %v5145, %v5416
        %v5418 = vpop.f32.mrb[0].mxu0
        %v5419 = vadd.f32 %v5149, %v5418
        %v5420 = vpop.f32.mrb[0].mxu0
        %v5421 = vadd.f32 %v5145, %v5420
        %v5422 = vpop.f32.mrb[0].mxu0
        %v5423 = vadd.f32 %v5149, %v5422
        %5424 = vmatprep.mubr.bf16.mxu0 %v5094
        %5425 = vmatmul.mubr.bf16.gmra.mrb[0].mxu0 %v5093
        %v5426 = vpop.f32.mrb[0].mxu0
        %v5427 = vadd.f32 %v5145, %v5426
        %v5428 = vpop.f32.mrb[0].mxu0
        %v5429 = vadd.f32 %v5149, %v5428
        %v5430 = vpop.f32.mrb[0].mxu0
        %v5431 = vadd.f32 %v5145, %v5430
        %v5432 = vpop.f32.mrb[0].mxu0
        %v5433 = vadd.f32 %v5149, %v5432
        %5434 = vmatprep.mubr.bf16.mxu0 %v5096
        %5435 = vmatmul.mubr.bf16.gmra.mrb[0].mxu0 %v5095
        %v5436 = vpop.f32.mrb[0].mxu0
        %v5437 = vadd.f32 %v5145, %v5436
        %v5438 = vpop.f32.mrb[0].mxu0
        %v5439 = vadd.f32 %v5149, %v5438
        %v5440 = vpop.f32.mrb[0].mxu0
        %v5441 = vadd.f32 %v5145, %v5440
        %v5442 = vpop.f32.mrb[0].mxu0
        %v5443 = vadd.f32 %v5149, %v5442
        %5444 = vmatprep.mubr.bf16.mxu0 %v5098
        %5445 = vmatmul.mubr.bf16.gmra.mrb[0].mxu0 %v5097
        %v5446 = vpop.f32.mrb[0].mxu0
        %v5447 = vadd.f32 %v5145, %v5446
        %v5448 = vpop.f32.mrb[0].mxu0
        %v5449 = vadd.f32 %v5149, %v5448
        %v5450 = vpop.f32.mrb[0].mxu0
        %v5451 = vadd.f32 %v5145, %v5450
        %v5452 = vpop.f32.mrb[0].mxu0
        %v5453 = vadd.f32 %v5149, %v5452
        %5454 = vmatprep.mubr.bf16.mxu0 %v5100
        %5455 = vmatmul.mubr.bf16.gmra.mrb[0].mxu0 %v5099
        %v5456 = vpop.f32.mrb[0].mxu0
        %v5457 = vadd.f32 %v5145, %v5456
        %v5458 = vpop.f32.mrb[0].mxu0
        %v5459 = vadd.f32 %v5149, %v5458
        %v5460 = vpop.f32.mrb[0].mxu0
        %v5461 = vadd.f32 %v5145, %v5460
        %v5462 = vpop.f32.mrb[0].mxu0
        %v5463 = vadd.f32 %v5149, %v5462
        %5464 = vmatprep.mubr.bf16.mxu0 %v5102
        %5465 = vmatmul.mubr.bf16.gmra.mrb[0].mxu0 %v5101
        %v5466 = vpop.f32.mrb[0].mxu0
        %v5467 = vadd.f32 %v5145, %v5466
        %v5468 = vpop.f32.mrb[0].mxu0
        %v5469 = vadd.f32 %v5149, %v5468
        %v5470 = vpop.f32.mrb[0].mxu0
        %v5471 = vadd.f32 %v5145, %v5470
        %v5472 = vpop.f32.mrb[0].mxu0
        %v5473 = vadd.f32 %v5149, %v5472
        %5474 = vmatprep.mubr.bf16.mxu0 %v5104
        %5475 = vmatmul.mubr.bf16.gmra.mrb[0].mxu0 %v5103
        %v5476 = vpop.f32.mrb[0].mxu0
        %v5477 = vadd.f32 %v5145, %v5476
        %v5478 = vpop.f32.mrb[0].mxu0
        %v5479 = vadd.f32 %v5149, %v5478
        %v5480 = vpop.f32.mrb[0].mxu0
        %v5481 = vadd.f32 %v5145, %v5480
        %v5482 = vpop.f32.mrb[0].mxu0
        %v5483 = vadd.f32 %v5149, %v5482
        %5484 = vmatprep.mubr.bf16.mxu0 %v5106
        %5485 = vmatmul.mubr.bf16.gmra.mrb[0].mxu0 %v5105
        %v5486 = vpop.f32.mrb[0].mxu0
        %v5487 = vadd.f32 %v5145, %v5486
        %v5488 = vpop.f32.mrb[0].mxu0
        %v5489 = vadd.f32 %v5149, %v5488
        %v5490 = vpop.f32.mrb[0].mxu0
        %v5491 = vadd.f32 %v5145, %v5490
        %v5492 = vpop.f32.mrb[0].mxu0
        %v5493 = vadd.f32 %v5149, %v5492
        %5494 = vmatprep.mubr.bf16.mxu0 %v5108
        %5495 = vmatmul.mubr.bf16.gmra.mrb[0].mxu0 %v5107
        %v5496 = vpop.f32.mrb[0].mxu0
        %v5497 = vadd.f32 %v5145, %v5496
        %v5498 = vpop.f32.mrb[0].mxu0
        %v5499 = vadd.f32 %v5149, %v5498
        %v5500 = vpop.f32.mrb[0].mxu0
        %v5501 = vadd.f32 %v5145, %v5500
        %v5502 = vpop.f32.mrb[0].mxu0
        %v5503 = vadd.f32 %v5149, %v5502
        %5504 = vmatprep.mubr.bf16.mxu0 %v5110
        %5505 = vmatmul.mubr.bf16.gmra.mrb[0].mxu0 %v5109
        %v5506 = vpop.f32.mrb[0].mxu0
        %v5507 = vadd.f32 %v5145, %v5506
        %v5508 = vpop.f32.mrb[0].mxu0
        %v5509 = vadd.f32 %v5149, %v5508
        %v5510 = vpop.f32.mrb[0].mxu0
        %v5511 = vadd.f32 %v5145, %v5510
        %v5512 = vpop.f32.mrb[0].mxu0
        %v5513 = vadd.f32 %v5149, %v5512
        %5514 = vmatprep.mubr.bf16.mxu0 %v5112
        %5515 = vmatmul.mubr.bf16.gmra.mrb[0].mxu0 %v5111
        %v5516 = vpop.f32.mrb[0].mxu0
        %v5517 = vadd.f32 %v5145, %v5516
        %v5518 = vpop.f32.mrb[0].mxu0
        %v5519 = vadd.f32 %v5149, %v5518
        %v5520 = vpop.f32.mrb[0].mxu0
        %v5521 = vadd.f32 %v5145, %v5520
        %v5522 = vpop.f32.mrb[0].mxu0
        %v5523 = vadd.f32 %v5149, %v5522
        %5524 = vmatprep.mubr.bf16.mxu0 %v5114
        %5525 = vmatmul.mubr.bf16.gmra.mrb[0].mxu0 %v5113
        %v5526 = vpop.f32.mrb[0].mxu0
        %v5527 = vadd.f32 %v5145, %v5526
        %v5528 = vpop.f32.mrb[0].mxu0
        %v5529 = vadd.f32 %v5149, %v5528
        %v5530 = vpop.f32.mrb[0].mxu0
        %v5531 = vadd.f32 %v5145, %v5530
        %v5532 = vpop.f32.mrb[0].mxu0
        %v5533 = vadd.f32 %v5149, %v5532
        %5534 = vmatprep.mubr.bf16.mxu0 %v5116
        %5535 = vmatmul.mubr.bf16.gmra.mrb[0].mxu0 %v5115
        %v5536 = vpop.f32.mrb[0].mxu0
        %v5537 = vadd.f32 %v5145, %v5536
        %v5538 = vpop.f32.mrb[0].mxu0
        %v5539 = vadd.f32 %v5149, %v5538
        %v5540 = vpop.f32.mrb[0].mxu0
        %v5541 = vadd.f32 %v5145, %v5540
        %v5542 = vpop.f32.mrb[0].mxu0
        %v5543 = vadd.f32 %v5149, %v5542
        %5544 = vmatprep.mubr.bf16.mxu0 %v5118
        %5545 = vmatmul.mubr.bf16.gmra.mrb[0].mxu0 %v5117
        %v5546 = vpop.f32.mrb[0].mxu0
        %v5547 = vadd.f32 %v5145, %v5546
        %v5548 = vpop.f32.mrb[0].mxu0
        %v5549 = vadd.f32 %v5149, %v5548
        %v5550 = vpop.f32.mrb[0].mxu0
        %v5551 = vadd.f32 %v5145, %v5550
        %v5552 = vpop.f32.mrb[0].mxu0
        %v5553 = vadd.f32 %v5149, %v5552
        %5554 = vmatprep.mubr.bf16.mxu0 %v5120
        %5555 = vmatmul.mubr.bf16.gmra.mrb[0].mxu0 %v5119
        %v5556 = vpop.f32.mrb[0].mxu0
        %v5557 = vadd.f32 %v5145, %v5556
        %v5558 = vpop.f32.mrb[0].mxu0
        %v5559 = vadd.f32 %v5149, %v5558
        %v5560 = vpop.f32.mrb[0].mxu0
        %v5561 = vadd.f32 %v5145, %v5560
        %v5562 = vpop.f32.mrb[0].mxu0
        %v5563 = vadd.f32 %v5149, %v5562
        %5564 = vmatprep.mubr.bf16.mxu0 %v5122
        %5565 = vmatmul.mubr.bf16.gmra.mrb[0].mxu0 %v5121
        %v5566 = vpop.f32.mrb[0].mxu0
        %v5567 = vadd.f32 %v5145, %v5566
        %v5568 = vpop.f32.mrb[0].mxu0
        %v5569 = vadd.f32 %v5149, %v5568
        %v5570 = vpop.f32.mrb[0].mxu0
        %v5571 = vadd.f32 %v5145, %v5570
        %v5572 = vpop.f32.mrb[0].mxu0
        %v5573 = vadd.f32 %v5149, %v5572
        %5574 = vmatprep.mubr.bf16.mxu0 %v5124
        %5575 = vmatmul.mubr.bf16.gmra.mrb[0].mxu0 %v5123
        %v5576 = vpop.f32.mrb[0].mxu0
        %v5577 = vadd.f32 %v5145, %v5576
        %v5578 = vpop.f32.mrb[0].mxu0
        %v5579 = vadd.f32 %v5149, %v5578
        %v5580 = vpop.f32.mrb[0].mxu0
        %v5581 = vadd.f32 %v5145, %v5580
        %v5582 = vpop.f32.mrb[0].mxu0
        %v5583 = vadd.f32 %v5149, %v5582
        %5584 = vmatprep.mubr.bf16.mxu0 %v5126
        %5585 = vmatmul.mubr.bf16.gmra.mrb[0].mxu0 %v5125
        %v5586 = vpop.f32.mrb[0].mxu0
        %v5587 = vadd.f32 %v5145, %v5586
        %v5588 = vpop.f32.mrb[0].mxu0
        %v5589 = vadd.f32 %v5149, %v5588
        %v5590 = vpop.f32.mrb[0].mxu0
        %v5591 = vadd.f32 %v5145, %v5590
        %v5592 = vpop.f32.mrb[0].mxu0
        %v5593 = vadd.f32 %v5149, %v5592
        %5594 = vmatprep.mubr.bf16.mxu0 %v5128
        %5595 = vmatmul.mubr.bf16.gmra.mrb[0].mxu0 %v5127
        %v5596 = vpop.f32.mrb[0].mxu0
        %v5597 = vadd.f32 %v5145, %v5596
        %v5598 = vpop.f32.mrb[0].mxu0
        %v5599 = vadd.f32 %v5149, %v5598
        %v5600 = vpop.f32.mrb[0].mxu0
        %v5601 = vadd.f32 %v5145, %v5600
        %v5602 = vpop.f32.mrb[0].mxu0
        %v5603 = vadd.f32 %v5149, %v5602
        %5604 = vmatprep.mubr.bf16.mxu0 %v5130
        %5605 = vmatmul.mubr.bf16.gmra.mrb[0].mxu0 %v5129
        %v5606 = vpop.f32.mrb[0].mxu0
        %v5607 = vadd.f32 %v5145, %v5606
        %v5608 = vpop.f32.mrb[0].mxu0
        %v5609 = vadd.f32 %v5149, %v5608
        %v5610 = vpop.f32.mrb[0].mxu0
        %v5611 = vadd.f32 %v5145, %v5610
        %v5612 = vpop.f32.mrb[0].mxu0
        %v5613 = vadd.f32 %v5149, %v5612
        %5614 = vmatprep.mubr.bf16.mxu0 %v5132
        %5615 = vmatmul.mubr.bf16.gmra.mrb[0].mxu0 %v5131
        %v5616 = vpop.f32.mrb[0].mxu0
        %v5617 = vadd.f32 %v5145, %v5616
        %v5618 = vpop.f32.mrb[0].mxu0
        %v5619 = vadd.f32 %v5149, %v5618
        %v5620 = vpop.f32.mrb[0].mxu0
        %v5621 = vadd.f32 %v5145, %v5620
        %v5622 = vpop.f32.mrb[0].mxu0
        %v5623 = vadd.f32 %v5149, %v5622
        %5624 = vmatprep.mubr.bf16.mxu0 %v5134
        %5625 = vmatmul.mubr.bf16.gmra.mrb[0].mxu0 %v5133
        %v5626 = vpop.f32.mrb[0].mxu0
        %v5627 = vadd.f32 %v5145, %v5626
        %v5628 = vpop.f32.mrb[0].mxu0
        %v5629 = vadd.f32 %v5149, %v5628
        %v5630 = vpop.f32.mrb[0].mxu0
        %v5631 = vadd.f32 %v5145, %v5630
        %v5632 = vpop.f32.mrb[0].mxu0
        %v5633 = vadd.f32 %v5149, %v5632
        %5634 = vmatprep.mubr.bf16.mxu0 %v5136
        %5635 = vmatmul.mubr.bf16.gmra.mrb[0].mxu0 %v5135
        %v5636 = vpop.f32.mrb[0].mxu0
        %v5637 = vadd.f32 %v5145, %v5636
        %v5638 = vpop.f32.mrb[0].mxu0
        %v5639 = vadd.f32 %v5149, %v5638
        %v5640 = vpop.f32.mrb[0].mxu0
        %v5641 = vadd.f32 %v5145, %v5640
        %v5642 = vpop.f32.mrb[0].mxu0
        %v5643 = vadd.f32 %v5149, %v5642
        %5644 = vmatprep.mubr.bf16.mxu0 %v5138
        %5645 = vmatmul.mubr.bf16.gmra.mrb[0].mxu0 %v5137
        %v5646 = vpop.f32.mrb[0].mxu0
        %v5647 = vadd.f32 %v5145, %v5646
        %v5648 = vpop.f32.mrb[0].mxu0
        %v5649 = vadd.f32 %v5149, %v5648
        %v5650 = vpop.f32.mrb[0].mxu0
        %v5651 = vadd.f32 %v5145, %v5650
        %v5652 = vpop.f32.mrb[0].mxu0
        %v5653 = vadd.f32 %v5149, %v5652
        %5654 = vmatprep.mubr.bf16.mxu0 %v5140
        %5655 = vmatmul.mubr.bf16.gmra.mrb[0].mxu0 %v5139
        %v5656 = vpop.f32.mrb[0].mxu0
        %v5657 = vadd.f32 %v5145, %v5656
        %v5658 = vpop.f32.mrb[0].mxu0
        %v5659 = vadd.f32 %v5149, %v5658
        %v5660 = vpop.f32.mrb[0].mxu0
        %v5661 = vadd.f32 %v5145, %v5660
        %v5662 = vpop.f32.mrb[0].mxu0
        %v5663 = vadd.f32 %v5149, %v5662
        %5664 = vdwg.mxu0
        %v5665 = vmax.f32 %v5347, 0.0
        %v5666 = vmax.f32 %v5349, 0.0
        %v5667 = vmax.f32 %v5351, 0.0
        %v5668 = vmax.f32 %v5353, 0.0
        %v5669 = vmax.f32 %v5357, 0.0
        %v5670 = vmax.f32 %v5359, 0.0
        %v5671 = vmax.f32 %v5361, 0.0
        %v5672 = vmax.f32 %v5363, 0.0
        %v5673 = vmax.f32 %v5367, 0.0
        %v5674 = vmax.f32 %v5369, 0.0
        %v5675 = vmax.f32 %v5371, 0.0
        %v5676 = vmax.f32 %v5373, 0.0
        %v5677 = vmax.f32 %v5377, 0.0
        %v5678 = vmax.f32 %v5379, 0.0
        %v5679 = vmax.f32 %v5381, 0.0
        %v5680 = vmax.f32 %v5383, 0.0
        %v5681 = vmax.f32 %v5387, 0.0
        %v5682 = vmax.f32 %v5389, 0.0
        %v5683 = vmax.f32 %v5391, 0.0
        %v5684 = vmax.f32 %v5393, 0.0
        %v5685 = vmax.f32 %v5397, 0.0
        %v5686 = vmax.f32 %v5399, 0.0
        %v5687 = vmax.f32 %v5401, 0.0
        %v5688 = vmax.f32 %v5403, 0.0
        %v5689 = vmax.f32 %v5407, 0.0
        %v5690 = vmax.f32 %v5409, 0.0
        %v5691 = vmax.f32 %v5411, 0.0
        %v5692 = vmax.f32 %v5413, 0.0
        %v5693 = vmax.f32 %v5417, 0.0
        %v5694 = vmax.f32 %v5419, 0.0
        %v5695 = vmax.f32 %v5421, 0.0
        %v5696 = vmax.f32 %v5423, 0.0
        %v5697 = vmax.f32 %v5427, 0.0
        %v5698 = vmax.f32 %v5429, 0.0
        %v5699 = vmax.f32 %v5431, 0.0
        %v5700 = vmax.f32 %v5433, 0.0
        %v5701 = vmax.f32 %v5437, 0.0
        %v5702 = vmax.f32 %v5439, 0.0
        %v5703 = vmax.f32 %v5441, 0.0
        %v5704 = vmax.f32 %v5443, 0.0
        %v5705 = vmax.f32 %v5447, 0.0
        %v5706 = vmax.f32 %v5449, 0.0
        %v5707 = vmax.f32 %v5451, 0.0
        %v5708 = vmax.f32 %v5453, 0.0
        %v5709 = vmax.f32 %v5457, 0.0
        %v5710 = vmax.f32 %v5459, 0.0
        %v5711 = vmax.f32 %v5461, 0.0
        %v5712 = vmax.f32 %v5463, 0.0
        %v5713 = vmax.f32 %v5467, 0.0
        %v5714 = vmax.f32 %v5469, 0.0
        %v5715 = vmax.f32 %v5471, 0.0
        %v5716 = vmax.f32 %v5473, 0.0
        %v5717 = vmax.f32 %v5477, 0.0
        %v5718 = vmax.f32 %v5479, 0.0
        %v5719 = vmax.f32 %v5481, 0.0
        %v5720 = vmax.f32 %v5483, 0.0
        %v5721 = vmax.f32 %v5487, 0.0
        %v5722 = vmax.f32 %v5489, 0.0
        %v5723 = vmax.f32 %v5491, 0.0
        %v5724 = vmax.f32 %v5493, 0.0
        %v5725 = vmax.f32 %v5497, 0.0
        %v5726 = vmax.f32 %v5499, 0.0
        %v5727 = vmax.f32 %v5501, 0.0
        %v5728 = vmax.f32 %v5503, 0.0
        %v5729 = vmax.f32 %v5507, 0.0
        %v5730 = vmax.f32 %v5509, 0.0
        %v5731 = vmax.f32 %v5511, 0.0
        %v5732 = vmax.f32 %v5513, 0.0
        %v5733 = vmax.f32 %v5517, 0.0
        %v5734 = vmax.f32 %v5519, 0.0
        %v5735 = vmax.f32 %v5521, 0.0
        %v5736 = vmax.f32 %v5523, 0.0
        %v5737 = vmax.f32 %v5527, 0.0
        %v5738 = vmax.f32 %v5529, 0.0
        %v5739 = vmax.f32 %v5531, 0.0
        %v5740 = vmax.f32 %v5533, 0.0
        %v5741 = vmax.f32 %v5537, 0.0
        %v5742 = vmax.f32 %v5539, 0.0
        %v5743 = vmax.f32 %v5541, 0.0
        %v5744 = vmax.f32 %v5543, 0.0
        %v5745 = vmax.f32 %v5547, 0.0
        %v5746 = vmax.f32 %v5549, 0.0
        %v5747 = vmax.f32 %v5551, 0.0
        %v5748 = vmax.f32 %v5553, 0.0
        %v5749 = vmax.f32 %v5557, 0.0
        %v5750 = vmax.f32 %v5559, 0.0
        %v5751 = vmax.f32 %v5561, 0.0
        %v5752 = vmax.f32 %v5563, 0.0
        %v5753 = vmax.f32 %v5567, 0.0
        %v5754 = vmax.f32 %v5569, 0.0
        %v5755 = vmax.f32 %v5571, 0.0
        %v5756 = vmax.f32 %v5573, 0.0
        %v5757 = vmax.f32 %v5577, 0.0
        %v5758 = vmax.f32 %v5579, 0.0
        %v5759 = vmax.f32 %v5581, 0.0
        %v5760 = vmax.f32 %v5583, 0.0
        %v5761 = vmax.f32 %v5587, 0.0
        %v5762 = vmax.f32 %v5589, 0.0
        %v5763 = vmax.f32 %v5591, 0.0
        %v5764 = vmax.f32 %v5593, 0.0
        %v5765 = vmax.f32 %v5597, 0.0
        %v5766 = vmax.f32 %v5599, 0.0
        %v5767 = vmax.f32 %v5601, 0.0
        %v5768 = vmax.f32 %v5603, 0.0
        %v5769 = vmax.f32 %v5607, 0.0
        %v5770 = vmax.f32 %v5609, 0.0
        %v5771 = vmax.f32 %v5611, 0.0
        %v5772 = vmax.f32 %v5613, 0.0
        %v5773 = vmax.f32 %v5617, 0.0
        %v5774 = vmax.f32 %v5619, 0.0
        %v5775 = vmax.f32 %v5621, 0.0
        %v5776 = vmax.f32 %v5623, 0.0
        %v5777 = vmax.f32 %v5627, 0.0
        %v5778 = vmax.f32 %v5629, 0.0
        %v5779 = vmax.f32 %v5631, 0.0
        %v5780 = vmax.f32 %v5633, 0.0
        %v5781 = vmax.f32 %v5637, 0.0
        %v5782 = vmax.f32 %v5639, 0.0
        %v5783 = vmax.f32 %v5641, 0.0
        %v5784 = vmax.f32 %v5643, 0.0
        %v5785 = vmax.f32 %v5647, 0.0
        %v5786 = vmax.f32 %v5649, 0.0
        %v5787 = vmax.f32 %v5651, 0.0
        %v5788 = vmax.f32 %v5653, 0.0
        %v5789 = vmax.f32 %v5657, 0.0
        %v5790 = vmax.f32 %v5659, 0.0
        %v5791 = vmax.f32 %v5661, 0.0
        %v5792 = vmax.f32 %v5663, 0.0
        %v5793 = vld [vmem:[#allocation16] sm:$0xff]
        %v5794 = vld [vmem:[#allocation16 + $0x8] sm:$0xff]
        %v5795 = vld [vmem:[#allocation16 + $0x10] sm:$0xff]
        %v5796 = vld [vmem:[#allocation16 + $0x18] sm:$0xff]
        %v5797 = vld [vmem:[#allocation16 + $0x20] sm:$0xff]
        %v5798 = vld [vmem:[#allocation16 + $0x28] sm:$0xff]
        %v5799 = vld [vmem:[#allocation16 + $0x30] sm:$0xff]
        %v5800 = vld [vmem:[#allocation16 + $0x38] sm:$0xff]
        %v5801 = vld [vmem:[#allocation16 + $0x40] sm:$0xff]
        %v5802 = vld [vmem:[#allocation16 + $0x48] sm:$0xff]
        %v5803 = vld [vmem:[#allocation16 + $0x50] sm:$0xff]
        %v5804 = vld [vmem:[#allocation16 + $0x58] sm:$0xff]
        %v5805 = vld [vmem:[#allocation16 + $0x60] sm:$0xff]
        %v5806 = vld [vmem:[#allocation16 + $0x68] sm:$0xff]
        %v5807 = vld [vmem:[#allocation16 + $0x70] sm:$0xff]
        %v5808 = vld [vmem:[#allocation16 + $0x78] sm:$0xff]
        %v5809 = vld [vmem:[#allocation16 + $0x80] sm:$0xff]
        %v5810 = vld [vmem:[#allocation16 + $0x88] sm:$0xff]
        %v5811 = vld [vmem:[#allocation16 + $0x90] sm:$0xff]
        %v5812 = vld [vmem:[#allocation16 + $0x98] sm:$0xff]
        %v5813 = vld [vmem:[#allocation16 + $0xa0] sm:$0xff]
        %v5814 = vld [vmem:[#allocation16 + $0xa8] sm:$0xff]
        %v5815 = vld [vmem:[#allocation16 + $0xb0] sm:$0xff]
        %v5816 = vld [vmem:[#allocation16 + $0xb8] sm:$0xff]
        %v5817 = vld [vmem:[#allocation16 + $0xc0] sm:$0xff]
        %v5818 = vld [vmem:[#allocation16 + $0xc8] sm:$0xff]
        %v5819 = vld [vmem:[#allocation16 + $0xd0] sm:$0xff]
        %v5820 = vld [vmem:[#allocation16 + $0xd8] sm:$0xff]
        %v5821 = vld [vmem:[#allocation16 + $0xe0] sm:$0xff]
        %v5822 = vld [vmem:[#allocation16 + $0xe8] sm:$0xff]
        %v5823 = vld [vmem:[#allocation16 + $0xf0] sm:$0xff]
        %v5824 = vld [vmem:[#allocation16 + $0xf8] sm:$0xff]
        %v5825 = vld [vmem:[%s15] sm:$0x3]
        %v5826 = vpack.c.bf16 %v5667, %v5665
        %v5827 = vpack.c.bf16 %v5668, %v5666
        %v5828 = vpack.c.bf16 %v5671, %v5669
        %v5829 = vpack.c.bf16 %v5672, %v5670
        %v5830 = vpack.c.bf16 %v5675, %v5673
        %v5831 = vpack.c.bf16 %v5676, %v5674
        %v5832 = vpack.c.bf16 %v5679, %v5677
        %v5833 = vpack.c.bf16 %v5680, %v5678
        %v5834 = vpack.c.bf16 %v5683, %v5681
        %v5835 = vpack.c.bf16 %v5684, %v5682
        %v5836 = vpack.c.bf16 %v5687, %v5685
        %v5837 = vpack.c.bf16 %v5688, %v5686
        %v5838 = vpack.c.bf16 %v5691, %v5689
        %v5839 = vpack.c.bf16 %v5692, %v5690
        %v5840 = vpack.c.bf16 %v5695, %v5693
        %v5841 = vpack.c.bf16 %v5696, %v5694
        %v5842 = vpack.c.bf16 %v5699, %v5697
        %v5843 = vpack.c.bf16 %v5700, %v5698
        %v5844 = vpack.c.bf16 %v5703, %v5701
        %v5845 = vpack.c.bf16 %v5704, %v5702
        %v5846 = vpack.c.bf16 %v5707, %v5705
        %v5847 = vpack.c.bf16 %v5708, %v5706
        %v5848 = vpack.c.bf16 %v5711, %v5709
        %v5849 = vpack.c.bf16 %v5712, %v5710
        %v5850 = vpack.c.bf16 %v5715, %v5713
        %v5851 = vpack.c.bf16 %v5716, %v5714
        %v5852 = vpack.c.bf16 %v5719, %v5717
        %v5853 = vpack.c.bf16 %v5720, %v5718
        %v5854 = vpack.c.bf16 %v5723, %v5721
        %v5855 = vpack.c.bf16 %v5724, %v5722
        %v5856 = vpack.c.bf16 %v5727, %v5725
        %v5857 = vpack.c.bf16 %v5728, %v5726
        %v5858 = vpack.c.bf16 %v5731, %v5729
        %v5859 = vpack.c.bf16 %v5732, %v5730
        %v5860 = vpack.c.bf16 %v5735, %v5733
        %v5861 = vpack.c.bf16 %v5736, %v5734
        %v5862 = vpack.c.bf16 %v5739, %v5737
        %v5863 = vpack.c.bf16 %v5740, %v5738
        %v5864 = vpack.c.bf16 %v5743, %v5741
        %v5865 = vpack.c.bf16 %v5744, %v5742
        %v5866 = vpack.c.bf16 %v5747, %v5745
        %v5867 = vpack.c.bf16 %v5748, %v5746
        %v5868 = vpack.c.bf16 %v5751, %v5749
        %v5869 = vpack.c.bf16 %v5752, %v5750
        %v5870 = vpack.c.bf16 %v5755, %v5753
        %v5871 = vpack.c.bf16 %v5756, %v5754
        %v5872 = vpack.c.bf16 %v5759, %v5757
        %v5873 = vpack.c.bf16 %v5760, %v5758
        %v5874 = vpack.c.bf16 %v5763, %v5761
        %v5875 = vpack.c.bf16 %v5764, %v5762
        %v5876 = vpack.c.bf16 %v5767, %v5765
        %v5877 = vpack.c.bf16 %v5768, %v5766
        %v5878 = vpack.c.bf16 %v5771, %v5769
        %v5879 = vpack.c.bf16 %v5772, %v5770
        %v5880 = vpack.c.bf16 %v5775, %v5773
        %v5881 = vpack.c.bf16 %v5776, %v5774
        %v5882 = vpack.c.bf16 %v5779, %v5777
        %v5883 = vpack.c.bf16 %v5780, %v5778
        %v5884 = vpack.c.bf16 %v5783, %v5781
        %v5885 = vpack.c.bf16 %v5784, %v5782
        %v5886 = vpack.c.bf16 %v5787, %v5785
        %v5887 = vpack.c.bf16 %v5788, %v5786
        %v5888 = vpack.c.bf16 %v5791, %v5789
        %v5889 = vpack.c.bf16 %v5792, %v5790
        %v5891 = vlaneseq
        %v5892 = vshrl.u32 %v5891, 7
        %v5893 = vsub.s32 0, %v5892
        %v5894 = vrot.slane %v5825, %v5893
        %v5895 = vlaneseq
        %v5896 = vshrl.u32 %v5895, 7
        %v5897 = vsub.s32 1, %v5896
        %v5898 = vrot.slane %v5825, %v5897
        %v5933 = vunpack.c.l.b16 %v5793
        %v5934 = vunpack.c.h.b16 %v5793
        %v5935 = vunpack.c.l.b16 %v5794
        %v5936 = vunpack.c.h.b16 %v5794
        %v5937 = vunpack.c.l.b16 %v5795
        %v5938 = vunpack.c.h.b16 %v5795
        %v5939 = vunpack.c.l.b16 %v5796
        %v5940 = vunpack.c.h.b16 %v5796
        %v5941 = vunpack.c.l.b16 %v5797
        %v5942 = vunpack.c.h.b16 %v5797
        %v5943 = vunpack.c.l.b16 %v5798
        %v5944 = vunpack.c.h.b16 %v5798
        %v5945 = vunpack.c.l.b16 %v5799
        %v5946 = vunpack.c.h.b16 %v5799
        %v5947 = vunpack.c.l.b16 %v5800
        %v5948 = vunpack.c.h.b16 %v5800
        %v5949 = vunpack.c.l.b16 %v5801
        %v5950 = vunpack.c.h.b16 %v5801
        %v5951 = vunpack.c.l.b16 %v5802
        %v5952 = vunpack.c.h.b16 %v5802
        %v5953 = vunpack.c.l.b16 %v5803
        %v5954 = vunpack.c.h.b16 %v5803
        %v5955 = vunpack.c.l.b16 %v5804
        %v5956 = vunpack.c.h.b16 %v5804
        %v5957 = vunpack.c.l.b16 %v5805
        %v5958 = vunpack.c.h.b16 %v5805
        %v5959 = vunpack.c.l.b16 %v5806
        %v5960 = vunpack.c.h.b16 %v5806
        %v5961 = vunpack.c.l.b16 %v5807
        %v5962 = vunpack.c.h.b16 %v5807
        %v5963 = vunpack.c.l.b16 %v5808
        %v5964 = vunpack.c.h.b16 %v5808
        %v5965 = vunpack.c.l.b16 %v5809
        %v5966 = vunpack.c.h.b16 %v5809
        %v5967 = vunpack.c.l.b16 %v5810
        %v5968 = vunpack.c.h.b16 %v5810
        %v5969 = vunpack.c.l.b16 %v5811
        %v5970 = vunpack.c.h.b16 %v5811
        %v5971 = vunpack.c.l.b16 %v5812
        %v5972 = vunpack.c.h.b16 %v5812
        %v5973 = vunpack.c.l.b16 %v5813
        %v5974 = vunpack.c.h.b16 %v5813
        %v5975 = vunpack.c.l.b16 %v5814
        %v5976 = vunpack.c.h.b16 %v5814
        %v5977 = vunpack.c.l.b16 %v5815
        %v5978 = vunpack.c.h.b16 %v5815
        %v5979 = vunpack.c.l.b16 %v5816
        %v5980 = vunpack.c.h.b16 %v5816
        %v5981 = vunpack.c.l.b16 %v5817
        %v5982 = vunpack.c.h.b16 %v5817
        %v5983 = vunpack.c.l.b16 %v5818
        %v5984 = vunpack.c.h.b16 %v5818
        %v5985 = vunpack.c.l.b16 %v5819
        %v5986 = vunpack.c.h.b16 %v5819
        %v5987 = vunpack.c.l.b16 %v5820
        %v5988 = vunpack.c.h.b16 %v5820
        %v5989 = vunpack.c.l.b16 %v5821
        %v5990 = vunpack.c.h.b16 %v5821
        %v5991 = vunpack.c.l.b16 %v5822
        %v5992 = vunpack.c.h.b16 %v5822
        %v5993 = vunpack.c.l.b16 %v5823
        %v5994 = vunpack.c.h.b16 %v5823
        %v5995 = vunpack.c.l.b16 %v5824
        %v5996 = vunpack.c.h.b16 %v5824
        %v5997 = vpack.c.b16 %v5935, %v5933
        %v5998 = vpack.c.b16 %v5936, %v5934
        %v5999 = vpack.c.b16 %v5939, %v5937
        %v6000 = vpack.c.b16 %v5940, %v5938
        %v6001 = vpack.c.b16 %v5943, %v5941
        %v6002 = vpack.c.b16 %v5944, %v5942
        %v6003 = vpack.c.b16 %v5947, %v5945
        %v6004 = vpack.c.b16 %v5948, %v5946
        %v6005 = vpack.c.b16 %v5951, %v5949
        %v6006 = vpack.c.b16 %v5952, %v5950
        %v6007 = vpack.c.b16 %v5955, %v5953
        %v6008 = vpack.c.b16 %v5956, %v5954
        %v6009 = vpack.c.b16 %v5959, %v5957
        %v6010 = vpack.c.b16 %v5960, %v5958
        %v6011 = vpack.c.b16 %v5963, %v5961
        %v6012 = vpack.c.b16 %v5964, %v5962
        %v6013 = vpack.c.b16 %v5967, %v5965
        %v6014 = vpack.c.b16 %v5968, %v5966
        %v6015 = vpack.c.b16 %v5971, %v5969
        %v6016 = vpack.c.b16 %v5972, %v5970
        %v6017 = vpack.c.b16 %v5975, %v5973
        %v6018 = vpack.c.b16 %v5976, %v5974
        %v6019 = vpack.c.b16 %v5979, %v5977
        %v6020 = vpack.c.b16 %v5980, %v5978
        %v6021 = vpack.c.b16 %v5983, %v5981
        %v6022 = vpack.c.b16 %v5984, %v5982
        %v6023 = vpack.c.b16 %v5987, %v5985
        %v6024 = vpack.c.b16 %v5988, %v5986
        %v6025 = vpack.c.b16 %v5991, %v5989
        %v6026 = vpack.c.b16 %v5992, %v5990
        %v6027 = vpack.c.b16 %v5995, %v5993
        %v6028 = vpack.c.b16 %v5996, %v5994
        %6061 = vmatprep.subr.bf16.mxu0 %v5998
        %6062 = vmatpush1.bf16.msra.mxu0 %v5997
        %6063 = vmatprep.subr.bf16.mxu0 %v6000
        %6064 = vmatpush1.bf16.msra.mxu0 %v5999
        %6065 = vmatprep.subr.bf16.mxu0 %v6002
        %6066 = vmatpush1.bf16.msra.mxu0 %v6001
        %6067 = vmatprep.subr.bf16.mxu0 %v6004
        %6068 = vmatpush1.bf16.msra.mxu0 %v6003
        %6069 = vmatprep.subr.bf16.mxu0 %v6006
        %6070 = vmatpush1.bf16.msra.mxu0 %v6005
        %6071 = vmatprep.subr.bf16.mxu0 %v6008
        %6072 = vmatpush1.bf16.msra.mxu0 %v6007
        %6073 = vmatprep.subr.bf16.mxu0 %v6010
        %6074 = vmatpush1.bf16.msra.mxu0 %v6009
        %6075 = vmatprep.subr.bf16.mxu0 %v6012
        %6076 = vmatpush1.bf16.msra.mxu0 %v6011
        %6077 = vmatprep.subr.bf16.mxu0 %v6014
        %6078 = vmatpush1.bf16.msra.mxu0 %v6013
        %6079 = vmatprep.subr.bf16.mxu0 %v6016
        %6080 = vmatpush1.bf16.msra.mxu0 %v6015
        %6081 = vmatprep.subr.bf16.mxu0 %v6018
        %6082 = vmatpush1.bf16.msra.mxu0 %v6017
        %6083 = vmatprep.subr.bf16.mxu0 %v6020
        %6084 = vmatpush1.bf16.msra.mxu0 %v6019
        %6085 = vmatprep.subr.bf16.mxu0 %v6022
        %6086 = vmatpush1.bf16.msra.mxu0 %v6021
        %6087 = vmatprep.subr.bf16.mxu0 %v6024
        %6088 = vmatpush1.bf16.msra.mxu0 %v6023
        %6089 = vmatprep.subr.bf16.mxu0 %v6026
        %6090 = vmatpush1.bf16.msra.mxu0 %v6025
        %6091 = vmatprep.subr.bf16.mxu0 %v6028
        %6092 = vmatpush1.bf16.msra.mxu0 %v6027
        %6093 = vmatprep.mubr.bf16.mxu0 %v5827
        %6094 = vmatmul.mubr.bf16.gmra.mrb[0].mxu0 %v5826
        %v6095 = vpop.f32.mrb[0].mxu0
        %v6096 = vadd.f32 %v5894, %v6095
        %v6097 = vpop.f32.mrb[0].mxu0
        %v6098 = vadd.f32 %v5898, %v6097
        %v6099 = vpop.f32.mrb[0].mxu0
        %v6100 = vadd.f32 %v5894, %v6099
        %v6101 = vpop.f32.mrb[0].mxu0
        %v6102 = vadd.f32 %v5898, %v6101
        %6103 = vmatprep.mubr.bf16.mxu0 %v5829
        %6104 = vmatmul.mubr.bf16.gmra.mrb[0].mxu0 %v5828
        %v6105 = vpop.f32.mrb[0].mxu0
        %v6106 = vadd.f32 %v5894, %v6105
        %v6107 = vpop.f32.mrb[0].mxu0
        %v6108 = vadd.f32 %v5898, %v6107
        %v6109 = vpop.f32.mrb[0].mxu0
        %v6110 = vadd.f32 %v5894, %v6109
        %v6111 = vpop.f32.mrb[0].mxu0
        %v6112 = vadd.f32 %v5898, %v6111
        %6113 = vmatprep.mubr.bf16.mxu0 %v5831
        %6114 = vmatmul.mubr.bf16.gmra.mrb[0].mxu0 %v5830
        %v6115 = vpop.f32.mrb[0].mxu0
        %v6116 = vadd.f32 %v5894, %v6115
        %v6117 = vpop.f32.mrb[0].mxu0
        %v6118 = vadd.f32 %v5898, %v6117
        %v6119 = vpop.f32.mrb[0].mxu0
        %v6120 = vadd.f32 %v5894, %v6119
        %v6121 = vpop.f32.mrb[0].mxu0
        %v6122 = vadd.f32 %v5898, %v6121
        %6123 = vmatprep.mubr.bf16.mxu0 %v5833
        %6124 = vmatmul.mubr.bf16.gmra.mrb[0].mxu0 %v5832
        %v6125 = vpop.f32.mrb[0].mxu0
        %v6126 = vadd.f32 %v5894, %v6125
        %v6127 = vpop.f32.mrb[0].mxu0
        %v6128 = vadd.f32 %v5898, %v6127
        %v6129 = vpop.f32.mrb[0].mxu0
        %v6130 = vadd.f32 %v5894, %v6129
        %v6131 = vpop.f32.mrb[0].mxu0
        %v6132 = vadd.f32 %v5898, %v6131
        %6133 = vmatprep.mubr.bf16.mxu0 %v5835
        %6134 = vmatmul.mubr.bf16.gmra.mrb[0].mxu0 %v5834
        %v6135 = vpop.f32.mrb[0].mxu0
        %v6136 = vadd.f32 %v5894, %v6135
        %v6137 = vpop.f32.mrb[0].mxu0
        %v6138 = vadd.f32 %v5898, %v6137
        %v6139 = vpop.f32.mrb[0].mxu0
        %v6140 = vadd.f32 %v5894, %v6139
        %v6141 = vpop.f32.mrb[0].mxu0
        %v6142 = vadd.f32 %v5898, %v6141
        %6143 = vmatprep.mubr.bf16.mxu0 %v5837
        %6144 = vmatmul.mubr.bf16.gmra.mrb[0].mxu0 %v5836
        %v6145 = vpop.f32.mrb[0].mxu0
        %v6146 = vadd.f32 %v5894, %v6145
        %v6147 = vpop.f32.mrb[0].mxu0
        %v6148 = vadd.f32 %v5898, %v6147
        %v6149 = vpop.f32.mrb[0].mxu0
        %v6150 = vadd.f32 %v5894, %v6149
        %v6151 = vpop.f32.mrb[0].mxu0
        %v6152 = vadd.f32 %v5898, %v6151
        %6153 = vmatprep.mubr.bf16.mxu0 %v5839
        %6154 = vmatmul.mubr.bf16.gmra.mrb[0].mxu0 %v5838
        %v6155 = vpop.f32.mrb[0].mxu0
        %v6156 = vadd.f32 %v5894, %v6155
        %v6157 = vpop.f32.mrb[0].mxu0
        %v6158 = vadd.f32 %v5898, %v6157
        %v6159 = vpop.f32.mrb[0].mxu0
        %v6160 = vadd.f32 %v5894, %v6159
        %v6161 = vpop.f32.mrb[0].mxu0
        %v6162 = vadd.f32 %v5898, %v6161
        %6163 = vmatprep.mubr.bf16.mxu0 %v5841
        %6164 = vmatmul.mubr.bf16.gmra.mrb[0].mxu0 %v5840
        %v6165 = vpop.f32.mrb[0].mxu0
        %v6166 = vadd.f32 %v5894, %v6165
        %v6167 = vpop.f32.mrb[0].mxu0
        %v6168 = vadd.f32 %v5898, %v6167
        %v6169 = vpop.f32.mrb[0].mxu0
        %v6170 = vadd.f32 %v5894, %v6169
        %v6171 = vpop.f32.mrb[0].mxu0
        %v6172 = vadd.f32 %v5898, %v6171
        %6173 = vmatprep.mubr.bf16.mxu0 %v5843
        %6174 = vmatmul.mubr.bf16.gmra.mrb[0].mxu0 %v5842
        %v6175 = vpop.f32.mrb[0].mxu0
        %v6176 = vadd.f32 %v5894, %v6175
        %v6177 = vpop.f32.mrb[0].mxu0
        %v6178 = vadd.f32 %v5898, %v6177
        %v6179 = vpop.f32.mrb[0].mxu0
        %v6180 = vadd.f32 %v5894, %v6179
        %v6181 = vpop.f32.mrb[0].mxu0
        %v6182 = vadd.f32 %v5898, %v6181
        %6183 = vmatprep.mubr.bf16.mxu0 %v5845
        %6184 = vmatmul.mubr.bf16.gmra.mrb[0].mxu0 %v5844
        %v6185 = vpop.f32.mrb[0].mxu0
        %v6186 = vadd.f32 %v5894, %v6185
        %v6187 = vpop.f32.mrb[0].mxu0
        %v6188 = vadd.f32 %v5898, %v6187
        %v6189 = vpop.f32.mrb[0].mxu0
        %v6190 = vadd.f32 %v5894, %v6189
        %v6191 = vpop.f32.mrb[0].mxu0
        %v6192 = vadd.f32 %v5898, %v6191
        %6193 = vmatprep.mubr.bf16.mxu0 %v5847
        %6194 = vmatmul.mubr.bf16.gmra.mrb[0].mxu0 %v5846
        %v6195 = vpop.f32.mrb[0].mxu0
        %v6196 = vadd.f32 %v5894, %v6195
        %v6197 = vpop.f32.mrb[0].mxu0
        %v6198 = vadd.f32 %v5898, %v6197
        %v6199 = vpop.f32.mrb[0].mxu0
        %v6200 = vadd.f32 %v5894, %v6199
        %v6201 = vpop.f32.mrb[0].mxu0
        %v6202 = vadd.f32 %v5898, %v6201
        %6203 = vmatprep.mubr.bf16.mxu0 %v5849
        %6204 = vmatmul.mubr.bf16.gmra.mrb[0].mxu0 %v5848
        %v6205 = vpop.f32.mrb[0].mxu0
        %v6206 = vadd.f32 %v5894, %v6205
        %v6207 = vpop.f32.mrb[0].mxu0
        %v6208 = vadd.f32 %v5898, %v6207
        %v6209 = vpop.f32.mrb[0].mxu0
        %v6210 = vadd.f32 %v5894, %v6209
        %v6211 = vpop.f32.mrb[0].mxu0
        %v6212 = vadd.f32 %v5898, %v6211
        %6213 = vmatprep.mubr.bf16.mxu0 %v5851
        %6214 = vmatmul.mubr.bf16.gmra.mrb[0].mxu0 %v5850
        %v6215 = vpop.f32.mrb[0].mxu0
        %v6216 = vadd.f32 %v5894, %v6215
        %v6217 = vpop.f32.mrb[0].mxu0
        %v6218 = vadd.f32 %v5898, %v6217
        %v6219 = vpop.f32.mrb[0].mxu0
        %v6220 = vadd.f32 %v5894, %v6219
        %v6221 = vpop.f32.mrb[0].mxu0
        %v6222 = vadd.f32 %v5898, %v6221
        %6223 = vmatprep.mubr.bf16.mxu0 %v5853
        %6224 = vmatmul.mubr.bf16.gmra.mrb[0].mxu0 %v5852
        %v6225 = vpop.f32.mrb[0].mxu0
        %v6226 = vadd.f32 %v5894, %v6225
        %v6227 = vpop.f32.mrb[0].mxu0
        %v6228 = vadd.f32 %v5898, %v6227
        %v6229 = vpop.f32.mrb[0].mxu0
        %v6230 = vadd.f32 %v5894, %v6229
        %v6231 = vpop.f32.mrb[0].mxu0
        %v6232 = vadd.f32 %v5898, %v6231
        %6233 = vmatprep.mubr.bf16.mxu0 %v5855
        %6234 = vmatmul.mubr.bf16.gmra.mrb[0].mxu0 %v5854
        %v6235 = vpop.f32.mrb[0].mxu0
        %v6236 = vadd.f32 %v5894, %v6235
        %v6237 = vpop.f32.mrb[0].mxu0
        %v6238 = vadd.f32 %v5898, %v6237
        %v6239 = vpop.f32.mrb[0].mxu0
        %v6240 = vadd.f32 %v5894, %v6239
        %v6241 = vpop.f32.mrb[0].mxu0
        %v6242 = vadd.f32 %v5898, %v6241
        %6243 = vmatprep.mubr.bf16.mxu0 %v5857
        %6244 = vmatmul.mubr.bf16.gmra.mrb[0].mxu0 %v5856
        %v6245 = vpop.f32.mrb[0].mxu0
        %v6246 = vadd.f32 %v5894, %v6245
        %v6247 = vpop.f32.mrb[0].mxu0
        %v6248 = vadd.f32 %v5898, %v6247
        %v6249 = vpop.f32.mrb[0].mxu0
        %v6250 = vadd.f32 %v5894, %v6249
        %v6251 = vpop.f32.mrb[0].mxu0
        %v6252 = vadd.f32 %v5898, %v6251
        %6253 = vmatprep.mubr.bf16.mxu0 %v5859
        %6254 = vmatmul.mubr.bf16.gmra.mrb[0].mxu0 %v5858
        %v6255 = vpop.f32.mrb[0].mxu0
        %v6256 = vadd.f32 %v5894, %v6255
        %v6257 = vpop.f32.mrb[0].mxu0
        %v6258 = vadd.f32 %v5898, %v6257
        %v6259 = vpop.f32.mrb[0].mxu0
        %v6260 = vadd.f32 %v5894, %v6259
        %v6261 = vpop.f32.mrb[0].mxu0
        %v6262 = vadd.f32 %v5898, %v6261
        %6263 = vmatprep.mubr.bf16.mxu0 %v5861
        %6264 = vmatmul.mubr.bf16.gmra.mrb[0].mxu0 %v5860
        %v6265 = vpop.f32.mrb[0].mxu0
        %v6266 = vadd.f32 %v5894, %v6265
        %v6267 = vpop.f32.mrb[0].mxu0
        %v6268 = vadd.f32 %v5898, %v6267
        %v6269 = vpop.f32.mrb[0].mxu0
        %v6270 = vadd.f32 %v5894, %v6269
        %v6271 = vpop.f32.mrb[0].mxu0
        %v6272 = vadd.f32 %v5898, %v6271
        %6273 = vmatprep.mubr.bf16.mxu0 %v5863
        %6274 = vmatmul.mubr.bf16.gmra.mrb[0].mxu0 %v5862
        %v6275 = vpop.f32.mrb[0].mxu0
        %v6276 = vadd.f32 %v5894, %v6275
        %v6277 = vpop.f32.mrb[0].mxu0
        %v6278 = vadd.f32 %v5898, %v6277
        %v6279 = vpop.f32.mrb[0].mxu0
        %v6280 = vadd.f32 %v5894, %v6279
        %v6281 = vpop.f32.mrb[0].mxu0
        %v6282 = vadd.f32 %v5898, %v6281
        %6283 = vmatprep.mubr.bf16.mxu0 %v5865
        %6284 = vmatmul.mubr.bf16.gmra.mrb[0].mxu0 %v5864
        %v6285 = vpop.f32.mrb[0].mxu0
        %v6286 = vadd.f32 %v5894, %v6285
        %v6287 = vpop.f32.mrb[0].mxu0
        %v6288 = vadd.f32 %v5898, %v6287
        %v6289 = vpop.f32.mrb[0].mxu0
        %v6290 = vadd.f32 %v5894, %v6289
        %v6291 = vpop.f32.mrb[0].mxu0
        %v6292 = vadd.f32 %v5898, %v6291
        %6293 = vmatprep.mubr.bf16.mxu0 %v5867
        %6294 = vmatmul.mubr.bf16.gmra.mrb[0].mxu0 %v5866
        %v6295 = vpop.f32.mrb[0].mxu0
        %v6296 = vadd.f32 %v5894, %v6295
        %v6297 = vpop.f32.mrb[0].mxu0
        %v6298 = vadd.f32 %v5898, %v6297
        %v6299 = vpop.f32.mrb[0].mxu0
        %v6300 = vadd.f32 %v5894, %v6299
        %v6301 = vpop.f32.mrb[0].mxu0
        %v6302 = vadd.f32 %v5898, %v6301
        %6303 = vmatprep.mubr.bf16.mxu0 %v5869
        %6304 = vmatmul.mubr.bf16.gmra.mrb[0].mxu0 %v5868
        %v6305 = vpop.f32.mrb[0].mxu0
        %v6306 = vadd.f32 %v5894, %v6305
        %v6307 = vpop.f32.mrb[0].mxu0
        %v6308 = vadd.f32 %v5898, %v6307
        %v6309 = vpop.f32.mrb[0].mxu0
        %v6310 = vadd.f32 %v5894, %v6309
        %v6311 = vpop.f32.mrb[0].mxu0
        %v6312 = vadd.f32 %v5898, %v6311
        %6313 = vmatprep.mubr.bf16.mxu0 %v5871
        %6314 = vmatmul.mubr.bf16.gmra.mrb[0].mxu0 %v5870
        %v6315 = vpop.f32.mrb[0].mxu0
        %v6316 = vadd.f32 %v5894, %v6315
        %v6317 = vpop.f32.mrb[0].mxu0
        %v6318 = vadd.f32 %v5898, %v6317
        %v6319 = vpop.f32.mrb[0].mxu0
        %v6320 = vadd.f32 %v5894, %v6319
        %v6321 = vpop.f32.mrb[0].mxu0
        %v6322 = vadd.f32 %v5898, %v6321
        %6323 = vmatprep.mubr.bf16.mxu0 %v5873
        %6324 = vmatmul.mubr.bf16.gmra.mrb[0].mxu0 %v5872
        %v6325 = vpop.f32.mrb[0].mxu0
        %v6326 = vadd.f32 %v5894, %v6325
        %v6327 = vpop.f32.mrb[0].mxu0
        %v6328 = vadd.f32 %v5898, %v6327
        %v6329 = vpop.f32.mrb[0].mxu0
        %v6330 = vadd.f32 %v5894, %v6329
        %v6331 = vpop.f32.mrb[0].mxu0
        %v6332 = vadd.f32 %v5898, %v6331
        %6333 = vmatprep.mubr.bf16.mxu0 %v5875
        %6334 = vmatmul.mubr.bf16.gmra.mrb[0].mxu0 %v5874
        %v6335 = vpop.f32.mrb[0].mxu0
        %v6336 = vadd.f32 %v5894, %v6335
        %v6337 = vpop.f32.mrb[0].mxu0
        %v6338 = vadd.f32 %v5898, %v6337
        %v6339 = vpop.f32.mrb[0].mxu0
        %v6340 = vadd.f32 %v5894, %v6339
        %v6341 = vpop.f32.mrb[0].mxu0
        %v6342 = vadd.f32 %v5898, %v6341
        %6343 = vmatprep.mubr.bf16.mxu0 %v5877
        %6344 = vmatmul.mubr.bf16.gmra.mrb[0].mxu0 %v5876
        %v6345 = vpop.f32.mrb[0].mxu0
        %v6346 = vadd.f32 %v5894, %v6345
        %v6347 = vpop.f32.mrb[0].mxu0
        %v6348 = vadd.f32 %v5898, %v6347
        %v6349 = vpop.f32.mrb[0].mxu0
        %v6350 = vadd.f32 %v5894, %v6349
        %v6351 = vpop.f32.mrb[0].mxu0
        %v6352 = vadd.f32 %v5898, %v6351
        %6353 = vmatprep.mubr.bf16.mxu0 %v5879
        %6354 = vmatmul.mubr.bf16.gmra.mrb[0].mxu0 %v5878
        %v6355 = vpop.f32.mrb[0].mxu0
        %v6356 = vadd.f32 %v5894, %v6355
        %v6357 = vpop.f32.mrb[0].mxu0
        %v6358 = vadd.f32 %v5898, %v6357
        %v6359 = vpop.f32.mrb[0].mxu0
        %v6360 = vadd.f32 %v5894, %v6359
        %v6361 = vpop.f32.mrb[0].mxu0
        %v6362 = vadd.f32 %v5898, %v6361
        %6363 = vmatprep.mubr.bf16.mxu0 %v5881
        %6364 = vmatmul.mubr.bf16.gmra.mrb[0].mxu0 %v5880
        %v6365 = vpop.f32.mrb[0].mxu0
        %v6366 = vadd.f32 %v5894, %v6365
        %v6367 = vpop.f32.mrb[0].mxu0
        %v6368 = vadd.f32 %v5898, %v6367
        %v6369 = vpop.f32.mrb[0].mxu0
        %v6370 = vadd.f32 %v5894, %v6369
        %v6371 = vpop.f32.mrb[0].mxu0
        %v6372 = vadd.f32 %v5898, %v6371
        %6373 = vmatprep.mubr.bf16.mxu0 %v5883
        %6374 = vmatmul.mubr.bf16.gmra.mrb[0].mxu0 %v5882
        %v6375 = vpop.f32.mrb[0].mxu0
        %v6376 = vadd.f32 %v5894, %v6375
        %v6377 = vpop.f32.mrb[0].mxu0
        %v6378 = vadd.f32 %v5898, %v6377
        %v6379 = vpop.f32.mrb[0].mxu0
        %v6380 = vadd.f32 %v5894, %v6379
        %v6381 = vpop.f32.mrb[0].mxu0
        %v6382 = vadd.f32 %v5898, %v6381
        %6383 = vmatprep.mubr.bf16.mxu0 %v5885
        %6384 = vmatmul.mubr.bf16.gmra.mrb[0].mxu0 %v5884
        %v6385 = vpop.f32.mrb[0].mxu0
        %v6386 = vadd.f32 %v5894, %v6385
        %v6387 = vpop.f32.mrb[0].mxu0
        %v6388 = vadd.f32 %v5898, %v6387
        %v6389 = vpop.f32.mrb[0].mxu0
        %v6390 = vadd.f32 %v5894, %v6389
        %v6391 = vpop.f32.mrb[0].mxu0
        %v6392 = vadd.f32 %v5898, %v6391
        %6393 = vmatprep.mubr.bf16.mxu0 %v5887
        %6394 = vmatmul.mubr.bf16.gmra.mrb[0].mxu0 %v5886
        %v6395 = vpop.f32.mrb[0].mxu0
        %v6396 = vadd.f32 %v5894, %v6395
        %v6397 = vpop.f32.mrb[0].mxu0
        %v6398 = vadd.f32 %v5898, %v6397
        %v6399 = vpop.f32.mrb[0].mxu0
        %v6400 = vadd.f32 %v5894, %v6399
        %v6401 = vpop.f32.mrb[0].mxu0
        %v6402 = vadd.f32 %v5898, %v6401
        %6403 = vmatprep.mubr.bf16.mxu0 %v5889
        %6404 = vmatmul.mubr.bf16.gmra.mrb[0].mxu0 %v5888
        %v6405 = vpop.f32.mrb[0].mxu0
        %v6406 = vadd.f32 %v5894, %v6405
        %v6407 = vpop.f32.mrb[0].mxu0
        %v6408 = vadd.f32 %v5898, %v6407
        %v6409 = vpop.f32.mrb[0].mxu0
        %v6410 = vadd.f32 %v5894, %v6409
        %v6411 = vpop.f32.mrb[0].mxu0
        %v6412 = vadd.f32 %v5898, %v6411
        %6413 = vdwg.mxu0
        %v6414 = vmax.f32 %v6096, 0.0
        %v6415 = vmax.f32 %v6098, 0.0
        %v6416 = vmax.f32 %v6100, 0.0
        %v6417 = vmax.f32 %v6102, 0.0
        %v6418 = vmax.f32 %v6106, 0.0
        %v6419 = vmax.f32 %v6108, 0.0
        %v6420 = vmax.f32 %v6110, 0.0
        %v6421 = vmax.f32 %v6112, 0.0
        %v6422 = vmax.f32 %v6116, 0.0
        %v6423 = vmax.f32 %v6118, 0.0
        %v6424 = vmax.f32 %v6120, 0.0
        %v6425 = vmax.f32 %v6122, 0.0
        %v6426 = vmax.f32 %v6126, 0.0
        %v6427 = vmax.f32 %v6128, 0.0
        %v6428 = vmax.f32 %v6130, 0.0
        %v6429 = vmax.f32 %v6132, 0.0
        %v6430 = vmax.f32 %v6136, 0.0
        %v6431 = vmax.f32 %v6138, 0.0
        %v6432 = vmax.f32 %v6140, 0.0
        %v6433 = vmax.f32 %v6142, 0.0
        %v6434 = vmax.f32 %v6146, 0.0
        %v6435 = vmax.f32 %v6148, 0.0
        %v6436 = vmax.f32 %v6150, 0.0
        %v6437 = vmax.f32 %v6152, 0.0
        %v6438 = vmax.f32 %v6156, 0.0
        %v6439 = vmax.f32 %v6158, 0.0
        %v6440 = vmax.f32 %v6160, 0.0
        %v6441 = vmax.f32 %v6162, 0.0
        %v6442 = vmax.f32 %v6166, 0.0
        %v6443 = vmax.f32 %v6168, 0.0
        %v6444 = vmax.f32 %v6170, 0.0
        %v6445 = vmax.f32 %v6172, 0.0
        %v6446 = vmax.f32 %v6176, 0.0
        %v6447 = vmax.f32 %v6178, 0.0
        %v6448 = vmax.f32 %v6180, 0.0
        %v6449 = vmax.f32 %v6182, 0.0
        %v6450 = vmax.f32 %v6186, 0.0
        %v6451 = vmax.f32 %v6188, 0.0
        %v6452 = vmax.f32 %v6190, 0.0
        %v6453 = vmax.f32 %v6192, 0.0
        %v6454 = vmax.f32 %v6196, 0.0
        %v6455 = vmax.f32 %v6198, 0.0
        %v6456 = vmax.f32 %v6200, 0.0
        %v6457 = vmax.f32 %v6202, 0.0
        %v6458 = vmax.f32 %v6206, 0.0
        %v6459 = vmax.f32 %v6208, 0.0
        %v6460 = vmax.f32 %v6210, 0.0
        %v6461 = vmax.f32 %v6212, 0.0
        %v6462 = vmax.f32 %v6216, 0.0
        %v6463 = vmax.f32 %v6218, 0.0
        %v6464 = vmax.f32 %v6220, 0.0
        %v6465 = vmax.f32 %v6222, 0.0
        %v6466 = vmax.f32 %v6226, 0.0
        %v6467 = vmax.f32 %v6228, 0.0
        %v6468 = vmax.f32 %v6230, 0.0
        %v6469 = vmax.f32 %v6232, 0.0
        %v6470 = vmax.f32 %v6236, 0.0
        %v6471 = vmax.f32 %v6238, 0.0
        %v6472 = vmax.f32 %v6240, 0.0
        %v6473 = vmax.f32 %v6242, 0.0
        %v6474 = vmax.f32 %v6246, 0.0
        %v6475 = vmax.f32 %v6248, 0.0
        %v6476 = vmax.f32 %v6250, 0.0
        %v6477 = vmax.f32 %v6252, 0.0
        %v6478 = vmax.f32 %v6256, 0.0
        %v6479 = vmax.f32 %v6258, 0.0
        %v6480 = vmax.f32 %v6260, 0.0
        %v6481 = vmax.f32 %v6262, 0.0
        %v6482 = vmax.f32 %v6266, 0.0
        %v6483 = vmax.f32 %v6268, 0.0
        %v6484 = vmax.f32 %v6270, 0.0
        %v6485 = vmax.f32 %v6272, 0.0
        %v6486 = vmax.f32 %v6276, 0.0
        %v6487 = vmax.f32 %v6278, 0.0
        %v6488 = vmax.f32 %v6280, 0.0
        %v6489 = vmax.f32 %v6282, 0.0
        %v6490 = vmax.f32 %v6286, 0.0
        %v6491 = vmax.f32 %v6288, 0.0
        %v6492 = vmax.f32 %v6290, 0.0
        %v6493 = vmax.f32 %v6292, 0.0
        %v6494 = vmax.f32 %v6296, 0.0
        %v6495 = vmax.f32 %v6298, 0.0
        %v6496 = vmax.f32 %v6300, 0.0
        %v6497 = vmax.f32 %v6302, 0.0
        %v6498 = vmax.f32 %v6306, 0.0
        %v6499 = vmax.f32 %v6308, 0.0
        %v6500 = vmax.f32 %v6310, 0.0
        %v6501 = vmax.f32 %v6312, 0.0
        %v6502 = vmax.f32 %v6316, 0.0
        %v6503 = vmax.f32 %v6318, 0.0
        %v6504 = vmax.f32 %v6320, 0.0
        %v6505 = vmax.f32 %v6322, 0.0
        %v6506 = vmax.f32 %v6326, 0.0
        %v6507 = vmax.f32 %v6328, 0.0
        %v6508 = vmax.f32 %v6330, 0.0
        %v6509 = vmax.f32 %v6332, 0.0
        %v6510 = vmax.f32 %v6336, 0.0
        %v6511 = vmax.f32 %v6338, 0.0
        %v6512 = vmax.f32 %v6340, 0.0
        %v6513 = vmax.f32 %v6342, 0.0
        %v6514 = vmax.f32 %v6346, 0.0
        %v6515 = vmax.f32 %v6348, 0.0
        %v6516 = vmax.f32 %v6350, 0.0
        %v6517 = vmax.f32 %v6352, 0.0
        %v6518 = vmax.f32 %v6356, 0.0
        %v6519 = vmax.f32 %v6358, 0.0
        %v6520 = vmax.f32 %v6360, 0.0
        %v6521 = vmax.f32 %v6362, 0.0
        %v6522 = vmax.f32 %v6366, 0.0
        %v6523 = vmax.f32 %v6368, 0.0
        %v6524 = vmax.f32 %v6370, 0.0
        %v6525 = vmax.f32 %v6372, 0.0
        %v6526 = vmax.f32 %v6376, 0.0
        %v6527 = vmax.f32 %v6378, 0.0
        %v6528 = vmax.f32 %v6380, 0.0
        %v6529 = vmax.f32 %v6382, 0.0
        %v6530 = vmax.f32 %v6386, 0.0
        %v6531 = vmax.f32 %v6388, 0.0
        %v6532 = vmax.f32 %v6390, 0.0
        %v6533 = vmax.f32 %v6392, 0.0
        %v6534 = vmax.f32 %v6396, 0.0
        %v6535 = vmax.f32 %v6398, 0.0
        %v6536 = vmax.f32 %v6400, 0.0
        %v6537 = vmax.f32 %v6402, 0.0
        %v6538 = vmax.f32 %v6406, 0.0
        %v6539 = vmax.f32 %v6408, 0.0
        %v6540 = vmax.f32 %v6410, 0.0
        %v6541 = vmax.f32 %v6412, 0.0
        %v6542 = vld [vmem:[#allocation17] sm:$0xff]
        %v6543 = vld [vmem:[#allocation17 + $0x8] sm:$0xff]
        %v6544 = vld [vmem:[#allocation17 + $0x10] sm:$0xff]
        %v6545 = vld [vmem:[#allocation17 + $0x18] sm:$0xff]
        %v6546 = vld [vmem:[#allocation17 + $0x20] sm:$0xff]
        %v6547 = vld [vmem:[#allocation17 + $0x28] sm:$0xff]
        %v6548 = vld [vmem:[#allocation17 + $0x30] sm:$0xff]
        %v6549 = vld [vmem:[#allocation17 + $0x38] sm:$0xff]
        %v6550 = vld [vmem:[#allocation17 + $0x40] sm:$0xff]
        %v6551 = vld [vmem:[#allocation17 + $0x48] sm:$0xff]
        %v6552 = vld [vmem:[#allocation17 + $0x50] sm:$0xff]
        %v6553 = vld [vmem:[#allocation17 + $0x58] sm:$0xff]
        %v6554 = vld [vmem:[#allocation17 + $0x60] sm:$0xff]
        %v6555 = vld [vmem:[#allocation17 + $0x68] sm:$0xff]
        %v6556 = vld [vmem:[#allocation17 + $0x70] sm:$0xff]
        %v6557 = vld [vmem:[#allocation17 + $0x78] sm:$0xff]
        %v6558 = vld [vmem:[#allocation17 + $0x80] sm:$0xff]
        %v6559 = vld [vmem:[#allocation17 + $0x88] sm:$0xff]
        %v6560 = vld [vmem:[#allocation17 + $0x90] sm:$0xff]
        %v6561 = vld [vmem:[#allocation17 + $0x98] sm:$0xff]
        %v6562 = vld [vmem:[#allocation17 + $0xa0] sm:$0xff]
        %v6563 = vld [vmem:[#allocation17 + $0xa8] sm:$0xff]
        %v6564 = vld [vmem:[#allocation17 + $0xb0] sm:$0xff]
        %v6565 = vld [vmem:[#allocation17 + $0xb8] sm:$0xff]
        %v6566 = vld [vmem:[#allocation17 + $0xc0] sm:$0xff]
        %v6567 = vld [vmem:[#allocation17 + $0xc8] sm:$0xff]
        %v6568 = vld [vmem:[#allocation17 + $0xd0] sm:$0xff]
        %v6569 = vld [vmem:[#allocation17 + $0xd8] sm:$0xff]
        %v6570 = vld [vmem:[#allocation17 + $0xe0] sm:$0xff]
        %v6571 = vld [vmem:[#allocation17 + $0xe8] sm:$0xff]
        %v6572 = vld [vmem:[#allocation17 + $0xf0] sm:$0xff]
        %v6573 = vld [vmem:[#allocation17 + $0xf8] sm:$0xff]
        %v6574 = vld [vmem:[%s17] sm:$0x3]
        %v6575 = vpack.c.bf16 %v6416, %v6414
        %v6576 = vpack.c.bf16 %v6417, %v6415
        %v6577 = vpack.c.bf16 %v6420, %v6418
        %v6578 = vpack.c.bf16 %v6421, %v6419
        %v6579 = vpack.c.bf16 %v6424, %v6422
        %v6580 = vpack.c.bf16 %v6425, %v6423
        %v6581 = vpack.c.bf16 %v6428, %v6426
        %v6582 = vpack.c.bf16 %v6429, %v6427
        %v6583 = vpack.c.bf16 %v6432, %v6430
        %v6584 = vpack.c.bf16 %v6433, %v6431
        %v6585 = vpack.c.bf16 %v6436, %v6434
        %v6586 = vpack.c.bf16 %v6437, %v6435
        %v6587 = vpack.c.bf16 %v6440, %v6438
        %v6588 = vpack.c.bf16 %v6441, %v6439
        %v6589 = vpack.c.bf16 %v6444, %v6442
        %v6590 = vpack.c.bf16 %v6445, %v6443
        %v6591 = vpack.c.bf16 %v6448, %v6446
        %v6592 = vpack.c.bf16 %v6449, %v6447
        %v6593 = vpack.c.bf16 %v6452, %v6450
        %v6594 = vpack.c.bf16 %v6453, %v6451
        %v6595 = vpack.c.bf16 %v6456, %v6454
        %v6596 = vpack.c.bf16 %v6457, %v6455
        %v6597 = vpack.c.bf16 %v6460, %v6458
        %v6598 = vpack.c.bf16 %v6461, %v6459
        %v6599 = vpack.c.bf16 %v6464, %v6462
        %v6600 = vpack.c.bf16 %v6465, %v6463
        %v6601 = vpack.c.bf16 %v6468, %v6466
        %v6602 = vpack.c.bf16 %v6469, %v6467
        %v6603 = vpack.c.bf16 %v6472, %v6470
        %v6604 = vpack.c.bf16 %v6473, %v6471
        %v6605 = vpack.c.bf16 %v6476, %v6474
        %v6606 = vpack.c.bf16 %v6477, %v6475
        %v6607 = vpack.c.bf16 %v6480, %v6478
        %v6608 = vpack.c.bf16 %v6481, %v6479
        %v6609 = vpack.c.bf16 %v6484, %v6482
        %v6610 = vpack.c.bf16 %v6485, %v6483
        %v6611 = vpack.c.bf16 %v6488, %v6486
        %v6612 = vpack.c.bf16 %v6489, %v6487
        %v6613 = vpack.c.bf16 %v6492, %v6490
        %v6614 = vpack.c.bf16 %v6493, %v6491
        %v6615 = vpack.c.bf16 %v6496, %v6494
        %v6616 = vpack.c.bf16 %v6497, %v6495
        %v6617 = vpack.c.bf16 %v6500, %v6498
        %v6618 = vpack.c.bf16 %v6501, %v6499
        %v6619 = vpack.c.bf16 %v6504, %v6502
        %v6620 = vpack.c.bf16 %v6505, %v6503
        %v6621 = vpack.c.bf16 %v6508, %v6506
        %v6622 = vpack.c.bf16 %v6509, %v6507
        %v6623 = vpack.c.bf16 %v6512, %v6510
        %v6624 = vpack.c.bf16 %v6513, %v6511
        %v6625 = vpack.c.bf16 %v6516, %v6514
        %v6626 = vpack.c.bf16 %v6517, %v6515
        %v6627 = vpack.c.bf16 %v6520, %v6518
        %v6628 = vpack.c.bf16 %v6521, %v6519
        %v6629 = vpack.c.bf16 %v6524, %v6522
        %v6630 = vpack.c.bf16 %v6525, %v6523
        %v6631 = vpack.c.bf16 %v6528, %v6526
        %v6632 = vpack.c.bf16 %v6529, %v6527
        %v6633 = vpack.c.bf16 %v6532, %v6530
        %v6634 = vpack.c.bf16 %v6533, %v6531
        %v6635 = vpack.c.bf16 %v6536, %v6534
        %v6636 = vpack.c.bf16 %v6537, %v6535
        %v6637 = vpack.c.bf16 %v6540, %v6538
        %v6638 = vpack.c.bf16 %v6541, %v6539
        %v6640 = vlaneseq
        %v6641 = vshrl.u32 %v6640, 7
        %v6642 = vsub.s32 0, %v6641
        %v6643 = vrot.slane %v6574, %v6642
        %v6644 = vlaneseq
        %v6645 = vshrl.u32 %v6644, 7
        %v6646 = vsub.s32 1, %v6645
        %v6647 = vrot.slane %v6574, %v6646
        %v6682 = vunpack.c.l.b16 %v6542
        %v6683 = vunpack.c.h.b16 %v6542
        %v6684 = vunpack.c.l.b16 %v6543
        %v6685 = vunpack.c.h.b16 %v6543
        %v6686 = vunpack.c.l.b16 %v6544
        %v6687 = vunpack.c.h.b16 %v6544
        %v6688 = vunpack.c.l.b16 %v6545
        %v6689 = vunpack.c.h.b16 %v6545
        %v6690 = vunpack.c.l.b16 %v6546
        %v6691 = vunpack.c.h.b16 %v6546
        %v6692 = vunpack.c.l.b16 %v6547
        %v6693 = vunpack.c.h.b16 %v6547
        %v6694 = vunpack.c.l.b16 %v6548
        %v6695 = vunpack.c.h.b16 %v6548
        %v6696 = vunpack.c.l.b16 %v6549
        %v6697 = vunpack.c.h.b16 %v6549
        %v6698 = vunpack.c.l.b16 %v6550
        %v6699 = vunpack.c.h.b16 %v6550
        %v6700 = vunpack.c.l.b16 %v6551
        %v6701 = vunpack.c.h.b16 %v6551
        %v6702 = vunpack.c.l.b16 %v6552
        %v6703 = vunpack.c.h.b16 %v6552
        %v6704 = vunpack.c.l.b16 %v6553
        %v6705 = vunpack.c.h.b16 %v6553
        %v6706 = vunpack.c.l.b16 %v6554
        %v6707 = vunpack.c.h.b16 %v6554
        %v6708 = vunpack.c.l.b16 %v6555
        %v6709 = vunpack.c.h.b16 %v6555
        %v6710 = vunpack.c.l.b16 %v6556
        %v6711 = vunpack.c.h.b16 %v6556
        %v6712 = vunpack.c.l.b16 %v6557
        %v6713 = vunpack.c.h.b16 %v6557
        %v6714 = vunpack.c.l.b16 %v6558
        %v6715 = vunpack.c.h.b16 %v6558
        %v6716 = vunpack.c.l.b16 %v6559
        %v6717 = vunpack.c.h.b16 %v6559
        %v6718 = vunpack.c.l.b16 %v6560
        %v6719 = vunpack.c.h.b16 %v6560
        %v6720 = vunpack.c.l.b16 %v6561
        %v6721 = vunpack.c.h.b16 %v6561
        %v6722 = vunpack.c.l.b16 %v6562
        %v6723 = vunpack.c.h.b16 %v6562
        %v6724 = vunpack.c.l.b16 %v6563
        %v6725 = vunpack.c.h.b16 %v6563
        %v6726 = vunpack.c.l.b16 %v6564
        %v6727 = vunpack.c.h.b16 %v6564
        %v6728 = vunpack.c.l.b16 %v6565
        %v6729 = vunpack.c.h.b16 %v6565
        %v6730 = vunpack.c.l.b16 %v6566
        %v6731 = vunpack.c.h.b16 %v6566
        %v6732 = vunpack.c.l.b16 %v6567
        %v6733 = vunpack.c.h.b16 %v6567
        %v6734 = vunpack.c.l.b16 %v6568
        %v6735 = vunpack.c.h.b16 %v6568
        %v6736 = vunpack.c.l.b16 %v6569
        %v6737 = vunpack.c.h.b16 %v6569
        %v6738 = vunpack.c.l.b16 %v6570
        %v6739 = vunpack.c.h.b16 %v6570
        %v6740 = vunpack.c.l.b16 %v6571
        %v6741 = vunpack.c.h.b16 %v6571
        %v6742 = vunpack.c.l.b16 %v6572
        %v6743 = vunpack.c.h.b16 %v6572
        %v6744 = vunpack.c.l.b16 %v6573
        %v6745 = vunpack.c.h.b16 %v6573
        %v6746 = vpack.c.b16 %v6684, %v6682
        %v6747 = vpack.c.b16 %v6685, %v6683
        %v6748 = vpack.c.b16 %v6688, %v6686
        %v6749 = vpack.c.b16 %v6689, %v6687
        %v6750 = vpack.c.b16 %v6692, %v6690
        %v6751 = vpack.c.b16 %v6693, %v6691
        %v6752 = vpack.c.b16 %v6696, %v6694
        %v6753 = vpack.c.b16 %v6697, %v6695
        %v6754 = vpack.c.b16 %v6700, %v6698
        %v6755 = vpack.c.b16 %v6701, %v6699
        %v6756 = vpack.c.b16 %v6704, %v6702
        %v6757 = vpack.c.b16 %v6705, %v6703
        %v6758 = vpack.c.b16 %v6708, %v6706
        %v6759 = vpack.c.b16 %v6709, %v6707
        %v6760 = vpack.c.b16 %v6712, %v6710
        %v6761 = vpack.c.b16 %v6713, %v6711
        %v6762 = vpack.c.b16 %v6716, %v6714
        %v6763 = vpack.c.b16 %v6717, %v6715
        %v6764 = vpack.c.b16 %v6720, %v6718
        %v6765 = vpack.c.b16 %v6721, %v6719
        %v6766 = vpack.c.b16 %v6724, %v6722
        %v6767 = vpack.c.b16 %v6725, %v6723
        %v6768 = vpack.c.b16 %v6728, %v6726
        %v6769 = vpack.c.b16 %v6729, %v6727
        %v6770 = vpack.c.b16 %v6732, %v6730
        %v6771 = vpack.c.b16 %v6733, %v6731
        %v6772 = vpack.c.b16 %v6736, %v6734
        %v6773 = vpack.c.b16 %v6737, %v6735
        %v6774 = vpack.c.b16 %v6740, %v6738
        %v6775 = vpack.c.b16 %v6741, %v6739
        %v6776 = vpack.c.b16 %v6744, %v6742
        %v6777 = vpack.c.b16 %v6745, %v6743
        %6810 = vmatprep.subr.bf16.mxu0 %v6747
        %6811 = vmatpush1.bf16.msra.mxu0 %v6746
        %6812 = vmatprep.subr.bf16.mxu0 %v6749
        %6813 = vmatpush1.bf16.msra.mxu0 %v6748
        %6814 = vmatprep.subr.bf16.mxu0 %v6751
        %6815 = vmatpush1.bf16.msra.mxu0 %v6750
        %6816 = vmatprep.subr.bf16.mxu0 %v6753
        %6817 = vmatpush1.bf16.msra.mxu0 %v6752
        %6818 = vmatprep.subr.bf16.mxu0 %v6755
        %6819 = vmatpush1.bf16.msra.mxu0 %v6754
        %6820 = vmatprep.subr.bf16.mxu0 %v6757
        %6821 = vmatpush1.bf16.msra.mxu0 %v6756
        %6822 = vmatprep.subr.bf16.mxu0 %v6759
        %6823 = vmatpush1.bf16.msra.mxu0 %v6758
        %6824 = vmatprep.subr.bf16.mxu0 %v6761
        %6825 = vmatpush1.bf16.msra.mxu0 %v6760
        %6826 = vmatprep.subr.bf16.mxu0 %v6763
        %6827 = vmatpush1.bf16.msra.mxu0 %v6762
        %6828 = vmatprep.subr.bf16.mxu0 %v6765
        %6829 = vmatpush1.bf16.msra.mxu0 %v6764
        %6830 = vmatprep.subr.bf16.mxu0 %v6767
        %6831 = vmatpush1.bf16.msra.mxu0 %v6766
        %6832 = vmatprep.subr.bf16.mxu0 %v6769
        %6833 = vmatpush1.bf16.msra.mxu0 %v6768
        %6834 = vmatprep.subr.bf16.mxu0 %v6771
        %6835 = vmatpush1.bf16.msra.mxu0 %v6770
        %6836 = vmatprep.subr.bf16.mxu0 %v6773
        %6837 = vmatpush1.bf16.msra.mxu0 %v6772
        %6838 = vmatprep.subr.bf16.mxu0 %v6775
        %6839 = vmatpush1.bf16.msra.mxu0 %v6774
        %6840 = vmatprep.subr.bf16.mxu0 %v6777
        %6841 = vmatpush1.bf16.msra.mxu0 %v6776
        %6842 = vmatprep.mubr.bf16.mxu0 %v6576
        %6843 = vmatmul.mubr.bf16.gmra.mrb[0].mxu0 %v6575
        %v6844 = vpop.f32.mrb[0].mxu0
        %v6845 = vadd.f32 %v6643, %v6844
        %v6846 = vpop.f32.mrb[0].mxu0
        %v6847 = vadd.f32 %v6647, %v6846
        %v6848 = vpop.f32.mrb[0].mxu0
        %v6849 = vadd.f32 %v6643, %v6848
        %v6850 = vpop.f32.mrb[0].mxu0
        %v6851 = vadd.f32 %v6647, %v6850
        %6852 = vmatprep.mubr.bf16.mxu0 %v6578
        %6853 = vmatmul.mubr.bf16.gmra.mrb[0].mxu0 %v6577
        %v6854 = vpop.f32.mrb[0].mxu0
        %v6855 = vadd.f32 %v6643, %v6854
        %v6856 = vpop.f32.mrb[0].mxu0
        %v6857 = vadd.f32 %v6647, %v6856
        %v6858 = vpop.f32.mrb[0].mxu0
        %v6859 = vadd.f32 %v6643, %v6858
        %v6860 = vpop.f32.mrb[0].mxu0
        %v6861 = vadd.f32 %v6647, %v6860
        %6862 = vmatprep.mubr.bf16.mxu0 %v6580
        %6863 = vmatmul.mubr.bf16.gmra.mrb[0].mxu0 %v6579
        %v6864 = vpop.f32.mrb[0].mxu0
        %v6865 = vadd.f32 %v6643, %v6864
        %v6866 = vpop.f32.mrb[0].mxu0
        %v6867 = vadd.f32 %v6647, %v6866
        %v6868 = vpop.f32.mrb[0].mxu0
        %v6869 = vadd.f32 %v6643, %v6868
        %v6870 = vpop.f32.mrb[0].mxu0
        %v6871 = vadd.f32 %v6647, %v6870
        %6872 = vmatprep.mubr.bf16.mxu0 %v6582
        %6873 = vmatmul.mubr.bf16.gmra.mrb[0].mxu0 %v6581
        %v6874 = vpop.f32.mrb[0].mxu0
        %v6875 = vadd.f32 %v6643, %v6874
        %v6876 = vpop.f32.mrb[0].mxu0
        %v6877 = vadd.f32 %v6647, %v6876
        %v6878 = vpop.f32.mrb[0].mxu0
        %v6879 = vadd.f32 %v6643, %v6878
        %v6880 = vpop.f32.mrb[0].mxu0
        %v6881 = vadd.f32 %v6647, %v6880
        %6882 = vmatprep.mubr.bf16.mxu0 %v6584
        %6883 = vmatmul.mubr.bf16.gmra.mrb[0].mxu0 %v6583
        %v6884 = vpop.f32.mrb[0].mxu0
        %v6885 = vadd.f32 %v6643, %v6884
        %v6886 = vpop.f32.mrb[0].mxu0
        %v6887 = vadd.f32 %v6647, %v6886
        %v6888 = vpop.f32.mrb[0].mxu0
        %v6889 = vadd.f32 %v6643, %v6888
        %v6890 = vpop.f32.mrb[0].mxu0
        %v6891 = vadd.f32 %v6647, %v6890
        %6892 = vmatprep.mubr.bf16.mxu0 %v6586
        %6893 = vmatmul.mubr.bf16.gmra.mrb[0].mxu0 %v6585
        %v6894 = vpop.f32.mrb[0].mxu0
        %v6895 = vadd.f32 %v6643, %v6894
        %v6896 = vpop.f32.mrb[0].mxu0
        %v6897 = vadd.f32 %v6647, %v6896
        %v6898 = vpop.f32.mrb[0].mxu0
        %v6899 = vadd.f32 %v6643, %v6898
        %v6900 = vpop.f32.mrb[0].mxu0
        %v6901 = vadd.f32 %v6647, %v6900
        %6902 = vmatprep.mubr.bf16.mxu0 %v6588
        %6903 = vmatmul.mubr.bf16.gmra.mrb[0].mxu0 %v6587
        %v6904 = vpop.f32.mrb[0].mxu0
        %v6905 = vadd.f32 %v6643, %v6904
        %v6906 = vpop.f32.mrb[0].mxu0
        %v6907 = vadd.f32 %v6647, %v6906
        %v6908 = vpop.f32.mrb[0].mxu0
        %v6909 = vadd.f32 %v6643, %v6908
        %v6910 = vpop.f32.mrb[0].mxu0
        %v6911 = vadd.f32 %v6647, %v6910
        %6912 = vmatprep.mubr.bf16.mxu0 %v6590
        %6913 = vmatmul.mubr.bf16.gmra.mrb[0].mxu0 %v6589
        %v6914 = vpop.f32.mrb[0].mxu0
        %v6915 = vadd.f32 %v6643, %v6914
        %v6916 = vpop.f32.mrb[0].mxu0
        %v6917 = vadd.f32 %v6647, %v6916
        %v6918 = vpop.f32.mrb[0].mxu0
        %v6919 = vadd.f32 %v6643, %v6918
        %v6920 = vpop.f32.mrb[0].mxu0
        %v6921 = vadd.f32 %v6647, %v6920
        %6922 = vmatprep.mubr.bf16.mxu0 %v6592
        %6923 = vmatmul.mubr.bf16.gmra.mrb[0].mxu0 %v6591
        %v6924 = vpop.f32.mrb[0].mxu0
        %v6925 = vadd.f32 %v6643, %v6924
        %v6926 = vpop.f32.mrb[0].mxu0
        %v6927 = vadd.f32 %v6647, %v6926
        %v6928 = vpop.f32.mrb[0].mxu0
        %v6929 = vadd.f32 %v6643, %v6928
        %v6930 = vpop.f32.mrb[0].mxu0
        %v6931 = vadd.f32 %v6647, %v6930
        %6932 = vmatprep.mubr.bf16.mxu0 %v6594
        %6933 = vmatmul.mubr.bf16.gmra.mrb[0].mxu0 %v6593
        %v6934 = vpop.f32.mrb[0].mxu0
        %v6935 = vadd.f32 %v6643, %v6934
        %v6936 = vpop.f32.mrb[0].mxu0
        %v6937 = vadd.f32 %v6647, %v6936
        %v6938 = vpop.f32.mrb[0].mxu0
        %v6939 = vadd.f32 %v6643, %v6938
        %v6940 = vpop.f32.mrb[0].mxu0
        %v6941 = vadd.f32 %v6647, %v6940
        %6942 = vmatprep.mubr.bf16.mxu0 %v6596
        %6943 = vmatmul.mubr.bf16.gmra.mrb[0].mxu0 %v6595
        %v6944 = vpop.f32.mrb[0].mxu0
        %v6945 = vadd.f32 %v6643, %v6944
        %v6946 = vpop.f32.mrb[0].mxu0
        %v6947 = vadd.f32 %v6647, %v6946
        %v6948 = vpop.f32.mrb[0].mxu0
        %v6949 = vadd.f32 %v6643, %v6948
        %v6950 = vpop.f32.mrb[0].mxu0
        %v6951 = vadd.f32 %v6647, %v6950
        %6952 = vmatprep.mubr.bf16.mxu0 %v6598
        %6953 = vmatmul.mubr.bf16.gmra.mrb[0].mxu0 %v6597
        %v6954 = vpop.f32.mrb[0].mxu0
        %v6955 = vadd.f32 %v6643, %v6954
        %v6956 = vpop.f32.mrb[0].mxu0
        %v6957 = vadd.f32 %v6647, %v6956
        %v6958 = vpop.f32.mrb[0].mxu0
        %v6959 = vadd.f32 %v6643, %v6958
        %v6960 = vpop.f32.mrb[0].mxu0
        %v6961 = vadd.f32 %v6647, %v6960
        %6962 = vmatprep.mubr.bf16.mxu0 %v6600
        %6963 = vmatmul.mubr.bf16.gmra.mrb[0].mxu0 %v6599
        %v6964 = vpop.f32.mrb[0].mxu0
        %v6965 = vadd.f32 %v6643, %v6964
        %v6966 = vpop.f32.mrb[0].mxu0
        %v6967 = vadd.f32 %v6647, %v6966
        %v6968 = vpop.f32.mrb[0].mxu0
        %v6969 = vadd.f32 %v6643, %v6968
        %v6970 = vpop.f32.mrb[0].mxu0
        %v6971 = vadd.f32 %v6647, %v6970
        %6972 = vmatprep.mubr.bf16.mxu0 %v6602
        %6973 = vmatmul.mubr.bf16.gmra.mrb[0].mxu0 %v6601
        %v6974 = vpop.f32.mrb[0].mxu0
        %v6975 = vadd.f32 %v6643, %v6974
        %v6976 = vpop.f32.mrb[0].mxu0
        %v6977 = vadd.f32 %v6647, %v6976
        %v6978 = vpop.f32.mrb[0].mxu0
        %v6979 = vadd.f32 %v6643, %v6978
        %v6980 = vpop.f32.mrb[0].mxu0
        %v6981 = vadd.f32 %v6647, %v6980
        %6982 = vmatprep.mubr.bf16.mxu0 %v6604
        %6983 = vmatmul.mubr.bf16.gmra.mrb[0].mxu0 %v6603
        %v6984 = vpop.f32.mrb[0].mxu0
        %v6985 = vadd.f32 %v6643, %v6984
        %v6986 = vpop.f32.mrb[0].mxu0
        %v6987 = vadd.f32 %v6647, %v6986
        %v6988 = vpop.f32.mrb[0].mxu0
        %v6989 = vadd.f32 %v6643, %v6988
        %v6990 = vpop.f32.mrb[0].mxu0
        %v6991 = vadd.f32 %v6647, %v6990
        %6992 = vmatprep.mubr.bf16.mxu0 %v6606
        %6993 = vmatmul.mubr.bf16.gmra.mrb[0].mxu0 %v6605
        %v6994 = vpop.f32.mrb[0].mxu0
        %v6995 = vadd.f32 %v6643, %v6994
        %v6996 = vpop.f32.mrb[0].mxu0
        %v6997 = vadd.f32 %v6647, %v6996
        %v6998 = vpop.f32.mrb[0].mxu0
        %v6999 = vadd.f32 %v6643, %v6998
        %v7000 = vpop.f32.mrb[0].mxu0
        %v7001 = vadd.f32 %v6647, %v7000
        %7002 = vmatprep.mubr.bf16.mxu0 %v6608
        %7003 = vmatmul.mubr.bf16.gmra.mrb[0].mxu0 %v6607
        %v7004 = vpop.f32.mrb[0].mxu0
        %v7005 = vadd.f32 %v6643, %v7004
        %v7006 = vpop.f32.mrb[0].mxu0
        %v7007 = vadd.f32 %v6647, %v7006
        %v7008 = vpop.f32.mrb[0].mxu0
        %v7009 = vadd.f32 %v6643, %v7008
        %v7010 = vpop.f32.mrb[0].mxu0
        %v7011 = vadd.f32 %v6647, %v7010
        %7012 = vmatprep.mubr.bf16.mxu0 %v6610
        %7013 = vmatmul.mubr.bf16.gmra.mrb[0].mxu0 %v6609
        %v7014 = vpop.f32.mrb[0].mxu0
        %v7015 = vadd.f32 %v6643, %v7014
        %v7016 = vpop.f32.mrb[0].mxu0
        %v7017 = vadd.f32 %v6647, %v7016
        %v7018 = vpop.f32.mrb[0].mxu0
        %v7019 = vadd.f32 %v6643, %v7018
        %v7020 = vpop.f32.mrb[0].mxu0
        %v7021 = vadd.f32 %v6647, %v7020
        %7022 = vmatprep.mubr.bf16.mxu0 %v6612
        %7023 = vmatmul.mubr.bf16.gmra.mrb[0].mxu0 %v6611
        %v7024 = vpop.f32.mrb[0].mxu0
        %v7025 = vadd.f32 %v6643, %v7024
        %v7026 = vpop.f32.mrb[0].mxu0
        %v7027 = vadd.f32 %v6647, %v7026
        %v7028 = vpop.f32.mrb[0].mxu0
        %v7029 = vadd.f32 %v6643, %v7028
        %v7030 = vpop.f32.mrb[0].mxu0
        %v7031 = vadd.f32 %v6647, %v7030
        %7032 = vmatprep.mubr.bf16.mxu0 %v6614
        %7033 = vmatmul.mubr.bf16.gmra.mrb[0].mxu0 %v6613
        %v7034 = vpop.f32.mrb[0].mxu0
        %v7035 = vadd.f32 %v6643, %v7034
        %v7036 = vpop.f32.mrb[0].mxu0
        %v7037 = vadd.f32 %v6647, %v7036
        %v7038 = vpop.f32.mrb[0].mxu0
        %v7039 = vadd.f32 %v6643, %v7038
        %v7040 = vpop.f32.mrb[0].mxu0
        %v7041 = vadd.f32 %v6647, %v7040
        %7042 = vmatprep.mubr.bf16.mxu0 %v6616
        %7043 = vmatmul.mubr.bf16.gmra.mrb[0].mxu0 %v6615
        %v7044 = vpop.f32.mrb[0].mxu0
        %v7045 = vadd.f32 %v6643, %v7044
        %v7046 = vpop.f32.mrb[0].mxu0
        %v7047 = vadd.f32 %v6647, %v7046
        %v7048 = vpop.f32.mrb[0].mxu0
        %v7049 = vadd.f32 %v6643, %v7048
        %v7050 = vpop.f32.mrb[0].mxu0
        %v7051 = vadd.f32 %v6647, %v7050
        %7052 = vmatprep.mubr.bf16.mxu0 %v6618
        %7053 = vmatmul.mubr.bf16.gmra.mrb[0].mxu0 %v6617
        %v7054 = vpop.f32.mrb[0].mxu0
        %v7055 = vadd.f32 %v6643, %v7054
        %v7056 = vpop.f32.mrb[0].mxu0
        %v7057 = vadd.f32 %v6647, %v7056
        %v7058 = vpop.f32.mrb[0].mxu0
        %v7059 = vadd.f32 %v6643, %v7058
        %v7060 = vpop.f32.mrb[0].mxu0
        %v7061 = vadd.f32 %v6647, %v7060
        %7062 = vmatprep.mubr.bf16.mxu0 %v6620
        %7063 = vmatmul.mubr.bf16.gmra.mrb[0].mxu0 %v6619
        %v7064 = vpop.f32.mrb[0].mxu0
        %v7065 = vadd.f32 %v6643, %v7064
        %v7066 = vpop.f32.mrb[0].mxu0
        %v7067 = vadd.f32 %v6647, %v7066
        %v7068 = vpop.f32.mrb[0].mxu0
        %v7069 = vadd.f32 %v6643, %v7068
        %v7070 = vpop.f32.mrb[0].mxu0
        %v7071 = vadd.f32 %v6647, %v7070
        %7072 = vmatprep.mubr.bf16.mxu0 %v6622
        %7073 = vmatmul.mubr.bf16.gmra.mrb[0].mxu0 %v6621
        %v7074 = vpop.f32.mrb[0].mxu0
        %v7075 = vadd.f32 %v6643, %v7074
        %v7076 = vpop.f32.mrb[0].mxu0
        %v7077 = vadd.f32 %v6647, %v7076
        %v7078 = vpop.f32.mrb[0].mxu0
        %v7079 = vadd.f32 %v6643, %v7078
        %v7080 = vpop.f32.mrb[0].mxu0
        %v7081 = vadd.f32 %v6647, %v7080
        %7082 = vmatprep.mubr.bf16.mxu0 %v6624
        %7083 = vmatmul.mubr.bf16.gmra.mrb[0].mxu0 %v6623
        %v7084 = vpop.f32.mrb[0].mxu0
        %v7085 = vadd.f32 %v6643, %v7084
        %v7086 = vpop.f32.mrb[0].mxu0
        %v7087 = vadd.f32 %v6647, %v7086
        %v7088 = vpop.f32.mrb[0].mxu0
        %v7089 = vadd.f32 %v6643, %v7088
        %v7090 = vpop.f32.mrb[0].mxu0
        %v7091 = vadd.f32 %v6647, %v7090
        %7092 = vmatprep.mubr.bf16.mxu0 %v6626
        %7093 = vmatmul.mubr.bf16.gmra.mrb[0].mxu0 %v6625
        %v7094 = vpop.f32.mrb[0].mxu0
        %v7095 = vadd.f32 %v6643, %v7094
        %v7096 = vpop.f32.mrb[0].mxu0
        %v7097 = vadd.f32 %v6647, %v7096
        %v7098 = vpop.f32.mrb[0].mxu0
        %v7099 = vadd.f32 %v6643, %v7098
        %v7100 = vpop.f32.mrb[0].mxu0
        %v7101 = vadd.f32 %v6647, %v7100
        %7102 = vmatprep.mubr.bf16.mxu0 %v6628
        %7103 = vmatmul.mubr.bf16.gmra.mrb[0].mxu0 %v6627
        %v7104 = vpop.f32.mrb[0].mxu0
        %v7105 = vadd.f32 %v6643, %v7104
        %v7106 = vpop.f32.mrb[0].mxu0
        %v7107 = vadd.f32 %v6647, %v7106
        %v7108 = vpop.f32.mrb[0].mxu0
        %v7109 = vadd.f32 %v6643, %v7108
        %v7110 = vpop.f32.mrb[0].mxu0
        %v7111 = vadd.f32 %v6647, %v7110
        %7112 = vmatprep.mubr.bf16.mxu0 %v6630
        %7113 = vmatmul.mubr.bf16.gmra.mrb[0].mxu0 %v6629
        %v7114 = vpop.f32.mrb[0].mxu0
        %v7115 = vadd.f32 %v6643, %v7114
        %v7116 = vpop.f32.mrb[0].mxu0
        %v7117 = vadd.f32 %v6647, %v7116
        %v7118 = vpop.f32.mrb[0].mxu0
        %v7119 = vadd.f32 %v6643, %v7118
        %v7120 = vpop.f32.mrb[0].mxu0
        %v7121 = vadd.f32 %v6647, %v7120
        %7122 = vmatprep.mubr.bf16.mxu0 %v6632
        %7123 = vmatmul.mubr.bf16.gmra.mrb[0].mxu0 %v6631
        %v7124 = vpop.f32.mrb[0].mxu0
        %v7125 = vadd.f32 %v6643, %v7124
        %v7126 = vpop.f32.mrb[0].mxu0
        %v7127 = vadd.f32 %v6647, %v7126
        %v7128 = vpop.f32.mrb[0].mxu0
        %v7129 = vadd.f32 %v6643, %v7128
        %v7130 = vpop.f32.mrb[0].mxu0
        %v7131 = vadd.f32 %v6647, %v7130
        %7132 = vmatprep.mubr.bf16.mxu0 %v6634
        %7133 = vmatmul.mubr.bf16.gmra.mrb[0].mxu0 %v6633
        %v7134 = vpop.f32.mrb[0].mxu0
        %v7135 = vadd.f32 %v6643, %v7134
        %v7136 = vpop.f32.mrb[0].mxu0
        %v7137 = vadd.f32 %v6647, %v7136
        %v7138 = vpop.f32.mrb[0].mxu0
        %v7139 = vadd.f32 %v6643, %v7138
        %v7140 = vpop.f32.mrb[0].mxu0
        %v7141 = vadd.f32 %v6647, %v7140
        %7142 = vmatprep.mubr.bf16.mxu0 %v6636
        %7143 = vmatmul.mubr.bf16.gmra.mrb[0].mxu0 %v6635
        %v7144 = vpop.f32.mrb[0].mxu0
        %v7145 = vadd.f32 %v6643, %v7144
        %v7146 = vpop.f32.mrb[0].mxu0
        %v7147 = vadd.f32 %v6647, %v7146
        %v7148 = vpop.f32.mrb[0].mxu0
        %v7149 = vadd.f32 %v6643, %v7148
        %v7150 = vpop.f32.mrb[0].mxu0
        %v7151 = vadd.f32 %v6647, %v7150
        %7152 = vmatprep.mubr.bf16.mxu0 %v6638
        %7153 = vmatmul.mubr.bf16.gmra.mrb[0].mxu0 %v6637
        %v7154 = vpop.f32.mrb[0].mxu0
        %v7155 = vadd.f32 %v6643, %v7154
        %v7156 = vpop.f32.mrb[0].mxu0
        %v7157 = vadd.f32 %v6647, %v7156
        %v7158 = vpop.f32.mrb[0].mxu0
        %v7159 = vadd.f32 %v6643, %v7158
        %v7160 = vpop.f32.mrb[0].mxu0
        %v7161 = vadd.f32 %v6647, %v7160
        %7162 = vdwg.mxu0
        %v7163 = vmax.f32 %v6845, 0.0
        %v7164 = vmax.f32 %v6847, 0.0
        %v7165 = vmax.f32 %v6849, 0.0
        %v7166 = vmax.f32 %v6851, 0.0
        %v7167 = vmax.f32 %v6855, 0.0
        %v7168 = vmax.f32 %v6857, 0.0
        %v7169 = vmax.f32 %v6859, 0.0
        %v7170 = vmax.f32 %v6861, 0.0
        %v7171 = vmax.f32 %v6865, 0.0
        %v7172 = vmax.f32 %v6867, 0.0
        %v7173 = vmax.f32 %v6869, 0.0
        %v7174 = vmax.f32 %v6871, 0.0
        %v7175 = vmax.f32 %v6875, 0.0
        %v7176 = vmax.f32 %v6877, 0.0
        %v7177 = vmax.f32 %v6879, 0.0
        %v7178 = vmax.f32 %v6881, 0.0
        %v7179 = vmax.f32 %v6885, 0.0
        %v7180 = vmax.f32 %v6887, 0.0
        %v7181 = vmax.f32 %v6889, 0.0
        %v7182 = vmax.f32 %v6891, 0.0
        %v7183 = vmax.f32 %v6895, 0.0
        %v7184 = vmax.f32 %v6897, 0.0
        %v7185 = vmax.f32 %v6899, 0.0
        %v7186 = vmax.f32 %v6901, 0.0
        %v7187 = vmax.f32 %v6905, 0.0
        %v7188 = vmax.f32 %v6907, 0.0
        %v7189 = vmax.f32 %v6909, 0.0
        %v7190 = vmax.f32 %v6911, 0.0
        %v7191 = vmax.f32 %v6915, 0.0
        %v7192 = vmax.f32 %v6917, 0.0
        %v7193 = vmax.f32 %v6919, 0.0
        %v7194 = vmax.f32 %v6921, 0.0
        %v7195 = vmax.f32 %v6925, 0.0
        %v7196 = vmax.f32 %v6927, 0.0
        %v7197 = vmax.f32 %v6929, 0.0
        %v7198 = vmax.f32 %v6931, 0.0
        %v7199 = vmax.f32 %v6935, 0.0
        %v7200 = vmax.f32 %v6937, 0.0
        %v7201 = vmax.f32 %v6939, 0.0
        %v7202 = vmax.f32 %v6941, 0.0
        %v7203 = vmax.f32 %v6945, 0.0
        %v7204 = vmax.f32 %v6947, 0.0
        %v7205 = vmax.f32 %v6949, 0.0
        %v7206 = vmax.f32 %v6951, 0.0
        %v7207 = vmax.f32 %v6955, 0.0
        %v7208 = vmax.f32 %v6957, 0.0
        %v7209 = vmax.f32 %v6959, 0.0
        %v7210 = vmax.f32 %v6961, 0.0
        %v7211 = vmax.f32 %v6965, 0.0
        %v7212 = vmax.f32 %v6967, 0.0
        %v7213 = vmax.f32 %v6969, 0.0
        %v7214 = vmax.f32 %v6971, 0.0
        %v7215 = vmax.f32 %v6975, 0.0
        %v7216 = vmax.f32 %v6977, 0.0
        %v7217 = vmax.f32 %v6979, 0.0
        %v7218 = vmax.f32 %v6981, 0.0
        %v7219 = vmax.f32 %v6985, 0.0
        %v7220 = vmax.f32 %v6987, 0.0
        %v7221 = vmax.f32 %v6989, 0.0
        %v7222 = vmax.f32 %v6991, 0.0
        %v7223 = vmax.f32 %v6995, 0.0
        %v7224 = vmax.f32 %v6997, 0.0
        %v7225 = vmax.f32 %v6999, 0.0
        %v7226 = vmax.f32 %v7001, 0.0
        %v7227 = vmax.f32 %v7005, 0.0
        %v7228 = vmax.f32 %v7007, 0.0
        %v7229 = vmax.f32 %v7009, 0.0
        %v7230 = vmax.f32 %v7011, 0.0
        %v7231 = vmax.f32 %v7015, 0.0
        %v7232 = vmax.f32 %v7017, 0.0
        %v7233 = vmax.f32 %v7019, 0.0
        %v7234 = vmax.f32 %v7021, 0.0
        %v7235 = vmax.f32 %v7025, 0.0
        %v7236 = vmax.f32 %v7027, 0.0
        %v7237 = vmax.f32 %v7029, 0.0
        %v7238 = vmax.f32 %v7031, 0.0
        %v7239 = vmax.f32 %v7035, 0.0
        %v7240 = vmax.f32 %v7037, 0.0
        %v7241 = vmax.f32 %v7039, 0.0
        %v7242 = vmax.f32 %v7041, 0.0
        %v7243 = vmax.f32 %v7045, 0.0
        %v7244 = vmax.f32 %v7047, 0.0
        %v7245 = vmax.f32 %v7049, 0.0
        %v7246 = vmax.f32 %v7051, 0.0
        %v7247 = vmax.f32 %v7055, 0.0
        %v7248 = vmax.f32 %v7057, 0.0
        %v7249 = vmax.f32 %v7059, 0.0
        %v7250 = vmax.f32 %v7061, 0.0
        %v7251 = vmax.f32 %v7065, 0.0
        %v7252 = vmax.f32 %v7067, 0.0
        %v7253 = vmax.f32 %v7069, 0.0
        %v7254 = vmax.f32 %v7071, 0.0
        %v7255 = vmax.f32 %v7075, 0.0
        %v7256 = vmax.f32 %v7077, 0.0
        %v7257 = vmax.f32 %v7079, 0.0
        %v7258 = vmax.f32 %v7081, 0.0
        %v7259 = vmax.f32 %v7085, 0.0
        %v7260 = vmax.f32 %v7087, 0.0
        %v7261 = vmax.f32 %v7089, 0.0
        %v7262 = vmax.f32 %v7091, 0.0
        %v7263 = vmax.f32 %v7095, 0.0
        %v7264 = vmax.f32 %v7097, 0.0
        %v7265 = vmax.f32 %v7099, 0.0
        %v7266 = vmax.f32 %v7101, 0.0
        %v7267 = vmax.f32 %v7105, 0.0
        %v7268 = vmax.f32 %v7107, 0.0
        %v7269 = vmax.f32 %v7109, 0.0
        %v7270 = vmax.f32 %v7111, 0.0
        %v7271 = vmax.f32 %v7115, 0.0
        %v7272 = vmax.f32 %v7117, 0.0
        %v7273 = vmax.f32 %v7119, 0.0
        %v7274 = vmax.f32 %v7121, 0.0
        %v7275 = vmax.f32 %v7125, 0.0
        %v7276 = vmax.f32 %v7127, 0.0
        %v7277 = vmax.f32 %v7129, 0.0
        %v7278 = vmax.f32 %v7131, 0.0
        %v7279 = vmax.f32 %v7135, 0.0
        %v7280 = vmax.f32 %v7137, 0.0
        %v7281 = vmax.f32 %v7139, 0.0
        %v7282 = vmax.f32 %v7141, 0.0
        %v7283 = vmax.f32 %v7145, 0.0
        %v7284 = vmax.f32 %v7147, 0.0
        %v7285 = vmax.f32 %v7149, 0.0
        %v7286 = vmax.f32 %v7151, 0.0
        %v7287 = vmax.f32 %v7155, 0.0
        %v7288 = vmax.f32 %v7157, 0.0
        %v7289 = vmax.f32 %v7159, 0.0
        %v7290 = vmax.f32 %v7161, 0.0
        %v7291 = vld [vmem:[%s18] sm:$0x3]
        %v7292 = vld [vmem:[#allocation2] sm:$0x1]
        %v7294 = vlaneseq
        %v7295 = vshrl.u32 %v7294, 7
        %v7296 = vsub.s32 0, %v7295
        %v7297 = vrot.slane %v7291, %v7296
        %v7298 = vlaneseq
        %v7299 = vshrl.u32 %v7298, 7
        %v7300 = vsub.s32 1, %v7299
        %v7301 = vrot.slane %v7291, %v7300
        %v7304 = vmul.f32 %v7163, %v7297
        %v7305 = vmul.f32 %v7164, %v7301
        %v7306 = vmul.f32 %v7165, %v7297
        %v7307 = vmul.f32 %v7166, %v7301
        %v7308 = vmul.f32 %v7167, %v7297
        %v7309 = vmul.f32 %v7168, %v7301
        %v7310 = vmul.f32 %v7169, %v7297
        %v7311 = vmul.f32 %v7170, %v7301
        %v7312 = vmul.f32 %v7171, %v7297
        %v7313 = vmul.f32 %v7172, %v7301
        %v7314 = vmul.f32 %v7173, %v7297
        %v7315 = vmul.f32 %v7174, %v7301
        %v7316 = vmul.f32 %v7175, %v7297
        %v7317 = vmul.f32 %v7176, %v7301
        %v7318 = vmul.f32 %v7177, %v7297
        %v7319 = vmul.f32 %v7178, %v7301
        %v7320 = vmul.f32 %v7179, %v7297
        %v7321 = vmul.f32 %v7180, %v7301
        %v7322 = vmul.f32 %v7181, %v7297
        %v7323 = vmul.f32 %v7182, %v7301
        %v7324 = vmul.f32 %v7183, %v7297
        %v7325 = vmul.f32 %v7184, %v7301
        %v7326 = vmul.f32 %v7185, %v7297
        %v7327 = vmul.f32 %v7186, %v7301
        %v7328 = vmul.f32 %v7187, %v7297
        %v7329 = vmul.f32 %v7188, %v7301
        %v7330 = vmul.f32 %v7189, %v7297
        %v7331 = vmul.f32 %v7190, %v7301
        %v7332 = vmul.f32 %v7191, %v7297
        %v7333 = vmul.f32 %v7192, %v7301
        %v7334 = vmul.f32 %v7193, %v7297
        %v7335 = vmul.f32 %v7194, %v7301
        %v7336 = vmul.f32 %v7195, %v7297
        %v7337 = vmul.f32 %v7196, %v7301
        %v7338 = vmul.f32 %v7197, %v7297
        %v7339 = vmul.f32 %v7198, %v7301
        %v7340 = vmul.f32 %v7199, %v7297
        %v7341 = vmul.f32 %v7200, %v7301
        %v7342 = vmul.f32 %v7201, %v7297
        %v7343 = vmul.f32 %v7202, %v7301
        %v7344 = vmul.f32 %v7203, %v7297
        %v7345 = vmul.f32 %v7204, %v7301
        %v7346 = vmul.f32 %v7205, %v7297
        %v7347 = vmul.f32 %v7206, %v7301
        %v7348 = vmul.f32 %v7207, %v7297
        %v7349 = vmul.f32 %v7208, %v7301
        %v7350 = vmul.f32 %v7209, %v7297
        %v7351 = vmul.f32 %v7210, %v7301
        %v7352 = vmul.f32 %v7211, %v7297
        %v7353 = vmul.f32 %v7212, %v7301
        %v7354 = vmul.f32 %v7213, %v7297
        %v7355 = vmul.f32 %v7214, %v7301
        %v7356 = vmul.f32 %v7215, %v7297
        %v7357 = vmul.f32 %v7216, %v7301
        %v7358 = vmul.f32 %v7217, %v7297
        %v7359 = vmul.f32 %v7218, %v7301
        %v7360 = vmul.f32 %v7219, %v7297
        %v7361 = vmul.f32 %v7220, %v7301
        %v7362 = vmul.f32 %v7221, %v7297
        %v7363 = vmul.f32 %v7222, %v7301
        %v7364 = vmul.f32 %v7223, %v7297
        %v7365 = vmul.f32 %v7224, %v7301
        %v7366 = vmul.f32 %v7225, %v7297
        %v7367 = vmul.f32 %v7226, %v7301
        %v7368 = vmul.f32 %v7227, %v7297
        %v7369 = vmul.f32 %v7228, %v7301
        %v7370 = vmul.f32 %v7229, %v7297
        %v7371 = vmul.f32 %v7230, %v7301
        %v7372 = vmul.f32 %v7231, %v7297
        %v7373 = vmul.f32 %v7232, %v7301
        %v7374 = vmul.f32 %v7233, %v7297
        %v7375 = vmul.f32 %v7234, %v7301
        %v7376 = vmul.f32 %v7235, %v7297
        %v7377 = vmul.f32 %v7236, %v7301
        %v7378 = vmul.f32 %v7237, %v7297
        %v7379 = vmul.f32 %v7238, %v7301
        %v7380 = vmul.f32 %v7239, %v7297
        %v7381 = vmul.f32 %v7240, %v7301
        %v7382 = vmul.f32 %v7241, %v7297
        %v7383 = vmul.f32 %v7242, %v7301
        %v7384 = vmul.f32 %v7243, %v7297
        %v7385 = vmul.f32 %v7244, %v7301
        %v7386 = vmul.f32 %v7245, %v7297
        %v7387 = vmul.f32 %v7246, %v7301
        %v7388 = vmul.f32 %v7247, %v7297
        %v7389 = vmul.f32 %v7248, %v7301
        %v7390 = vmul.f32 %v7249, %v7297
        %v7391 = vmul.f32 %v7250, %v7301
        %v7392 = vmul.f32 %v7251, %v7297
        %v7393 = vmul.f32 %v7252, %v7301
        %v7394 = vmul.f32 %v7253, %v7297
        %v7395 = vmul.f32 %v7254, %v7301
        %v7396 = vmul.f32 %v7255, %v7297
        %v7397 = vmul.f32 %v7256, %v7301
        %v7398 = vmul.f32 %v7257, %v7297
        %v7399 = vmul.f32 %v7258, %v7301
        %v7400 = vmul.f32 %v7259, %v7297
        %v7401 = vmul.f32 %v7260, %v7301
        %v7402 = vmul.f32 %v7261, %v7297
        %v7403 = vmul.f32 %v7262, %v7301
        %v7404 = vmul.f32 %v7263, %v7297
        %v7405 = vmul.f32 %v7264, %v7301
        %v7406 = vmul.f32 %v7265, %v7297
        %v7407 = vmul.f32 %v7266, %v7301
        %v7408 = vmul.f32 %v7267, %v7297
        %v7409 = vmul.f32 %v7268, %v7301
        %v7410 = vmul.f32 %v7269, %v7297
        %v7411 = vmul.f32 %v7270, %v7301
        %v7412 = vmul.f32 %v7271, %v7297
        %v7413 = vmul.f32 %v7272, %v7301
        %v7414 = vmul.f32 %v7273, %v7297
        %v7415 = vmul.f32 %v7274, %v7301
        %v7416 = vmul.f32 %v7275, %v7297
        %v7417 = vmul.f32 %v7276, %v7301
        %v7418 = vmul.f32 %v7277, %v7297
        %v7419 = vmul.f32 %v7278, %v7301
        %v7420 = vmul.f32 %v7279, %v7297
        %v7421 = vmul.f32 %v7280, %v7301
        %v7422 = vmul.f32 %v7281, %v7297
        %v7423 = vmul.f32 %v7282, %v7301
        %v7424 = vmul.f32 %v7283, %v7297
        %v7425 = vmul.f32 %v7284, %v7301
        %v7426 = vmul.f32 %v7285, %v7297
        %v7427 = vmul.f32 %v7286, %v7301
        %v7428 = vmul.f32 %v7287, %v7297
        %v7429 = vmul.f32 %v7288, %v7301
        %v7430 = vmul.f32 %v7289, %v7297
        %v7431 = vmul.f32 %v7290, %v7301
        %v7432 = vadd.f32 %v7304, %v7305
        %7433 = vadd.xlane.f32.xlu0 %v7432
        %v7434 = vpop.xlane.xlu0 %7433
        %v7435 = vadd.f32 %v7306, %v7307
        %7436 = vadd.xlane.f32.xlu0 %v7435
        %v7437 = vpop.xlane.xlu0 %7436
        %v7438 = vadd.f32 %v7308, %v7309
        %7439 = vadd.xlane.f32.xlu0 %v7438
        %v7440 = vpop.xlane.xlu0 %7439
        %v7441 = vadd.f32 %v7310, %v7311
        %7442 = vadd.xlane.f32.xlu0 %v7441
        %v7443 = vpop.xlane.xlu0 %7442
        %v7444 = vadd.f32 %v7312, %v7313
        %7445 = vadd.xlane.f32.xlu0 %v7444
        %v7446 = vpop.xlane.xlu0 %7445
        %v7447 = vadd.f32 %v7314, %v7315
        %7448 = vadd.xlane.f32.xlu0 %v7447
        %v7449 = vpop.xlane.xlu0 %7448
        %v7450 = vadd.f32 %v7316, %v7317
        %7451 = vadd.xlane.f32.xlu0 %v7450
        %v7452 = vpop.xlane.xlu0 %7451
        %v7453 = vadd.f32 %v7318, %v7319
        %7454 = vadd.xlane.f32.xlu0 %v7453
        %v7455 = vpop.xlane.xlu0 %7454
        %v7456 = vadd.f32 %v7320, %v7321
        %7457 = vadd.xlane.f32.xlu0 %v7456
        %v7458 = vpop.xlane.xlu0 %7457
        %v7459 = vadd.f32 %v7322, %v7323
        %7460 = vadd.xlane.f32.xlu0 %v7459
        %v7461 = vpop.xlane.xlu0 %7460
        %v7462 = vadd.f32 %v7324, %v7325
        %7463 = vadd.xlane.f32.xlu0 %v7462
        %v7464 = vpop.xlane.xlu0 %7463
        %v7465 = vadd.f32 %v7326, %v7327
        %7466 = vadd.xlane.f32.xlu0 %v7465
        %v7467 = vpop.xlane.xlu0 %7466
        %v7468 = vadd.f32 %v7328, %v7329
        %7469 = vadd.xlane.f32.xlu0 %v7468
        %v7470 = vpop.xlane.xlu0 %7469
        %v7471 = vadd.f32 %v7330, %v7331
        %7472 = vadd.xlane.f32.xlu0 %v7471
        %v7473 = vpop.xlane.xlu0 %7472
        %v7474 = vadd.f32 %v7332, %v7333
        %7475 = vadd.xlane.f32.xlu0 %v7474
        %v7476 = vpop.xlane.xlu0 %7475
        %v7477 = vadd.f32 %v7334, %v7335
        %7478 = vadd.xlane.f32.xlu0 %v7477
        %v7479 = vpop.xlane.xlu0 %7478
        %v7480 = vadd.f32 %v7336, %v7337
        %7481 = vadd.xlane.f32.xlu0 %v7480
        %v7482 = vpop.xlane.xlu0 %7481
        %v7483 = vadd.f32 %v7338, %v7339
        %7484 = vadd.xlane.f32.xlu0 %v7483
        %v7485 = vpop.xlane.xlu0 %7484
        %v7486 = vadd.f32 %v7340, %v7341
        %7487 = vadd.xlane.f32.xlu0 %v7486
        %v7488 = vpop.xlane.xlu0 %7487
        %v7489 = vadd.f32 %v7342, %v7343
        %7490 = vadd.xlane.f32.xlu0 %v7489
        %v7491 = vpop.xlane.xlu0 %7490
        %v7492 = vadd.f32 %v7344, %v7345
        %7493 = vadd.xlane.f32.xlu0 %v7492
        %v7494 = vpop.xlane.xlu0 %7493
        %v7495 = vadd.f32 %v7346, %v7347
        %7496 = vadd.xlane.f32.xlu0 %v7495
        %v7497 = vpop.xlane.xlu0 %7496
        %v7498 = vadd.f32 %v7348, %v7349
        %7499 = vadd.xlane.f32.xlu0 %v7498
        %v7500 = vpop.xlane.xlu0 %7499
        %v7501 = vadd.f32 %v7350, %v7351
        %7502 = vadd.xlane.f32.xlu0 %v7501
        %v7503 = vpop.xlane.xlu0 %7502
        %v7504 = vadd.f32 %v7352, %v7353
        %7505 = vadd.xlane.f32.xlu0 %v7504
        %v7506 = vpop.xlane.xlu0 %7505
        %v7507 = vadd.f32 %v7354, %v7355
        %7508 = vadd.xlane.f32.xlu0 %v7507
        %v7509 = vpop.xlane.xlu0 %7508
        %v7510 = vadd.f32 %v7356, %v7357
        %7511 = vadd.xlane.f32.xlu0 %v7510
        %v7512 = vpop.xlane.xlu0 %7511
        %v7513 = vadd.f32 %v7358, %v7359
        %7514 = vadd.xlane.f32.xlu0 %v7513
        %v7515 = vpop.xlane.xlu0 %7514
        %v7516 = vadd.f32 %v7360, %v7361
        %7517 = vadd.xlane.f32.xlu0 %v7516
        %v7518 = vpop.xlane.xlu0 %7517
        %v7519 = vadd.f32 %v7362, %v7363
        %7520 = vadd.xlane.f32.xlu0 %v7519
        %v7521 = vpop.xlane.xlu0 %7520
        %v7522 = vadd.f32 %v7364, %v7365
        %7523 = vadd.xlane.f32.xlu0 %v7522
        %v7524 = vpop.xlane.xlu0 %7523
        %v7525 = vadd.f32 %v7366, %v7367
        %7526 = vadd.xlane.f32.xlu0 %v7525
        %v7527 = vpop.xlane.xlu0 %7526
        %v7528 = vadd.f32 %v7368, %v7369
        %7529 = vadd.xlane.f32.xlu0 %v7528
        %v7530 = vpop.xlane.xlu0 %7529
        %v7531 = vadd.f32 %v7370, %v7371
        %7532 = vadd.xlane.f32.xlu0 %v7531
        %v7533 = vpop.xlane.xlu0 %7532
        %v7534 = vadd.f32 %v7372, %v7373
        %7535 = vadd.xlane.f32.xlu0 %v7534
        %v7536 = vpop.xlane.xlu0 %7535
        %v7537 = vadd.f32 %v7374, %v7375
        %7538 = vadd.xlane.f32.xlu0 %v7537
        %v7539 = vpop.xlane.xlu0 %7538
        %v7540 = vadd.f32 %v7376, %v7377
        %7541 = vadd.xlane.f32.xlu0 %v7540
        %v7542 = vpop.xlane.xlu0 %7541
        %v7543 = vadd.f32 %v7378, %v7379
        %7544 = vadd.xlane.f32.xlu0 %v7543
        %v7545 = vpop.xlane.xlu0 %7544
        %v7546 = vadd.f32 %v7380, %v7381
        %7547 = vadd.xlane.f32.xlu0 %v7546
        %v7548 = vpop.xlane.xlu0 %7547
        %v7549 = vadd.f32 %v7382, %v7383
        %7550 = vadd.xlane.f32.xlu0 %v7549
        %v7551 = vpop.xlane.xlu0 %7550
        %v7552 = vadd.f32 %v7384, %v7385
        %7553 = vadd.xlane.f32.xlu0 %v7552
        %v7554 = vpop.xlane.xlu0 %7553
        %v7555 = vadd.f32 %v7386, %v7387
        %7556 = vadd.xlane.f32.xlu0 %v7555
        %v7557 = vpop.xlane.xlu0 %7556
        %v7558 = vadd.f32 %v7388, %v7389
        %7559 = vadd.xlane.f32.xlu0 %v7558
        %v7560 = vpop.xlane.xlu0 %7559
        %v7561 = vadd.f32 %v7390, %v7391
        %7562 = vadd.xlane.f32.xlu0 %v7561
        %v7563 = vpop.xlane.xlu0 %7562
        %v7564 = vadd.f32 %v7392, %v7393
        %7565 = vadd.xlane.f32.xlu0 %v7564
        %v7566 = vpop.xlane.xlu0 %7565
        %v7567 = vadd.f32 %v7394, %v7395
        %7568 = vadd.xlane.f32.xlu0 %v7567
        %v7569 = vpop.xlane.xlu0 %7568
        %v7570 = vadd.f32 %v7396, %v7397
        %7571 = vadd.xlane.f32.xlu0 %v7570
        %v7572 = vpop.xlane.xlu0 %7571
        %v7573 = vadd.f32 %v7398, %v7399
        %7574 = vadd.xlane.f32.xlu0 %v7573
        %v7575 = vpop.xlane.xlu0 %7574
        %v7576 = vadd.f32 %v7400, %v7401
        %7577 = vadd.xlane.f32.xlu0 %v7576
        %v7578 = vpop.xlane.xlu0 %7577
        %v7579 = vadd.f32 %v7402, %v7403
        %7580 = vadd.xlane.f32.xlu0 %v7579
        %v7581 = vpop.xlane.xlu0 %7580
        %v7582 = vadd.f32 %v7404, %v7405
        %7583 = vadd.xlane.f32.xlu0 %v7582
        %v7584 = vpop.xlane.xlu0 %7583
        %v7585 = vadd.f32 %v7406, %v7407
        %7586 = vadd.xlane.f32.xlu0 %v7585
        %v7587 = vpop.xlane.xlu0 %7586
        %v7588 = vadd.f32 %v7408, %v7409
        %7589 = vadd.xlane.f32.xlu0 %v7588
        %v7590 = vpop.xlane.xlu0 %7589
        %v7591 = vadd.f32 %v7410, %v7411
        %7592 = vadd.xlane.f32.xlu0 %v7591
        %v7593 = vpop.xlane.xlu0 %7592
        %v7594 = vadd.f32 %v7412, %v7413
        %7595 = vadd.xlane.f32.xlu0 %v7594
        %v7596 = vpop.xlane.xlu0 %7595
        %v7597 = vadd.f32 %v7414, %v7415
        %7598 = vadd.xlane.f32.xlu0 %v7597
        %v7599 = vpop.xlane.xlu0 %7598
        %v7600 = vadd.f32 %v7416, %v7417
        %7601 = vadd.xlane.f32.xlu0 %v7600
        %v7602 = vpop.xlane.xlu0 %7601
        %v7603 = vadd.f32 %v7418, %v7419
        %7604 = vadd.xlane.f32.xlu0 %v7603
        %v7605 = vpop.xlane.xlu0 %7604
        %v7606 = vadd.f32 %v7420, %v7421
        %7607 = vadd.xlane.f32.xlu0 %v7606
        %v7608 = vpop.xlane.xlu0 %7607
        %v7609 = vadd.f32 %v7422, %v7423
        %7610 = vadd.xlane.f32.xlu0 %v7609
        %v7611 = vpop.xlane.xlu0 %7610
        %v7612 = vadd.f32 %v7424, %v7425
        %7613 = vadd.xlane.f32.xlu0 %v7612
        %v7614 = vpop.xlane.xlu0 %7613
        %v7615 = vadd.f32 %v7426, %v7427
        %7616 = vadd.xlane.f32.xlu0 %v7615
        %v7617 = vpop.xlane.xlu0 %7616
        %v7618 = vadd.f32 %v7428, %v7429
        %7619 = vadd.xlane.f32.xlu0 %v7618
        %v7620 = vpop.xlane.xlu0 %7619
        %v7621 = vadd.f32 %v7430, %v7431
        %7622 = vadd.xlane.f32.xlu0 %v7621
        %v7623 = vpop.xlane.xlu0 %7622
        %v7625 = vlaneseq
        %v7626 = vshrl.u32 %v7625, 7
        %v7627 = vsub.s32 0, %v7626
        %v7628 = vrot.slane %v7292, %v7627
        %v7630 = vadd.f32 %v7434, %v7628
        %v7631 = vadd.f32 %v7437, %v7628
        %v7632 = vadd.f32 %v7440, %v7628
        %v7633 = vadd.f32 %v7443, %v7628
        %v7634 = vadd.f32 %v7446, %v7628
        %v7635 = vadd.f32 %v7449, %v7628
        %v7636 = vadd.f32 %v7452, %v7628
        %v7637 = vadd.f32 %v7455, %v7628
        %v7638 = vadd.f32 %v7458, %v7628
        %v7639 = vadd.f32 %v7461, %v7628
        %v7640 = vadd.f32 %v7464, %v7628
        %v7641 = vadd.f32 %v7467, %v7628
        %v7642 = vadd.f32 %v7470, %v7628
        %v7643 = vadd.f32 %v7473, %v7628
        %v7644 = vadd.f32 %v7476, %v7628
        %v7645 = vadd.f32 %v7479, %v7628
        %v7646 = vadd.f32 %v7482, %v7628
        %v7647 = vadd.f32 %v7485, %v7628
        %v7648 = vadd.f32 %v7488, %v7628
        %v7649 = vadd.f32 %v7491, %v7628
        %v7650 = vadd.f32 %v7494, %v7628
        %v7651 = vadd.f32 %v7497, %v7628
        %v7652 = vadd.f32 %v7500, %v7628
        %v7653 = vadd.f32 %v7503, %v7628
        %v7654 = vadd.f32 %v7506, %v7628
        %v7655 = vadd.f32 %v7509, %v7628
        %v7656 = vadd.f32 %v7512, %v7628
        %v7657 = vadd.f32 %v7515, %v7628
        %v7658 = vadd.f32 %v7518, %v7628
        %v7659 = vadd.f32 %v7521, %v7628
        %v7660 = vadd.f32 %v7524, %v7628
        %v7661 = vadd.f32 %v7527, %v7628
        %v7662 = vadd.f32 %v7530, %v7628
        %v7663 = vadd.f32 %v7533, %v7628
        %v7664 = vadd.f32 %v7536, %v7628
        %v7665 = vadd.f32 %v7539, %v7628
        %v7666 = vadd.f32 %v7542, %v7628
        %v7667 = vadd.f32 %v7545, %v7628
        %v7668 = vadd.f32 %v7548, %v7628
        %v7669 = vadd.f32 %v7551, %v7628
        %v7670 = vadd.f32 %v7554, %v7628
        %v7671 = vadd.f32 %v7557, %v7628
        %v7672 = vadd.f32 %v7560, %v7628
        %v7673 = vadd.f32 %v7563, %v7628
        %v7674 = vadd.f32 %v7566, %v7628
        %v7675 = vadd.f32 %v7569, %v7628
        %v7676 = vadd.f32 %v7572, %v7628
        %v7677 = vadd.f32 %v7575, %v7628
        %v7678 = vadd.f32 %v7578, %v7628
        %v7679 = vadd.f32 %v7581, %v7628
        %v7680 = vadd.f32 %v7584, %v7628
        %v7681 = vadd.f32 %v7587, %v7628
        %v7682 = vadd.f32 %v7590, %v7628
        %v7683 = vadd.f32 %v7593, %v7628
        %v7684 = vadd.f32 %v7596, %v7628
        %v7685 = vadd.f32 %v7599, %v7628
        %v7686 = vadd.f32 %v7602, %v7628
        %v7687 = vadd.f32 %v7605, %v7628
        %v7688 = vadd.f32 %v7608, %v7628
        %v7689 = vadd.f32 %v7611, %v7628
        %v7690 = vadd.f32 %v7614, %v7628
        %v7691 = vadd.f32 %v7617, %v7628
        %v7692 = vadd.f32 %v7620, %v7628
        %v7693 = vadd.f32 %v7623, %v7628
        %v7694 = vxor.u32 %v7630, 2147483648
        %v7695 = vxor.u32 %v7631, 2147483648
        %v7696 = vxor.u32 %v7632, 2147483648
        %v7697 = vxor.u32 %v7633, 2147483648
        %v7698 = vxor.u32 %v7634, 2147483648
        %v7699 = vxor.u32 %v7635, 2147483648
        %v7700 = vxor.u32 %v7636, 2147483648
        %v7701 = vxor.u32 %v7637, 2147483648
        %v7702 = vxor.u32 %v7638, 2147483648
        %v7703 = vxor.u32 %v7639, 2147483648
        %v7704 = vxor.u32 %v7640, 2147483648
        %v7705 = vxor.u32 %v7641, 2147483648
        %v7706 = vxor.u32 %v7642, 2147483648
        %v7707 = vxor.u32 %v7643, 2147483648
        %v7708 = vxor.u32 %v7644, 2147483648
        %v7709 = vxor.u32 %v7645, 2147483648
        %v7710 = vxor.u32 %v7646, 2147483648
        %v7711 = vxor.u32 %v7647, 2147483648
        %v7712 = vxor.u32 %v7648, 2147483648
        %v7713 = vxor.u32 %v7649, 2147483648
        %v7714 = vxor.u32 %v7650, 2147483648
        %v7715 = vxor.u32 %v7651, 2147483648
        %v7716 = vxor.u32 %v7652, 2147483648
        %v7717 = vxor.u32 %v7653, 2147483648
        %v7718 = vxor.u32 %v7654, 2147483648
        %v7719 = vxor.u32 %v7655, 2147483648
        %v7720 = vxor.u32 %v7656, 2147483648
        %v7721 = vxor.u32 %v7657, 2147483648
        %v7722 = vxor.u32 %v7658, 2147483648
        %v7723 = vxor.u32 %v7659, 2147483648
        %v7724 = vxor.u32 %v7660, 2147483648
        %v7725 = vxor.u32 %v7661, 2147483648
        %v7726 = vxor.u32 %v7662, 2147483648
        %v7727 = vxor.u32 %v7663, 2147483648
        %v7728 = vxor.u32 %v7664, 2147483648
        %v7729 = vxor.u32 %v7665, 2147483648
        %v7730 = vxor.u32 %v7666, 2147483648
        %v7731 = vxor.u32 %v7667, 2147483648
        %v7732 = vxor.u32 %v7668, 2147483648
        %v7733 = vxor.u32 %v7669, 2147483648
        %v7734 = vxor.u32 %v7670, 2147483648
        %v7735 = vxor.u32 %v7671, 2147483648
        %v7736 = vxor.u32 %v7672, 2147483648
        %v7737 = vxor.u32 %v7673, 2147483648
        %v7738 = vxor.u32 %v7674, 2147483648
        %v7739 = vxor.u32 %v7675, 2147483648
        %v7740 = vxor.u32 %v7676, 2147483648
        %v7741 = vxor.u32 %v7677, 2147483648
        %v7742 = vxor.u32 %v7678, 2147483648
        %v7743 = vxor.u32 %v7679, 2147483648
        %v7744 = vxor.u32 %v7680, 2147483648
        %v7745 = vxor.u32 %v7681, 2147483648
        %v7746 = vxor.u32 %v7682, 2147483648
        %v7747 = vxor.u32 %v7683, 2147483648
        %v7748 = vxor.u32 %v7684, 2147483648
        %v7749 = vxor.u32 %v7685, 2147483648
        %v7750 = vxor.u32 %v7686, 2147483648
        %v7751 = vxor.u32 %v7687, 2147483648
        %v7752 = vxor.u32 %v7688, 2147483648
        %v7753 = vxor.u32 %v7689, 2147483648
        %v7754 = vxor.u32 %v7690, 2147483648
        %v7755 = vxor.u32 %v7691, 2147483648
        %v7756 = vxor.u32 %v7692, 2147483648
        %v7757 = vxor.u32 %v7693, 2147483648
        %v7758 = vmul.f32 %v7694, 1.442695
        %v7759 = vpow.pop %v7758
        %v7760 = vmul.f32 %v7695, 1.442695
        %v7761 = vpow.pop %v7760
        %v7762 = vmul.f32 %v7696, 1.442695
        %v7763 = vpow.pop %v7762
        %v7764 = vmul.f32 %v7697, 1.442695
        %v7765 = vpow.pop %v7764
        %v7766 = vmul.f32 %v7698, 1.442695
        %v7767 = vpow.pop %v7766
        %v7768 = vmul.f32 %v7699, 1.442695
        %v7769 = vpow.pop %v7768
        %v7770 = vmul.f32 %v7700, 1.442695
        %v7771 = vpow.pop %v7770
        %v7772 = vmul.f32 %v7701, 1.442695
        %v7773 = vpow.pop %v7772
        %v7774 = vmul.f32 %v7702, 1.442695
        %v7775 = vpow.pop %v7774
        %v7776 = vmul.f32 %v7703, 1.442695
        %v7777 = vpow.pop %v7776
        %v7778 = vmul.f32 %v7704, 1.442695
        %v7779 = vpow.pop %v7778
        %v7780 = vmul.f32 %v7705, 1.442695
        %v7781 = vpow.pop %v7780
        %v7782 = vmul.f32 %v7706, 1.442695
        %v7783 = vpow.pop %v7782
        %v7784 = vmul.f32 %v7707, 1.442695
        %v7785 = vpow.pop %v7784
        %v7786 = vmul.f32 %v7708, 1.442695
        %v7787 = vpow.pop %v7786
        %v7788 = vmul.f32 %v7709, 1.442695
        %v7789 = vpow.pop %v7788
        %v7790 = vmul.f32 %v7710, 1.442695
        %v7791 = vpow.pop %v7790
        %v7792 = vmul.f32 %v7711, 1.442695
        %v7793 = vpow.pop %v7792
        %v7794 = vmul.f32 %v7712, 1.442695
        %v7795 = vpow.pop %v7794
        %v7796 = vmul.f32 %v7713, 1.442695
        %v7797 = vpow.pop %v7796
        %v7798 = vmul.f32 %v7714, 1.442695
        %v7799 = vpow.pop %v7798
        %v7800 = vmul.f32 %v7715, 1.442695
        %v7801 = vpow.pop %v7800
        %v7802 = vmul.f32 %v7716, 1.442695
        %v7803 = vpow.pop %v7802
        %v7804 = vmul.f32 %v7717, 1.442695
        %v7805 = vpow.pop %v7804
        %v7806 = vmul.f32 %v7718, 1.442695
        %v7807 = vpow.pop %v7806
        %v7808 = vmul.f32 %v7719, 1.442695
        %v7809 = vpow.pop %v7808
        %v7810 = vmul.f32 %v7720, 1.442695
        %v7811 = vpow.pop %v7810
        %v7812 = vmul.f32 %v7721, 1.442695
        %v7813 = vpow.pop %v7812
        %v7814 = vmul.f32 %v7722, 1.442695
        %v7815 = vpow.pop %v7814
        %v7816 = vmul.f32 %v7723, 1.442695
        %v7817 = vpow.pop %v7816
        %v7818 = vmul.f32 %v7724, 1.442695
        %v7819 = vpow.pop %v7818
        %v7820 = vmul.f32 %v7725, 1.442695
        %v7821 = vpow.pop %v7820
        %v7822 = vmul.f32 %v7726, 1.442695
        %v7823 = vpow.pop %v7822
        %v7824 = vmul.f32 %v7727, 1.442695
        %v7825 = vpow.pop %v7824
        %v7826 = vmul.f32 %v7728, 1.442695
        %v7827 = vpow.pop %v7826
        %v7828 = vmul.f32 %v7729, 1.442695
        %v7829 = vpow.pop %v7828
        %v7830 = vmul.f32 %v7730, 1.442695
        %v7831 = vpow.pop %v7830
        %v7832 = vmul.f32 %v7731, 1.442695
        %v7833 = vpow.pop %v7832
        %v7834 = vmul.f32 %v7732, 1.442695
        %v7835 = vpow.pop %v7834
        %v7836 = vmul.f32 %v7733, 1.442695
        %v7837 = vpow.pop %v7836
        %v7838 = vmul.f32 %v7734, 1.442695
        %v7839 = vpow.pop %v7838
        %v7840 = vmul.f32 %v7735, 1.442695
        %v7841 = vpow.pop %v7840
        %v7842 = vmul.f32 %v7736, 1.442695
        %v7843 = vpow.pop %v7842
        %v7844 = vmul.f32 %v7737, 1.442695
        %v7845 = vpow.pop %v7844
        %v7846 = vmul.f32 %v7738, 1.442695
        %v7847 = vpow.pop %v7846
        %v7848 = vmul.f32 %v7739, 1.442695
        %v7849 = vpow.pop %v7848
        %v7850 = vmul.f32 %v7740, 1.442695
        %v7851 = vpow.pop %v7850
        %v7852 = vmul.f32 %v7741, 1.442695
        %v7853 = vpow.pop %v7852
        %v7854 = vmul.f32 %v7742, 1.442695
        %v7855 = vpow.pop %v7854
        %v7856 = vmul.f32 %v7743, 1.442695
        %v7857 = vpow.pop %v7856
        %v7858 = vmul.f32 %v7744, 1.442695
        %v7859 = vpow.pop %v7858
        %v7860 = vmul.f32 %v7745, 1.442695
        %v7861 = vpow.pop %v7860
        %v7862 = vmul.f32 %v7746, 1.442695
        %v7863 = vpow.pop %v7862
        %v7864 = vmul.f32 %v7747, 1.442695
        %v7865 = vpow.pop %v7864
        %v7866 = vmul.f32 %v7748, 1.442695
        %v7867 = vpow.pop %v7866
        %v7868 = vmul.f32 %v7749, 1.442695
        %v7869 = vpow.pop %v7868
        %v7870 = vmul.f32 %v7750, 1.442695
        %v7871 = vpow.pop %v7870
        %v7872 = vmul.f32 %v7751, 1.442695
        %v7873 = vpow.pop %v7872
        %v7874 = vmul.f32 %v7752, 1.442695
        %v7875 = vpow.pop %v7874
        %v7876 = vmul.f32 %v7753, 1.442695
        %v7877 = vpow.pop %v7876
        %v7878 = vmul.f32 %v7754, 1.442695
        %v7879 = vpow.pop %v7878
        %v7880 = vmul.f32 %v7755, 1.442695
        %v7881 = vpow.pop %v7880
        %v7882 = vmul.f32 %v7756, 1.442695
        %v7883 = vpow.pop %v7882
        %v7884 = vmul.f32 %v7757, 1.442695
        %v7885 = vpow.pop %v7884
        %v7886 = vadd.f32 %v7759, 1.0
        %v7887 = vadd.f32 %v7761, 1.0
        %v7888 = vadd.f32 %v7763, 1.0
        %v7889 = vadd.f32 %v7765, 1.0
        %v7890 = vadd.f32 %v7767, 1.0
        %v7891 = vadd.f32 %v7769, 1.0
        %v7892 = vadd.f32 %v7771, 1.0
        %v7893 = vadd.f32 %v7773, 1.0
        %v7894 = vadd.f32 %v7775, 1.0
        %v7895 = vadd.f32 %v7777, 1.0
        %v7896 = vadd.f32 %v7779, 1.0
        %v7897 = vadd.f32 %v7781, 1.0
        %v7898 = vadd.f32 %v7783, 1.0
        %v7899 = vadd.f32 %v7785, 1.0
        %v7900 = vadd.f32 %v7787, 1.0
        %v7901 = vadd.f32 %v7789, 1.0
        %v7902 = vadd.f32 %v7791, 1.0
        %v7903 = vadd.f32 %v7793, 1.0
        %v7904 = vadd.f32 %v7795, 1.0
        %v7905 = vadd.f32 %v7797, 1.0
        %v7906 = vadd.f32 %v7799, 1.0
        %v7907 = vadd.f32 %v7801, 1.0
        %v7908 = vadd.f32 %v7803, 1.0
        %v7909 = vadd.f32 %v7805, 1.0
        %v7910 = vadd.f32 %v7807, 1.0
        %v7911 = vadd.f32 %v7809, 1.0
        %v7912 = vadd.f32 %v7811, 1.0
        %v7913 = vadd.f32 %v7813, 1.0
        %v7914 = vadd.f32 %v7815, 1.0
        %v7915 = vadd.f32 %v7817, 1.0
        %v7916 = vadd.f32 %v7819, 1.0
        %v7917 = vadd.f32 %v7821, 1.0
        %v7918 = vadd.f32 %v7823, 1.0
        %v7919 = vadd.f32 %v7825, 1.0
        %v7920 = vadd.f32 %v7827, 1.0
        %v7921 = vadd.f32 %v7829, 1.0
        %v7922 = vadd.f32 %v7831, 1.0
        %v7923 = vadd.f32 %v7833, 1.0
        %v7924 = vadd.f32 %v7835, 1.0
        %v7925 = vadd.f32 %v7837, 1.0
        %v7926 = vadd.f32 %v7839, 1.0
        %v7927 = vadd.f32 %v7841, 1.0
        %v7928 = vadd.f32 %v7843, 1.0
        %v7929 = vadd.f32 %v7845, 1.0
        %v7930 = vadd.f32 %v7847, 1.0
        %v7931 = vadd.f32 %v7849, 1.0
        %v7932 = vadd.f32 %v7851, 1.0
        %v7933 = vadd.f32 %v7853, 1.0
        %v7934 = vadd.f32 %v7855, 1.0
        %v7935 = vadd.f32 %v7857, 1.0
        %v7936 = vadd.f32 %v7859, 1.0
        %v7937 = vadd.f32 %v7861, 1.0
        %v7938 = vadd.f32 %v7863, 1.0
        %v7939 = vadd.f32 %v7865, 1.0
        %v7940 = vadd.f32 %v7867, 1.0
        %v7941 = vadd.f32 %v7869, 1.0
        %v7942 = vadd.f32 %v7871, 1.0
        %v7943 = vadd.f32 %v7873, 1.0
        %v7944 = vadd.f32 %v7875, 1.0
        %v7945 = vadd.f32 %v7877, 1.0
        %v7946 = vadd.f32 %v7879, 1.0
        %v7947 = vadd.f32 %v7881, 1.0
        %v7948 = vadd.f32 %v7883, 1.0
        %v7949 = vadd.f32 %v7885, 1.0
        %v7950 = vrcp.pop %v7886
        %v7951 = vmul.f32 1.0, %v7950
        %v7952 = vrcp.pop %v7887
        %v7953 = vmul.f32 1.0, %v7952
        %v7954 = vrcp.pop %v7888
        %v7955 = vmul.f32 1.0, %v7954
        %v7956 = vrcp.pop %v7889
        %v7957 = vmul.f32 1.0, %v7956
        %v7958 = vrcp.pop %v7890
        %v7959 = vmul.f32 1.0, %v7958
        %v7960 = vrcp.pop %v7891
        %v7961 = vmul.f32 1.0, %v7960
        %v7962 = vrcp.pop %v7892
        %v7963 = vmul.f32 1.0, %v7962
        %v7964 = vrcp.pop %v7893
        %v7965 = vmul.f32 1.0, %v7964
        %v7966 = vrcp.pop %v7894
        %v7967 = vmul.f32 1.0, %v7966
        %v7968 = vrcp.pop %v7895
        %v7969 = vmul.f32 1.0, %v7968
        %v7970 = vrcp.pop %v7896
        %v7971 = vmul.f32 1.0, %v7970
        %v7972 = vrcp.pop %v7897
        %v7973 = vmul.f32 1.0, %v7972
        %v7974 = vrcp.pop %v7898
        %v7975 = vmul.f32 1.0, %v7974
        %v7976 = vrcp.pop %v7899
        %v7977 = vmul.f32 1.0, %v7976
        %v7978 = vrcp.pop %v7900
        %v7979 = vmul.f32 1.0, %v7978
        %v7980 = vrcp.pop %v7901
        %v7981 = vmul.f32 1.0, %v7980
        %v7982 = vrcp.pop %v7902
        %v7983 = vmul.f32 1.0, %v7982
        %v7984 = vrcp.pop %v7903
        %v7985 = vmul.f32 1.0, %v7984
        %v7986 = vrcp.pop %v7904
        %v7987 = vmul.f32 1.0, %v7986
        %v7988 = vrcp.pop %v7905
        %v7989 = vmul.f32 1.0, %v7988
        %v7990 = vrcp.pop %v7906
        %v7991 = vmul.f32 1.0, %v7990
        %v7992 = vrcp.pop %v7907
        %v7993 = vmul.f32 1.0, %v7992
        %v7994 = vrcp.pop %v7908
        %v7995 = vmul.f32 1.0, %v7994
        %v7996 = vrcp.pop %v7909
        %v7997 = vmul.f32 1.0, %v7996
        %v7998 = vrcp.pop %v7910
        %v7999 = vmul.f32 1.0, %v7998
        %v8000 = vrcp.pop %v7911
        %v8001 = vmul.f32 1.0, %v8000
        %v8002 = vrcp.pop %v7912
        %v8003 = vmul.f32 1.0, %v8002
        %v8004 = vrcp.pop %v7913
        %v8005 = vmul.f32 1.0, %v8004
        %v8006 = vrcp.pop %v7914
        %v8007 = vmul.f32 1.0, %v8006
        %v8008 = vrcp.pop %v7915
        %v8009 = vmul.f32 1.0, %v8008
        %v8010 = vrcp.pop %v7916
        %v8011 = vmul.f32 1.0, %v8010
        %v8012 = vrcp.pop %v7917
        %v8013 = vmul.f32 1.0, %v8012
        %v8014 = vrcp.pop %v7918
        %v8015 = vmul.f32 1.0, %v8014
        %v8016 = vrcp.pop %v7919
        %v8017 = vmul.f32 1.0, %v8016
        %v8018 = vrcp.pop %v7920
        %v8019 = vmul.f32 1.0, %v8018
        %v8020 = vrcp.pop %v7921
        %v8021 = vmul.f32 1.0, %v8020
        %v8022 = vrcp.pop %v7922
        %v8023 = vmul.f32 1.0, %v8022
        %v8024 = vrcp.pop %v7923
        %v8025 = vmul.f32 1.0, %v8024
        %v8026 = vrcp.pop %v7924
        %v8027 = vmul.f32 1.0, %v8026
        %v8028 = vrcp.pop %v7925
        %v8029 = vmul.f32 1.0, %v8028
        %v8030 = vrcp.pop %v7926
        %v8031 = vmul.f32 1.0, %v8030
        %v8032 = vrcp.pop %v7927
        %v8033 = vmul.f32 1.0, %v8032
        %v8034 = vrcp.pop %v7928
        %v8035 = vmul.f32 1.0, %v8034
        %v8036 = vrcp.pop %v7929
        %v8037 = vmul.f32 1.0, %v8036
        %v8038 = vrcp.pop %v7930
        %v8039 = vmul.f32 1.0, %v8038
        %v8040 = vrcp.pop %v7931
        %v8041 = vmul.f32 1.0, %v8040
        %v8042 = vrcp.pop %v7932
        %v8043 = vmul.f32 1.0, %v8042
        %v8044 = vrcp.pop %v7933
        %v8045 = vmul.f32 1.0, %v8044
        %v8046 = vrcp.pop %v7934
        %v8047 = vmul.f32 1.0, %v8046
        %v8048 = vrcp.pop %v7935
        %v8049 = vmul.f32 1.0, %v8048
        %v8050 = vrcp.pop %v7936
        %v8051 = vmul.f32 1.0, %v8050
        %v8052 = vrcp.pop %v7937
        %v8053 = vmul.f32 1.0, %v8052
        %v8054 = vrcp.pop %v7938
        %v8055 = vmul.f32 1.0, %v8054
        %v8056 = vrcp.pop %v7939
        %v8057 = vmul.f32 1.0, %v8056
        %v8058 = vrcp.pop %v7940
        %v8059 = vmul.f32 1.0, %v8058
        %v8060 = vrcp.pop %v7941
        %v8061 = vmul.f32 1.0, %v8060
        %v8062 = vrcp.pop %v7942
        %v8063 = vmul.f32 1.0, %v8062
        %v8064 = vrcp.pop %v7943
        %v8065 = vmul.f32 1.0, %v8064
        %v8066 = vrcp.pop %v7944
        %v8067 = vmul.f32 1.0, %v8066
        %v8068 = vrcp.pop %v7945
        %v8069 = vmul.f32 1.0, %v8068
        %v8070 = vrcp.pop %v7946
        %v8071 = vmul.f32 1.0, %v8070
        %v8072 = vrcp.pop %v7947
        %v8073 = vmul.f32 1.0, %v8072
        %v8074 = vrcp.pop %v7948
        %v8075 = vmul.f32 1.0, %v8074
        %v8076 = vrcp.pop %v7949
        %v8077 = vmul.f32 1.0, %v8076
        %vm8078 = vcmask 7168
        %8079 = vst.msk [vmem:[%s783] sm:$0xff] %vm8078, %v7951
        %8080 = vst.msk [vmem:[%s783 + $0x8] sm:$0xff] %vm8078, %v7953
        %8081 = vst.msk [vmem:[%s783 + $0x10] sm:$0xff] %vm8078, %v7955
        %8082 = vst.msk [vmem:[%s783 + $0x18] sm:$0xff] %vm8078, %v7957
        %8083 = vst.msk [vmem:[%s783 + $0x20] sm:$0xff] %vm8078, %v7959
        %8084 = vst.msk [vmem:[%s783 + $0x28] sm:$0xff] %vm8078, %v7961
        %8085 = vst.msk [vmem:[%s783 + $0x30] sm:$0xff] %vm8078, %v7963
        %8086 = vst.msk [vmem:[%s783 + $0x38] sm:$0xff] %vm8078, %v7965
        %8087 = vst.msk [vmem:[%s783 + $0x40] sm:$0xff] %vm8078, %v7967
        %8088 = vst.msk [vmem:[%s783 + $0x48] sm:$0xff] %vm8078, %v7969
        %8089 = vst.msk [vmem:[%s783 + $0x50] sm:$0xff] %vm8078, %v7971
        %8090 = vst.msk [vmem:[%s783 + $0x58] sm:$0xff] %vm8078, %v7973
        %8091 = vst.msk [vmem:[%s783 + $0x60] sm:$0xff] %vm8078, %v7975
        %8092 = vst.msk [vmem:[%s783 + $0x68] sm:$0xff] %vm8078, %v7977
        %8093 = vst.msk [vmem:[%s783 + $0x70] sm:$0xff] %vm8078, %v7979
        %8094 = vst.msk [vmem:[%s783 + $0x78] sm:$0xff] %vm8078, %v7981
        %8095 = vst.msk [vmem:[%s783 + $0x80] sm:$0xff] %vm8078, %v7983
        %8096 = vst.msk [vmem:[%s783 + $0x88] sm:$0xff] %vm8078, %v7985
        %8097 = vst.msk [vmem:[%s783 + $0x90] sm:$0xff] %vm8078, %v7987
        %8098 = vst.msk [vmem:[%s783 + $0x98] sm:$0xff] %vm8078, %v7989
        %8099 = vst.msk [vmem:[%s783 + $0xa0] sm:$0xff] %vm8078, %v7991
        %8100 = vst.msk [vmem:[%s783 + $0xa8] sm:$0xff] %vm8078, %v7993
        %8101 = vst.msk [vmem:[%s783 + $0xb0] sm:$0xff] %vm8078, %v7995
        %8102 = vst.msk [vmem:[%s783 + $0xb8] sm:$0xff] %vm8078, %v7997
        %8103 = vst.msk [vmem:[%s783 + $0xc0] sm:$0xff] %vm8078, %v7999
        %8104 = vst.msk [vmem:[%s783 + $0xc8] sm:$0xff] %vm8078, %v8001
        %8105 = vst.msk [vmem:[%s783 + $0xd0] sm:$0xff] %vm8078, %v8003
        %8106 = vst.msk [vmem:[%s783 + $0xd8] sm:$0xff] %vm8078, %v8005
        %8107 = vst.msk [vmem:[%s783 + $0xe0] sm:$0xff] %vm8078, %v8007
        %8108 = vst.msk [vmem:[%s783 + $0xe8] sm:$0xff] %vm8078, %v8009
        %8109 = vst.msk [vmem:[%s783 + $0xf0] sm:$0xff] %vm8078, %v8011
        %8110 = vst.msk [vmem:[%s783 + $0xf8] sm:$0xff] %vm8078, %v8013
        %8111 = vst.msk [vmem:[%s783 + $0x100] sm:$0xff] %vm8078, %v8015
        %8112 = vst.msk [vmem:[%s783 + $0x108] sm:$0xff] %vm8078, %v8017
        %8113 = vst.msk [vmem:[%s783 + $0x110] sm:$0xff] %vm8078, %v8019
        %8114 = vst.msk [vmem:[%s783 + $0x118] sm:$0xff] %vm8078, %v8021
        %8115 = vst.msk [vmem:[%s783 + $0x120] sm:$0xff] %vm8078, %v8023
        %8116 = vst.msk [vmem:[%s783 + $0x128] sm:$0xff] %vm8078, %v8025
        %8117 = vst.msk [vmem:[%s783 + $0x130] sm:$0xff] %vm8078, %v8027
        %8118 = vst.msk [vmem:[%s783 + $0x138] sm:$0xff] %vm8078, %v8029
        %8119 = vst.msk [vmem:[%s783 + $0x140] sm:$0xff] %vm8078, %v8031
        %8120 = vst.msk [vmem:[%s783 + $0x148] sm:$0xff] %vm8078, %v8033
        %8121 = vst.msk [vmem:[%s783 + $0x150] sm:$0xff] %vm8078, %v8035
        %8122 = vst.msk [vmem:[%s783 + $0x158] sm:$0xff] %vm8078, %v8037
        %8123 = vst.msk [vmem:[%s783 + $0x160] sm:$0xff] %vm8078, %v8039
        %8124 = vst.msk [vmem:[%s783 + $0x168] sm:$0xff] %vm8078, %v8041
        %8125 = vst.msk [vmem:[%s783 + $0x170] sm:$0xff] %vm8078, %v8043
        %8126 = vst.msk [vmem:[%s783 + $0x178] sm:$0xff] %vm8078, %v8045
        %8127 = vst.msk [vmem:[%s783 + $0x180] sm:$0xff] %vm8078, %v8047
        %8128 = vst.msk [vmem:[%s783 + $0x188] sm:$0xff] %vm8078, %v8049
        %8129 = vst.msk [vmem:[%s783 + $0x190] sm:$0xff] %vm8078, %v8051
        %8130 = vst.msk [vmem:[%s783 + $0x198] sm:$0xff] %vm8078, %v8053
        %8131 = vst.msk [vmem:[%s783 + $0x1a0] sm:$0xff] %vm8078, %v8055
        %8132 = vst.msk [vmem:[%s783 + $0x1a8] sm:$0xff] %vm8078, %v8057
        %8133 = vst.msk [vmem:[%s783 + $0x1b0] sm:$0xff] %vm8078, %v8059
        %8134 = vst.msk [vmem:[%s783 + $0x1b8] sm:$0xff] %vm8078, %v8061
        %8135 = vst.msk [vmem:[%s783 + $0x1c0] sm:$0xff] %vm8078, %v8063
        %8136 = vst.msk [vmem:[%s783 + $0x1c8] sm:$0xff] %vm8078, %v8065
        %8137 = vst.msk [vmem:[%s783 + $0x1d0] sm:$0xff] %vm8078, %v8067
        %8138 = vst.msk [vmem:[%s783 + $0x1d8] sm:$0xff] %vm8078, %v8069
        %8139 = vst.msk [vmem:[%s783 + $0x1e0] sm:$0xff] %vm8078, %v8071
        %8140 = vst.msk [vmem:[%s783 + $0x1e8] sm:$0xff] %vm8078, %v8073
        %8141 = vst.msk [vmem:[%s783 + $0x1f0] sm:$0xff] %vm8078, %v8075
        %8142 = vst.msk [vmem:[%s783 + $0x1f8] sm:$0xff] %vm8078, %v8077
        %s8143 = smul.u32 64, %s41
        %p8144 = scmp.lt.s32.totalorder %s8143, 127
        %s8145 = scalar_select %p8144, %s8143, 127
        %s8146 = smul.addr %s8145, 8
        %s8147 = scalar_lea.vmem %s20, %s8146
        // Predicated region
        $region141: #{tpu_custom_call.1} parent=99 // pred_check
          %p8148 = pneg %p484
        $region142: #{tpu_custom_call.1} parent=99 // pred_check_branch
          %8150 = sbr.rel (%p8148) target = $region144
        $region143: #{tpu_custom_call.1} parent=99 // pred_region
          %s8151 = smul.u32 64, %s41
        $region144: #{tpu_custom_call.1} parent=99 // pred_fallthru
          _
      $region100: #{tpu_custom_call.1} parent=5 // pred_fallthru
        _
      %p8152 = scmp.le.s32.totalorder 2, %s36
      // Predicated region
      $region145: #{tpu_custom_call.1} parent=5 // pred_check
        %p8153 = pneg %p8152
      $region146: #{tpu_custom_call.1} parent=5 // pred_check_branch
        %8155 = sbr.rel (%p8153) target = $region148
      $region147: #{tpu_custom_call.1} parent=5 // pred_region
        %s8156 = ssub.s32 %s36, 2
        // Predicated region
        $region149: #{tpu_custom_call.1} parent=147 // pred_check
          %p8157 = pneg %p490
        $region150: #{tpu_custom_call.1} parent=147 // pred_check_branch
          %8159 = sbr.rel (%p8157) target = $region152
        $region151: #{tpu_custom_call.1} parent=147 // pred_region
          %s8160 = smul.u32 64, %s42
          %p8161 = scmp.lt.s32.totalorder %s8160, 127
          %s8162 = scalar_select %p8161, %s8160, 127
          %s8163 = smul.addr %s8162, 8
          %s8164 = scalar_lea.vmem %s20, %s8163
        $region152: #{tpu_custom_call.1} parent=147 // pred_fallthru
          _
      $region148: #{tpu_custom_call.1} parent=5 // pred_fallthru
        _
    $region6: #{tpu_custom_call.1} parent=1 // loop_footer
      %s40 = sadd.s32 1, %s36
    $region7: #{tpu_custom_call.1} parent=1 // loop_footer_branch
      %35 = sbr.rel target = $region3
    $region8: #{tpu_custom_call.1} parent=1 // loop_exit
      _
    %8165 = vsyncpa [#allocation4], 1
    %s8166 = scalar_lea.sflag [#allocation4], 1
    %8167 = vsyncpa %s8166, 1
    %8168 = vsyncpa [#allocation6], 1
    %8169 = vsyncpa [#allocation9], 1
    %8170 = vsyncpa [#allocation12], 1
    %8171 = vsyncpa [#allocation15], 1
    %8172 = vsyncpa [#allocation18], 1

</llo_original>
